<compile_context>
chip_gen: v7x
topology: tpu7x:2x2x1
jax: 0.10.0
libtpu: 0.0.40
codegen_flags: <defaults>
</compile_context>

<pallas_src>
import functools

import jax
import jax.numpy as jnp
from jax.experimental import pallas as pl
from jax.experimental.pallas import tpu as pltpu

# ----------------------------- model config (small) -----------------------------
VOCAB = 256
HIDDEN = 128
N_HEADS = 4
HEAD_DIM = HIDDEN // N_HEADS
FFN = 256
N_LAYERS = 2
LORA_R = 8
LORA_ALPHA = 16
LORA_SCALE = LORA_ALPHA / LORA_R
IGNORE_INDEX = -100

VMEM_LIMIT = 32 * 1024 * 1024  # safe on v5e/v6e/v7x; demo usage is far below


def _ln(x, g, b, eps=1e-5):
    mu = jnp.mean(x, axis=-1, keepdims=True)
    var = jnp.mean((x - mu) ** 2, axis=-1, keepdims=True)
    return (x - mu) * jax.lax.rsqrt(var + eps) * g + b


# ----------------------------- fused transformer-layer kernel -------------------
def _layer_kernel(x_ref, ln1_g, ln1_b, qkv_w, qkv_b, lora_a, lora_b,
                  dense_w, dense_b, ln2_g, ln2_b, fc1_w, fc1_b, fc2_w, fc2_b,
                  o_ref, *, seq, lora_scale):
    # One sequence (one batch element) per grid step.
    x = x_ref[...].astype(jnp.float32)                              # [S, H]

    # --- attention block: LN1 -> QKV (+ LoRA activation path) -> causal attn -> dense + residual
    y = _ln(x, ln1_g[...], ln1_b[...])
    qkv = jnp.dot(y.astype(jnp.bfloat16), qkv_w[...],
                  preferred_element_type=jnp.float32)               # [S, 3H], MXU bf16 -> f32
    # LoRA activation path in f32 (avoids bf16-fold underflow of the adapter delta).
    lora = jnp.dot(jnp.dot(y, lora_a[...], preferred_element_type=jnp.float32),
                   lora_b[...], preferred_element_type=jnp.float32)
    qkv = qkv + lora_scale * lora + qkv_b[...]

    att_scale = 1.0 / float(HEAD_DIM) ** 0.5
    row = jax.lax.broadcasted_iota(jnp.int32, (seq, seq), 0)
    col = jax.lax.broadcasted_iota(jnp.int32, (seq, seq), 1)
    causal = col <= row
    lane = jax.lax.broadcasted_iota(jnp.int32, (seq, HIDDEN), 1)
    # Head lane-masks built ONCE (hoisted; HEAD_DIM=32 < 128 so masks keep every slice
    # (8,128)-aligned).  At real head_dim=128 slice heads directly instead.
    head_masks = [((lane >= h * HEAD_DIM) & (lane < (h + 1) * HEAD_DIM)).astype(jnp.float32)
                  for h in range(N_HEADS)]

    q_slab = qkv[:, 0:HIDDEN]
    k_slab = qkv[:, HIDDEN:2 * HIDDEN]
    v_slab = qkv[:, 2 * HIDDEN:3 * HIDDEN]

    acc = jnp.zeros((seq, HIDDEN), jnp.float32)
    for h in range(N_HEADS):
        mask_h = head_masks[h]
        scores = jax.lax.dot_general(
            q_slab, k_slab * mask_h, (((1,), (1,)), ((), ())),
            preferred_element_type=jnp.float32) * att_scale
        scores = jnp.where(causal, scores, -1e30)
        scores = scores - jnp.max(scores, axis=-1, keepdims=True)
        p = jnp.exp(scores)
        p = p / jnp.sum(p, axis=-1, keepdims=True)                  # exact softmax
        # p @ (V masked to head h) lands in head h's lanes -> lane-dense accumulate.
        acc = acc + jnp.dot(p, v_slab * mask_h, preferred_element_type=jnp.float32)

    # attention accumulator stays in vregs -> straight into the dense matmul.
    attn_out = jnp.dot(acc.astype(jnp.bfloat16), dense_w[...],
                       preferred_element_type=jnp.float32) + dense_b[...]
    x = x + attn_out                                                # residual fused in-kernel

    # --- MLP block: LN2 -> fc1(gelu) -> fc2 + residual
    y = _ln(x, ln2_g[...], ln2_b[...])
    h1 = jnp.dot(y.astype(jnp.bfloat16), fc1_w[...],
                 preferred_element_type=jnp.float32) + fc1_b[...]
    h1 = jax.nn.gelu(h1, approximate=True)
    h2 = jnp.dot(h1.astype(jnp.bfloat16), fc2_w[...],
                 preferred_element_type=jnp.float32) + fc2_b[...]
    o_ref[...] = (x + h2).astype(o_ref.dtype)


def transformer_layer(x, layer, batch, seq):
    m = x.shape[0]
    kernel = functools.partial(_layer_kernel, seq=seq, lora_scale=LORA_SCALE)

    def rep(shape):  # whole-array block, constant index -> DMA'd once, stays resident
        return pl.BlockSpec(shape, lambda b: (0, 0))

    in_specs = [
        pl.BlockSpec((seq, HIDDEN), lambda b: (b, 0)),     # x: one sequence per grid step
        rep((1, HIDDEN)), rep((1, HIDDEN)),                # ln1 g/b
        rep((HIDDEN, 3 * HIDDEN)), rep((1, 3 * HIDDEN)),   # qkv w/b
        rep((HIDDEN, LORA_R)), rep((LORA_R, 3 * HIDDEN)),  # lora A/B
        rep((HIDDEN, HIDDEN)), rep((1, HIDDEN)),           # dense w/b
        rep((1, HIDDEN)), rep((1, HIDDEN)),                # ln2 g/b
        rep((HIDDEN, FFN)), rep((1, FFN)),                 # fc1 w/b
        rep((FFN, HIDDEN)), rep((1, HIDDEN)),              # fc2 w/b
    ]
    return pl.pallas_call(
        kernel,
        out_shape=jax.ShapeDtypeStruct((m, HIDDEN), x.dtype),
        grid=(batch,),
        in_specs=in_specs,
        out_specs=pl.BlockSpec((seq, HIDDEN), lambda b: (b, 0)),
        compiler_params=pltpu.CompilerParams(
            dimension_semantics=("parallel",),             # batch split across TCs (v7x megacore)
            vmem_limit_bytes=VMEM_LIMIT),
    )(x,
      layer["ln1_g"], layer["ln1_b"],
      layer["qkv_w"], layer["qkv_b"],
      layer["lora_a"], layer["lora_b"],
      layer["dense_w"], layer["dense_b"],
      layer["ln2_g"], layer["ln2_b"],
      layer["fc1_w"], layer["fc1_b"],
      layer["fc2_w"], layer["fc2_b"])


# ----------------------------- fused lm_head + online CE + argmax ---------------
def _head_kernel(x_ref, lnf_g, lnf_b, w_ref, lbl_ref, nll_ref, pred_ref,
                 xn_scr, m_scr, l_scr, bestv_scr, besti_scr, tgt_scr, *, tv):
    vi = pl.program_id(1)
    nv = pl.num_programs(1)

    @pl.when(vi == 0)
    def _():
        # final LN computed once per M tile, cached bf16 for the MXU
        xn = _ln(x_ref[...].astype(jnp.float32), lnf_g[...], lnf_b[...])
        xn_scr[...] = xn.astype(jnp.bfloat16)
        m_scr[...] = jnp.full(m_scr.shape, -jnp.inf, m_scr.dtype)
        l_scr[...] = jnp.zeros(l_scr.shape, l_scr.dtype)
        bestv_scr[...] = jnp.full(bestv_scr.shape, -jnp.inf, bestv_scr.dtype)
        besti_scr[...] = jnp.zeros(besti_scr.shape, besti_scr.dtype)
        tgt_scr[...] = jnp.zeros(tgt_scr.shape, tgt_scr.dtype)

    # logits for this vocab tile -- never written to HBM
    logits = jnp.dot(xn_scr[...], w_ref[...], preferred_element_type=jnp.float32)  # [tm, tv]
    tm_rows = logits.shape[0]
    gidx = jax.lax.broadcasted_iota(jnp.int32, (tm_rows, tv), 1) + vi * tv

    tile_max = jnp.max(logits, axis=-1, keepdims=True)

    # online LSE
    m_new = jnp.maximum(m_scr[...], tile_max)
    l_scr[...] = l_scr[...] * jnp.exp(m_scr[...] - m_new) + jnp.sum(
        jnp.exp(logits - m_new), axis=-1, keepdims=True)
    m_scr[...] = m_new

    # online argmax (lowest global index wins ties, like torch in practice)
    loc_idx = jnp.min(jnp.where(logits == tile_max, gidx, jnp.iinfo(jnp.int32).max),
                      axis=-1, keepdims=True)
    take = tile_max > bestv_scr[...]
    besti_scr[...] = jnp.where(take, loc_idx, besti_scr[...])
    bestv_scr[...] = jnp.where(take, tile_max, bestv_scr[...])

    # target logit (label lands in exactly one vocab tile; IGNORE_INDEX never matches)
    lbl = lbl_ref[...]                                                            # [tm, 1] int32
    tgt_scr[...] = tgt_scr[...] + jnp.sum(
        jnp.where(gidx == lbl, logits, 0.0), axis=-1, keepdims=True)

    @pl.when(vi == nv - 1)
    def _():
        lse = m_scr[...] + jnp.log(l_scr[...])
        nll = lse - tgt_scr[...]
        valid = (lbl_ref[...] >= 0).astype(jnp.float32)
        nll_ref[...] = nll * valid            # masked NLL per row; mean done in wrapper
        pred_ref[...] = besti_scr[...]


def lm_head_loss_preds(x, lnf_g, lnf_b, lm_head_w, shifted_labels, *, tm=8, tv=128):
    m = x.shape[0]
    v = lm_head_w.shape[1]
    tm = min(tm, m)
    tv = min(tv, v)
    grid = (pl.cdiv(m, tm), pl.cdiv(v, tv))
    kernel = functools.partial(_head_kernel, tv=tv)
    nll, preds = pl.pallas_call(
        kernel,
        out_shape=(jax.ShapeDtypeStruct((m, 1), jnp.float32),
                   jax.ShapeDtypeStruct((m, 1), jnp.int32)),
        grid=grid,
        in_specs=[pl.BlockSpec((tm, HIDDEN), lambda mi, vi: (mi, 0)),
                  pl.BlockSpec((1, HIDDEN), lambda mi, vi: (0, 0)),
                  pl.BlockSpec((1, HIDDEN), lambda mi, vi: (0, 0)),
                  pl.BlockSpec((HIDDEN, tv), lambda mi, vi: (0, vi)),
                  pl.BlockSpec((tm, 1), lambda mi, vi: (mi, 0))],
        out_specs=(pl.BlockSpec((tm, 1), lambda mi, vi: (mi, 0)),
                   pl.BlockSpec((tm, 1), lambda mi, vi: (mi, 0))),
        scratch_shapes=[pltpu.VMEM((tm, HIDDEN), jnp.bfloat16),   # LN(x) cache
                        pltpu.VMEM((tm, 1), jnp.float32),         # running max
                        pltpu.VMEM((tm, 1), jnp.float32),         # running denom
                        pltpu.VMEM((tm, 1), jnp.float32),         # best logit
                        pltpu.VMEM((tm, 1), jnp.int32),           # best index
                        pltpu.VMEM((tm, 1), jnp.float32)],        # target logit
        compiler_params=pltpu.CompilerParams(
            dimension_semantics=("parallel", "arbitrary"),
            vmem_limit_bytes=VMEM_LIMIT),
    )(x, lnf_g, lnf_b, lm_head_w, shifted_labels)
    return nll, preds


# ----------------------------- parameters ----------------------------------------
def init_params(key):
    def normal(k, shape, std=0.02, dtype=jnp.float32):
        return (std * jax.random.normal(k, shape)).astype(dtype)

    keys = iter(jax.random.split(key, 4 + 8 * N_LAYERS))
    embed = normal(next(keys), (VOCAB, HIDDEN))
    params = {
        "embed": embed,
        "lnf_g": jnp.ones((1, HIDDEN), jnp.float32),
        "lnf_b": jnp.zeros((1, HIDDEN), jnp.float32),
        # lm_head tied to the embedding, no bias (ChatGLM); stored bf16 for the MXU.
        "lm_head_w": embed.T.astype(jnp.bfloat16),
        "layers": [],
    }
    for _ in range(N_LAYERS):
        layer = {
            "ln1_g": jnp.ones((1, HIDDEN), jnp.float32),
            "ln1_b": jnp.zeros((1, HIDDEN), jnp.float32),
            "qkv_w": normal(next(keys), (HIDDEN, 3 * HIDDEN), dtype=jnp.bfloat16),
            "qkv_b": normal(next(keys), (1, 3 * HIDDEN)),
            # PEFT LoRA init: A ~ N(0, .02), B = 0 (adapter starts as identity)
            "lora_a": normal(next(keys), (HIDDEN, LORA_R)),
            "lora_b": jnp.zeros((LORA_R, 3 * HIDDEN), jnp.float32),
            "dense_w": normal(next(keys), (HIDDEN, HIDDEN), dtype=jnp.bfloat16),
            "dense_b": jnp.zeros((1, HIDDEN), jnp.float32),
            "ln2_g": jnp.ones((1, HIDDEN), jnp.float32),
            "ln2_b": jnp.zeros((1, HIDDEN), jnp.float32),
            "fc1_w": normal(next(keys), (HIDDEN, FFN), dtype=jnp.bfloat16),
            "fc1_b": jnp.zeros((1, FFN), jnp.float32),
            "fc2_w": normal(next(keys), (FFN, HIDDEN), dtype=jnp.bfloat16),
            "fc2_b": jnp.zeros((1, HIDDEN), jnp.float32),
        }
        params["layers"].append(layer)
    return params


# ----------------------------- forward (== ChatGLMLoraModel.forward) -------------
def chatglm_lora_forward(params, input_ids, labels):
    b, s = input_ids.shape
    # TODO(synk): embedding gather stays in XLA; a Pallas DMA-gather isn't worth it at this scale.
    x = jnp.take(params["embed"], input_ids, axis=0).reshape(b * s, HIDDEN)

    # One fused pallas_call per transformer layer, gridded over batch (parallel).
    # TODO(synk): cross-call prefetch of the next layer's weights would hide weight DMA on v5e.
    for layer in params["layers"]:
        x = transformer_layer(x, layer, b, s)

    # Pre-shift labels so the fused tail kernel pairs logits[t] with labels[t+1];
    # the last position of every sequence is marked ignore.
    shifted = jnp.concatenate(
        [labels[:, 1:], jnp.full((b, 1), IGNORE_INDEX, labels.dtype)], axis=1)
    shifted = shifted.reshape(b * s, 1).astype(jnp.int32)

    nll, preds = lm_head_loss_preds(x, params["lnf_g"], params["lnf_b"],
                                    params["lm_head_w"], shifted)
    # mean over non-ignored positions (tiny reduction; megacore-safe in XLA)
    count = jnp.sum((shifted >= 0).astype(jnp.float32))
    loss = jnp.sum(nll) / jnp.maximum(count, 1.0)
    # predictions = logits.argmax(dim=-1)  (torch returns int64; int32 here)
    return loss, preds.reshape(b, s)


# ----------------------------- demo ----------------------------------------------
if __name__ == "__main__":
    key = jax.random.PRNGKey(0)
    pkey, ikey = jax.random.split(key)
    params = init_params(pkey)

    B, S = 2, 8
    input_ids = jax.random.randint(ikey, (B, S), 0, VOCAB, dtype=jnp.int32)
    # label the first 3 positions as prompt (ignored in the loss), like ChatGLM tuning
    pos = jnp.arange(S)[None, :]
    labels = jnp.where(pos < 3, IGNORE_INDEX, input_ids).astype(jnp.int32)

    fwd = jax.jit(chatglm_lora_forward)
    loss, preds = fwd(params, input_ids, labels)
    jax.block_until_ready((loss, preds))

    assert preds.shape == (B, S)
    assert jnp.isfinite(loss)
    print("KERNEL_OK")
</pallas_src>

<mosaic_0001>
module attributes {stable_mosaic.version = 11 : i64} {
  func.func @_layer_kernel(%arg0: i32, %arg1: memref<8x128xf32, #tpu.memory_space<vmem>>, %arg2: memref<1x128xf32, #tpu.memory_space<vmem>>, %arg3: memref<1x128xf32, #tpu.memory_space<vmem>>, %arg4: memref<128x384xbf16, #tpu.memory_space<vmem>>, %arg5: memref<1x384xf32, #tpu.memory_space<vmem>>, %arg6: memref<128x8xf32, #tpu.memory_space<vmem>>, %arg7: memref<8x384xf32, #tpu.memory_space<vmem>>, %arg8: memref<128x128xbf16, #tpu.memory_space<vmem>>, %arg9: memref<1x128xf32, #tpu.memory_space<vmem>>, %arg10: memref<1x128xf32, #tpu.memory_space<vmem>>, %arg11: memref<1x128xf32, #tpu.memory_space<vmem>>, %arg12: memref<128x256xbf16, #tpu.memory_space<vmem>>, %arg13: memref<1x256xf32, #tpu.memory_space<vmem>>, %arg14: memref<256x128xbf16, #tpu.memory_space<vmem>>, %arg15: memref<1x128xf32, #tpu.memory_space<vmem>>, %arg16: memref<8x128xf32, #tpu.memory_space<vmem>>) attributes {dimension_semantics = [#tpu.dimension_semantics<parallel>], iteration_bounds = array<i64: 2>, scalar_prefetch = 0 : i64, scratch_operands = 0 : i64, tpu.core_type = #tpu.core_type<tc>, window_params = [{transform_indices = @transform_0, window_bounds = array<i64: 8, 128>}, {pipeline_mode = #tpu.pipeline_mode<synchronous>, transform_indices = @transform_1, window_bounds = array<i64: 1, 128>}, {pipeline_mode = #tpu.pipeline_mode<synchronous>, transform_indices = @transform_2, window_bounds = array<i64: 1, 128>}, {pipeline_mode = #tpu.pipeline_mode<synchronous>, transform_indices = @transform_3, window_bounds = array<i64: 128, 384>}, {pipeline_mode = #tpu.pipeline_mode<synchronous>, transform_indices = @transform_4, window_bounds = array<i64: 1, 384>}, {pipeline_mode = #tpu.pipeline_mode<synchronous>, transform_indices = @transform_5, window_bounds = array<i64: 128, 8>}, {pipeline_mode = #tpu.pipeline_mode<synchronous>, transform_indices = @transform_6, window_bounds = array<i64: 8, 384>}, {pipeline_mode = #tpu.pipeline_mode<synchronous>, transform_indices = @transform_7, window_bounds = array<i64: 128, 128>}, {pipeline_mode = #tpu.pipeline_mode<synchronous>, transform_indices = @transform_8, window_bounds = array<i64: 1, 128>}, {pipeline_mode = #tpu.pipeline_mode<synchronous>, transform_indices = @transform_9, window_bounds = array<i64: 1, 128>}, {pipeline_mode = #tpu.pipeline_mode<synchronous>, transform_indices = @transform_10, window_bounds = array<i64: 1, 128>}, {pipeline_mode = #tpu.pipeline_mode<synchronous>, transform_indices = @transform_11, window_bounds = array<i64: 128, 256>}, {pipeline_mode = #tpu.pipeline_mode<synchronous>, transform_indices = @transform_12, window_bounds = array<i64: 1, 256>}, {pipeline_mode = #tpu.pipeline_mode<synchronous>, transform_indices = @transform_13, window_bounds = array<i64: 256, 128>}, {pipeline_mode = #tpu.pipeline_mode<synchronous>, transform_indices = @transform_14, window_bounds = array<i64: 1, 128>}, {transform_indices = @transform_15, window_bounds = array<i64: 8, 128>}]} {
    %c0 = arith.constant 0 : index
    %c0_0 = arith.constant 0 : index
    %0 = vector.load %arg1[%c0, %c0_0] : memref<8x128xf32, #tpu.memory_space<vmem>>, vector<8x128xf32>
    %c0_1 = arith.constant 0 : index
    %c0_2 = arith.constant 0 : index
    %1 = vector.load %arg2[%c0_1, %c0_2] : memref<1x128xf32, #tpu.memory_space<vmem>>, vector<1x128xf32>
    %c0_3 = arith.constant 0 : index
    %c0_4 = arith.constant 0 : index
    %2 = vector.load %arg3[%c0_3, %c0_4] : memref<1x128xf32, #tpu.memory_space<vmem>>, vector<1x128xf32>
    %cst = arith.constant dense<0.000000e+00> : vector<8xf32>
    %3 = vector.multi_reduction <add>, %0, %cst [1] : vector<8x128xf32> to vector<8xf32>
    %4 = vector.shape_cast %3 : vector<8xf32> to vector<8x1xf32>
    %cst_5 = arith.constant 1.280000e+02 : f32
    %5 = vector.broadcast %cst_5 : f32 to vector<8x1xf32>
    %6 = arith.divf %4, %5 : vector<8x1xf32>
    %7 = vector.broadcast %6 : vector<8x1xf32> to vector<8x128xf32>
    %8 = arith.subf %0, %7 : vector<8x128xf32>
    %9 = arith.mulf %8, %8 : vector<8x128xf32>
    %cst_6 = arith.constant dense<0.000000e+00> : vector<8xf32>
    %10 = vector.multi_reduction <add>, %9, %cst_6 [1] : vector<8x128xf32> to vector<8xf32>
    %11 = vector.shape_cast %10 : vector<8xf32> to vector<8x1xf32>
    %cst_7 = arith.constant 1.280000e+02 : f32
    %12 = vector.broadcast %cst_7 : f32 to vector<8x1xf32>
    %13 = arith.divf %11, %12 : vector<8x1xf32>
    %14 = vector.broadcast %6 : vector<8x1xf32> to vector<8x128xf32>
    %15 = arith.subf %0, %14 : vector<8x128xf32>
    %cst_8 = arith.constant 9.99999974E-6 : f32
    %16 = vector.broadcast %cst_8 : f32 to vector<8x1xf32>
    %17 = arith.addf %13, %16 : vector<8x1xf32>
    %18 = math.rsqrt %17 : vector<8x1xf32>
    %19 = vector.broadcast %18 : vector<8x1xf32> to vector<8x128xf32>
    %20 = arith.mulf %15, %19 : vector<8x128xf32>
    %21 = vector.broadcast %1 : vector<1x128xf32> to vector<8x128xf32>
    %22 = arith.mulf %20, %21 : vector<8x128xf32>
    %23 = vector.broadcast %2 : vector<1x128xf32> to vector<8x128xf32>
    %24 = arith.addf %22, %23 : vector<8x128xf32>
    %25 = arith.truncf %24 : vector<8x128xf32> to vector<8x128xbf16>
    %c0_9 = arith.constant 0 : index
    %c0_10 = arith.constant 0 : index
    %26 = vector.load %arg4[%c0_9, %c0_10] : memref<128x384xbf16, #tpu.memory_space<vmem>>, vector<128x384xbf16>
    %cst_11 = arith.constant dense<0.000000e+00> : vector<8x384xf32>
    %27 = tpu.matmul %25, %26, %cst_11 {dimension_numbers = #tpu.dot_dimension_numbers<[1], [0], [0], [1], [0, 0, 1, 1], [], []>} : vector<8x128xbf16>, vector<128x384xbf16>, vector<8x384xf32> -> vector<8x384xf32>
    %c0_12 = arith.constant 0 : index
    %c0_13 = arith.constant 0 : index
    %28 = vector.load %arg6[%c0_12, %c0_13] : memref<128x8xf32, #tpu.memory_space<vmem>>, vector<128x8xf32>
    %cst_14 = arith.constant dense<0.000000e+00> : vector<8x8xf32>
    %29 = tpu.matmul %24, %28, %cst_14 {dimension_numbers = #tpu.dot_dimension_numbers<[1], [0], [0], [1], [0, 0, 1, 1], [], []>} : vector<8x128xf32>, vector<128x8xf32>, vector<8x8xf32> -> vector<8x8xf32>
    %c0_15 = arith.constant 0 : index
    %c0_16 = arith.constant 0 : index
    %30 = vector.load %arg7[%c0_15, %c0_16] : memref<8x384xf32, #tpu.memory_space<vmem>>, vector<8x384xf32>
    %cst_17 = arith.constant dense<0.000000e+00> : vector<8x384xf32>
    %31 = tpu.matmul %29, %30, %cst_17 {dimension_numbers = #tpu.dot_dimension_numbers<[1], [0], [0], [1], [0, 0, 1, 1], [], []>} : vector<8x8xf32>, vector<8x384xf32>, vector<8x384xf32> -> vector<8x384xf32>
    %cst_18 = arith.constant 2.000000e+00 : f32
    %32 = vector.broadcast %cst_18 : f32 to vector<8x384xf32>
    %33 = arith.mulf %32, %31 : vector<8x384xf32>
    %34 = arith.addf %27, %33 : vector<8x384xf32>
    %c0_19 = arith.constant 0 : index
    %c0_20 = arith.constant 0 : index
    %35 = vector.load %arg5[%c0_19, %c0_20] : memref<1x384xf32, #tpu.memory_space<vmem>>, vector<1x384xf32>
    %36 = vector.broadcast %35 : vector<1x384xf32> to vector<8x384xf32>
    %37 = arith.addf %34, %36 : vector<8x384xf32>
    %38 = tpu.iota {dimensions = array<i32: 0>} : vector<8x8xi32>
    %39 = tpu.iota {dimensions = array<i32: 1>} : vector<8x8xi32>
    %40 = arith.cmpi sle, %39, %38 : vector<8x8xi32>
    %41 = tpu.iota {dimensions = array<i32: 1>} : vector<8x128xi32>
    %c0_i32 = arith.constant 0 : i32
    %42 = vector.broadcast %c0_i32 : i32 to vector<8x128xi32>
    %43 = arith.cmpi sge, %41, %42 : vector<8x128xi32>
    %c32_i32 = arith.constant 32 : i32
    %44 = vector.broadcast %c32_i32 : i32 to vector<8x128xi32>
    %45 = arith.cmpi slt, %41, %44 : vector<8x128xi32>
    %46 = arith.andi %43, %45 : vector<8x128xi1>
    %47 = arith.extui %46 : vector<8x128xi1> to vector<8x128xi32>
    %48 = arith.sitofp %47 : vector<8x128xi32> to vector<8x128xf32>
    %c32_i32_21 = arith.constant 32 : i32
    %49 = vector.broadcast %c32_i32_21 : i32 to vector<8x128xi32>
    %50 = arith.cmpi sge, %41, %49 : vector<8x128xi32>
    %c64_i32 = arith.constant 64 : i32
    %51 = vector.broadcast %c64_i32 : i32 to vector<8x128xi32>
    %52 = arith.cmpi slt, %41, %51 : vector<8x128xi32>
    %53 = arith.andi %50, %52 : vector<8x128xi1>
    %54 = arith.extui %53 : vector<8x128xi1> to vector<8x128xi32>
    %55 = arith.sitofp %54 : vector<8x128xi32> to vector<8x128xf32>
    %c64_i32_22 = arith.constant 64 : i32
    %56 = vector.broadcast %c64_i32_22 : i32 to vector<8x128xi32>
    %57 = arith.cmpi sge, %41, %56 : vector<8x128xi32>
    %c96_i32 = arith.constant 96 : i32
    %58 = vector.broadcast %c96_i32 : i32 to vector<8x128xi32>
    %59 = arith.cmpi slt, %41, %58 : vector<8x128xi32>
    %60 = arith.andi %57, %59 : vector<8x128xi1>
    %61 = arith.extui %60 : vector<8x128xi1> to vector<8x128xi32>
    %62 = arith.sitofp %61 : vector<8x128xi32> to vector<8x128xf32>
    %c96_i32_23 = arith.constant 96 : i32
    %63 = vector.broadcast %c96_i32_23 : i32 to vector<8x128xi32>
    %64 = arith.cmpi sge, %41, %63 : vector<8x128xi32>
    %c128_i32 = arith.constant 128 : i32
    %65 = vector.broadcast %c128_i32 : i32 to vector<8x128xi32>
    %66 = arith.cmpi slt, %41, %65 : vector<8x128xi32>
    %67 = arith.andi %64, %66 : vector<8x128xi1>
    %68 = arith.extui %67 : vector<8x128xi1> to vector<8x128xi32>
    %69 = arith.sitofp %68 : vector<8x128xi32> to vector<8x128xf32>
    %70 = vector.extract_strided_slice %37 {offsets = [0, 0], sizes = [8, 128], strides = [1, 1]} : vector<8x384xf32> to vector<8x128xf32>
    %71 = vector.extract_strided_slice %37 {offsets = [0, 128], sizes = [8, 128], strides = [1, 1]} : vector<8x384xf32> to vector<8x128xf32>
    %72 = vector.extract_strided_slice %37 {offsets = [0, 256], sizes = [8, 128], strides = [1, 1]} : vector<8x384xf32> to vector<8x128xf32>
    %cst_24 = arith.constant 0.000000e+00 : f32
    %73 = vector.broadcast %cst_24 : f32 to vector<8x128xf32>
    %74 = arith.mulf %71, %48 : vector<8x128xf32>
    %cst_25 = arith.constant dense<0.000000e+00> : vector<8x8xf32>
    %75 = tpu.matmul %70, %74, %cst_25 {dimension_numbers = #tpu.dot_dimension_numbers<[1], [1], [0], [0], [0, 0, 1, 0], [], []>} : vector<8x128xf32>, vector<8x128xf32>, vector<8x8xf32> -> vector<8x8xf32>
    %cst_26 = arith.constant 0.176776692 : f32
    %76 = vector.broadcast %cst_26 : f32 to vector<8x8xf32>
    %77 = arith.mulf %75, %76 : vector<8x8xf32>
    %cst_27 = arith.constant -1.000000e+30 : f32
    %78 = vector.broadcast %cst_27 : f32 to vector<8x8xf32>
    %79 = arith.select %40, %77, %78 : vector<8x8xi1>, vector<8x8xf32>
    %cst_28 = arith.constant dense<0xFF800000> : vector<8xf32>
    %80 = vector.multi_reduction <maximumf>, %79, %cst_28 [1] : vector<8x8xf32> to vector<8xf32>
    %81 = vector.shape_cast %80 : vector<8xf32> to vector<8x1xf32>
    %82 = vector.broadcast %81 : vector<8x1xf32> to vector<8x8xf32>
    %83 = arith.subf %79, %82 : vector<8x8xf32>
    %84 = math.exp %83 : vector<8x8xf32>
    %cst_29 = arith.constant dense<0.000000e+00> : vector<8xf32>
    %85 = vector.multi_reduction <add>, %84, %cst_29 [1] : vector<8x8xf32> to vector<8xf32>
    %86 = vector.shape_cast %85 : vector<8xf32> to vector<8x1xf32>
    %87 = vector.broadcast %86 : vector<8x1xf32> to vector<8x8xf32>
    %88 = arith.divf %84, %87 : vector<8x8xf32>
    %89 = arith.mulf %72, %48 : vector<8x128xf32>
    %cst_30 = arith.constant dense<0.000000e+00> : vector<8x128xf32>
    %90 = tpu.matmul %88, %89, %cst_30 {dimension_numbers = #tpu.dot_dimension_numbers<[1], [0], [0], [1], [0, 0, 1, 1], [], []>} : vector<8x8xf32>, vector<8x128xf32>, vector<8x128xf32> -> vector<8x128xf32>
    %91 = arith.addf %73, %90 : vector<8x128xf32>
    %92 = arith.mulf %71, %55 : vector<8x128xf32>
    %cst_31 = arith.constant dense<0.000000e+00> : vector<8x8xf32>
    %93 = tpu.matmul %70, %92, %cst_31 {dimension_numbers = #tpu.dot_dimension_numbers<[1], [1], [0], [0], [0, 0, 1, 0], [], []>} : vector<8x128xf32>, vector<8x128xf32>, vector<8x8xf32> -> vector<8x8xf32>
    %cst_32 = arith.constant 0.176776692 : f32
    %94 = vector.broadcast %cst_32 : f32 to vector<8x8xf32>
    %95 = arith.mulf %93, %94 : vector<8x8xf32>
    %cst_33 = arith.constant -1.000000e+30 : f32
    %96 = vector.broadcast %cst_33 : f32 to vector<8x8xf32>
    %97 = arith.select %40, %95, %96 : vector<8x8xi1>, vector<8x8xf32>
    %cst_34 = arith.constant dense<0xFF800000> : vector<8xf32>
    %98 = vector.multi_reduction <maximumf>, %97, %cst_34 [1] : vector<8x8xf32> to vector<8xf32>
    %99 = vector.shape_cast %98 : vector<8xf32> to vector<8x1xf32>
    %100 = vector.broadcast %99 : vector<8x1xf32> to vector<8x8xf32>
    %101 = arith.subf %97, %100 : vector<8x8xf32>
    %102 = math.exp %101 : vector<8x8xf32>
    %cst_35 = arith.constant dense<0.000000e+00> : vector<8xf32>
    %103 = vector.multi_reduction <add>, %102, %cst_35 [1] : vector<8x8xf32> to vector<8xf32>
    %104 = vector.shape_cast %103 : vector<8xf32> to vector<8x1xf32>
    %105 = vector.broadcast %104 : vector<8x1xf32> to vector<8x8xf32>
    %106 = arith.divf %102, %105 : vector<8x8xf32>
    %107 = arith.mulf %72, %55 : vector<8x128xf32>
    %cst_36 = arith.constant dense<0.000000e+00> : vector<8x128xf32>
    %108 = tpu.matmul %106, %107, %cst_36 {dimension_numbers = #tpu.dot_dimension_numbers<[1], [0], [0], [1], [0, 0, 1, 1], [], []>} : vector<8x8xf32>, vector<8x128xf32>, vector<8x128xf32> -> vector<8x128xf32>
    %109 = arith.addf %91, %108 : vector<8x128xf32>
    %110 = arith.mulf %71, %62 : vector<8x128xf32>
    %cst_37 = arith.constant dense<0.000000e+00> : vector<8x8xf32>
    %111 = tpu.matmul %70, %110, %cst_37 {dimension_numbers = #tpu.dot_dimension_numbers<[1], [1], [0], [0], [0, 0, 1, 0], [], []>} : vector<8x128xf32>, vector<8x128xf32>, vector<8x8xf32> -> vector<8x8xf32>
    %cst_38 = arith.constant 0.176776692 : f32
    %112 = vector.broadcast %cst_38 : f32 to vector<8x8xf32>
    %113 = arith.mulf %111, %112 : vector<8x8xf32>
    %cst_39 = arith.constant -1.000000e+30 : f32
    %114 = vector.broadcast %cst_39 : f32 to vector<8x8xf32>
    %115 = arith.select %40, %113, %114 : vector<8x8xi1>, vector<8x8xf32>
    %cst_40 = arith.constant dense<0xFF800000> : vector<8xf32>
    %116 = vector.multi_reduction <maximumf>, %115, %cst_40 [1] : vector<8x8xf32> to vector<8xf32>
    %117 = vector.shape_cast %116 : vector<8xf32> to vector<8x1xf32>
    %118 = vector.broadcast %117 : vector<8x1xf32> to vector<8x8xf32>
    %119 = arith.subf %115, %118 : vector<8x8xf32>
    %120 = math.exp %119 : vector<8x8xf32>
    %cst_41 = arith.constant dense<0.000000e+00> : vector<8xf32>
    %121 = vector.multi_reduction <add>, %120, %cst_41 [1] : vector<8x8xf32> to vector<8xf32>
    %122 = vector.shape_cast %121 : vector<8xf32> to vector<8x1xf32>
    %123 = vector.broadcast %122 : vector<8x1xf32> to vector<8x8xf32>
    %124 = arith.divf %120, %123 : vector<8x8xf32>
    %125 = arith.mulf %72, %62 : vector<8x128xf32>
    %cst_42 = arith.constant dense<0.000000e+00> : vector<8x128xf32>
    %126 = tpu.matmul %124, %125, %cst_42 {dimension_numbers = #tpu.dot_dimension_numbers<[1], [0], [0], [1], [0, 0, 1, 1], [], []>} : vector<8x8xf32>, vector<8x128xf32>, vector<8x128xf32> -> vector<8x128xf32>
    %127 = arith.addf %109, %126 : vector<8x128xf32>
    %128 = arith.mulf %71, %69 : vector<8x128xf32>
    %cst_43 = arith.constant dense<0.000000e+00> : vector<8x8xf32>
    %129 = tpu.matmul %70, %128, %cst_43 {dimension_numbers = #tpu.dot_dimension_numbers<[1], [1], [0], [0], [0, 0, 1, 0], [], []>} : vector<8x128xf32>, vector<8x128xf32>, vector<8x8xf32> -> vector<8x8xf32>
    %cst_44 = arith.constant 0.176776692 : f32
    %130 = vector.broadcast %cst_44 : f32 to vector<8x8xf32>
    %131 = arith.mulf %129, %130 : vector<8x8xf32>
    %cst_45 = arith.constant -1.000000e+30 : f32
    %132 = vector.broadcast %cst_45 : f32 to vector<8x8xf32>
    %133 = arith.select %40, %131, %132 : vector<8x8xi1>, vector<8x8xf32>
    %cst_46 = arith.constant dense<0xFF800000> : vector<8xf32>
    %134 = vector.multi_reduction <maximumf>, %133, %cst_46 [1] : vector<8x8xf32> to vector<8xf32>
    %135 = vector.shape_cast %134 : vector<8xf32> to vector<8x1xf32>
    %136 = vector.broadcast %135 : vector<8x1xf32> to vector<8x8xf32>
    %137 = arith.subf %133, %136 : vector<8x8xf32>
    %138 = math.exp %137 : vector<8x8xf32>
    %cst_47 = arith.constant dense<0.000000e+00> : vector<8xf32>
    %139 = vector.multi_reduction <add>, %138, %cst_47 [1] : vector<8x8xf32> to vector<8xf32>
    %140 = vector.shape_cast %139 : vector<8xf32> to vector<8x1xf32>
    %141 = vector.broadcast %140 : vector<8x1xf32> to vector<8x8xf32>
    %142 = arith.divf %138, %141 : vector<8x8xf32>
    %143 = arith.mulf %72, %69 : vector<8x128xf32>
    %cst_48 = arith.constant dense<0.000000e+00> : vector<8x128xf32>
    %144 = tpu.matmul %142, %143, %cst_48 {dimension_numbers = #tpu.dot_dimension_numbers<[1], [0], [0], [1], [0, 0, 1, 1], [], []>} : vector<8x8xf32>, vector<8x128xf32>, vector<8x128xf32> -> vector<8x128xf32>
    %145 = arith.addf %127, %144 : vector<8x128xf32>
    %146 = arith.truncf %145 : vector<8x128xf32> to vector<8x128xbf16>
    %c0_49 = arith.constant 0 : index
    %c0_50 = arith.constant 0 : index
    %147 = vector.load %arg8[%c0_49, %c0_50] : memref<128x128xbf16, #tpu.memory_space<vmem>>, vector<128x128xbf16>
    %cst_51 = arith.constant dense<0.000000e+00> : vector<8x128xf32>
    %148 = tpu.matmul %146, %147, %cst_51 {dimension_numbers = #tpu.dot_dimension_numbers<[1], [0], [0], [1], [0, 0, 1, 1], [], []>} : vector<8x128xbf16>, vector<128x128xbf16>, vector<8x128xf32> -> vector<8x128xf32>
    %c0_52 = arith.constant 0 : index
    %c0_53 = arith.constant 0 : index
    %149 = vector.load %arg9[%c0_52, %c0_53] : memref<1x128xf32, #tpu.memory_space<vmem>>, vector<1x128xf32>
    %150 = vector.broadcast %149 : vector<1x128xf32> to vector<8x128xf32>
    %151 = arith.addf %148, %150 : vector<8x128xf32>
    %152 = arith.addf %0, %151 : vector<8x128xf32>
    %c0_54 = arith.constant 0 : index
    %c0_55 = arith.constant 0 : index
    %153 = vector.load %arg10[%c0_54, %c0_55] : memref<1x128xf32, #tpu.memory_space<vmem>>, vector<1x128xf32>
    %c0_56 = arith.constant 0 : index
    %c0_57 = arith.constant 0 : index
    %154 = vector.load %arg11[%c0_56, %c0_57] : memref<1x128xf32, #tpu.memory_space<vmem>>, vector<1x128xf32>
    %cst_58 = arith.constant dense<0.000000e+00> : vector<8xf32>
    %155 = vector.multi_reduction <add>, %152, %cst_58 [1] : vector<8x128xf32> to vector<8xf32>
    %156 = vector.shape_cast %155 : vector<8xf32> to vector<8x1xf32>
    %cst_59 = arith.constant 1.280000e+02 : f32
    %157 = vector.broadcast %cst_59 : f32 to vector<8x1xf32>
    %158 = arith.divf %156, %157 : vector<8x1xf32>
    %159 = vector.broadcast %158 : vector<8x1xf32> to vector<8x128xf32>
    %160 = arith.subf %152, %159 : vector<8x128xf32>
    %161 = arith.mulf %160, %160 : vector<8x128xf32>
    %cst_60 = arith.constant dense<0.000000e+00> : vector<8xf32>
    %162 = vector.multi_reduction <add>, %161, %cst_60 [1] : vector<8x128xf32> to vector<8xf32>
    %163 = vector.shape_cast %162 : vector<8xf32> to vector<8x1xf32>
    %cst_61 = arith.constant 1.280000e+02 : f32
    %164 = vector.broadcast %cst_61 : f32 to vector<8x1xf32>
    %165 = arith.divf %163, %164 : vector<8x1xf32>
    %166 = vector.broadcast %158 : vector<8x1xf32> to vector<8x128xf32>
    %167 = arith.subf %152, %166 : vector<8x128xf32>
    %cst_62 = arith.constant 9.99999974E-6 : f32
    %168 = vector.broadcast %cst_62 : f32 to vector<8x1xf32>
    %169 = arith.addf %165, %168 : vector<8x1xf32>
    %170 = math.rsqrt %169 : vector<8x1xf32>
    %171 = vector.broadcast %170 : vector<8x1xf32> to vector<8x128xf32>
    %172 = arith.mulf %167, %171 : vector<8x128xf32>
    %173 = vector.broadcast %153 : vector<1x128xf32> to vector<8x128xf32>
    %174 = arith.mulf %172, %173 : vector<8x128xf32>
    %175 = vector.broadcast %154 : vector<1x128xf32> to vector<8x128xf32>
    %176 = arith.addf %174, %175 : vector<8x128xf32>
    %177 = arith.truncf %176 : vector<8x128xf32> to vector<8x128xbf16>
    %c0_63 = arith.constant 0 : index
    %c0_64 = arith.constant 0 : index
    %178 = vector.load %arg12[%c0_63, %c0_64] : memref<128x256xbf16, #tpu.memory_space<vmem>>, vector<128x256xbf16>
    %cst_65 = arith.constant dense<0.000000e+00> : vector<8x256xf32>
    %179 = tpu.matmul %177, %178, %cst_65 {dimension_numbers = #tpu.dot_dimension_numbers<[1], [0], [0], [1], [0, 0, 1, 1], [], []>} : vector<8x128xbf16>, vector<128x256xbf16>, vector<8x256xf32> -> vector<8x256xf32>
    %c0_66 = arith.constant 0 : index
    %c0_67 = arith.constant 0 : index
    %180 = vector.load %arg13[%c0_66, %c0_67] : memref<1x256xf32, #tpu.memory_space<vmem>>, vector<1x256xf32>
    %181 = vector.broadcast %180 : vector<1x256xf32> to vector<8x256xf32>
    %182 = arith.addf %179, %181 : vector<8x256xf32>
    %183 = arith.mulf %182, %182 : vector<8x256xf32>
    %184 = arith.mulf %182, %183 : vector<8x256xf32>
    %cst_68 = arith.constant 4.471500e-02 : f32
    %185 = vector.broadcast %cst_68 : f32 to vector<8x256xf32>
    %186 = arith.mulf %185, %184 : vector<8x256xf32>
    %187 = arith.addf %182, %186 : vector<8x256xf32>
    %cst_69 = arith.constant 0.797884583 : f32
    %188 = vector.broadcast %cst_69 : f32 to vector<8x256xf32>
    %189 = arith.mulf %188, %187 : vector<8x256xf32>
    %190 = math.tanh %189 : vector<8x256xf32>
    %cst_70 = arith.constant 1.000000e+00 : f32
    %191 = vector.broadcast %cst_70 : f32 to vector<8x256xf32>
    %192 = arith.addf %191, %190 : vector<8x256xf32>
    %cst_71 = arith.constant 5.000000e-01 : f32
    %193 = vector.broadcast %cst_71 : f32 to vector<8x256xf32>
    %194 = arith.mulf %193, %192 : vector<8x256xf32>
    %195 = arith.mulf %182, %194 : vector<8x256xf32>
    %196 = arith.truncf %195 : vector<8x256xf32> to vector<8x256xbf16>
    %c0_72 = arith.constant 0 : index
    %c0_73 = arith.constant 0 : index
    %197 = vector.load %arg14[%c0_72, %c0_73] : memref<256x128xbf16, #tpu.memory_space<vmem>>, vector<256x128xbf16>
    %cst_74 = arith.constant dense<0.000000e+00> : vector<8x128xf32>
    %198 = tpu.matmul %196, %197, %cst_74 {dimension_numbers = #tpu.dot_dimension_numbers<[1], [0], [0], [1], [0, 0, 1, 1], [], []>} : vector<8x256xbf16>, vector<256x128xbf16>, vector<8x128xf32> -> vector<8x128xf32>
    %c0_75 = arith.constant 0 : index
    %c0_76 = arith.constant 0 : index
    %199 = vector.load %arg15[%c0_75, %c0_76] : memref<1x128xf32, #tpu.memory_space<vmem>>, vector<1x128xf32>
    %200 = vector.broadcast %199 : vector<1x128xf32> to vector<8x128xf32>
    %201 = arith.addf %198, %200 : vector<8x128xf32>
    %202 = arith.addf %152, %201 : vector<8x128xf32>
    %c0_77 = arith.constant 0 : index
    %c0_78 = arith.constant 0 : index
    %203 = vector.load %arg16[%c0_77, %c0_78] : memref<8x128xf32, #tpu.memory_space<vmem>>, vector<8x128xf32>
    tpu.vector_store %arg16[%c0_77, %c0_78], %202 {strides = array<i32>} : memref<8x128xf32, #tpu.memory_space<vmem>>, vector<8x128xf32>,
    return
  }
  func.func @transform_0(%arg0: i32) -> (i32, i32) {
    %c0_i32 = arith.constant 0 : i32
    %c0_i32_0 = arith.constant 0 : i32
    return %arg0, %c0_i32 : i32, i32
  }
  func.func @transform_1(%arg0: i32) -> (i32, i32) {
    %c0_i32 = arith.constant 0 : i32
    %c0_i32_0 = arith.constant 0 : i32
    %c0_i32_1 = arith.constant 0 : i32
    return %c0_i32, %c0_i32_0 : i32, i32
  }
  func.func @transform_2(%arg0: i32) -> (i32, i32) {
    %c0_i32 = arith.constant 0 : i32
    %c0_i32_0 = arith.constant 0 : i32
    %c0_i32_1 = arith.constant 0 : i32
    return %c0_i32, %c0_i32_0 : i32, i32
  }
  func.func @transform_3(%arg0: i32) -> (i32, i32) {
    %c0_i32 = arith.constant 0 : i32
    %c0_i32_0 = arith.constant 0 : i32
    %c0_i32_1 = arith.constant 0 : i32
    return %c0_i32, %c0_i32_0 : i32, i32
  }
  func.func @transform_4(%arg0: i32) -> (i32, i32) {
    %c0_i32 = arith.constant 0 : i32
    %c0_i32_0 = arith.constant 0 : i32
    %c0_i32_1 = arith.constant 0 : i32
    return %c0_i32, %c0_i32_0 : i32, i32
  }
  func.func @transform_5(%arg0: i32) -> (i32, i32) {
    %c0_i32 = arith.constant 0 : i32
    %c0_i32_0 = arith.constant 0 : i32
    %c0_i32_1 = arith.constant 0 : i32
    return %c0_i32, %c0_i32_0 : i32, i32
  }
  func.func @transform_6(%arg0: i32) -> (i32, i32) {
    %c0_i32 = arith.constant 0 : i32
    %c0_i32_0 = arith.constant 0 : i32
    %c0_i32_1 = arith.constant 0 : i32
    return %c0_i32, %c0_i32_0 : i32, i32
  }
  func.func @transform_7(%arg0: i32) -> (i32, i32) {
    %c0_i32 = arith.constant 0 : i32
    %c0_i32_0 = arith.constant 0 : i32
    %c0_i32_1 = arith.constant 0 : i32
    return %c0_i32, %c0_i32_0 : i32, i32
  }
  func.func @transform_8(%arg0: i32) -> (i32, i32) {
    %c0_i32 = arith.constant 0 : i32
    %c0_i32_0 = arith.constant 0 : i32
    %c0_i32_1 = arith.constant 0 : i32
    return %c0_i32, %c0_i32_0 : i32, i32
  }
  func.func @transform_9(%arg0: i32) -> (i32, i32) {
    %c0_i32 = arith.constant 0 : i32
    %c0_i32_0 = arith.constant 0 : i32
    %c0_i32_1 = arith.constant 0 : i32
    return %c0_i32, %c0_i32_0 : i32, i32
  }
  func.func @transform_10(%arg0: i32) -> (i32, i32) {
    %c0_i32 = arith.constant 0 : i32
    %c0_i32_0 = arith.constant 0 : i32
    %c0_i32_1 = arith.constant 0 : i32
    return %c0_i32, %c0_i32_0 : i32, i32
  }
  func.func @transform_11(%arg0: i32) -> (i32, i32) {
    %c0_i32 = arith.constant 0 : i32
    %c0_i32_0 = arith.constant 0 : i32
    %c0_i32_1 = arith.constant 0 : i32
    return %c0_i32, %c0_i32_0 : i32, i32
  }
  func.func @transform_12(%arg0: i32) -> (i32, i32) {
    %c0_i32 = arith.constant 0 : i32
    %c0_i32_0 = arith.constant 0 : i32
    %c0_i32_1 = arith.constant 0 : i32
    return %c0_i32, %c0_i32_0 : i32, i32
  }
  func.func @transform_13(%arg0: i32) -> (i32, i32) {
    %c0_i32 = arith.constant 0 : i32
    %c0_i32_0 = arith.constant 0 : i32
    %c0_i32_1 = arith.constant 0 : i32
    return %c0_i32, %c0_i32_0 : i32, i32
  }
  func.func @transform_14(%arg0: i32) -> (i32, i32) {
    %c0_i32 = arith.constant 0 : i32
    %c0_i32_0 = arith.constant 0 : i32
    %c0_i32_1 = arith.constant 0 : i32
    return %c0_i32, %c0_i32_0 : i32, i32
  }
  func.func @transform_15(%arg0: i32) -> (i32, i32) {
    %c0_i32 = arith.constant 0 : i32
    %c0_i32_0 = arith.constant 0 : i32
    return %arg0, %c0_i32 : i32, i32
  }
}

module attributes {stable_mosaic.version = 11 : i64} {
  func.func @_head_kernel(%arg0: i32, %arg1: i32, %arg2: memref<8x128xf32, #tpu.memory_space<vmem>>, %arg3: memref<1x128xf32, #tpu.memory_space<vmem>>, %arg4: memref<1x128xf32, #tpu.memory_space<vmem>>, %arg5: memref<128x128xbf16, #tpu.memory_space<vmem>>, %arg6: memref<8x1xi32, #tpu.memory_space<vmem>>, %arg7: memref<8x1xf32, #tpu.memory_space<vmem>>, %arg8: memref<8x1xi32, #tpu.memory_space<vmem>>, %arg9: memref<8x128xbf16, #tpu.memory_space<vmem>>, %arg10: memref<8x1xf32, #tpu.memory_space<vmem>>, %arg11: memref<8x1xf32, #tpu.memory_space<vmem>>, %arg12: memref<8x1xf32, #tpu.memory_space<vmem>>, %arg13: memref<8x1xi32, #tpu.memory_space<vmem>>, %arg14: memref<8x1xf32, #tpu.memory_space<vmem>>) attributes {dimension_semantics = [#tpu.dimension_semantics<parallel>, #tpu.dimension_semantics<arbitrary>], iteration_bounds = array<i64: 2, 2>, scalar_prefetch = 0 : i64, scratch_operands = 6 : i64, tpu.core_type = #tpu.core_type<tc>, window_params = [{transform_indices = @transform_0, window_bounds = array<i64: 8, 128>}, {pipeline_mode = #tpu.pipeline_mode<synchronous>, transform_indices = @transform_1, window_bounds = array<i64: 1, 128>}, {pipeline_mode = #tpu.pipeline_mode<synchronous>, transform_indices = @transform_2, window_bounds = array<i64: 1, 128>}, {transform_indices = @transform_3, window_bounds = array<i64: 128, 128>}, {transform_indices = @transform_4, window_bounds = array<i64: 8, 1>}, {transform_indices = @transform_5, window_bounds = array<i64: 8, 1>}, {transform_indices = @transform_6, window_bounds = array<i64: 8, 1>}]} {
    %c0_i32 = arith.constant 0 : i32
    %0 = arith.cmpi eq, %arg1, %c0_i32 : i32
    %1 = arith.extui %0 : i1 to i32
    %c0_i32_0 = arith.constant 0 : i32
    %2 = arith.cmpi ne, %1, %c0_i32_0 : i32
    scf.if %2 {
      %c0_36 = arith.constant 0 : index
      %c0_37 = arith.constant 0 : index
      %54 = vector.load %arg2[%c0_36, %c0_37] : memref<8x128xf32, #tpu.memory_space<vmem>>, vector<8x128xf32>
      %c0_38 = arith.constant 0 : index
      %c0_39 = arith.constant 0 : index
      %55 = vector.load %arg3[%c0_38, %c0_39] : memref<1x128xf32, #tpu.memory_space<vmem>>, vector<1x128xf32>
      %c0_40 = arith.constant 0 : index
      %c0_41 = arith.constant 0 : index
      %56 = vector.load %arg4[%c0_40, %c0_41] : memref<1x128xf32, #tpu.memory_space<vmem>>, vector<1x128xf32>
      %cst_42 = arith.constant dense<0.000000e+00> : vector<8xf32>
      %57 = vector.multi_reduction <add>, %54, %cst_42 [1] : vector<8x128xf32> to vector<8xf32>
      %58 = vector.shape_cast %57 : vector<8xf32> to vector<8x1xf32>
      %cst_43 = arith.constant 1.280000e+02 : f32
      %59 = vector.broadcast %cst_43 : f32 to vector<8x1xf32>
      %60 = arith.divf %58, %59 : vector<8x1xf32>
      %61 = vector.broadcast %60 : vector<8x1xf32> to vector<8x128xf32>
      %62 = arith.subf %54, %61 : vector<8x128xf32>
      %63 = arith.mulf %62, %62 : vector<8x128xf32>
      %cst_44 = arith.constant dense<0.000000e+00> : vector<8xf32>
      %64 = vector.multi_reduction <add>, %63, %cst_44 [1] : vector<8x128xf32> to vector<8xf32>
      %65 = vector.shape_cast %64 : vector<8xf32> to vector<8x1xf32>
      %cst_45 = arith.constant 1.280000e+02 : f32
      %66 = vector.broadcast %cst_45 : f32 to vector<8x1xf32>
      %67 = arith.divf %65, %66 : vector<8x1xf32>
      %68 = vector.broadcast %60 : vector<8x1xf32> to vector<8x128xf32>
      %69 = arith.subf %54, %68 : vector<8x128xf32>
      %cst_46 = arith.constant 9.99999974E-6 : f32
      %70 = vector.broadcast %cst_46 : f32 to vector<8x1xf32>
      %71 = arith.addf %67, %70 : vector<8x1xf32>
      %72 = math.rsqrt %71 : vector<8x1xf32>
      %73 = vector.broadcast %72 : vector<8x1xf32> to vector<8x128xf32>
      %74 = arith.mulf %69, %73 : vector<8x128xf32>
      %75 = vector.broadcast %55 : vector<1x128xf32> to vector<8x128xf32>
      %76 = arith.mulf %74, %75 : vector<8x128xf32>
      %77 = vector.broadcast %56 : vector<1x128xf32> to vector<8x128xf32>
      %78 = arith.addf %76, %77 : vector<8x128xf32>
      %79 = arith.truncf %78 : vector<8x128xf32> to vector<8x128xbf16>
      %c0_47 = arith.constant 0 : index
      %c0_48 = arith.constant 0 : index
      %80 = vector.load %arg9[%c0_47, %c0_48] : memref<8x128xbf16, #tpu.memory_space<vmem>>, vector<8x128xbf16>
      tpu.vector_store %arg9[%c0_47, %c0_48], %79 {strides = array<i32>} : memref<8x128xbf16, #tpu.memory_space<vmem>>, vector<8x128xbf16>,
      %cst_49 = arith.constant 0xFF800000 : f32
      %81 = vector.broadcast %cst_49 : f32 to vector<8x1xf32>
      %c0_50 = arith.constant 0 : index
      %c0_51 = arith.constant 0 : index
      %82 = vector.load %arg10[%c0_50, %c0_51] : memref<8x1xf32, #tpu.memory_space<vmem>>, vector<8x1xf32>
      tpu.vector_store %arg10[%c0_50, %c0_51], %81 {strides = array<i32>} : memref<8x1xf32, #tpu.memory_space<vmem>>, vector<8x1xf32>,
      %cst_52 = arith.constant 0.000000e+00 : f32
      %83 = vector.broadcast %cst_52 : f32 to vector<8x1xf32>
      %c0_53 = arith.constant 0 : index
      %c0_54 = arith.constant 0 : index
      %84 = vector.load %arg11[%c0_53, %c0_54] : memref<8x1xf32, #tpu.memory_space<vmem>>, vector<8x1xf32>
      tpu.vector_store %arg11[%c0_53, %c0_54], %83 {strides = array<i32>} : memref<8x1xf32, #tpu.memory_space<vmem>>, vector<8x1xf32>,
      %cst_55 = arith.constant 0xFF800000 : f32
      %85 = vector.broadcast %cst_55 : f32 to vector<8x1xf32>
      %c0_56 = arith.constant 0 : index
      %c0_57 = arith.constant 0 : index
      %86 = vector.load %arg12[%c0_56, %c0_57] : memref<8x1xf32, #tpu.memory_space<vmem>>, vector<8x1xf32>
      tpu.vector_store %arg12[%c0_56, %c0_57], %85 {strides = array<i32>} : memref<8x1xf32, #tpu.memory_space<vmem>>, vector<8x1xf32>,
      %c0_i32_58 = arith.constant 0 : i32
      %87 = vector.broadcast %c0_i32_58 : i32 to vector<8x1xi32>
      %c0_59 = arith.constant 0 : index
      %c0_60 = arith.constant 0 : index
      %88 = vector.load %arg13[%c0_59, %c0_60] : memref<8x1xi32, #tpu.memory_space<vmem>>, vector<8x1xi32>
      tpu.vector_store %arg13[%c0_59, %c0_60], %87 {strides = array<i32>} : memref<8x1xi32, #tpu.memory_space<vmem>>, vector<8x1xi32>,
      %cst_61 = arith.constant 0.000000e+00 : f32
      %89 = vector.broadcast %cst_61 : f32 to vector<8x1xf32>
      %c0_62 = arith.constant 0 : index
      %c0_63 = arith.constant 0 : index
      %90 = vector.load %arg14[%c0_62, %c0_63] : memref<8x1xf32, #tpu.memory_space<vmem>>, vector<8x1xf32>
      tpu.vector_store %arg14[%c0_62, %c0_63], %89 {strides = array<i32>} : memref<8x1xf32, #tpu.memory_space<vmem>>, vector<8x1xf32>,
    } else {
    }
    %c0 = arith.constant 0 : index
    %c0_1 = arith.constant 0 : index
    %3 = vector.load %arg9[%c0, %c0_1] : memref<8x128xbf16, #tpu.memory_space<vmem>>, vector<8x128xbf16>
    %c0_2 = arith.constant 0 : index
    %c0_3 = arith.constant 0 : index
    %4 = vector.load %arg5[%c0_2, %c0_3] : memref<128x128xbf16, #tpu.memory_space<vmem>>, vector<128x128xbf16>
    %cst = arith.constant dense<0.000000e+00> : vector<8x128xf32>
    %5 = tpu.matmul %3, %4, %cst {dimension_numbers = #tpu.dot_dimension_numbers<[1], [0], [0], [1], [0, 0, 1, 1], [], []>} : vector<8x128xbf16>, vector<128x128xbf16>, vector<8x128xf32> -> vector<8x128xf32>
    %6 = tpu.iota {dimensions = array<i32: 1>} : vector<8x128xi32>
    %c128_i32 = arith.constant 128 : i32
    %7 = arith.muli %arg1, %c128_i32 : i32
    %8 = vector.broadcast %7 : i32 to vector<8x128xi32>
    %9 = arith.addi %6, %8 : vector<8x128xi32>
    %cst_4 = arith.constant dense<0xFF800000> : vector<8xf32>
    %10 = vector.multi_reduction <maximumf>, %5, %cst_4 [1] : vector<8x128xf32> to vector<8xf32>
    %11 = vector.shape_cast %10 : vector<8xf32> to vector<8x1xf32>
    %c0_5 = arith.constant 0 : index
    %c0_6 = arith.constant 0 : index
    %12 = vector.load %arg10[%c0_5, %c0_6] : memref<8x1xf32, #tpu.memory_space<vmem>>, vector<8x1xf32>
    %13 = arith.maximumf %12, %11 : vector<8x1xf32>
    %c0_7 = arith.constant 0 : index
    %c0_8 = arith.constant 0 : index
    %14 = vector.load %arg11[%c0_7, %c0_8] : memref<8x1xf32, #tpu.memory_space<vmem>>, vector<8x1xf32>
    %c0_9 = arith.constant 0 : index
    %c0_10 = arith.constant 0 : index
    %15 = vector.load %arg10[%c0_9, %c0_10] : memref<8x1xf32, #tpu.memory_space<vmem>>, vector<8x1xf32>
    %16 = arith.subf %15, %13 : vector<8x1xf32>
    %17 = math.exp %16 : vector<8x1xf32>
    %18 = arith.mulf %14, %17 : vector<8x1xf32>
    %19 = vector.broadcast %13 : vector<8x1xf32> to vector<8x128xf32>
    %20 = arith.subf %5, %19 : vector<8x128xf32>
    %21 = math.exp %20 : vector<8x128xf32>
    %cst_11 = arith.constant dense<0.000000e+00> : vector<8xf32>
    %22 = vector.multi_reduction <add>, %21, %cst_11 [1] : vector<8x128xf32> to vector<8xf32>
    %23 = vector.shape_cast %22 : vector<8xf32> to vector<8x1xf32>
    %24 = arith.addf %18, %23 : vector<8x1xf32>
    %c0_12 = arith.constant 0 : index
    %c0_13 = arith.constant 0 : index
    %25 = vector.load %arg11[%c0_12, %c0_13] : memref<8x1xf32, #tpu.memory_space<vmem>>, vector<8x1xf32>
    tpu.vector_store %arg11[%c0_12, %c0_13], %24 {strides = array<i32>} : memref<8x1xf32, #tpu.memory_space<vmem>>, vector<8x1xf32>,
    %c0_14 = arith.constant 0 : index
    %c0_15 = arith.constant 0 : index
    %26 = vector.load %arg10[%c0_14, %c0_15] : memref<8x1xf32, #tpu.memory_space<vmem>>, vector<8x1xf32>
    tpu.vector_store %arg10[%c0_14, %c0_15], %13 {strides = array<i32>} : memref<8x1xf32, #tpu.memory_space<vmem>>, vector<8x1xf32>,
    %27 = vector.broadcast %11 : vector<8x1xf32> to vector<8x128xf32>
    %28 = arith.cmpf oeq, %5, %27 : vector<8x128xf32>
    %c2147483647_i32 = arith.constant 2147483647 : i32
    %29 = vector.broadcast %c2147483647_i32 : i32 to vector<8x128xi32>
    %30 = arith.select %28, %9, %29 : vector<8x128xi1>, vector<8x128xi32>
    %cst_16 = arith.constant dense<2147483647> : vector<8xi32>
    %31 = vector.multi_reduction <minsi>, %30, %cst_16 [1] : vector<8x128xi32> to vector<8xi32>
    %32 = vector.shape_cast %31 : vector<8xi32> to vector<8x1xi32>
    %c0_17 = arith.constant 0 : index
    %c0_18 = arith.constant 0 : index
    %33 = vector.load %arg12[%c0_17, %c0_18] : memref<8x1xf32, #tpu.memory_space<vmem>>, vector<8x1xf32>
    %34 = arith.cmpf ogt, %11, %33 : vector<8x1xf32>
    %c0_19 = arith.constant 0 : index
    %c0_20 = arith.constant 0 : index
    %35 = vector.load %arg13[%c0_19, %c0_20] : memref<8x1xi32, #tpu.memory_space<vmem>>, vector<8x1xi32>
    %36 = arith.select %34, %32, %35 : vector<8x1xi1>, vector<8x1xi32>
    %c0_21 = arith.constant 0 : index
    %c0_22 = arith.constant 0 : index
    %37 = vector.load %arg13[%c0_21, %c0_22] : memref<8x1xi32, #tpu.memory_space<vmem>>, vector<8x1xi32>
    tpu.vector_store %arg13[%c0_21, %c0_22], %36 {strides = array<i32>} : memref<8x1xi32, #tpu.memory_space<vmem>>, vector<8x1xi32>,
    %c0_23 = arith.constant 0 : index
    %c0_24 = arith.constant 0 : index
    %38 = vector.load %arg12[%c0_23, %c0_24] : memref<8x1xf32, #tpu.memory_space<vmem>>, vector<8x1xf32>
    %39 = arith.select %34, %11, %38 : vector<8x1xi1>, vector<8x1xf32>
    %c0_25 = arith.constant 0 : index
    %c0_26 = arith.constant 0 : index
    %40 = vector.load %arg12[%c0_25, %c0_26] : memref<8x1xf32, #tpu.memory_space<vmem>>, vector<8x1xf32>
    tpu.vector_store %arg12[%c0_25, %c0_26], %39 {strides = array<i32>} : memref<8x1xf32, #tpu.memory_space<vmem>>, vector<8x1xf32>,
    %c0_27 = arith.constant 0 : index
    %c0_28 = arith.constant 0 : index
    %41 = vector.load %arg6[%c0_27, %c0_28] : memref<8x1xi32, #tpu.memory_space<vmem>>, vector<8x1xi32>
    %c0_29 = arith.constant 0 : index
    %c0_30 = arith.constant 0 : index
    %42 = vector.load %arg14[%c0_29, %c0_30] : memref<8x1xf32, #tpu.memory_space<vmem>>, vector<8x1xf32>
    %43 = vector.broadcast %41 : vector<8x1xi32> to vector<8x128xi32>
    %44 = arith.cmpi eq, %9, %43 : vector<8x128xi32>
    %cst_31 = arith.constant 0.000000e+00 : f32
    %45 = vector.broadcast %cst_31 : f32 to vector<8x128xf32>
    %46 = arith.select %44, %5, %45 : vector<8x128xi1>, vector<8x128xf32>
    %cst_32 = arith.constant dense<0.000000e+00> : vector<8xf32>
    %47 = vector.multi_reduction <add>, %46, %cst_32 [1] : vector<8x128xf32> to vector<8xf32>
    %48 = vector.shape_cast %47 : vector<8xf32> to vector<8x1xf32>
    %49 = arith.addf %42, %48 : vector<8x1xf32>
    %c0_33 = arith.constant 0 : index
    %c0_34 = arith.constant 0 : index
    %50 = vector.load %arg14[%c0_33, %c0_34] : memref<8x1xf32, #tpu.memory_space<vmem>>, vector<8x1xf32>
    tpu.vector_store %arg14[%c0_33, %c0_34], %49 {strides = array<i32>} : memref<8x1xf32, #tpu.memory_space<vmem>>, vector<8x1xf32>,
    %c1_i32 = arith.constant 1 : i32
    %51 = arith.cmpi eq, %arg1, %c1_i32 : i32
    %52 = arith.extui %51 : i1 to i32
    %c0_i32_35 = arith.constant 0 : i32
    %53 = arith.cmpi ne, %52, %c0_i32_35 : i32
    scf.if %53 {
      %c0_36 = arith.constant 0 : index
      %c0_37 = arith.constant 0 : index
      %54 = vector.load %arg10[%c0_36, %c0_37] : memref<8x1xf32, #tpu.memory_space<vmem>>, vector<8x1xf32>
      %c0_38 = arith.constant 0 : index
      %c0_39 = arith.constant 0 : index
      %55 = vector.load %arg11[%c0_38, %c0_39] : memref<8x1xf32, #tpu.memory_space<vmem>>, vector<8x1xf32>
      %56 = math.log %55 : vector<8x1xf32>
      %57 = arith.addf %54, %56 : vector<8x1xf32>
      %c0_40 = arith.constant 0 : index
      %c0_41 = arith.constant 0 : index
      %58 = vector.load %arg14[%c0_40, %c0_41] : memref<8x1xf32, #tpu.memory_space<vmem>>, vector<8x1xf32>
      %59 = arith.subf %57, %58 : vector<8x1xf32>
      %c0_42 = arith.constant 0 : index
      %c0_43 = arith.constant 0 : index
      %60 = vector.load %arg6[%c0_42, %c0_43] : memref<8x1xi32, #tpu.memory_space<vmem>>, vector<8x1xi32>
      %c0_i32_44 = arith.constant 0 : i32
      %61 = vector.broadcast %c0_i32_44 : i32 to vector<8x1xi32>
      %62 = arith.cmpi sge, %60, %61 : vector<8x1xi32>
      %63 = arith.extui %62 : vector<8x1xi1> to vector<8x1xi32>
      %64 = arith.sitofp %63 : vector<8x1xi32> to vector<8x1xf32>
      %65 = arith.mulf %59, %64 : vector<8x1xf32>
      %c0_45 = arith.constant 0 : index
      %c0_46 = arith.constant 0 : index
      %66 = vector.load %arg7[%c0_45, %c0_46] : memref<8x1xf32, #tpu.memory_space<vmem>>, vector<8x1xf32>
      tpu.vector_store %arg7[%c0_45, %c0_46], %65 {strides = array<i32>} : memref<8x1xf32, #tpu.memory_space<vmem>>, vector<8x1xf32>,
      %c0_47 = arith.constant 0 : index
      %c0_48 = arith.constant 0 : index
      %67 = vector.load %arg13[%c0_47, %c0_48] : memref<8x1xi32, #tpu.memory_space<vmem>>, vector<8x1xi32>
      %c0_49 = arith.constant 0 : index
      %c0_50 = arith.constant 0 : index
      %68 = vector.load %arg8[%c0_49, %c0_50] : memref<8x1xi32, #tpu.memory_space<vmem>>, vector<8x1xi32>
      tpu.vector_store %arg8[%c0_49, %c0_50], %67 {strides = array<i32>} : memref<8x1xi32, #tpu.memory_space<vmem>>, vector<8x1xi32>,
    } else {
    }
    return
  }
  func.func @transform_0(%arg0: i32, %arg1: i32) -> (i32, i32) {
    %c0_i32 = arith.constant 0 : i32
    %c0_i32_0 = arith.constant 0 : i32
    return %arg0, %c0_i32 : i32, i32
  }
  func.func @transform_1(%arg0: i32, %arg1: i32) -> (i32, i32) {
    %c0_i32 = arith.constant 0 : i32
    %c0_i32_0 = arith.constant 0 : i32
    %c0_i32_1 = arith.constant 0 : i32
    return %c0_i32, %c0_i32_0 : i32, i32
  }
  func.func @transform_2(%arg0: i32, %arg1: i32) -> (i32, i32) {
    %c0_i32 = arith.constant 0 : i32
    %c0_i32_0 = arith.constant 0 : i32
    %c0_i32_1 = arith.constant 0 : i32
    return %c0_i32, %c0_i32_0 : i32, i32
  }
  func.func @transform_3(%arg0: i32, %arg1: i32) -> (i32, i32) {
    %c0_i32 = arith.constant 0 : i32
    %c0_i32_0 = arith.constant 0 : i32
    return %c0_i32, %arg1 : i32, i32
  }
  func.func @transform_4(%arg0: i32, %arg1: i32) -> (i32, i32) {
    %c0_i32 = arith.constant 0 : i32
    %c0_i32_0 = arith.constant 0 : i32
    return %arg0, %c0_i32 : i32, i32
  }
  func.func @transform_5(%arg0: i32, %arg1: i32) -> (i32, i32) {
    %c0_i32 = arith.constant 0 : i32
    %c0_i32_0 = arith.constant 0 : i32
    return %arg0, %c0_i32 : i32, i32
  }
  func.func @transform_6(%arg0: i32, %arg1: i32) -> (i32, i32) {
    %c0_i32 = arith.constant 0 : i32
    %c0_i32_0 = arith.constant 0 : i32
    return %arg0, %c0_i32 : i32, i32
  }
}

module attributes {stable_mosaic.version = 11 : i64} {
  func.func @_layer_kernel(%arg0: i32, %arg1: memref<8x128xf32, #tpu.memory_space<vmem>>, %arg2: memref<1x128xf32, #tpu.memory_space<vmem>>, %arg3: memref<1x128xf32, #tpu.memory_space<vmem>>, %arg4: memref<128x384xbf16, #tpu.memory_space<vmem>>, %arg5: memref<1x384xf32, #tpu.memory_space<vmem>>, %arg6: memref<128x8xf32, #tpu.memory_space<vmem>>, %arg7: memref<8x384xf32, #tpu.memory_space<vmem>>, %arg8: memref<128x128xbf16, #tpu.memory_space<vmem>>, %arg9: memref<1x128xf32, #tpu.memory_space<vmem>>, %arg10: memref<1x128xf32, #tpu.memory_space<vmem>>, %arg11: memref<1x128xf32, #tpu.memory_space<vmem>>, %arg12: memref<128x256xbf16, #tpu.memory_space<vmem>>, %arg13: memref<1x256xf32, #tpu.memory_space<vmem>>, %arg14: memref<256x128xbf16, #tpu.memory_space<vmem>>, %arg15: memref<1x128xf32, #tpu.memory_space<vmem>>, %arg16: memref<8x128xf32, #tpu.memory_space<vmem>>) attributes {dimension_semantics = [#tpu.dimension_semantics<parallel>], iteration_bounds = array<i64: 2>, scalar_prefetch = 0 : i64, scratch_operands = 0 : i64, tpu.core_type = #tpu.core_type<tc>, window_params = [{transform_indices = @transform_0, window_bounds = array<i64: 8, 128>}, {pipeline_mode = #tpu.pipeline_mode<synchronous>, transform_indices = @transform_1, window_bounds = array<i64: 1, 128>}, {pipeline_mode = #tpu.pipeline_mode<synchronous>, transform_indices = @transform_2, window_bounds = array<i64: 1, 128>}, {pipeline_mode = #tpu.pipeline_mode<synchronous>, transform_indices = @transform_3, window_bounds = array<i64: 128, 384>}, {pipeline_mode = #tpu.pipeline_mode<synchronous>, transform_indices = @transform_4, window_bounds = array<i64: 1, 384>}, {pipeline_mode = #tpu.pipeline_mode<synchronous>, transform_indices = @transform_5, window_bounds = array<i64: 128, 8>}, {pipeline_mode = #tpu.pipeline_mode<synchronous>, transform_indices = @transform_6, window_bounds = array<i64: 8, 384>}, {pipeline_mode = #tpu.pipeline_mode<synchronous>, transform_indices = @transform_7, window_bounds = array<i64: 128, 128>}, {pipeline_mode = #tpu.pipeline_mode<synchronous>, transform_indices = @transform_8, window_bounds = array<i64: 1, 128>}, {pipeline_mode = #tpu.pipeline_mode<synchronous>, transform_indices = @transform_9, window_bounds = array<i64: 1, 128>}, {pipeline_mode = #tpu.pipeline_mode<synchronous>, transform_indices = @transform_10, window_bounds = array<i64: 1, 128>}, {pipeline_mode = #tpu.pipeline_mode<synchronous>, transform_indices = @transform_11, window_bounds = array<i64: 128, 256>}, {pipeline_mode = #tpu.pipeline_mode<synchronous>, transform_indices = @transform_12, window_bounds = array<i64: 1, 256>}, {pipeline_mode = #tpu.pipeline_mode<synchronous>, transform_indices = @transform_13, window_bounds = array<i64: 256, 128>}, {pipeline_mode = #tpu.pipeline_mode<synchronous>, transform_indices = @transform_14, window_bounds = array<i64: 1, 128>}, {transform_indices = @transform_15, window_bounds = array<i64: 8, 128>}]} {
    %c0 = arith.constant 0 : index
    %c0_0 = arith.constant 0 : index
    %0 = vector.load %arg1[%c0, %c0_0] : memref<8x128xf32, #tpu.memory_space<vmem>>, vector<8x128xf32>
    %c0_1 = arith.constant 0 : index
    %c0_2 = arith.constant 0 : index
    %1 = vector.load %arg2[%c0_1, %c0_2] : memref<1x128xf32, #tpu.memory_space<vmem>>, vector<1x128xf32>
    %c0_3 = arith.constant 0 : index
    %c0_4 = arith.constant 0 : index
    %2 = vector.load %arg3[%c0_3, %c0_4] : memref<1x128xf32, #tpu.memory_space<vmem>>, vector<1x128xf32>
    %cst = arith.constant dense<0.000000e+00> : vector<8xf32>
    %3 = vector.multi_reduction <add>, %0, %cst [1] : vector<8x128xf32> to vector<8xf32>
    %4 = vector.shape_cast %3 : vector<8xf32> to vector<8x1xf32>
    %cst_5 = arith.constant 1.280000e+02 : f32
    %5 = vector.broadcast %cst_5 : f32 to vector<8x1xf32>
    %6 = arith.divf %4, %5 : vector<8x1xf32>
    %7 = vector.broadcast %6 : vector<8x1xf32> to vector<8x128xf32>
    %8 = arith.subf %0, %7 : vector<8x128xf32>
    %9 = arith.mulf %8, %8 : vector<8x128xf32>
    %cst_6 = arith.constant dense<0.000000e+00> : vector<8xf32>
    %10 = vector.multi_reduction <add>, %9, %cst_6 [1] : vector<8x128xf32> to vector<8xf32>
    %11 = vector.shape_cast %10 : vector<8xf32> to vector<8x1xf32>
    %cst_7 = arith.constant 1.280000e+02 : f32
    %12 = vector.broadcast %cst_7 : f32 to vector<8x1xf32>
    %13 = arith.divf %11, %12 : vector<8x1xf32>
    %14 = vector.broadcast %6 : vector<8x1xf32> to vector<8x128xf32>
    %15 = arith.subf %0, %14 : vector<8x128xf32>
    %cst_8 = arith.constant 9.99999974E-6 : f32
    %16 = vector.broadcast %cst_8 : f32 to vector<8x1xf32>
    %17 = arith.addf %13, %16 : vector<8x1xf32>
    %18 = math.rsqrt %17 : vector<8x1xf32>
    %19 = vector.broadcast %18 : vector<8x1xf32> to vector<8x128xf32>
    %20 = arith.mulf %15, %19 : vector<8x128xf32>
    %21 = vector.broadcast %1 : vector<1x128xf32> to vector<8x128xf32>
    %22 = arith.mulf %20, %21 : vector<8x128xf32>
    %23 = vector.broadcast %2 : vector<1x128xf32> to vector<8x128xf32>
    %24 = arith.addf %22, %23 : vector<8x128xf32>
    %25 = arith.truncf %24 : vector<8x128xf32> to vector<8x128xbf16>
    %c0_9 = arith.constant 0 : index
    %c0_10 = arith.constant 0 : index
    %26 = vector.load %arg4[%c0_9, %c0_10] : memref<128x384xbf16, #tpu.memory_space<vmem>>, vector<128x384xbf16>
    %cst_11 = arith.constant dense<0.000000e+00> : vector<8x384xf32>
    %27 = tpu.matmul %25, %26, %cst_11 {dimension_numbers = #tpu.dot_dimension_numbers<[1], [0], [0], [1], [0, 0, 1, 1], [], []>} : vector<8x128xbf16>, vector<128x384xbf16>, vector<8x384xf32> -> vector<8x384xf32>
    %c0_12 = arith.constant 0 : index
    %c0_13 = arith.constant 0 : index
    %28 = vector.load %arg6[%c0_12, %c0_13] : memref<128x8xf32, #tpu.memory_space<vmem>>, vector<128x8xf32>
    %cst_14 = arith.constant dense<0.000000e+00> : vector<8x8xf32>
    %29 = tpu.matmul %24, %28, %cst_14 {dimension_numbers = #tpu.dot_dimension_numbers<[1], [0], [0], [1], [0, 0, 1, 1], [], []>} : vector<8x128xf32>, vector<128x8xf32>, vector<8x8xf32> -> vector<8x8xf32>
    %c0_15 = arith.constant 0 : index
    %c0_16 = arith.constant 0 : index
    %30 = vector.load %arg7[%c0_15, %c0_16] : memref<8x384xf32, #tpu.memory_space<vmem>>, vector<8x384xf32>
    %cst_17 = arith.constant dense<0.000000e+00> : vector<8x384xf32>
    %31 = tpu.matmul %29, %30, %cst_17 {dimension_numbers = #tpu.dot_dimension_numbers<[1], [0], [0], [1], [0, 0, 1, 1], [], []>} : vector<8x8xf32>, vector<8x384xf32>, vector<8x384xf32> -> vector<8x384xf32>
    %cst_18 = arith.constant 2.000000e+00 : f32
    %32 = vector.broadcast %cst_18 : f32 to vector<8x384xf32>
    %33 = arith.mulf %32, %31 : vector<8x384xf32>
    %34 = arith.addf %27, %33 : vector<8x384xf32>
    %c0_19 = arith.constant 0 : index
    %c0_20 = arith.constant 0 : index
    %35 = vector.load %arg5[%c0_19, %c0_20] : memref<1x384xf32, #tpu.memory_space<vmem>>, vector<1x384xf32>
    %36 = vector.broadcast %35 : vector<1x384xf32> to vector<8x384xf32>
    %37 = arith.addf %34, %36 : vector<8x384xf32>
    %38 = tpu.iota {dimensions = array<i32: 0>} : vector<8x8xi32>
    %39 = tpu.iota {dimensions = array<i32: 1>} : vector<8x8xi32>
    %40 = arith.cmpi sle, %39, %38 : vector<8x8xi32>
    %41 = tpu.iota {dimensions = array<i32: 1>} : vector<8x128xi32>
    %c0_i32 = arith.constant 0 : i32
    %42 = vector.broadcast %c0_i32 : i32 to vector<8x128xi32>
    %43 = arith.cmpi sge, %41, %42 : vector<8x128xi32>
    %c32_i32 = arith.constant 32 : i32
    %44 = vector.broadcast %c32_i32 : i32 to vector<8x128xi32>
    %45 = arith.cmpi slt, %41, %44 : vector<8x128xi32>
    %46 = arith.andi %43, %45 : vector<8x128xi1>
    %47 = arith.extui %46 : vector<8x128xi1> to vector<8x128xi32>
    %48 = arith.sitofp %47 : vector<8x128xi32> to vector<8x128xf32>
    %c32_i32_21 = arith.constant 32 : i32
    %49 = vector.broadcast %c32_i32_21 : i32 to vector<8x128xi32>
    %50 = arith.cmpi sge, %41, %49 : vector<8x128xi32>
    %c64_i32 = arith.constant 64 : i32
    %51 = vector.broadcast %c64_i32 : i32 to vector<8x128xi32>
    %52 = arith.cmpi slt, %41, %51 : vector<8x128xi32>
    %53 = arith.andi %50, %52 : vector<8x128xi1>
    %54 = arith.extui %53 : vector<8x128xi1> to vector<8x128xi32>
    %55 = arith.sitofp %54 : vector<8x128xi32> to vector<8x128xf32>
    %c64_i32_22 = arith.constant 64 : i32
    %56 = vector.broadcast %c64_i32_22 : i32 to vector<8x128xi32>
    %57 = arith.cmpi sge, %41, %56 : vector<8x128xi32>
    %c96_i32 = arith.constant 96 : i32
    %58 = vector.broadcast %c96_i32 : i32 to vector<8x128xi32>
    %59 = arith.cmpi slt, %41, %58 : vector<8x128xi32>
    %60 = arith.andi %57, %59 : vector<8x128xi1>
    %61 = arith.extui %60 : vector<8x128xi1> to vector<8x128xi32>
    %62 = arith.sitofp %61 : vector<8x128xi32> to vector<8x128xf32>
    %c96_i32_23 = arith.constant 96 : i32
    %63 = vector.broadcast %c96_i32_23 : i32 to vector<8x128xi32>
    %64 = arith.cmpi sge, %41, %63 : vector<8x128xi32>
    %c128_i32 = arith.constant 128 : i32
    %65 = vector.broadcast %c128_i32 : i32 to vector<8x128xi32>
    %66 = arith.cmpi slt, %41, %65 : vector<8x128xi32>
    %67 = arith.andi %64, %66 : vector<8x128xi1>
    %68 = arith.extui %67 : vector<8x128xi1> to vector<8x128xi32>
    %69 = arith.sitofp %68 : vector<8x128xi32> to vector<8x128xf32>
    %70 = vector.extract_strided_slice %37 {offsets = [0, 0], sizes = [8, 128], strides = [1, 1]} : vector<8x384xf32> to vector<8x128xf32>
    %71 = vector.extract_strided_slice %37 {offsets = [0, 128], sizes = [8, 128], strides = [1, 1]} : vector<8x384xf32> to vector<8x128xf32>
    %72 = vector.extract_strided_slice %37 {offsets = [0, 256], sizes = [8, 128], strides = [1, 1]} : vector<8x384xf32> to vector<8x128xf32>
    %cst_24 = arith.constant 0.000000e+00 : f32
    %73 = vector.broadcast %cst_24 : f32 to vector<8x128xf32>
    %74 = arith.mulf %71, %48 : vector<8x128xf32>
    %cst_25 = arith.constant dense<0.000000e+00> : vector<8x8xf32>
    %75 = tpu.matmul %70, %74, %cst_25 {dimension_numbers = #tpu.dot_dimension_numbers<[1], [1], [0], [0], [0, 0, 1, 0], [], []>} : vector<8x128xf32>, vector<8x128xf32>, vector<8x8xf32> -> vector<8x8xf32>
    %cst_26 = arith.constant 0.176776692 : f32
    %76 = vector.broadcast %cst_26 : f32 to vector<8x8xf32>
    %77 = arith.mulf %75, %76 : vector<8x8xf32>
    %cst_27 = arith.constant -1.000000e+30 : f32
    %78 = vector.broadcast %cst_27 : f32 to vector<8x8xf32>
    %79 = arith.select %40, %77, %78 : vector<8x8xi1>, vector<8x8xf32>
    %cst_28 = arith.constant dense<0xFF800000> : vector<8xf32>
    %80 = vector.multi_reduction <maximumf>, %79, %cst_28 [1] : vector<8x8xf32> to vector<8xf32>
    %81 = vector.shape_cast %80 : vector<8xf32> to vector<8x1xf32>
    %82 = vector.broadcast %81 : vector<8x1xf32> to vector<8x8xf32>
    %83 = arith.subf %79, %82 : vector<8x8xf32>
    %84 = math.exp %83 : vector<8x8xf32>
    %cst_29 = arith.constant dense<0.000000e+00> : vector<8xf32>
    %85 = vector.multi_reduction <add>, %84, %cst_29 [1] : vector<8x8xf32> to vector<8xf32>
    %86 = vector.shape_cast %85 : vector<8xf32> to vector<8x1xf32>
    %87 = vector.broadcast %86 : vector<8x1xf32> to vector<8x8xf32>
    %88 = arith.divf %84, %87 : vector<8x8xf32>
    %89 = arith.mulf %72, %48 : vector<8x128xf32>
    %cst_30 = arith.constant dense<0.000000e+00> : vector<8x128xf32>
    %90 = tpu.matmul %88, %89, %cst_30 {dimension_numbers = #tpu.dot_dimension_numbers<[1], [0], [0], [1], [0, 0, 1, 1], [], []>} : vector<8x8xf32>, vector<8x128xf32>, vector<8x128xf32> -> vector<8x128xf32>
    %91 = arith.addf %73, %90 : vector<8x128xf32>
    %92 = arith.mulf %71, %55 : vector<8x128xf32>
    %cst_31 = arith.constant dense<0.000000e+00> : vector<8x8xf32>
    %93 = tpu.matmul %70, %92, %cst_31 {dimension_numbers = #tpu.dot_dimension_numbers<[1], [1], [0], [0], [0, 0, 1, 0], [], []>} : vector<8x128xf32>, vector<8x128xf32>, vector<8x8xf32> -> vector<8x8xf32>
    %cst_32 = arith.constant 0.176776692 : f32
    %94 = vector.broadcast %cst_32 : f32 to vector<8x8xf32>
    %95 = arith.mulf %93, %94 : vector<8x8xf32>
    %cst_33 = arith.constant -1.000000e+30 : f32
    %96 = vector.broadcast %cst_33 : f32 to vector<8x8xf32>
    %97 = arith.select %40, %95, %96 : vector<8x8xi1>, vector<8x8xf32>
    %cst_34 = arith.constant dense<0xFF800000> : vector<8xf32>
    %98 = vector.multi_reduction <maximumf>, %97, %cst_34 [1] : vector<8x8xf32> to vector<8xf32>
    %99 = vector.shape_cast %98 : vector<8xf32> to vector<8x1xf32>
    %100 = vector.broadcast %99 : vector<8x1xf32> to vector<8x8xf32>
    %101 = arith.subf %97, %100 : vector<8x8xf32>
    %102 = math.exp %101 : vector<8x8xf32>
    %cst_35 = arith.constant dense<0.000000e+00> : vector<8xf32>
    %103 = vector.multi_reduction <add>, %102, %cst_35 [1] : vector<8x8xf32> to vector<8xf32>
    %104 = vector.shape_cast %103 : vector<8xf32> to vector<8x1xf32>
    %105 = vector.broadcast %104 : vector<8x1xf32> to vector<8x8xf32>
    %106 = arith.divf %102, %105 : vector<8x8xf32>
    %107 = arith.mulf %72, %55 : vector<8x128xf32>
    %cst_36 = arith.constant dense<0.000000e+00> : vector<8x128xf32>
    %108 = tpu.matmul %106, %107, %cst_36 {dimension_numbers = #tpu.dot_dimension_numbers<[1], [0], [0], [1], [0, 0, 1, 1], [], []>} : vector<8x8xf32>, vector<8x128xf32>, vector<8x128xf32> -> vector<8x128xf32>
    %109 = arith.addf %91, %108 : vector<8x128xf32>
    %110 = arith.mulf %71, %62 : vector<8x128xf32>
    %cst_37 = arith.constant dense<0.000000e+00> : vector<8x8xf32>
    %111 = tpu.matmul %70, %110, %cst_37 {dimension_numbers = #tpu.dot_dimension_numbers<[1], [1], [0], [0], [0, 0, 1, 0], [], []>} : vector<8x128xf32>, vector<8x128xf32>, vector<8x8xf32> -> vector<8x8xf32>
    %cst_38 = arith.constant 0.176776692 : f32
    %112 = vector.broadcast %cst_38 : f32 to vector<8x8xf32>
    %113 = arith.mulf %111, %112 : vector<8x8xf32>
    %cst_39 = arith.constant -1.000000e+30 : f32
    %114 = vector.broadcast %cst_39 : f32 to vector<8x8xf32>
    %115 = arith.select %40, %113, %114 : vector<8x8xi1>, vector<8x8xf32>
    %cst_40 = arith.constant dense<0xFF800000> : vector<8xf32>
    %116 = vector.multi_reduction <maximumf>, %115, %cst_40 [1] : vector<8x8xf32> to vector<8xf32>
    %117 = vector.shape_cast %116 : vector<8xf32> to vector<8x1xf32>
    %118 = vector.broadcast %117 : vector<8x1xf32> to vector<8x8xf32>
    %119 = arith.subf %115, %118 : vector<8x8xf32>
    %120 = math.exp %119 : vector<8x8xf32>
    %cst_41 = arith.constant dense<0.000000e+00> : vector<8xf32>
    %121 = vector.multi_reduction <add>, %120, %cst_41 [1] : vector<8x8xf32> to vector<8xf32>
    %122 = vector.shape_cast %121 : vector<8xf32> to vector<8x1xf32>
    %123 = vector.broadcast %122 : vector<8x1xf32> to vector<8x8xf32>
    %124 = arith.divf %120, %123 : vector<8x8xf32>
    %125 = arith.mulf %72, %62 : vector<8x128xf32>
    %cst_42 = arith.constant dense<0.000000e+00> : vector<8x128xf32>
    %126 = tpu.matmul %124, %125, %cst_42 {dimension_numbers = #tpu.dot_dimension_numbers<[1], [0], [0], [1], [0, 0, 1, 1], [], []>} : vector<8x8xf32>, vector<8x128xf32>, vector<8x128xf32> -> vector<8x128xf32>
    %127 = arith.addf %109, %126 : vector<8x128xf32>
    %128 = arith.mulf %71, %69 : vector<8x128xf32>
    %cst_43 = arith.constant dense<0.000000e+00> : vector<8x8xf32>
    %129 = tpu.matmul %70, %128, %cst_43 {dimension_numbers = #tpu.dot_dimension_numbers<[1], [1], [0], [0], [0, 0, 1, 0], [], []>} : vector<8x128xf32>, vector<8x128xf32>, vector<8x8xf32> -> vector<8x8xf32>
    %cst_44 = arith.constant 0.176776692 : f32
    %130 = vector.broadcast %cst_44 : f32 to vector<8x8xf32>
    %131 = arith.mulf %129, %130 : vector<8x8xf32>
    %cst_45 = arith.constant -1.000000e+30 : f32
    %132 = vector.broadcast %cst_45 : f32 to vector<8x8xf32>
    %133 = arith.select %40, %131, %132 : vector<8x8xi1>, vector<8x8xf32>
    %cst_46 = arith.constant dense<0xFF800000> : vector<8xf32>
    %134 = vector.multi_reduction <maximumf>, %133, %cst_46 [1] : vector<8x8xf32> to vector<8xf32>
    %135 = vector.shape_cast %134 : vector<8xf32> to vector<8x1xf32>
    %136 = vector.broadcast %135 : vector<8x1xf32> to vector<8x8xf32>
    %137 = arith.subf %133, %136 : vector<8x8xf32>
    %138 = math.exp %137 : vector<8x8xf32>
    %cst_47 = arith.constant dense<0.000000e+00> : vector<8xf32>
    %139 = vector.multi_reduction <add>, %138, %cst_47 [1] : vector<8x8xf32> to vector<8xf32>
    %140 = vector.shape_cast %139 : vector<8xf32> to vector<8x1xf32>
    %141 = vector.broadcast %140 : vector<8x1xf32> to vector<8x8xf32>
    %142 = arith.divf %138, %141 : vector<8x8xf32>
    %143 = arith.mulf %72, %69 : vector<8x128xf32>
    %cst_48 = arith.constant dense<0.000000e+00> : vector<8x128xf32>
    %144 = tpu.matmul %142, %143, %cst_48 {dimension_numbers = #tpu.dot_dimension_numbers<[1], [0], [0], [1], [0, 0, 1, 1], [], []>} : vector<8x8xf32>, vector<8x128xf32>, vector<8x128xf32> -> vector<8x128xf32>
    %145 = arith.addf %127, %144 : vector<8x128xf32>
    %146 = arith.truncf %145 : vector<8x128xf32> to vector<8x128xbf16>
    %c0_49 = arith.constant 0 : index
    %c0_50 = arith.constant 0 : index
    %147 = vector.load %arg8[%c0_49, %c0_50] : memref<128x128xbf16, #tpu.memory_space<vmem>>, vector<128x128xbf16>
    %cst_51 = arith.constant dense<0.000000e+00> : vector<8x128xf32>
    %148 = tpu.matmul %146, %147, %cst_51 {dimension_numbers = #tpu.dot_dimension_numbers<[1], [0], [0], [1], [0, 0, 1, 1], [], []>} : vector<8x128xbf16>, vector<128x128xbf16>, vector<8x128xf32> -> vector<8x128xf32>
    %c0_52 = arith.constant 0 : index
    %c0_53 = arith.constant 0 : index
    %149 = vector.load %arg9[%c0_52, %c0_53] : memref<1x128xf32, #tpu.memory_space<vmem>>, vector<1x128xf32>
    %150 = vector.broadcast %149 : vector<1x128xf32> to vector<8x128xf32>
    %151 = arith.addf %148, %150 : vector<8x128xf32>
    %152 = arith.addf %0, %151 : vector<8x128xf32>
    %c0_54 = arith.constant 0 : index
    %c0_55 = arith.constant 0 : index
    %153 = vector.load %arg10[%c0_54, %c0_55] : memref<1x128xf32, #tpu.memory_space<vmem>>, vector<1x128xf32>
    %c0_56 = arith.constant 0 : index
    %c0_57 = arith.constant 0 : index
    %154 = vector.load %arg11[%c0_56, %c0_57] : memref<1x128xf32, #tpu.memory_space<vmem>>, vector<1x128xf32>
    %cst_58 = arith.constant dense<0.000000e+00> : vector<8xf32>
    %155 = vector.multi_reduction <add>, %152, %cst_58 [1] : vector<8x128xf32> to vector<8xf32>
    %156 = vector.shape_cast %155 : vector<8xf32> to vector<8x1xf32>
    %cst_59 = arith.constant 1.280000e+02 : f32
    %157 = vector.broadcast %cst_59 : f32 to vector<8x1xf32>
    %158 = arith.divf %156, %157 : vector<8x1xf32>
    %159 = vector.broadcast %158 : vector<8x1xf32> to vector<8x128xf32>
    %160 = arith.subf %152, %159 : vector<8x128xf32>
    %161 = arith.mulf %160, %160 : vector<8x128xf32>
    %cst_60 = arith.constant dense<0.000000e+00> : vector<8xf32>
    %162 = vector.multi_reduction <add>, %161, %cst_60 [1] : vector<8x128xf32> to vector<8xf32>
    %163 = vector.shape_cast %162 : vector<8xf32> to vector<8x1xf32>
    %cst_61 = arith.constant 1.280000e+02 : f32
    %164 = vector.broadcast %cst_61 : f32 to vector<8x1xf32>
    %165 = arith.divf %163, %164 : vector<8x1xf32>
    %166 = vector.broadcast %158 : vector<8x1xf32> to vector<8x128xf32>
    %167 = arith.subf %152, %166 : vector<8x128xf32>
    %cst_62 = arith.constant 9.99999974E-6 : f32
    %168 = vector.broadcast %cst_62 : f32 to vector<8x1xf32>
    %169 = arith.addf %165, %168 : vector<8x1xf32>
    %170 = math.rsqrt %169 : vector<8x1xf32>
    %171 = vector.broadcast %170 : vector<8x1xf32> to vector<8x128xf32>
    %172 = arith.mulf %167, %171 : vector<8x128xf32>
    %173 = vector.broadcast %153 : vector<1x128xf32> to vector<8x128xf32>
    %174 = arith.mulf %172, %173 : vector<8x128xf32>
    %175 = vector.broadcast %154 : vector<1x128xf32> to vector<8x128xf32>
    %176 = arith.addf %174, %175 : vector<8x128xf32>
    %177 = arith.truncf %176 : vector<8x128xf32> to vector<8x128xbf16>
    %c0_63 = arith.constant 0 : index
    %c0_64 = arith.constant 0 : index
    %178 = vector.load %arg12[%c0_63, %c0_64] : memref<128x256xbf16, #tpu.memory_space<vmem>>, vector<128x256xbf16>
    %cst_65 = arith.constant dense<0.000000e+00> : vector<8x256xf32>
    %179 = tpu.matmul %177, %178, %cst_65 {dimension_numbers = #tpu.dot_dimension_numbers<[1], [0], [0], [1], [0, 0, 1, 1], [], []>} : vector<8x128xbf16>, vector<128x256xbf16>, vector<8x256xf32> -> vector<8x256xf32>
    %c0_66 = arith.constant 0 : index
    %c0_67 = arith.constant 0 : index
    %180 = vector.load %arg13[%c0_66, %c0_67] : memref<1x256xf32, #tpu.memory_space<vmem>>, vector<1x256xf32>
    %181 = vector.broadcast %180 : vector<1x256xf32> to vector<8x256xf32>
    %182 = arith.addf %179, %181 : vector<8x256xf32>
    %183 = arith.mulf %182, %182 : vector<8x256xf32>
    %184 = arith.mulf %182, %183 : vector<8x256xf32>
    %cst_68 = arith.constant 4.471500e-02 : f32
    %185 = vector.broadcast %cst_68 : f32 to vector<8x256xf32>
    %186 = arith.mulf %185, %184 : vector<8x256xf32>
    %187 = arith.addf %182, %186 : vector<8x256xf32>
    %cst_69 = arith.constant 0.797884583 : f32
    %188 = vector.broadcast %cst_69 : f32 to vector<8x256xf32>
    %189 = arith.mulf %188, %187 : vector<8x256xf32>
    %190 = math.tanh %189 : vector<8x256xf32>
    %cst_70 = arith.constant 1.000000e+00 : f32
    %191 = vector.broadcast %cst_70 : f32 to vector<8x256xf32>
    %192 = arith.addf %191, %190 : vector<8x256xf32>
    %cst_71 = arith.constant 5.000000e-01 : f32
    %193 = vector.broadcast %cst_71 : f32 to vector<8x256xf32>
    %194 = arith.mulf %193, %192 : vector<8x256xf32>
    %195 = arith.mulf %182, %194 : vector<8x256xf32>
    %196 = arith.truncf %195 : vector<8x256xf32> to vector<8x256xbf16>
    %c0_72 = arith.constant 0 : index
    %c0_73 = arith.constant 0 : index
    %197 = vector.load %arg14[%c0_72, %c0_73] : memref<256x128xbf16, #tpu.memory_space<vmem>>, vector<256x128xbf16>
    %cst_74 = arith.constant dense<0.000000e+00> : vector<8x128xf32>
    %198 = tpu.matmul %196, %197, %cst_74 {dimension_numbers = #tpu.dot_dimension_numbers<[1], [0], [0], [1], [0, 0, 1, 1], [], []>} : vector<8x256xbf16>, vector<256x128xbf16>, vector<8x128xf32> -> vector<8x128xf32>
    %c0_75 = arith.constant 0 : index
    %c0_76 = arith.constant 0 : index
    %199 = vector.load %arg15[%c0_75, %c0_76] : memref<1x128xf32, #tpu.memory_space<vmem>>, vector<1x128xf32>
    %200 = vector.broadcast %199 : vector<1x128xf32> to vector<8x128xf32>
    %201 = arith.addf %198, %200 : vector<8x128xf32>
    %202 = arith.addf %152, %201 : vector<8x128xf32>
    %c0_77 = arith.constant 0 : index
    %c0_78 = arith.constant 0 : index
    %203 = vector.load %arg16[%c0_77, %c0_78] : memref<8x128xf32, #tpu.memory_space<vmem>>, vector<8x128xf32>
    tpu.vector_store %arg16[%c0_77, %c0_78], %202 {strides = array<i32>} : memref<8x128xf32, #tpu.memory_space<vmem>>, vector<8x128xf32>,
    return
  }
  func.func @transform_0(%arg0: i32) -> (i32, i32) {
    %c0_i32 = arith.constant 0 : i32
    %c0_i32_0 = arith.constant 0 : i32
    return %arg0, %c0_i32 : i32, i32
  }
  func.func @transform_1(%arg0: i32) -> (i32, i32) {
    %c0_i32 = arith.constant 0 : i32
    %c0_i32_0 = arith.constant 0 : i32
    %c0_i32_1 = arith.constant 0 : i32
    return %c0_i32, %c0_i32_0 : i32, i32
  }
  func.func @transform_2(%arg0: i32) -> (i32, i32) {
    %c0_i32 = arith.constant 0 : i32
    %c0_i32_0 = arith.constant 0 : i32
    %c0_i32_1 = arith.constant 0 : i32
    return %c0_i32, %c0_i32_0 : i32, i32
  }
  func.func @transform_3(%arg0: i32) -> (i32, i32) {
    %c0_i32 = arith.constant 0 : i32
    %c0_i32_0 = arith.constant 0 : i32
    %c0_i32_1 = arith.constant 0 : i32
    return %c0_i32, %c0_i32_0 : i32, i32
  }
  func.func @transform_4(%arg0: i32) -> (i32, i32) {
    %c0_i32 = arith.constant 0 : i32
    %c0_i32_0 = arith.constant 0 : i32
    %c0_i32_1 = arith.constant 0 : i32
    return %c0_i32, %c0_i32_0 : i32, i32
  }
  func.func @transform_5(%arg0: i32) -> (i32, i32) {
    %c0_i32 = arith.constant 0 : i32
    %c0_i32_0 = arith.constant 0 : i32
    %c0_i32_1 = arith.constant 0 : i32
    return %c0_i32, %c0_i32_0 : i32, i32
  }
  func.func @transform_6(%arg0: i32) -> (i32, i32) {
    %c0_i32 = arith.constant 0 : i32
    %c0_i32_0 = arith.constant 0 : i32
    %c0_i32_1 = arith.constant 0 : i32
    return %c0_i32, %c0_i32_0 : i32, i32
  }
  func.func @transform_7(%arg0: i32) -> (i32, i32) {
    %c0_i32 = arith.constant 0 : i32
    %c0_i32_0 = arith.constant 0 : i32
    %c0_i32_1 = arith.constant 0 : i32
    return %c0_i32, %c0_i32_0 : i32, i32
  }
  func.func @transform_8(%arg0: i32) -> (i32, i32) {
    %c0_i32 = arith.constant 0 : i32
    %c0_i32_0 = arith.constant 0 : i32
    %c0_i32_1 = arith.constant 0 : i32
    return %c0_i32, %c0_i32_0 : i32, i32
  }
  func.func @transform_9(%arg0: i32) -> (i32, i32) {
    %c0_i32 = arith.constant 0 : i32
    %c0_i32_0 = arith.constant 0 : i32
    %c0_i32_1 = arith.constant 0 : i32
    return %c0_i32, %c0_i32_0 : i32, i32
  }
  func.func @transform_10(%arg0: i32) -> (i32, i32) {
    %c0_i32 = arith.constant 0 : i32
    %c0_i32_0 = arith.constant 0 : i32
    %c0_i32_1 = arith.constant 0 : i32
    return %c0_i32, %c0_i32_0 : i32, i32
  }
  func.func @transform_11(%arg0: i32) -> (i32, i32) {
    %c0_i32 = arith.constant 0 : i32
    %c0_i32_0 = arith.constant 0 : i32
    %c0_i32_1 = arith.constant 0 : i32
    return %c0_i32, %c0_i32_0 : i32, i32
  }
  func.func @transform_12(%arg0: i32) -> (i32, i32) {
    %c0_i32 = arith.constant 0 : i32
    %c0_i32_0 = arith.constant 0 : i32
    %c0_i32_1 = arith.constant 0 : i32
    return %c0_i32, %c0_i32_0 : i32, i32
  }
  func.func @transform_13(%arg0: i32) -> (i32, i32) {
    %c0_i32 = arith.constant 0 : i32
    %c0_i32_0 = arith.constant 0 : i32
    %c0_i32_1 = arith.constant 0 : i32
    return %c0_i32, %c0_i32_0 : i32, i32
  }
  func.func @transform_14(%arg0: i32) -> (i32, i32) {
    %c0_i32 = arith.constant 0 : i32
    %c0_i32_0 = arith.constant 0 : i32
    %c0_i32_1 = arith.constant 0 : i32
    return %c0_i32, %c0_i32_0 : i32, i32
  }
  func.func @transform_15(%arg0: i32) -> (i32, i32) {
    %c0_i32 = arith.constant 0 : i32
    %c0_i32_0 = arith.constant 0 : i32
    return %arg0, %c0_i32 : i32, i32
  }
}

</mosaic_0001>

<llo_original>
// kernel: chatglm_lora_forward.5
$region0: #{chatglm_lora_forward.5}
  #allocation0 [shape = 'u32[]', space=smem, size = 0x4, offset = 0x4, fixed_abs, tag = 'smem constant byte address 0x4 - core index']
  #allocation1 [shape = 'u32[144,128]{1,0:T(1,128)}', space=vmem, size = 0x12000, scoped, tag = 'internal scratch']
  #allocation2 [shape = 'bf16[8,128]{1,0:T(8,128)(2,1)}', space=vmem, size = 0x800, scoped, tag = 'scratch operand']
  #allocation3 [shape = 'f32[8,1]{1,0:T(8,128)}', space=vmem, size = 0x1000, scoped, tag = 'scratch operand']
  #allocation4 [shape = 'f32[8,1]{1,0:T(8,128)}', space=vmem, size = 0x1000, scoped, tag = 'scratch operand']
  #allocation5 [shape = 'f32[8,1]{1,0:T(8,128)}', space=vmem, size = 0x1000, scoped, tag = 'scratch operand']
  #allocation6 [shape = 's32[8,1]{1,0:T(8,128)}', space=vmem, size = 0x1000, scoped, tag = 'scratch operand']
  #allocation7 [shape = 'f32[8,1]{1,0:T(8,128)}', space=vmem, size = 0x1000, scoped, tag = 'scratch operand']
  %s0 = inlined_call_operand.vmem [shape: f32[16,128], index: 0, kind: input, shape index: {}]
  %s1 = inlined_call_operand.vmem [shape: f32[1,128], index: 1, kind: input, shape index: {}]
  %s2 = inlined_call_operand.vmem [shape: f32[1,128], index: 2, kind: input, shape index: {}]
  %s3 = inlined_call_operand.vmem [shape: bf16[128,256], index: 3, kind: input, shape index: {}]
  %s4 = inlined_call_operand.vmem [shape: s32[16,1], index: 4, kind: input, shape index: {}]
  %s5 = inlined_call_operand.vmem [shape: f32[16,1], index: 5, kind: output, shape index: {0}]
  %s6 = inlined_call_operand.vmem [shape: s32[16,1], index: 6, kind: output, shape index: {1}]
  %7 = xla_tuple %s5, %s6
  %s8 = sld [smem:[#allocation0]]
  $region110: #{chatglm_lora_forward.5} parent=0
    _
  %s10 = ssub.s32 1, %s8
  %s11 = scalar_select 0, %s10, %s8
  $region1: #{chatglm_lora_forward.5} parent=0
    #allocation8 [shape = 'u8[65536]{0}', space=vmem, size = 0x10000, scoped, tag = 'input window, operand 3']
    loop: start=0, step=1, limit=6
    $region2: #{chatglm_lora_forward.5} parent=1 // loop_pre_header
      _
    $region3: #{chatglm_lora_forward.5} parent=1 // loop_header
      %s13 = sphi 0, %s17
      %p14 = scmp.ge.s32.totalorder %s13, 6
      %s20 = sphi 0, %s32
      %s21 = sphi 0, %s28
      %s22 = sphi 0, %s20
      %s23 = sphi 0, %s21
      %s24 = sphi 0, %s22
      %s25 = sphi 0, %s23
      %s35 = sphi 0, %s37
      %s38 = sphi 0, %s35
      %s39 = sphi 0, %s38
      %s55 = sphi 0, %s39
      %s59 = sphi 0, %s59
      %s61 = sphi 0, %s59
      %s62 = sphi 0, %s61
      %s76 = sphi 0, %s62
      %s80 = sphi 0, %s80
      %s82 = sphi 0, %s80
      %s83 = sphi 0, %s82
      %s97 = sphi 0, %s83
      %s103 = sphi 0, %s105
      %s106 = sphi 0, %s103
      %s107 = sphi 0, %s106
      %s123 = sphi 0, %s107
      %s129 = sphi 0, %s131
      %s132 = sphi 0, %s129
      %s133 = sphi 0, %s132
      %s149 = sphi 0, %s133
      %s155 = sphi 0, %s157
      %s158 = sphi 0, %s155
      %s159 = sphi 0, %s158
      %s175 = sphi 0, %s159
      %s181 = sphi 0, %s183
      %s184 = sphi 0, %s181
      %s185 = sphi 0, %s184
      %s201 = sphi 0, %s185
    $region4: #{chatglm_lora_forward.5} parent=1 // loop_header_branch
      %16 = sbr.rel (%p14) target = $region8
    $region5: #{chatglm_lora_forward.5} parent=1 // loop_body
      %s18 = ssub.s32 %s13, 1
      %s19 = ssub.s32 %s13, 2
      %s26 = sadd.s32 1, %s21
      %p27 = scmp.ge.s32.totalorder %s26, 2
      %s28 = scalar_select %p27, 0, %s26
      %s29 = sadd.s32 1, %s20
      %s30 = scalar_select %p27, %s29, %s20
      %p31 = scmp.ge.s32.totalorder %s30, 2
      %s32 = scalar_select %p31, 0, %s30
      %s33 = ssub.s32 %s20, %s32
      %p34 = scmp.eq.s32.totalorder %s33, 0
      %s36 = sadd.s32 %s35, 1
      %s37 = scalar_select %p34, %s35, %s36
      %p40 = pneg %p34
      %p41 = scmp.eq.s32.totalorder %s13, 3
      %p42 = por %p40, %p41
      %p43 = scmp.ne.s32.totalorder %s35, %s38
      %p44 = scmp.eq.s32.totalorder %s13, 0
      %p45 = por %p43, %p44
      %p46 = scmp.ne.s32.totalorder %s35, %s38
      %p47 = scmp.eq.s32.totalorder %s18, 3
      %p48 = por %p46, %p47
      %p49 = scmp.ne.s32.totalorder %s38, %s39
      %p50 = scmp.eq.s32.totalorder %s18, 0
      %p51 = por %p49, %p50
      %p52 = scmp.ne.s32.totalorder %s38, %s39
      %p53 = scmp.eq.s32.totalorder %s19, 3
      %p54 = por %p52, %p53
      %p56 = scmp.ne.s32.totalorder %s39, %s55
      %p57 = scmp.eq.s32.totalorder %s19, 0
      %p58 = por %p56, %p57
      %s60 = sadd.s32 %s59, 1
      %p63 = scmp.eq.s32.totalorder %s13, 3
      %p64 = scmp.ne.s32.totalorder %s59, %s61
      %p65 = scmp.eq.s32.totalorder %s13, 0
      %p66 = por %p64, %p65
      %p67 = scmp.ne.s32.totalorder %s59, %s61
      %p68 = scmp.eq.s32.totalorder %s18, 3
      %p69 = por %p67, %p68
      %p70 = scmp.ne.s32.totalorder %s61, %s62
      %p71 = scmp.eq.s32.totalorder %s18, 0
      %p72 = por %p70, %p71
      %p73 = scmp.ne.s32.totalorder %s61, %s62
      %p74 = scmp.eq.s32.totalorder %s19, 3
      %p75 = por %p73, %p74
      %p77 = scmp.ne.s32.totalorder %s62, %s76
      %p78 = scmp.eq.s32.totalorder %s19, 0
      %p79 = por %p77, %p78
      %s81 = sadd.s32 %s80, 1
      %p84 = scmp.eq.s32.totalorder %s13, 3
      %p85 = scmp.ne.s32.totalorder %s80, %s82
      %p86 = scmp.eq.s32.totalorder %s13, 0
      %p87 = por %p85, %p86
      %p88 = scmp.ne.s32.totalorder %s80, %s82
      %p89 = scmp.eq.s32.totalorder %s18, 3
      %p90 = por %p88, %p89
      %p91 = scmp.ne.s32.totalorder %s82, %s83
      %p92 = scmp.eq.s32.totalorder %s18, 0
      %p93 = por %p91, %p92
      %p94 = scmp.ne.s32.totalorder %s82, %s83
      %p95 = scmp.eq.s32.totalorder %s19, 3
      %p96 = por %p94, %p95
      %p98 = scmp.ne.s32.totalorder %s83, %s97
      %p99 = scmp.eq.s32.totalorder %s19, 0
      %p100 = por %p98, %p99
      %s101 = ssub.s32 %s21, %s28
      %p102 = scmp.eq.s32.totalorder %s101, 0
      %s104 = sadd.s32 %s103, 1
      %s105 = scalar_select %p102, %s103, %s104
      %p108 = pneg %p102
      %p109 = scmp.eq.s32.totalorder %s13, 3
      %p110 = por %p108, %p109
      %p111 = scmp.ne.s32.totalorder %s103, %s106
      %p112 = scmp.eq.s32.totalorder %s13, 0
      %p113 = por %p111, %p112
      %p114 = scmp.ne.s32.totalorder %s103, %s106
      %p115 = scmp.eq.s32.totalorder %s18, 3
      %p116 = por %p114, %p115
      %p117 = scmp.ne.s32.totalorder %s106, %s107
      %p118 = scmp.eq.s32.totalorder %s18, 0
      %p119 = por %p117, %p118
      %p120 = scmp.ne.s32.totalorder %s106, %s107
      %p121 = scmp.eq.s32.totalorder %s19, 3
      %p122 = por %p120, %p121
      %p124 = scmp.ne.s32.totalorder %s107, %s123
      %p125 = scmp.eq.s32.totalorder %s19, 0
      %p126 = por %p124, %p125
      %s127 = ssub.s32 %s20, %s32
      %p128 = scmp.eq.s32.totalorder %s127, 0
      %s130 = sadd.s32 %s129, 1
      %s131 = scalar_select %p128, %s129, %s130
      %p134 = pneg %p128
      %p135 = scmp.eq.s32.totalorder %s13, 3
      %p136 = por %p134, %p135
      %p137 = scmp.ne.s32.totalorder %s129, %s132
      %p138 = scmp.eq.s32.totalorder %s13, 0
      %p139 = por %p137, %p138
      %p140 = scmp.ne.s32.totalorder %s129, %s132
      %p141 = scmp.eq.s32.totalorder %s18, 3
      %p142 = por %p140, %p141
      %p143 = scmp.ne.s32.totalorder %s132, %s133
      %p144 = scmp.eq.s32.totalorder %s18, 0
      %p145 = por %p143, %p144
      %p146 = scmp.ne.s32.totalorder %s132, %s133
      %p147 = scmp.eq.s32.totalorder %s19, 3
      %p148 = por %p146, %p147
      %p150 = scmp.ne.s32.totalorder %s133, %s149
      %p151 = scmp.eq.s32.totalorder %s19, 0
      %p152 = por %p150, %p151
      %s153 = ssub.s32 %s20, %s32
      %p154 = scmp.eq.s32.totalorder %s153, 0
      %s156 = sadd.s32 %s155, 1
      %s157 = scalar_select %p154, %s155, %s156
      %p160 = pneg %p154
      %p161 = scmp.eq.s32.totalorder %s13, 3
      %p162 = por %p160, %p161
      %p163 = scmp.ne.s32.totalorder %s155, %s158
      %p164 = scmp.eq.s32.totalorder %s13, 0
      %p165 = por %p163, %p164
      %p166 = scmp.ne.s32.totalorder %s155, %s158
      %p167 = scmp.eq.s32.totalorder %s18, 3
      %p168 = por %p166, %p167
      %p169 = scmp.ne.s32.totalorder %s158, %s159
      %p170 = scmp.eq.s32.totalorder %s18, 0
      %p171 = por %p169, %p170
      %p172 = scmp.ne.s32.totalorder %s158, %s159
      %p173 = scmp.eq.s32.totalorder %s19, 3
      %p174 = por %p172, %p173
      %p176 = scmp.ne.s32.totalorder %s159, %s175
      %p177 = scmp.eq.s32.totalorder %s19, 0
      %p178 = por %p176, %p177
      %s179 = ssub.s32 %s20, %s32
      %p180 = scmp.eq.s32.totalorder %s179, 0
      %s182 = sadd.s32 %s181, 1
      %s183 = scalar_select %p180, %s181, %s182
      %p186 = pneg %p180
      %p187 = scmp.eq.s32.totalorder %s13, 3
      %p188 = por %p186, %p187
      %p189 = scmp.ne.s32.totalorder %s181, %s184
      %p190 = scmp.eq.s32.totalorder %s13, 0
      %p191 = por %p189, %p190
      %p192 = scmp.ne.s32.totalorder %s181, %s184
      %p193 = scmp.eq.s32.totalorder %s18, 3
      %p194 = por %p192, %p193
      %p195 = scmp.ne.s32.totalorder %s184, %s185
      %p196 = scmp.eq.s32.totalorder %s18, 0
      %p197 = por %p195, %p196
      %p198 = scmp.ne.s32.totalorder %s184, %s185
      %p199 = scmp.eq.s32.totalorder %s19, 3
      %p200 = por %p198, %p199
      %p202 = scmp.ne.s32.totalorder %s185, %s201
      %p203 = scmp.eq.s32.totalorder %s19, 0
      %p204 = por %p202, %p203
      %p205 = scmp.le.s32.totalorder 1, %s13
      %p206 = scmp.lt.s32.totalorder %s13, 5
      %p207 = pnand %p205, %p206
      %p208 = pneg %p207
      // Predicated region
      $region9: #{chatglm_lora_forward.5} parent=5 // pred_check
        _
      $region10: #{chatglm_lora_forward.5} parent=5 // pred_check_branch
        %210 = sbr.rel (%p207) target = $region12
      $region11: #{chatglm_lora_forward.5} parent=5 // pred_region
        %s211 = ssub.s32 %s13, 1
        // Predicated region
        $region13: #{chatglm_lora_forward.5} parent=11 // pred_check
          %p212 = pneg %p72
        $region14: #{chatglm_lora_forward.5} parent=11 // pred_check_branch
          %214 = sbr.rel (%p212) target = $region16
        $region15: #{chatglm_lora_forward.5} parent=11 // pred_region
          _
        $region16: #{chatglm_lora_forward.5} parent=11 // pred_fallthru
          _
        // Predicated region
        $region17: #{chatglm_lora_forward.5} parent=11 // pred_check
          %p215 = pneg %p93
        $region18: #{chatglm_lora_forward.5} parent=11 // pred_check_branch
          %217 = sbr.rel (%p215) target = $region20
        $region19: #{chatglm_lora_forward.5} parent=11 // pred_region
          _
        $region20: #{chatglm_lora_forward.5} parent=11 // pred_fallthru
          _
      $region12: #{chatglm_lora_forward.5} parent=5 // pred_fallthru
        _
      %p218 = scmp.lt.s32.totalorder %s13, 4
      // Predicated region
      $region21: #{chatglm_lora_forward.5} parent=5 // pred_check
        %p219 = pneg %p218
      $region22: #{chatglm_lora_forward.5} parent=5 // pred_check_branch
        %221 = sbr.rel (%p219) target = $region24
      $region23: #{chatglm_lora_forward.5} parent=5 // pred_region
        // Predicated region
        $region25: #{chatglm_lora_forward.5} parent=23 // pred_check
          %p222 = pneg %p45
        $region26: #{chatglm_lora_forward.5} parent=23 // pred_check_branch
          %224 = sbr.rel (%p222) target = $region28
        $region27: #{chatglm_lora_forward.5} parent=23 // pred_region
          %p225 = scmp.lt.s32.totalorder %s20, 1
          %s226 = scalar_select %p225, %s20, 1
          %s227 = smul.addr %s226, 8
          %s228 = scalar_lea.vmem %s0, %s227
        $region28: #{chatglm_lora_forward.5} parent=23 // pred_fallthru
          _
        // Predicated region
        $region29: #{chatglm_lora_forward.5} parent=23 // pred_check
          %p229 = pneg %p113
        $region30: #{chatglm_lora_forward.5} parent=23 // pred_check_branch
          %231 = sbr.rel (%p229) target = $region32
        $region31: #{chatglm_lora_forward.5} parent=23 // pred_region
          %s232 = sand.u32 %s103, 1
          %s233 = sand.u32 %s103, 1
          %s234 = smul.addr %s233, 64
          %s235 = scalar_lea.vmem [#allocation8], %s234
          %s236 = smul.addr %s21, 4
          %s237 = scalar_lea.vmem %s3, %s236
          // Predicated region
          $region33: #{chatglm_lora_forward.5} parent=31 // pred_check
            _
          $region34: #{chatglm_lora_forward.5} parent=31 // pred_check_branch
            %239 = sbr.rel (0) target = $region36
          $region35: #{chatglm_lora_forward.5} parent=31 // pred_region
            // Predicated region
            $region37: #{chatglm_lora_forward.5} parent=35 // pred_check
              _
            $region38: #{chatglm_lora_forward.5} parent=35 // pred_check_branch
              %241 = sbr.rel target = $region40
            $region39: #{chatglm_lora_forward.5} parent=35 // pred_region
              // Predicated region
              $region52: #{chatglm_lora_forward.5} parent=39 // pred_check
                _
              $region53: #{chatglm_lora_forward.5} parent=39 // pred_check_branch
                %286 = sbr.rel (0) target = $region55
              $region54: #{chatglm_lora_forward.5} parent=39 // pred_region
                loop: start=0, step=1, limit=1
                $region56: #{chatglm_lora_forward.5} parent=54 // loop_pre_header
                  _
                $region57: #{chatglm_lora_forward.5} parent=54 // loop_header
                  %s288 = sphi 0, %s292
                  %p289 = scmp.ge.s32.totalorder %s288, 1
                  %s293 = sphi %s237, %s237
                  %s294 = sphi %s235, %s235
                $region58: #{chatglm_lora_forward.5} parent=54 // loop_header_branch
                  %291 = sbr.rel (%p289) target = $region62
                $region59: #{chatglm_lora_forward.5} parent=54 // loop_body
                  _
                $region60: #{chatglm_lora_forward.5} parent=54 // loop_footer
                  %s292 = sadd.s32 1, %s288
                $region61: #{chatglm_lora_forward.5} parent=54 // loop_footer_branch
                  %287 = sbr.rel target = $region57
                $region62: #{chatglm_lora_forward.5} parent=54 // loop_exit
                  _
                loop: start=0, step=1, limit=1
                $region63: #{chatglm_lora_forward.5} parent=54 // loop_pre_header
                  _
                $region64: #{chatglm_lora_forward.5} parent=54 // loop_header
                  %s297 = sphi 0, %s301
                  %p298 = scmp.ge.s32.totalorder %s297, 1
                  %s302 = sphi %s237, %s237
                  %s303 = sphi %s235, %s235
                $region65: #{chatglm_lora_forward.5} parent=54 // loop_header_branch
                  %300 = sbr.rel (%p298) target = $region69
                $region66: #{chatglm_lora_forward.5} parent=54 // loop_body
                  %v304 = vld [vmem:[%s302] sm:$0xf]
                  %305 = vst [vmem:[%s303] sm:$0xf] %v304
                  %v306 = vld [vmem:[%s302 + $0x8] sm:$0xf]
                  %307 = vst [vmem:[%s303 + $0x4] sm:$0xf] %v306
                  %v308 = vld [vmem:[%s302 + $0x10] sm:$0xf]
                  %309 = vst [vmem:[%s303 + $0x8] sm:$0xf] %v308
                  %v310 = vld [vmem:[%s302 + $0x18] sm:$0xf]
                  %311 = vst [vmem:[%s303 + $0xc] sm:$0xf] %v310
                  %v312 = vld [vmem:[%s302 + $0x20] sm:$0xf]
                  %313 = vst [vmem:[%s303 + $0x10] sm:$0xf] %v312
                  %v314 = vld [vmem:[%s302 + $0x28] sm:$0xf]
                  %315 = vst [vmem:[%s303 + $0x14] sm:$0xf] %v314
                  %v316 = vld [vmem:[%s302 + $0x30] sm:$0xf]
                  %317 = vst [vmem:[%s303 + $0x18] sm:$0xf] %v316
                  %v318 = vld [vmem:[%s302 + $0x38] sm:$0xf]
                  %319 = vst [vmem:[%s303 + $0x1c] sm:$0xf] %v318
                  %v320 = vld [vmem:[%s302 + $0x40] sm:$0xf]
                  %321 = vst [vmem:[%s303 + $0x20] sm:$0xf] %v320
                  %v322 = vld [vmem:[%s302 + $0x48] sm:$0xf]
                  %323 = vst [vmem:[%s303 + $0x24] sm:$0xf] %v322
                  %v324 = vld [vmem:[%s302 + $0x50] sm:$0xf]
                  %325 = vst [vmem:[%s303 + $0x28] sm:$0xf] %v324
                  %v326 = vld [vmem:[%s302 + $0x58] sm:$0xf]
                  %327 = vst [vmem:[%s303 + $0x2c] sm:$0xf] %v326
                  %v328 = vld [vmem:[%s302 + $0x60] sm:$0xf]
                  %329 = vst [vmem:[%s303 + $0x30] sm:$0xf] %v328
                  %v330 = vld [vmem:[%s302 + $0x68] sm:$0xf]
                  %331 = vst [vmem:[%s303 + $0x34] sm:$0xf] %v330
                  %v332 = vld [vmem:[%s302 + $0x70] sm:$0xf]
                  %333 = vst [vmem:[%s303 + $0x38] sm:$0xf] %v332
                  %v334 = vld [vmem:[%s302 + $0x78] sm:$0xf]
                  %335 = vst [vmem:[%s303 + $0x3c] sm:$0xf] %v334
                $region67: #{chatglm_lora_forward.5} parent=54 // loop_footer
                  %s301 = sadd.s32 1, %s297
                $region68: #{chatglm_lora_forward.5} parent=54 // loop_footer_branch
                  %296 = sbr.rel target = $region64
                $region69: #{chatglm_lora_forward.5} parent=54 // loop_exit
                  _
              $region55: #{chatglm_lora_forward.5} parent=39 // pred_fallthru
                _
            $region40: #{chatglm_lora_forward.5} parent=35 // pred_fallthru
              _
            // Predicated region
            $region41: #{chatglm_lora_forward.5} parent=35 // pred_check
              _
            $region42: #{chatglm_lora_forward.5} parent=35 // pred_check_branch
              %243 = sbr.rel (0) target = $region44
            $region43: #{chatglm_lora_forward.5} parent=35 // pred_region
              loop: start=0, step=1, limit=1
              $region45: #{chatglm_lora_forward.5} parent=43 // loop_pre_header
                _
              $region46: #{chatglm_lora_forward.5} parent=43 // loop_header
                %s246 = sphi 0, %s250
                %p247 = scmp.ge.s32.totalorder %s246, 1
                %s251 = sphi %s237, %s237
                %s252 = sphi %s235, %s235
              $region47: #{chatglm_lora_forward.5} parent=43 // loop_header_branch
                %249 = sbr.rel (%p247) target = $region51
              $region48: #{chatglm_lora_forward.5} parent=43 // loop_body
                %v253 = vld [vmem:[%s251] sm:$0xf]
                %254 = vst [vmem:[%s252] sm:$0xf] %v253
                %v255 = vld [vmem:[%s251 + $0x8] sm:$0xf]
                %256 = vst [vmem:[%s252 + $0x4] sm:$0xf] %v255
                %v257 = vld [vmem:[%s251 + $0x10] sm:$0xf]
                %258 = vst [vmem:[%s252 + $0x8] sm:$0xf] %v257
                %v259 = vld [vmem:[%s251 + $0x18] sm:$0xf]
                %260 = vst [vmem:[%s252 + $0xc] sm:$0xf] %v259
                %v261 = vld [vmem:[%s251 + $0x20] sm:$0xf]
                %262 = vst [vmem:[%s252 + $0x10] sm:$0xf] %v261
                %v263 = vld [vmem:[%s251 + $0x28] sm:$0xf]
                %264 = vst [vmem:[%s252 + $0x14] sm:$0xf] %v263
                %v265 = vld [vmem:[%s251 + $0x30] sm:$0xf]
                %266 = vst [vmem:[%s252 + $0x18] sm:$0xf] %v265
                %v267 = vld [vmem:[%s251 + $0x38] sm:$0xf]
                %268 = vst [vmem:[%s252 + $0x1c] sm:$0xf] %v267
                %v269 = vld [vmem:[%s251 + $0x40] sm:$0xf]
                %270 = vst [vmem:[%s252 + $0x20] sm:$0xf] %v269
                %v271 = vld [vmem:[%s251 + $0x48] sm:$0xf]
                %272 = vst [vmem:[%s252 + $0x24] sm:$0xf] %v271
                %v273 = vld [vmem:[%s251 + $0x50] sm:$0xf]
                %274 = vst [vmem:[%s252 + $0x28] sm:$0xf] %v273
                %v275 = vld [vmem:[%s251 + $0x58] sm:$0xf]
                %276 = vst [vmem:[%s252 + $0x2c] sm:$0xf] %v275
                %v277 = vld [vmem:[%s251 + $0x60] sm:$0xf]
                %278 = vst [vmem:[%s252 + $0x30] sm:$0xf] %v277
                %v279 = vld [vmem:[%s251 + $0x68] sm:$0xf]
                %280 = vst [vmem:[%s252 + $0x34] sm:$0xf] %v279
                %v281 = vld [vmem:[%s251 + $0x70] sm:$0xf]
                %282 = vst [vmem:[%s252 + $0x38] sm:$0xf] %v281
                %v283 = vld [vmem:[%s251 + $0x78] sm:$0xf]
                %284 = vst [vmem:[%s252 + $0x3c] sm:$0xf] %v283
              $region49: #{chatglm_lora_forward.5} parent=43 // loop_footer
                %s250 = sadd.s32 1, %s246
              $region50: #{chatglm_lora_forward.5} parent=43 // loop_footer_branch
                %245 = sbr.rel target = $region46
              $region51: #{chatglm_lora_forward.5} parent=43 // loop_exit
                _
            $region44: #{chatglm_lora_forward.5} parent=35 // pred_fallthru
              _
          $region36: #{chatglm_lora_forward.5} parent=31 // pred_fallthru
            _
          %336 = vnop
        $region32: #{chatglm_lora_forward.5} parent=23 // pred_fallthru
          _
        // Predicated region
        $region70: #{chatglm_lora_forward.5} parent=23 // pred_check
          %p337 = pneg %p139
        $region71: #{chatglm_lora_forward.5} parent=23 // pred_check_branch
          %339 = sbr.rel (%p337) target = $region73
        $region72: #{chatglm_lora_forward.5} parent=23 // pred_region
          %p340 = scmp.lt.s32.totalorder %s20, 1
          %s341 = scalar_select %p340, %s20, 1
          %s342 = smul.addr %s341, 8
          %s343 = scalar_lea.vmem %s4, %s342
        $region73: #{chatglm_lora_forward.5} parent=23 // pred_fallthru
          _
      $region24: #{chatglm_lora_forward.5} parent=5 // pred_fallthru
        _
      %p344 = scmp.le.s32.totalorder 1, %s13
      %p345 = scmp.lt.s32.totalorder %s13, 5
      %p346 = pnand %p344, %p345
      %p347 = pneg %p346
      // Predicated region
      $region74: #{chatglm_lora_forward.5} parent=5 // pred_check
        _
      $region75: #{chatglm_lora_forward.5} parent=5 // pred_check_branch
        %349 = sbr.rel (%p346) target = $region77
      $region76: #{chatglm_lora_forward.5} parent=5 // pred_region
        %s350 = ssub.s32 %s13, 1
        %s351 = sand.u32 %s106, 1
        %s352 = sand.u32 %s106, 1
        %s353 = smul.addr %s352, 64
        %s354 = scalar_lea.vmem [#allocation8], %s353
        // Predicated region
        $region78: #{chatglm_lora_forward.5} parent=76 // pred_check
          %p355 = pneg %p119
        $region79: #{chatglm_lora_forward.5} parent=76 // pred_check_branch
          %357 = sbr.rel (%p355) target = $region81
        $region80: #{chatglm_lora_forward.5} parent=76 // pred_region
          _
        $region81: #{chatglm_lora_forward.5} parent=76 // pred_fallthru
          _
        %p358 = scmp.lt.s32.totalorder %s22, 1
        %s359 = scalar_select %p358, %s22, 1
        %s360 = smul.addr %s359, 8
        %s361 = scalar_lea.vmem %s0, %s360
        %p362 = pneg %p51
        %p363 = pneg %p48
        %p364 = pneg %p72
        %p365 = pneg %p69
        %p366 = pneg %p93
        %p367 = pneg %p90
        %s368 = sand.u32 %s106, 1
        %s369 = sand.u32 %s106, 1
        %s370 = smul.addr %s369, 64
        %s371 = scalar_lea.vmem [#allocation8], %s370
        %p372 = pneg %p119
        %p373 = pneg %p116
        %p374 = scmp.lt.s32.totalorder %s22, 1
        %s375 = scalar_select %p374, %s22, 1
        %s376 = smul.addr %s375, 8
        %s377 = scalar_lea.vmem %s4, %s376
        %p378 = pneg %p145
        %p379 = pneg %p142
        %p380 = pneg %p171
        %p381 = pneg %p168
        %p382 = scmp.lt.s32.totalorder %s22, 1
        %s383 = scalar_select %p382, %s22, 1
        %s384 = smul.addr %s383, 8
        %s385 = scalar_lea.vmem %s5, %s384
        %p386 = pneg %p197
        %p387 = pneg %p194
        %p388 = scmp.lt.s32.totalorder %s22, 1
        %s389 = scalar_select %p388, %s22, 1
        %s390 = smul.addr %s389, 8
        %s391 = scalar_lea.vmem %s6, %s390
        %p392 = scmp.lt.s32.totalorder %s22, 1
        %s393 = scalar_select %p392, %s22, 1
        %s394 = smul.addr %s393, 8
        %s395 = scalar_lea.vmem %s0, %s394
        %p396 = scmp.lt.s32.totalorder %s22, 1
        %s397 = scalar_select %p396, %s22, 1
        %s398 = smul.addr %s397, 8
        %s399 = scalar_lea.vmem %s4, %s398
        %p400 = scmp.lt.s32.totalorder %s22, 1
        %s401 = scalar_select %p400, %s22, 1
        %s402 = smul.addr %s401, 8
        %s403 = scalar_lea.vmem %s5, %s402
        %p404 = scmp.lt.s32.totalorder %s22, 1
        %s405 = scalar_select %p404, %s22, 1
        %s406 = smul.addr %s405, 8
        %s407 = scalar_lea.vmem %s6, %s406
        %p409 = scmp.eq.s32.totalorder %s23, 0
        // Predicated region
        $region82: #{chatglm_lora_forward.5} parent=76 // pred_check
          %p410 = pneg %p409
        $region83: #{chatglm_lora_forward.5} parent=76 // pred_check_branch
          %412 = sbr.rel (%p410) target = $region85
        $region84: #{chatglm_lora_forward.5} parent=76 // pred_region
          %v413 = vld [vmem:[%s395] sm:$0xff]
          %v414 = vld [vmem:[%s1] sm:$0x1]
          %v415 = vld [vmem:[%s2] sm:$0x1]
          %416 = vadd.xlane.f32.xlu0 %v413
          %v417 = vpop.xlane.xlu0 %416
          %v418 = vrcp.pop 128.0
          %v419 = vmul.f32 %v417, %v418
          %v420 = vsub.f32 %v413, %v419
          %v421 = vmul.f32 %v420, %v420
          %422 = vadd.xlane.f32.xlu0 %v421
          %v423 = vpop.xlane.xlu0 %422
          %v424 = vmul.f32 %v423, %v418
          %v425 = vadd.f32 %v424, 1e-05
          %v426 = vrsqrt.pop %v425
          %v427 = vmul.f32 %v420, %v426
          %v429 = vlaneseq
          %v430 = vshrl.u32 %v429, 7
          %v431 = vsub.s32 0, %v430
          %v432 = vrot.slane %v414, %v431
          %v434 = vmul.f32 %v427, %v432
          %v436 = vlaneseq
          %v437 = vshrl.u32 %v436, 7
          %v438 = vsub.s32 0, %v437
          %v439 = vrot.slane %v415, %v438
          %v441 = vadd.f32 %v434, %v439
          %v442 = vpack.c.bf16 %v441, %v441
          %443 = vst [vmem:[#allocation2] sm:$0xf] %v442
          %vm444 = vcmask 7168
          %445 = vst.msk [vmem:[#allocation3] sm:$0xff] %vm444, -inf
          %446 = vst.msk [vmem:[#allocation4] sm:$0xff] %vm444, 0.0
          %447 = vst.msk [vmem:[#allocation5] sm:$0xff] %vm444, -inf
          %448 = vst.msk [vmem:[#allocation6] sm:$0xff] %vm444, 0
          %449 = vst.msk [vmem:[#allocation7] sm:$0xff] %vm444, 0.0
        $region85: #{chatglm_lora_forward.5} parent=76 // pred_fallthru
          _
        %v450 = vld [vmem:[#allocation2] sm:$0xf]
        %v451 = vld [vmem:[%s354] sm:$0xf]
        %v452 = vld [vmem:[%s354 + $0x4] sm:$0xf]
        %v453 = vld [vmem:[%s354 + $0x8] sm:$0xf]
        %v454 = vld [vmem:[%s354 + $0xc] sm:$0xf]
        %v455 = vld [vmem:[%s354 + $0x10] sm:$0xf]
        %v456 = vld [vmem:[%s354 + $0x14] sm:$0xf]
        %v457 = vld [vmem:[%s354 + $0x18] sm:$0xf]
        %v458 = vld [vmem:[%s354 + $0x1c] sm:$0xf]
        %v459 = vld [vmem:[%s354 + $0x20] sm:$0xf]
        %v460 = vld [vmem:[%s354 + $0x24] sm:$0xf]
        %v461 = vld [vmem:[%s354 + $0x28] sm:$0xf]
        %v462 = vld [vmem:[%s354 + $0x2c] sm:$0xf]
        %v463 = vld [vmem:[%s354 + $0x30] sm:$0xf]
        %v464 = vld [vmem:[%s354 + $0x34] sm:$0xf]
        %v465 = vld [vmem:[%s354 + $0x38] sm:$0xf]
        %v466 = vld [vmem:[%s354 + $0x3c] sm:$0xf]
        %v483 = vunpack.c.l.b16 %v451
        %v484 = vunpack.c.l.b16 %v452
        %v485 = vunpack.c.l.b16 %v453
        %v486 = vunpack.c.l.b16 %v454
        %v487 = vunpack.c.l.b16 %v455
        %v488 = vunpack.c.l.b16 %v456
        %v489 = vunpack.c.l.b16 %v457
        %v490 = vunpack.c.l.b16 %v458
        %v491 = vunpack.c.l.b16 %v459
        %v492 = vunpack.c.l.b16 %v460
        %v493 = vunpack.c.l.b16 %v461
        %v494 = vunpack.c.l.b16 %v462
        %v495 = vunpack.c.l.b16 %v463
        %v496 = vunpack.c.l.b16 %v464
        %v497 = vunpack.c.l.b16 %v465
        %v498 = vunpack.c.l.b16 %v466
        %v499 = vpack.c.b16 %v484, %v483
        %v500 = vpack.c.b16 %v486, %v485
        %v501 = vpack.c.b16 %v488, %v487
        %v502 = vpack.c.b16 %v490, %v489
        %v503 = vpack.c.b16 %v492, %v491
        %v504 = vpack.c.b16 %v494, %v493
        %v505 = vpack.c.b16 %v496, %v495
        %v506 = vpack.c.b16 %v498, %v497
        %515 = vmatprep.subr.bf16.mxu0 0
        %516 = vmatpush1.bf16.msra.mxu0 %v499
        %517 = vmatprep.subr.bf16.mxu0 0
        %518 = vmatpush1.bf16.msra.mxu0 %v500
        %519 = vmatprep.subr.bf16.mxu0 0
        %520 = vmatpush1.bf16.msra.mxu0 %v501
        %521 = vmatprep.subr.bf16.mxu0 0
        %522 = vmatpush1.bf16.msra.mxu0 %v502
        %523 = vmatprep.subr.bf16.mxu0 0
        %524 = vmatpush1.bf16.msra.mxu0 %v503
        %525 = vmatprep.subr.bf16.mxu0 0
        %526 = vmatpush1.bf16.msra.mxu0 %v504
        %527 = vmatprep.subr.bf16.mxu0 0
        %528 = vmatpush1.bf16.msra.mxu0 %v505
        %529 = vmatprep.subr.bf16.mxu0 0
        %530 = vmatpush1.bf16.msra.mxu0 %v506
        %531 = vmatprep.subr.bf16.mxu0 0
        %532 = vmatpush1.bf16.msra.mxu0 0
        %533 = vmatprep.subr.bf16.mxu0 0
        %534 = vmatpush1.bf16.msra.mxu0 0
        %535 = vmatprep.subr.bf16.mxu0 0
        %536 = vmatpush1.bf16.msra.mxu0 0
        %537 = vmatprep.subr.bf16.mxu0 0
        %538 = vmatpush1.bf16.msra.mxu0 0
        %539 = vmatprep.subr.bf16.mxu0 0
        %540 = vmatpush1.bf16.msra.mxu0 0
        %541 = vmatprep.subr.bf16.mxu0 0
        %542 = vmatpush1.bf16.msra.mxu0 0
        %543 = vmatprep.subr.bf16.mxu0 0
        %544 = vmatpush1.bf16.msra.mxu0 0
        %545 = vmatprep.subr.bf16.mxu0 0
        %546 = vmatpush1.bf16.msra.mxu0 0
        %547 = vmatprep.mubr.bf16.mxu0 0
        %548 = vmatmul.mubr.bf16.gmra.mrb[0].mxu0 %v450
        %v549 = vpop.f32.mrb[0].mxu0
        %v550 = vadd.f32 0.0, %v549
        %v551 = vpop.f32.mrb[0].mxu0
        %v552 = vpop.f32.mrb[0].mxu0
        %v553 = vpop.f32.mrb[0].mxu0
        %554 = vdwg.mxu0
        %v555 = vlaneseq
        %v556 = vand.u32 %v555, 127
        %s557 = smul.u32 %s23, 128
        %v558 = vstv %s557
        %v559 = vadd.s32 %v556, %v558
        %560 = vmax.xlane.f32.xlu0 %v550
        %v561 = vpop.xlane.xlu0 %560
        %v562 = vld [vmem:[#allocation3] sm:$0xff]
        %v563 = vmax.f32 %v562, %v561
        %v564 = vld [vmem:[#allocation4] sm:$0xff]
        %v565 = vsub.f32 %v562, %v563
        %v566 = vmul.f32 %v565, 1.442695
        %v567 = vpow.pop %v566
        %v568 = vmul.f32 %v564, %v567
        %570 = vset.pattern.permute.xlu0 0
        %571 = vperm.xlu0 %570, %v563
        %v572 = vpop.permute.xlu0 %571
        %v574 = vsub.f32 %v550, %v572
        %v575 = vmul.f32 %v574, 1.442695
        %v576 = vpow.pop %v575
        %577 = vadd.xlane.f32.xlu0 %v576
        %v578 = vpop.xlane.xlu0 %577
        %v579 = vadd.f32 %v568, %v578
        %vm580 = vcmask 7168
        %581 = vst.msk [vmem:[#allocation4] sm:$0xff] %vm580, %v579
        %582 = vst.msk [vmem:[#allocation3] sm:$0xff] %vm580, %v563
        %vm583 = vcmp.eq.f32.partialorder %v550, %v561
        %v584 = vsel %vm583, %v559, 2147483647
        %v585 = vand.u32 %v584, 65535
        %v586 = vshra.s32 %v584, 16
        %v587 = vcvt.s32.f32 %v585
        %v588 = vcvt.s32.f32 %v586
        %589 = vmin.xlane.f32.xlu0 %v588
        %v590 = vpop.xlane.xlu0 %589
        %vm591 = vcmp.eq.f32.partialorder %v588, %v590
        %v592 = vsel %vm591, %v587, inf
        %593 = vmin.xlane.f32.xlu0 %v592
        %v594 = vpop.xlane.xlu0 %593
        %v595 = vcvt.f32.s32 %v594
        %v596 = vcvt.f32.s32 %v590
        %v597 = vshll.u32 %v596, 16
        %v598 = vadd.s32 %v597, %v595
        %v599 = vld [vmem:[#allocation5] sm:$0xff]
        %vm600 = vcmp.gt.f32.partialorder %v561, %v599
        %v601 = vld [vmem:[#allocation6] sm:$0xff]
        %v602 = vsel %vm600, %v598, %v601
        %603 = vst.msk [vmem:[#allocation6] sm:$0xff] %vm580, %v602
        %v604 = vld [vmem:[#allocation5] sm:$0xff]
        %v605 = vsel %vm600, %v561, %v604
        %606 = vst.msk [vmem:[#allocation5] sm:$0xff] %vm580, %v605
        %v607 = vld [vmem:[%s399] sm:$0xff]
        %v608 = vld [vmem:[#allocation7] sm:$0xff]
        %609 = vset.pattern.permute.xlu0 0
        %610 = vperm.xlu0 %609, %v607
        %v611 = vpop.permute.xlu0 %610
        %vm612 = vcmp.eq.s32.totalorder %v559, %v611
        %v613 = vsel %vm612, %v550, 0.0
        %614 = vadd.xlane.f32.xlu0 %v613
        %v615 = vpop.xlane.xlu0 %614
        %v616 = vadd.f32 %v608, %v615
        %617 = vst.msk [vmem:[#allocation7] sm:$0xff] %vm580, %v616
        %p618 = scmp.eq.s32.totalorder %s23, 1
        // Predicated region
        $region86: #{chatglm_lora_forward.5} parent=76 // pred_check
          %p619 = pneg %p618
        $region87: #{chatglm_lora_forward.5} parent=76 // pred_check_branch
          %621 = sbr.rel (%p619) target = $region89
        $region88: #{chatglm_lora_forward.5} parent=76 // pred_region
          %v622 = vld [vmem:[#allocation3] sm:$0xff]
          %v623 = vld [vmem:[#allocation4] sm:$0xff]
          %v624 = vlog2.pop %v623
          %v625 = vmul.f32 %v624, 0.6931472
          %v626 = vadd.f32 %v622, %v625
          %v627 = vld [vmem:[#allocation7] sm:$0xff]
          %v628 = vsub.f32 %v626, %v627
          %v629 = vld [vmem:[%s399] sm:$0xff]
          %vm630 = vcmp.ge.s32.totalorder %v629, 0
          %v631 = vsel %vm630, 1, 0
          %v632 = vcvt.s32.f32 %v631
          %v633 = vmul.f32 %v628, %v632
          %634 = vst.msk [vmem:[%s403] sm:$0xff] %vm580, %v633
          %v635 = vld [vmem:[#allocation6] sm:$0xff]
          %636 = vst.msk [vmem:[%s407] sm:$0xff] %vm580, %v635
        $region89: #{chatglm_lora_forward.5} parent=76 // pred_fallthru
          _
        %p637 = scmp.lt.s32.totalorder %s22, 1
        %s638 = scalar_select %p637, %s22, 1
        %s639 = smul.addr %s638, 8
        %s640 = scalar_lea.vmem %s5, %s639
        %p641 = scmp.lt.s32.totalorder %s22, 1
        %s642 = scalar_select %p641, %s22, 1
        %s643 = smul.addr %s642, 8
        %s644 = scalar_lea.vmem %s6, %s643
        // Predicated region
        $region90: #{chatglm_lora_forward.5} parent=76 // pred_check
          %p645 = pneg %p168
        $region91: #{chatglm_lora_forward.5} parent=76 // pred_check_branch
          %647 = sbr.rel (%p645) target = $region93
        $region92: #{chatglm_lora_forward.5} parent=76 // pred_region
          _
        $region93: #{chatglm_lora_forward.5} parent=76 // pred_fallthru
          _
        // Predicated region
        $region94: #{chatglm_lora_forward.5} parent=76 // pred_check
          %p648 = pneg %p194
        $region95: #{chatglm_lora_forward.5} parent=76 // pred_check_branch
          %650 = sbr.rel (%p648) target = $region97
        $region96: #{chatglm_lora_forward.5} parent=76 // pred_region
          _
        $region97: #{chatglm_lora_forward.5} parent=76 // pred_fallthru
          _
      $region77: #{chatglm_lora_forward.5} parent=5 // pred_fallthru
        _
      %p651 = scmp.le.s32.totalorder 2, %s13
      // Predicated region
      $region98: #{chatglm_lora_forward.5} parent=5 // pred_check
        %p652 = pneg %p651
      $region99: #{chatglm_lora_forward.5} parent=5 // pred_check_branch
        %654 = sbr.rel (%p652) target = $region101
      $region100: #{chatglm_lora_forward.5} parent=5 // pred_region
        %s655 = ssub.s32 %s13, 2
        // Predicated region
        $region102: #{chatglm_lora_forward.5} parent=100 // pred_check
          %p656 = pneg %p174
        $region103: #{chatglm_lora_forward.5} parent=100 // pred_check_branch
          %658 = sbr.rel (%p656) target = $region105
        $region104: #{chatglm_lora_forward.5} parent=100 // pred_region
          %p659 = scmp.lt.s32.totalorder %s24, 1
          %s660 = scalar_select %p659, %s24, 1
          %s661 = smul.addr %s660, 8
          %s662 = scalar_lea.vmem %s5, %s661
        $region105: #{chatglm_lora_forward.5} parent=100 // pred_fallthru
          _
        // Predicated region
        $region106: #{chatglm_lora_forward.5} parent=100 // pred_check
          %p663 = pneg %p200
        $region107: #{chatglm_lora_forward.5} parent=100 // pred_check_branch
          %665 = sbr.rel (%p663) target = $region109
        $region108: #{chatglm_lora_forward.5} parent=100 // pred_region
          %p666 = scmp.lt.s32.totalorder %s24, 1
          %s667 = scalar_select %p666, %s24, 1
          %s668 = smul.addr %s667, 8
          %s669 = scalar_lea.vmem %s6, %s668
        $region109: #{chatglm_lora_forward.5} parent=100 // pred_fallthru
          _
      $region101: #{chatglm_lora_forward.5} parent=5 // pred_fallthru
        _
    $region6: #{chatglm_lora_forward.5} parent=1 // loop_footer
      %s17 = sadd.s32 1, %s13
    $region7: #{chatglm_lora_forward.5} parent=1 // loop_footer_branch
      %12 = sbr.rel target = $region3
    $region8: #{chatglm_lora_forward.5} parent=1 // loop_exit
      _

// kernel: chatglm_lora_forward.3
$region0: #{chatglm_lora_forward.3}
  #allocation0 [shape = 'u32[]', space=smem, size = 0x4, offset = 0x4, fixed_abs, tag = 'smem constant byte address 0x4 - core index']
  #allocation1 [shape = 'u32[144,128]{1,0:T(1,128)}', space=vmem, size = 0x12000, scoped, tag = 'internal scratch']
  %s0 = inlined_call_operand.vmem [shape: f32[16,128], index: 0, kind: input, shape index: {}]
  %s1 = inlined_call_operand.vmem [shape: f32[1,128], index: 1, kind: input, shape index: {}]
  %s2 = inlined_call_operand.vmem [shape: f32[1,128], index: 2, kind: input, shape index: {}]
  %s3 = inlined_call_operand.vmem [shape: bf16[128,384], index: 3, kind: input, shape index: {}]
  %s4 = inlined_call_operand.vmem [shape: f32[1,384], index: 4, kind: input, shape index: {}]
  %s5 = inlined_call_operand.vmem [shape: f32[128,8], index: 5, kind: input, shape index: {}]
  %s6 = inlined_call_operand.vmem [shape: f32[8,384], index: 6, kind: input, shape index: {}]
  %s7 = inlined_call_operand.vmem [shape: bf16[128,128], index: 7, kind: input, shape index: {}]
  %s8 = inlined_call_operand.vmem [shape: f32[1,128], index: 8, kind: input, shape index: {}]
  %s9 = inlined_call_operand.hbm [shape: f32[1,128], index: 9, kind: input, shape index: {}]
  %s10 = inlined_call_operand.hbm [shape: f32[1,128], index: 10, kind: input, shape index: {}]
  %s11 = inlined_call_operand.vmem [shape: bf16[128,256], index: 11, kind: input, shape index: {}]
  %s12 = inlined_call_operand.vmem [shape: f32[1,256], index: 12, kind: input, shape index: {}]
  %s13 = inlined_call_operand.hbm [shape: bf16[256,128], index: 13, kind: input, shape index: {}]
  %s14 = inlined_call_operand.hbm [shape: f32[1,128], index: 14, kind: input, shape index: {}]
  %s15 = inlined_call_operand.vmem [shape: f32[16,128], index: 15, kind: output, shape index: {}]
  %s16 = sld [smem:[#allocation0]]
  $region109: #{chatglm_lora_forward.3} parent=0
    _
  %s18 = ssub.s32 1, %s16
  %s19 = scalar_select 0, %s18, %s16
  $region1: #{chatglm_lora_forward.3} parent=0
    #allocation2 [shape = 'u8[512]{0}', space=vmem, size = 0x400, scoped, tag = 'input window, operand 9, single buffered']
    #allocation3 [shape = 's32[2]{0}', space=sflag, size = 0x8, scoped, tag = 'scoped memory for chatglm_lora_forward.3']
    #allocation4 [shape = 'u8[512]{0}', space=vmem, size = 0x400, scoped, tag = 'input window, operand 10, single buffered']
    #allocation5 [shape = 's32[1]{0}', space=sflag, size = 0x4, scoped, tag = 'scoped memory for chatglm_lora_forward.3']
    #allocation6 [shape = 'u8[65536]{0}', space=vmem, size = 0x10000, scoped, tag = 'input window, operand 13, single buffered']
    #allocation7 [shape = 'u8[512]{0}', space=vmem, size = 0x400, scoped, tag = 'input window, operand 14, single buffered']
    #allocation8 [shape = 's32[1]{0}', space=sflag, size = 0x4, scoped, tag = 'scoped memory for chatglm_lora_forward.3']
    %20 = vsyncpa [#allocation3], 0
    %21 = vsyncpa [#allocation5], 0
    %22 = vsyncpa [#allocation8], 0
    loop: start=0, step=1, limit=4
    $region2: #{chatglm_lora_forward.3} parent=1 // loop_pre_header
      _
    $region3: #{chatglm_lora_forward.3} parent=1 // loop_header
      %s24 = sphi 0, %s28
      %p25 = scmp.ge.s32.totalorder %s24, 4
      %s34 = sphi 0, %s36
      %s37 = sphi 0, %s34
      %s38 = sphi 0, %s37
      %s54 = sphi 0, %s38
      %s58 = sphi 0, %s58
      %s60 = sphi 0, %s58
      %s61 = sphi 0, %s60
      %s75 = sphi 0, %s61
      %s79 = sphi 0, %s79
      %s81 = sphi 0, %s79
      %s82 = sphi 0, %s81
      %s96 = sphi 0, %s82
      %s100 = sphi 0, %s100
      %s102 = sphi 0, %s100
      %s103 = sphi 0, %s102
      %s117 = sphi 0, %s103
      %s121 = sphi 0, %s121
      %s123 = sphi 0, %s121
      %s124 = sphi 0, %s123
      %s138 = sphi 0, %s124
      %s142 = sphi 0, %s142
      %s144 = sphi 0, %s142
      %s145 = sphi 0, %s144
      %s159 = sphi 0, %s145
      %s163 = sphi 0, %s163
      %s165 = sphi 0, %s163
      %s166 = sphi 0, %s165
      %s180 = sphi 0, %s166
      %s184 = sphi 0, %s184
      %s186 = sphi 0, %s184
      %s187 = sphi 0, %s186
      %s201 = sphi 0, %s187
      %s205 = sphi 0, %s205
      %s207 = sphi 0, %s205
      %s208 = sphi 0, %s207
      %s222 = sphi 0, %s208
      %s226 = sphi 0, %s226
      %s228 = sphi 0, %s226
      %s229 = sphi 0, %s228
      %s243 = sphi 0, %s229
      %s247 = sphi 0, %s247
      %s249 = sphi 0, %s247
      %s250 = sphi 0, %s249
      %s264 = sphi 0, %s250
      %s268 = sphi 0, %s268
      %s270 = sphi 0, %s268
      %s271 = sphi 0, %s270
      %s285 = sphi 0, %s271
      %s289 = sphi 0, %s289
      %s291 = sphi 0, %s289
      %s292 = sphi 0, %s291
      %s306 = sphi 0, %s292
      %s310 = sphi 0, %s310
      %s312 = sphi 0, %s310
      %s313 = sphi 0, %s312
      %s327 = sphi 0, %s313
      %s331 = sphi 0, %s331
      %s333 = sphi 0, %s331
      %s334 = sphi 0, %s333
      %s348 = sphi 0, %s334
      %s354 = sphi 0, %s356
      %s357 = sphi 0, %s354
      %s358 = sphi 0, %s357
      %s374 = sphi 0, %s358
    $region4: #{chatglm_lora_forward.3} parent=1 // loop_header_branch
      %27 = sbr.rel (%p25) target = $region8
    $region5: #{chatglm_lora_forward.3} parent=1 // loop_body
      %s29 = ssub.s32 %s24, 1
      %s30 = ssub.s32 %s24, 2
      %s31 = sadd.s32 %s24, 1
      %s32 = ssub.s32 %s24, %s31
      %p33 = scmp.eq.s32.totalorder %s32, 0
      %s35 = sadd.s32 %s34, 1
      %s36 = scalar_select %p33, %s34, %s35
      %p39 = pneg %p33
      %p40 = scmp.eq.s32.totalorder %s24, 1
      %p41 = por %p39, %p40
      %p42 = scmp.ne.s32.totalorder %s34, %s37
      %p43 = scmp.eq.s32.totalorder %s24, 0
      %p44 = por %p42, %p43
      %p45 = scmp.ne.s32.totalorder %s34, %s37
      %p46 = scmp.eq.s32.totalorder %s29, 1
      %p47 = por %p45, %p46
      %p48 = scmp.ne.s32.totalorder %s37, %s38
      %p49 = scmp.eq.s32.totalorder %s29, 0
      %p50 = por %p48, %p49
      %p51 = scmp.ne.s32.totalorder %s37, %s38
      %p52 = scmp.eq.s32.totalorder %s30, 1
      %p53 = por %p51, %p52
      %p55 = scmp.ne.s32.totalorder %s38, %s54
      %p56 = scmp.eq.s32.totalorder %s30, 0
      %p57 = por %p55, %p56
      %s59 = sadd.s32 %s58, 1
      %p62 = scmp.eq.s32.totalorder %s24, 1
      %p63 = scmp.ne.s32.totalorder %s58, %s60
      %p64 = scmp.eq.s32.totalorder %s24, 0
      %p65 = por %p63, %p64
      %p66 = scmp.ne.s32.totalorder %s58, %s60
      %p67 = scmp.eq.s32.totalorder %s29, 1
      %p68 = por %p66, %p67
      %p69 = scmp.ne.s32.totalorder %s60, %s61
      %p70 = scmp.eq.s32.totalorder %s29, 0
      %p71 = por %p69, %p70
      %p72 = scmp.ne.s32.totalorder %s60, %s61
      %p73 = scmp.eq.s32.totalorder %s30, 1
      %p74 = por %p72, %p73
      %p76 = scmp.ne.s32.totalorder %s61, %s75
      %p77 = scmp.eq.s32.totalorder %s30, 0
      %p78 = por %p76, %p77
      %s80 = sadd.s32 %s79, 1
      %p83 = scmp.eq.s32.totalorder %s24, 1
      %p84 = scmp.ne.s32.totalorder %s79, %s81
      %p85 = scmp.eq.s32.totalorder %s24, 0
      %p86 = por %p84, %p85
      %p87 = scmp.ne.s32.totalorder %s79, %s81
      %p88 = scmp.eq.s32.totalorder %s29, 1
      %p89 = por %p87, %p88
      %p90 = scmp.ne.s32.totalorder %s81, %s82
      %p91 = scmp.eq.s32.totalorder %s29, 0
      %p92 = por %p90, %p91
      %p93 = scmp.ne.s32.totalorder %s81, %s82
      %p94 = scmp.eq.s32.totalorder %s30, 1
      %p95 = por %p93, %p94
      %p97 = scmp.ne.s32.totalorder %s82, %s96
      %p98 = scmp.eq.s32.totalorder %s30, 0
      %p99 = por %p97, %p98
      %s101 = sadd.s32 %s100, 1
      %p104 = scmp.eq.s32.totalorder %s24, 1
      %p105 = scmp.ne.s32.totalorder %s100, %s102
      %p106 = scmp.eq.s32.totalorder %s24, 0
      %p107 = por %p105, %p106
      %p108 = scmp.ne.s32.totalorder %s100, %s102
      %p109 = scmp.eq.s32.totalorder %s29, 1
      %p110 = por %p108, %p109
      %p111 = scmp.ne.s32.totalorder %s102, %s103
      %p112 = scmp.eq.s32.totalorder %s29, 0
      %p113 = por %p111, %p112
      %p114 = scmp.ne.s32.totalorder %s102, %s103
      %p115 = scmp.eq.s32.totalorder %s30, 1
      %p116 = por %p114, %p115
      %p118 = scmp.ne.s32.totalorder %s103, %s117
      %p119 = scmp.eq.s32.totalorder %s30, 0
      %p120 = por %p118, %p119
      %s122 = sadd.s32 %s121, 1
      %p125 = scmp.eq.s32.totalorder %s24, 1
      %p126 = scmp.ne.s32.totalorder %s121, %s123
      %p127 = scmp.eq.s32.totalorder %s24, 0
      %p128 = por %p126, %p127
      %p129 = scmp.ne.s32.totalorder %s121, %s123
      %p130 = scmp.eq.s32.totalorder %s29, 1
      %p131 = por %p129, %p130
      %p132 = scmp.ne.s32.totalorder %s123, %s124
      %p133 = scmp.eq.s32.totalorder %s29, 0
      %p134 = por %p132, %p133
      %p135 = scmp.ne.s32.totalorder %s123, %s124
      %p136 = scmp.eq.s32.totalorder %s30, 1
      %p137 = por %p135, %p136
      %p139 = scmp.ne.s32.totalorder %s124, %s138
      %p140 = scmp.eq.s32.totalorder %s30, 0
      %p141 = por %p139, %p140
      %s143 = sadd.s32 %s142, 1
      %p146 = scmp.eq.s32.totalorder %s24, 1
      %p147 = scmp.ne.s32.totalorder %s142, %s144
      %p148 = scmp.eq.s32.totalorder %s24, 0
      %p149 = por %p147, %p148
      %p150 = scmp.ne.s32.totalorder %s142, %s144
      %p151 = scmp.eq.s32.totalorder %s29, 1
      %p152 = por %p150, %p151
      %p153 = scmp.ne.s32.totalorder %s144, %s145
      %p154 = scmp.eq.s32.totalorder %s29, 0
      %p155 = por %p153, %p154
      %p156 = scmp.ne.s32.totalorder %s144, %s145
      %p157 = scmp.eq.s32.totalorder %s30, 1
      %p158 = por %p156, %p157
      %p160 = scmp.ne.s32.totalorder %s145, %s159
      %p161 = scmp.eq.s32.totalorder %s30, 0
      %p162 = por %p160, %p161
      %s164 = sadd.s32 %s163, 1
      %p167 = scmp.eq.s32.totalorder %s24, 1
      %p168 = scmp.ne.s32.totalorder %s163, %s165
      %p169 = scmp.eq.s32.totalorder %s24, 0
      %p170 = por %p168, %p169
      %p171 = scmp.ne.s32.totalorder %s163, %s165
      %p172 = scmp.eq.s32.totalorder %s29, 1
      %p173 = por %p171, %p172
      %p174 = scmp.ne.s32.totalorder %s165, %s166
      %p175 = scmp.eq.s32.totalorder %s29, 0
      %p176 = por %p174, %p175
      %p177 = scmp.ne.s32.totalorder %s165, %s166
      %p178 = scmp.eq.s32.totalorder %s30, 1
      %p179 = por %p177, %p178
      %p181 = scmp.ne.s32.totalorder %s166, %s180
      %p182 = scmp.eq.s32.totalorder %s30, 0
      %p183 = por %p181, %p182
      %s185 = sadd.s32 %s184, 1
      %p188 = scmp.eq.s32.totalorder %s24, 1
      %p189 = scmp.ne.s32.totalorder %s184, %s186
      %p190 = scmp.eq.s32.totalorder %s24, 0
      %p191 = por %p189, %p190
      %p192 = scmp.ne.s32.totalorder %s184, %s186
      %p193 = scmp.eq.s32.totalorder %s29, 1
      %p194 = por %p192, %p193
      %p195 = scmp.ne.s32.totalorder %s186, %s187
      %p196 = scmp.eq.s32.totalorder %s29, 0
      %p197 = por %p195, %p196
      %p198 = scmp.ne.s32.totalorder %s186, %s187
      %p199 = scmp.eq.s32.totalorder %s30, 1
      %p200 = por %p198, %p199
      %p202 = scmp.ne.s32.totalorder %s187, %s201
      %p203 = scmp.eq.s32.totalorder %s30, 0
      %p204 = por %p202, %p203
      %s206 = sadd.s32 %s205, 1
      %p209 = scmp.eq.s32.totalorder %s24, 1
      %p210 = scmp.ne.s32.totalorder %s205, %s207
      %p211 = scmp.eq.s32.totalorder %s24, 0
      %p212 = por %p210, %p211
      %p213 = scmp.ne.s32.totalorder %s205, %s207
      %p214 = scmp.eq.s32.totalorder %s29, 1
      %p215 = por %p213, %p214
      %p216 = scmp.ne.s32.totalorder %s207, %s208
      %p217 = scmp.eq.s32.totalorder %s29, 0
      %p218 = por %p216, %p217
      %p219 = scmp.ne.s32.totalorder %s207, %s208
      %p220 = scmp.eq.s32.totalorder %s30, 1
      %p221 = por %p219, %p220
      %p223 = scmp.ne.s32.totalorder %s208, %s222
      %p224 = scmp.eq.s32.totalorder %s30, 0
      %p225 = por %p223, %p224
      %s227 = sadd.s32 %s226, 1
      %p230 = scmp.eq.s32.totalorder %s24, 1
      %p231 = scmp.ne.s32.totalorder %s226, %s228
      %p232 = scmp.eq.s32.totalorder %s24, 0
      %p233 = por %p231, %p232
      %p234 = scmp.ne.s32.totalorder %s226, %s228
      %p235 = scmp.eq.s32.totalorder %s29, 1
      %p236 = por %p234, %p235
      %p237 = scmp.ne.s32.totalorder %s228, %s229
      %p238 = scmp.eq.s32.totalorder %s29, 0
      %p239 = por %p237, %p238
      %p240 = scmp.ne.s32.totalorder %s228, %s229
      %p241 = scmp.eq.s32.totalorder %s30, 1
      %p242 = por %p240, %p241
      %p244 = scmp.ne.s32.totalorder %s229, %s243
      %p245 = scmp.eq.s32.totalorder %s30, 0
      %p246 = por %p244, %p245
      %s248 = sadd.s32 %s247, 1
      %p251 = scmp.eq.s32.totalorder %s24, 1
      %p252 = scmp.ne.s32.totalorder %s247, %s249
      %p253 = scmp.eq.s32.totalorder %s24, 0
      %p254 = por %p252, %p253
      %p255 = scmp.ne.s32.totalorder %s247, %s249
      %p256 = scmp.eq.s32.totalorder %s29, 1
      %p257 = por %p255, %p256
      %p258 = scmp.ne.s32.totalorder %s249, %s250
      %p259 = scmp.eq.s32.totalorder %s29, 0
      %p260 = por %p258, %p259
      %p261 = scmp.ne.s32.totalorder %s249, %s250
      %p262 = scmp.eq.s32.totalorder %s30, 1
      %p263 = por %p261, %p262
      %p265 = scmp.ne.s32.totalorder %s250, %s264
      %p266 = scmp.eq.s32.totalorder %s30, 0
      %p267 = por %p265, %p266
      %s269 = sadd.s32 %s268, 1
      %p272 = scmp.eq.s32.totalorder %s24, 1
      %p273 = scmp.ne.s32.totalorder %s268, %s270
      %p274 = scmp.eq.s32.totalorder %s24, 0
      %p275 = por %p273, %p274
      %p276 = scmp.ne.s32.totalorder %s268, %s270
      %p277 = scmp.eq.s32.totalorder %s29, 1
      %p278 = por %p276, %p277
      %p279 = scmp.ne.s32.totalorder %s270, %s271
      %p280 = scmp.eq.s32.totalorder %s29, 0
      %p281 = por %p279, %p280
      %p282 = scmp.ne.s32.totalorder %s270, %s271
      %p283 = scmp.eq.s32.totalorder %s30, 1
      %p284 = por %p282, %p283
      %p286 = scmp.ne.s32.totalorder %s271, %s285
      %p287 = scmp.eq.s32.totalorder %s30, 0
      %p288 = por %p286, %p287
      %s290 = sadd.s32 %s289, 1
      %p293 = scmp.eq.s32.totalorder %s24, 1
      %p294 = scmp.ne.s32.totalorder %s289, %s291
      %p295 = scmp.eq.s32.totalorder %s24, 0
      %p296 = por %p294, %p295
      %p297 = scmp.ne.s32.totalorder %s289, %s291
      %p298 = scmp.eq.s32.totalorder %s29, 1
      %p299 = por %p297, %p298
      %p300 = scmp.ne.s32.totalorder %s291, %s292
      %p301 = scmp.eq.s32.totalorder %s29, 0
      %p302 = por %p300, %p301
      %p303 = scmp.ne.s32.totalorder %s291, %s292
      %p304 = scmp.eq.s32.totalorder %s30, 1
      %p305 = por %p303, %p304
      %p307 = scmp.ne.s32.totalorder %s292, %s306
      %p308 = scmp.eq.s32.totalorder %s30, 0
      %p309 = por %p307, %p308
      %s311 = sadd.s32 %s310, 1
      %p314 = scmp.eq.s32.totalorder %s24, 1
      %p315 = scmp.ne.s32.totalorder %s310, %s312
      %p316 = scmp.eq.s32.totalorder %s24, 0
      %p317 = por %p315, %p316
      %p318 = scmp.ne.s32.totalorder %s310, %s312
      %p319 = scmp.eq.s32.totalorder %s29, 1
      %p320 = por %p318, %p319
      %p321 = scmp.ne.s32.totalorder %s312, %s313
      %p322 = scmp.eq.s32.totalorder %s29, 0
      %p323 = por %p321, %p322
      %p324 = scmp.ne.s32.totalorder %s312, %s313
      %p325 = scmp.eq.s32.totalorder %s30, 1
      %p326 = por %p324, %p325
      %p328 = scmp.ne.s32.totalorder %s313, %s327
      %p329 = scmp.eq.s32.totalorder %s30, 0
      %p330 = por %p328, %p329
      %s332 = sadd.s32 %s331, 1
      %p335 = scmp.eq.s32.totalorder %s24, 1
      %p336 = scmp.ne.s32.totalorder %s331, %s333
      %p337 = scmp.eq.s32.totalorder %s24, 0
      %p338 = por %p336, %p337
      %p339 = scmp.ne.s32.totalorder %s331, %s333
      %p340 = scmp.eq.s32.totalorder %s29, 1
      %p341 = por %p339, %p340
      %p342 = scmp.ne.s32.totalorder %s333, %s334
      %p343 = scmp.eq.s32.totalorder %s29, 0
      %p344 = por %p342, %p343
      %p345 = scmp.ne.s32.totalorder %s333, %s334
      %p346 = scmp.eq.s32.totalorder %s30, 1
      %p347 = por %p345, %p346
      %p349 = scmp.ne.s32.totalorder %s334, %s348
      %p350 = scmp.eq.s32.totalorder %s30, 0
      %p351 = por %p349, %p350
      %s352 = ssub.s32 %s24, %s31
      %p353 = scmp.eq.s32.totalorder %s352, 0
      %s355 = sadd.s32 %s354, 1
      %s356 = scalar_select %p353, %s354, %s355
      %p359 = pneg %p353
      %p360 = scmp.eq.s32.totalorder %s24, 1
      %p361 = por %p359, %p360
      %p362 = scmp.ne.s32.totalorder %s354, %s357
      %p363 = scmp.eq.s32.totalorder %s24, 0
      %p364 = por %p362, %p363
      %p365 = scmp.ne.s32.totalorder %s354, %s357
      %p366 = scmp.eq.s32.totalorder %s29, 1
      %p367 = por %p365, %p366
      %p368 = scmp.ne.s32.totalorder %s357, %s358
      %p369 = scmp.eq.s32.totalorder %s29, 0
      %p370 = por %p368, %p369
      %p371 = scmp.ne.s32.totalorder %s357, %s358
      %p372 = scmp.eq.s32.totalorder %s30, 1
      %p373 = por %p371, %p372
      %p375 = scmp.ne.s32.totalorder %s358, %s374
      %p376 = scmp.eq.s32.totalorder %s30, 0
      %p377 = por %p375, %p376
      %p378 = scmp.le.s32.totalorder 1, %s24
      %p379 = scmp.lt.s32.totalorder %s24, 3
      %p380 = pnand %p378, %p379
      %p381 = pneg %p380
      // Predicated region
      $region9: #{chatglm_lora_forward.3} parent=5 // pred_check
        _
      $region10: #{chatglm_lora_forward.3} parent=5 // pred_check_branch
        %383 = sbr.rel (%p380) target = $region12
      $region11: #{chatglm_lora_forward.3} parent=5 // pred_region
        %s384 = ssub.s32 %s24, 1
        // Predicated region
        $region13: #{chatglm_lora_forward.3} parent=11 // pred_check
          %p385 = pneg %p71
        $region14: #{chatglm_lora_forward.3} parent=11 // pred_check_branch
          %387 = sbr.rel (%p385) target = $region16
        $region15: #{chatglm_lora_forward.3} parent=11 // pred_region
          _
        $region16: #{chatglm_lora_forward.3} parent=11 // pred_fallthru
          _
        // Predicated region
        $region17: #{chatglm_lora_forward.3} parent=11 // pred_check
          %p388 = pneg %p92
        $region18: #{chatglm_lora_forward.3} parent=11 // pred_check_branch
          %390 = sbr.rel (%p388) target = $region20
        $region19: #{chatglm_lora_forward.3} parent=11 // pred_region
          _
        $region20: #{chatglm_lora_forward.3} parent=11 // pred_fallthru
          _
        // Predicated region
        $region21: #{chatglm_lora_forward.3} parent=11 // pred_check
          %p391 = pneg %p113
        $region22: #{chatglm_lora_forward.3} parent=11 // pred_check_branch
          %393 = sbr.rel (%p391) target = $region24
        $region23: #{chatglm_lora_forward.3} parent=11 // pred_region
          _
        $region24: #{chatglm_lora_forward.3} parent=11 // pred_fallthru
          _
        // Predicated region
        $region25: #{chatglm_lora_forward.3} parent=11 // pred_check
          %p394 = pneg %p134
        $region26: #{chatglm_lora_forward.3} parent=11 // pred_check_branch
          %396 = sbr.rel (%p394) target = $region28
        $region27: #{chatglm_lora_forward.3} parent=11 // pred_region
          _
        $region28: #{chatglm_lora_forward.3} parent=11 // pred_fallthru
          _
        // Predicated region
        $region29: #{chatglm_lora_forward.3} parent=11 // pred_check
          %p397 = pneg %p155
        $region30: #{chatglm_lora_forward.3} parent=11 // pred_check_branch
          %399 = sbr.rel (%p397) target = $region32
        $region31: #{chatglm_lora_forward.3} parent=11 // pred_region
          _
        $region32: #{chatglm_lora_forward.3} parent=11 // pred_fallthru
          _
        // Predicated region
        $region33: #{chatglm_lora_forward.3} parent=11 // pred_check
          %p400 = pneg %p176
        $region34: #{chatglm_lora_forward.3} parent=11 // pred_check_branch
          %402 = sbr.rel (%p400) target = $region36
        $region35: #{chatglm_lora_forward.3} parent=11 // pred_region
          _
        $region36: #{chatglm_lora_forward.3} parent=11 // pred_fallthru
          _
        // Predicated region
        $region37: #{chatglm_lora_forward.3} parent=11 // pred_check
          %p403 = pneg %p197
        $region38: #{chatglm_lora_forward.3} parent=11 // pred_check_branch
          %405 = sbr.rel (%p403) target = $region40
        $region39: #{chatglm_lora_forward.3} parent=11 // pred_region
          _
        $region40: #{chatglm_lora_forward.3} parent=11 // pred_fallthru
          _
        // Predicated region
        $region41: #{chatglm_lora_forward.3} parent=11 // pred_check
          %p406 = pneg %p218
        $region42: #{chatglm_lora_forward.3} parent=11 // pred_check_branch
          %408 = sbr.rel (%p406) target = $region44
        $region43: #{chatglm_lora_forward.3} parent=11 // pred_region
          _
        $region44: #{chatglm_lora_forward.3} parent=11 // pred_fallthru
          _
        // Predicated region
        $region45: #{chatglm_lora_forward.3} parent=11 // pred_check
          %p409 = pneg %p239
        $region46: #{chatglm_lora_forward.3} parent=11 // pred_check_branch
          %411 = sbr.rel (%p409) target = $region48
        $region47: #{chatglm_lora_forward.3} parent=11 // pred_region
          %s413 = ssub.s32 16, 16
          %414 = vsyncadd [#allocation3], %s413
          %s416 = sshll.u32 [#allocation2], 4
          %s417 = int_to_ptr.vmem [resolvable:$true] %s416
          %419 = dma.hbm_to_vmem [thread:$0]  %s9, 16, %s417, [#allocation3]
        $region48: #{chatglm_lora_forward.3} parent=11 // pred_fallthru
          _
        // Predicated region
        $region49: #{chatglm_lora_forward.3} parent=11 // pred_check
          %p420 = pneg %p260
        $region50: #{chatglm_lora_forward.3} parent=11 // pred_check_branch
          %422 = sbr.rel (%p420) target = $region52
        $region51: #{chatglm_lora_forward.3} parent=11 // pred_region
          %s424 = ssub.s32 16, 16
          %425 = vsyncadd [#allocation5], %s424
          %s427 = sshll.u32 [#allocation4], 4
          %s428 = int_to_ptr.vmem [resolvable:$true] %s427
          %430 = dma.hbm_to_vmem [thread:$0]  %s10, 16, %s428, [#allocation5]
        $region52: #{chatglm_lora_forward.3} parent=11 // pred_fallthru
          _
        // Predicated region
        $region53: #{chatglm_lora_forward.3} parent=11 // pred_check
          %p431 = pneg %p281
        $region54: #{chatglm_lora_forward.3} parent=11 // pred_check_branch
          %433 = sbr.rel (%p431) target = $region56
        $region55: #{chatglm_lora_forward.3} parent=11 // pred_region
          _
        $region56: #{chatglm_lora_forward.3} parent=11 // pred_fallthru
          _
        // Predicated region
        $region57: #{chatglm_lora_forward.3} parent=11 // pred_check
          %p434 = pneg %p302
        $region58: #{chatglm_lora_forward.3} parent=11 // pred_check_branch
          %436 = sbr.rel (%p434) target = $region60
        $region59: #{chatglm_lora_forward.3} parent=11 // pred_region
          _
        $region60: #{chatglm_lora_forward.3} parent=11 // pred_fallthru
          _
        // Predicated region
        $region61: #{chatglm_lora_forward.3} parent=11 // pred_check
          %p437 = pneg %p323
        $region62: #{chatglm_lora_forward.3} parent=11 // pred_check_branch
          %439 = sbr.rel (%p437) target = $region64
        $region63: #{chatglm_lora_forward.3} parent=11 // pred_region
          %s441 = ssub.s32 2048, 2048
          %442 = vsyncadd [#allocation5], %s441
          %s443 = sshll.u32 [#allocation6], 4
          %s444 = int_to_ptr.vmem [resolvable:$true] %s443
          %449 = dma.hbm_to_vmem [thread:$0]  %s13, 2048, %s444, [#allocation5], 64, 64, 4
        $region64: #{chatglm_lora_forward.3} parent=11 // pred_fallthru
          _
        // Predicated region
        $region65: #{chatglm_lora_forward.3} parent=11 // pred_check
          %p450 = pneg %p344
        $region66: #{chatglm_lora_forward.3} parent=11 // pred_check_branch
          %452 = sbr.rel (%p450) target = $region68
        $region67: #{chatglm_lora_forward.3} parent=11 // pred_region
          %s454 = ssub.s32 16, 16
          %455 = vsyncadd [#allocation8], %s454
          %s457 = sshll.u32 [#allocation7], 4
          %s458 = int_to_ptr.vmem [resolvable:$true] %s457
          %460 = dma.hbm_to_vmem [thread:$0]  %s14, 16, %s458, [#allocation8]
        $region68: #{chatglm_lora_forward.3} parent=11 // pred_fallthru
          _
      $region12: #{chatglm_lora_forward.3} parent=5 // pred_fallthru
        _
      %p461 = scmp.lt.s32.totalorder %s24, 2
      // Predicated region
      $region69: #{chatglm_lora_forward.3} parent=5 // pred_check
        %p462 = pneg %p461
      $region70: #{chatglm_lora_forward.3} parent=5 // pred_check_branch
        %464 = sbr.rel (%p462) target = $region72
      $region71: #{chatglm_lora_forward.3} parent=5 // pred_region
        // Predicated region
        $region73: #{chatglm_lora_forward.3} parent=71 // pred_check
          %p465 = pneg %p44
        $region74: #{chatglm_lora_forward.3} parent=71 // pred_check_branch
          %467 = sbr.rel (%p465) target = $region76
        $region75: #{chatglm_lora_forward.3} parent=71 // pred_region
          %p468 = scmp.lt.s32.totalorder %s24, 1
          %s469 = scalar_select %p468, %s24, 1
          %s470 = smul.addr %s469, 8
          %s471 = scalar_lea.vmem %s0, %s470
        $region76: #{chatglm_lora_forward.3} parent=71 // pred_fallthru
          _
      $region72: #{chatglm_lora_forward.3} parent=5 // pred_fallthru
        _
      %p472 = scmp.le.s32.totalorder 1, %s24
      %p473 = scmp.lt.s32.totalorder %s24, 3
      %p474 = pnand %p472, %p473
      %p475 = pneg %p474
      // Predicated region
      $region77: #{chatglm_lora_forward.3} parent=5 // pred_check
        _
      $region78: #{chatglm_lora_forward.3} parent=5 // pred_check_branch
        %477 = sbr.rel (%p474) target = $region80
      $region79: #{chatglm_lora_forward.3} parent=5 // pred_region
        %s478 = ssub.s32 %s24, 1
        // Predicated region
        $region81: #{chatglm_lora_forward.3} parent=79 // pred_check
          %p479 = pneg %p239
        $region82: #{chatglm_lora_forward.3} parent=79 // pred_check_branch
          %481 = sbr.rel (%p479) target = $region84
        $region83: #{chatglm_lora_forward.3} parent=79 // pred_region
          %482 = dma.done [#allocation3], 16
        $region84: #{chatglm_lora_forward.3} parent=79 // pred_fallthru
          _
        // Predicated region
        $region85: #{chatglm_lora_forward.3} parent=79 // pred_check
          %p483 = pneg %p260
        $region86: #{chatglm_lora_forward.3} parent=79 // pred_check_branch
          %485 = sbr.rel (%p483) target = $region88
        $region87: #{chatglm_lora_forward.3} parent=79 // pred_region
          %486 = dma.done [#allocation5], 16
        $region88: #{chatglm_lora_forward.3} parent=79 // pred_fallthru
          _
        // Predicated region
        $region89: #{chatglm_lora_forward.3} parent=79 // pred_check
          %p487 = pneg %p323
        $region90: #{chatglm_lora_forward.3} parent=79 // pred_check_branch
          %489 = sbr.rel (%p487) target = $region92
        $region91: #{chatglm_lora_forward.3} parent=79 // pred_region
          %490 = dma.done [#allocation5], 2048
        $region92: #{chatglm_lora_forward.3} parent=79 // pred_fallthru
          _
        // Predicated region
        $region93: #{chatglm_lora_forward.3} parent=79 // pred_check
          %p491 = pneg %p344
        $region94: #{chatglm_lora_forward.3} parent=79 // pred_check_branch
          %493 = sbr.rel (%p491) target = $region96
        $region95: #{chatglm_lora_forward.3} parent=79 // pred_region
          %494 = dma.done [#allocation8], 16
        $region96: #{chatglm_lora_forward.3} parent=79 // pred_fallthru
          _
        %p495 = scmp.lt.s32.totalorder %s29, 1
        %s496 = scalar_select %p495, %s29, 1
        %s497 = smul.addr %s496, 8
        %s498 = scalar_lea.vmem %s0, %s497
        %p499 = pneg %p50
        %p500 = pneg %p47
        %p501 = pneg %p71
        %p502 = pneg %p68
        %p503 = pneg %p92
        %p504 = pneg %p89
        %p505 = pneg %p113
        %p506 = pneg %p110
        %p507 = pneg %p134
        %p508 = pneg %p131
        %p509 = pneg %p155
        %p510 = pneg %p152
        %p511 = pneg %p176
        %p512 = pneg %p173
        %p513 = pneg %p197
        %p514 = pneg %p194
        %p515 = pneg %p218
        %p516 = pneg %p215
        %p517 = pneg %p239
        %p518 = pneg %p236
        %p519 = pneg %p260
        %p520 = pneg %p257
        %p521 = pneg %p281
        %p522 = pneg %p278
        %p523 = pneg %p302
        %p524 = pneg %p299
        %p525 = pneg %p323
        %p526 = pneg %p320
        %p527 = pneg %p344
        %p528 = pneg %p341
        %p529 = pneg %p370
        %p530 = pneg %p367
        %p531 = scmp.lt.s32.totalorder %s29, 1
        %s532 = scalar_select %p531, %s29, 1
        %s533 = smul.addr %s532, 8
        %s534 = scalar_lea.vmem %s15, %s533
        %p535 = scmp.lt.s32.totalorder %s29, 1
        %s536 = scalar_select %p535, %s29, 1
        %s537 = smul.addr %s536, 8
        %s538 = scalar_lea.vmem %s0, %s537
        %p539 = scmp.lt.s32.totalorder %s29, 1
        %s540 = scalar_select %p539, %s29, 1
        %s541 = smul.addr %s540, 8
        %s542 = scalar_lea.vmem %s15, %s541
        %v544 = vld [vmem:[%s538] sm:$0xff]
        %v545 = vld [vmem:[%s1] sm:$0x1]
        %v546 = vld [vmem:[%s2] sm:$0x1]
        %547 = vadd.xlane.f32.xlu0 %v544
        %v548 = vpop.xlane.xlu0 %547
        %v549 = vrcp.pop 128.0
        %v550 = vmul.f32 %v548, %v549
        %v551 = vsub.f32 %v544, %v550
        %v552 = vmul.f32 %v551, %v551
        %553 = vadd.xlane.f32.xlu0 %v552
        %v554 = vpop.xlane.xlu0 %553
        %v555 = vmul.f32 %v554, %v549
        %v556 = vadd.f32 %v555, 1e-05
        %v557 = vrsqrt.pop %v556
        %v558 = vmul.f32 %v551, %v557
        %v560 = vlaneseq
        %v561 = vshrl.u32 %v560, 7
        %v562 = vsub.s32 0, %v561
        %v563 = vrot.slane %v545, %v562
        %v565 = vmul.f32 %v558, %v563
        %v567 = vlaneseq
        %v568 = vshrl.u32 %v567, 7
        %v569 = vsub.s32 0, %v568
        %v570 = vrot.slane %v546, %v569
        %v572 = vadd.f32 %v565, %v570
        %v573 = vpack.c.bf16 %v572, %v572
        %v574 = vld [vmem:[%s3] sm:$0xff]
        %v575 = vld [vmem:[%s3 + $0x8] sm:$0xf]
        %v576 = vld [vmem:[%s3 + $0xc] sm:$0xff]
        %v577 = vld [vmem:[%s3 + $0x14] sm:$0xf]
        %v578 = vld [vmem:[%s3 + $0x18] sm:$0xff]
        %v579 = vld [vmem:[%s3 + $0x20] sm:$0xf]
        %v580 = vld [vmem:[%s3 + $0x24] sm:$0xff]
        %v581 = vld [vmem:[%s3 + $0x2c] sm:$0xf]
        %v582 = vld [vmem:[%s3 + $0x30] sm:$0xff]
        %v583 = vld [vmem:[%s3 + $0x38] sm:$0xf]
        %v584 = vld [vmem:[%s3 + $0x3c] sm:$0xff]
        %v585 = vld [vmem:[%s3 + $0x44] sm:$0xf]
        %v586 = vld [vmem:[%s3 + $0x48] sm:$0xff]
        %v587 = vld [vmem:[%s3 + $0x50] sm:$0xf]
        %v588 = vld [vmem:[%s3 + $0x54] sm:$0xff]
        %v589 = vld [vmem:[%s3 + $0x5c] sm:$0xf]
        %v590 = vld [vmem:[%s3 + $0x60] sm:$0xff]
        %v591 = vld [vmem:[%s3 + $0x68] sm:$0xf]
        %v592 = vld [vmem:[%s3 + $0x6c] sm:$0xff]
        %v593 = vld [vmem:[%s3 + $0x74] sm:$0xf]
        %v594 = vld [vmem:[%s3 + $0x78] sm:$0xff]
        %v595 = vld [vmem:[%s3 + $0x80] sm:$0xf]
        %v596 = vld [vmem:[%s3 + $0x84] sm:$0xff]
        %v597 = vld [vmem:[%s3 + $0x8c] sm:$0xf]
        %v598 = vld [vmem:[%s3 + $0x90] sm:$0xff]
        %v599 = vld [vmem:[%s3 + $0x98] sm:$0xf]
        %v600 = vld [vmem:[%s3 + $0x9c] sm:$0xff]
        %v601 = vld [vmem:[%s3 + $0xa4] sm:$0xf]
        %v602 = vld [vmem:[%s3 + $0xa8] sm:$0xff]
        %v603 = vld [vmem:[%s3 + $0xb0] sm:$0xf]
        %v604 = vld [vmem:[%s3 + $0xb4] sm:$0xff]
        %v605 = vld [vmem:[%s3 + $0xbc] sm:$0xf]
        %v606 = vld [vmem:[%s5] sm:$0xff]
        %v607 = vld [vmem:[%s5 + $0x8] sm:$0xff]
        %v608 = vld [vmem:[%s5 + $0x10] sm:$0xff]
        %v609 = vld [vmem:[%s5 + $0x18] sm:$0xff]
        %v610 = vld [vmem:[%s5 + $0x20] sm:$0xff]
        %v611 = vld [vmem:[%s5 + $0x28] sm:$0xff]
        %v612 = vld [vmem:[%s5 + $0x30] sm:$0xff]
        %v613 = vld [vmem:[%s5 + $0x38] sm:$0xff]
        %v614 = vld [vmem:[%s5 + $0x40] sm:$0xff]
        %v615 = vld [vmem:[%s5 + $0x48] sm:$0xff]
        %v616 = vld [vmem:[%s5 + $0x50] sm:$0xff]
        %v617 = vld [vmem:[%s5 + $0x58] sm:$0xff]
        %v618 = vld [vmem:[%s5 + $0x60] sm:$0xff]
        %v619 = vld [vmem:[%s5 + $0x68] sm:$0xff]
        %v620 = vld [vmem:[%s5 + $0x70] sm:$0xff]
        %v621 = vld [vmem:[%s5 + $0x78] sm:$0xff]
        %622 = vmatprep.subr.mxu0 0.0
        %623 = vmatpush1.msra.mxu0 %v606
        %624 = vmatprep.subr.mxu0 0.0
        %625 = vmatpush1.msra.mxu0 %v607
        %626 = vmatprep.subr.mxu0 0.0
        %627 = vmatpush1.msra.mxu0 %v608
        %628 = vmatprep.subr.mxu0 0.0
        %629 = vmatpush1.msra.mxu0 %v609
        %630 = vmatprep.subr.mxu0 0.0
        %631 = vmatpush1.msra.mxu0 %v610
        %632 = vmatprep.subr.mxu0 0.0
        %633 = vmatpush1.msra.mxu0 %v611
        %634 = vmatprep.subr.mxu0 0.0
        %635 = vmatpush1.msra.mxu0 %v612
        %636 = vmatprep.subr.mxu0 0.0
        %637 = vmatpush1.msra.mxu0 %v613
        %638 = vmatprep.subr.mxu0 0.0
        %639 = vmatpush1.msra.mxu0 %v614
        %640 = vmatprep.subr.mxu0 0.0
        %641 = vmatpush1.msra.mxu0 %v615
        %642 = vmatprep.subr.mxu0 0.0
        %643 = vmatpush1.msra.mxu0 %v616
        %644 = vmatprep.subr.mxu0 0.0
        %645 = vmatpush1.msra.mxu0 %v617
        %646 = vmatprep.subr.mxu0 0.0
        %647 = vmatpush1.msra.mxu0 %v618
        %648 = vmatprep.subr.mxu0 0.0
        %649 = vmatpush1.msra.mxu0 %v619
        %650 = vmatprep.subr.mxu0 0.0
        %651 = vmatpush1.msra.mxu0 %v620
        %652 = vmatprep.subr.mxu0 0.0
        %653 = vmatpush1.msra.mxu0 %v621
        %654 = vmatprep.subr.mxu0 0.0
        %655 = vmatpush1.msra.mxu0 0.0
        %656 = vmatprep.subr.mxu0 0.0
        %657 = vmatpush1.msra.mxu0 0.0
        %658 = vmatprep.subr.mxu0 0.0
        %659 = vmatpush1.msra.mxu0 0.0
        %660 = vmatprep.subr.mxu0 0.0
        %661 = vmatpush1.msra.mxu0 0.0
        %662 = vmatprep.subr.mxu0 0.0
        %663 = vmatpush1.msra.mxu0 0.0
        %664 = vmatprep.subr.mxu0 0.0
        %665 = vmatpush1.msra.mxu0 0.0
        %666 = vmatprep.subr.mxu0 0.0
        %667 = vmatpush1.msra.mxu0 0.0
        %668 = vmatprep.subr.mxu0 0.0
        %669 = vmatpush1.msra.mxu0 0.0
        %670 = vmatprep.subr.mxu0 0.0
        %671 = vmatpush1.msra.mxu0 0.0
        %672 = vmatprep.subr.mxu0 0.0
        %673 = vmatpush1.msra.mxu0 0.0
        %674 = vmatprep.subr.mxu0 0.0
        %675 = vmatpush1.msra.mxu0 0.0
        %676 = vmatprep.subr.mxu0 0.0
        %677 = vmatpush1.msra.mxu0 0.0
        %678 = vmatprep.subr.mxu0 0.0
        %679 = vmatpush1.msra.mxu0 0.0
        %680 = vmatprep.subr.mxu0 0.0
        %681 = vmatpush1.msra.mxu0 0.0
        %682 = vmatprep.subr.mxu0 0.0
        %683 = vmatpush1.msra.mxu0 0.0
        %684 = vmatprep.subr.mxu0 0.0
        %685 = vmatpush1.msra.mxu0 0.0
        %686 = vmatprep.mubr.f32.mxu0 0.0
        %687 = vmatmul.mubr.f32.gmra.mrb[0].mxu0 %v572
        %v688 = vpop.f32.mrb[0].mxu0
        %v689 = vadd.f32 0.0, %v688
        %v690 = vpop.f32.mrb[0].mxu0
        %691 = vdwg.mxu0
        %v692 = vld [vmem:[%s6] sm:$0xff]
        %v693 = vld [vmem:[%s6 + $0x8] sm:$0xff]
        %v694 = vld [vmem:[%s6 + $0x10] sm:$0xff]
        %vm695 = vcmask 64512
        %v697 = vsel %vm695, %v689, 0
        %699 = vmatprep.subr.mxu0 %v693
        %700 = vmatpush1.msra.mxu0 %v692
        %701 = vmatprep.subr.mxu0 0.0
        %702 = vmatpush1.msra.mxu0 0.0
        %703 = vmatprep.subr.mxu0 0.0
        %704 = vmatpush1.msra.mxu0 0.0
        %705 = vmatprep.subr.mxu0 0.0
        %706 = vmatpush1.msra.mxu0 0.0
        %707 = vmatprep.subr.mxu0 0.0
        %708 = vmatpush1.msra.mxu0 0.0
        %709 = vmatprep.subr.mxu0 0.0
        %710 = vmatpush1.msra.mxu0 0.0
        %711 = vmatprep.subr.mxu0 0.0
        %712 = vmatpush1.msra.mxu0 0.0
        %713 = vmatprep.subr.mxu0 0.0
        %714 = vmatpush1.msra.mxu0 0.0
        %715 = vmatprep.subr.mxu0 0.0
        %716 = vmatpush1.msra.mxu0 0.0
        %717 = vmatprep.subr.mxu0 0.0
        %718 = vmatpush1.msra.mxu0 0.0
        %719 = vmatprep.subr.mxu0 0.0
        %720 = vmatpush1.msra.mxu0 0.0
        %721 = vmatprep.subr.mxu0 0.0
        %722 = vmatpush1.msra.mxu0 0.0
        %723 = vmatprep.subr.mxu0 0.0
        %724 = vmatpush1.msra.mxu0 0.0
        %725 = vmatprep.subr.mxu0 0.0
        %726 = vmatpush1.msra.mxu0 0.0
        %727 = vmatprep.subr.mxu0 0.0
        %728 = vmatpush1.msra.mxu0 0.0
        %729 = vmatprep.subr.mxu0 0.0
        %730 = vmatpush1.msra.mxu0 0.0
        %731 = vmatprep.subr.mxu0 0.0
        %732 = vmatpush1.msra.mxu0 0.0
        %733 = vmatprep.subr.mxu0 0.0
        %734 = vmatpush1.msra.mxu0 0.0
        %735 = vmatprep.subr.mxu0 0.0
        %736 = vmatpush1.msra.mxu0 0.0
        %737 = vmatprep.subr.mxu0 0.0
        %738 = vmatpush1.msra.mxu0 0.0
        %739 = vmatprep.subr.mxu0 0.0
        %740 = vmatpush1.msra.mxu0 0.0
        %741 = vmatprep.subr.mxu0 0.0
        %742 = vmatpush1.msra.mxu0 0.0
        %743 = vmatprep.subr.mxu0 0.0
        %744 = vmatpush1.msra.mxu0 0.0
        %745 = vmatprep.subr.mxu0 0.0
        %746 = vmatpush1.msra.mxu0 0.0
        %747 = vmatprep.subr.mxu0 0.0
        %748 = vmatpush1.msra.mxu0 0.0
        %749 = vmatprep.subr.mxu0 0.0
        %750 = vmatpush1.msra.mxu0 0.0
        %751 = vmatprep.subr.mxu0 0.0
        %752 = vmatpush1.msra.mxu0 0.0
        %753 = vmatprep.subr.mxu0 0.0
        %754 = vmatpush1.msra.mxu0 0.0
        %755 = vmatprep.subr.mxu0 0.0
        %756 = vmatpush1.msra.mxu0 0.0
        %757 = vmatprep.subr.mxu0 0.0
        %758 = vmatpush1.msra.mxu0 0.0
        %759 = vmatprep.subr.mxu0 0.0
        %760 = vmatpush1.msra.mxu0 0.0
        %761 = vmatprep.subr.mxu0 0.0
        %762 = vmatpush1.msra.mxu0 0.0
        %763 = vmatprep.mubr.f32.mxu0 0.0
        %764 = vmatmul.mubr.f32.gmra.mrb[0].mxu0 %v697
        %v765 = vpop.f32.mrb[0].mxu0
        %v766 = vadd.f32 0.0, %v765
        %v767 = vpop.f32.mrb[0].mxu0
        %v768 = vadd.f32 0.0, %v767
        %769 = vdwg.mxu0
        %770 = vmatprep.subr.mxu0 0.0
        %771 = vmatpush1.msra.mxu0 %v694
        %772 = vmatprep.subr.mxu0 0.0
        %773 = vmatpush1.msra.mxu0 0.0
        %774 = vmatprep.subr.mxu0 0.0
        %775 = vmatpush1.msra.mxu0 0.0
        %776 = vmatprep.subr.mxu0 0.0
        %777 = vmatpush1.msra.mxu0 0.0
        %778 = vmatprep.subr.mxu0 0.0
        %779 = vmatpush1.msra.mxu0 0.0
        %780 = vmatprep.subr.mxu0 0.0
        %781 = vmatpush1.msra.mxu0 0.0
        %782 = vmatprep.subr.mxu0 0.0
        %783 = vmatpush1.msra.mxu0 0.0
        %784 = vmatprep.subr.mxu0 0.0
        %785 = vmatpush1.msra.mxu0 0.0
        %786 = vmatprep.subr.mxu0 0.0
        %787 = vmatpush1.msra.mxu0 0.0
        %788 = vmatprep.subr.mxu0 0.0
        %789 = vmatpush1.msra.mxu0 0.0
        %790 = vmatprep.subr.mxu0 0.0
        %791 = vmatpush1.msra.mxu0 0.0
        %792 = vmatprep.subr.mxu0 0.0
        %793 = vmatpush1.msra.mxu0 0.0
        %794 = vmatprep.subr.mxu0 0.0
        %795 = vmatpush1.msra.mxu0 0.0
        %796 = vmatprep.subr.mxu0 0.0
        %797 = vmatpush1.msra.mxu0 0.0
        %798 = vmatprep.subr.mxu0 0.0
        %799 = vmatpush1.msra.mxu0 0.0
        %800 = vmatprep.subr.mxu0 0.0
        %801 = vmatpush1.msra.mxu0 0.0
        %802 = vmatprep.subr.mxu0 0.0
        %803 = vmatpush1.msra.mxu0 0.0
        %804 = vmatprep.subr.mxu0 0.0
        %805 = vmatpush1.msra.mxu0 0.0
        %806 = vmatprep.subr.mxu0 0.0
        %807 = vmatpush1.msra.mxu0 0.0
        %808 = vmatprep.subr.mxu0 0.0
        %809 = vmatpush1.msra.mxu0 0.0
        %810 = vmatprep.subr.mxu0 0.0
        %811 = vmatpush1.msra.mxu0 0.0
        %812 = vmatprep.subr.mxu0 0.0
        %813 = vmatpush1.msra.mxu0 0.0
        %814 = vmatprep.subr.mxu0 0.0
        %815 = vmatpush1.msra.mxu0 0.0
        %816 = vmatprep.subr.mxu0 0.0
        %817 = vmatpush1.msra.mxu0 0.0
        %818 = vmatprep.subr.mxu0 0.0
        %819 = vmatpush1.msra.mxu0 0.0
        %820 = vmatprep.subr.mxu0 0.0
        %821 = vmatpush1.msra.mxu0 0.0
        %822 = vmatprep.subr.mxu0 0.0
        %823 = vmatpush1.msra.mxu0 0.0
        %824 = vmatprep.subr.mxu0 0.0
        %825 = vmatpush1.msra.mxu0 0.0
        %826 = vmatprep.subr.mxu0 0.0
        %827 = vmatpush1.msra.mxu0 0.0
        %828 = vmatprep.subr.mxu0 0.0
        %829 = vmatpush1.msra.mxu0 0.0
        %830 = vmatprep.subr.mxu0 0.0
        %831 = vmatpush1.msra.mxu0 0.0
        %832 = vmatprep.subr.mxu0 0.0
        %833 = vmatpush1.msra.mxu0 0.0
        %834 = vmatprep.mubr.f32.mxu0 0.0
        %835 = vmatmul.mubr.f32.gmra.mrb[0].mxu0 %v697
        %v836 = vpop.f32.mrb[0].mxu0
        %v837 = vadd.f32 0.0, %v836
        %v838 = vpop.f32.mrb[0].mxu0
        %839 = vdwg.mxu0
        %v840 = vmul.f32 %v766, 2.0
        %v841 = vmul.f32 %v768, 2.0
        %v842 = vmul.f32 %v837, 2.0
        %v875 = vunpack.c.l.b16 %v574
        %v876 = vunpack.c.h.b16 %v574
        %v877 = vunpack.c.l.b16 %v575
        %v878 = vunpack.c.l.b16 %v576
        %v879 = vunpack.c.h.b16 %v576
        %v880 = vunpack.c.l.b16 %v577
        %v881 = vunpack.c.l.b16 %v578
        %v882 = vunpack.c.h.b16 %v578
        %v883 = vunpack.c.l.b16 %v579
        %v884 = vunpack.c.l.b16 %v580
        %v885 = vunpack.c.h.b16 %v580
        %v886 = vunpack.c.l.b16 %v581
        %v887 = vunpack.c.l.b16 %v582
        %v888 = vunpack.c.h.b16 %v582
        %v889 = vunpack.c.l.b16 %v583
        %v890 = vunpack.c.l.b16 %v584
        %v891 = vunpack.c.h.b16 %v584
        %v892 = vunpack.c.l.b16 %v585
        %v893 = vunpack.c.l.b16 %v586
        %v894 = vunpack.c.h.b16 %v586
        %v895 = vunpack.c.l.b16 %v587
        %v896 = vunpack.c.l.b16 %v588
        %v897 = vunpack.c.h.b16 %v588
        %v898 = vunpack.c.l.b16 %v589
        %v899 = vunpack.c.l.b16 %v590
        %v900 = vunpack.c.h.b16 %v590
        %v901 = vunpack.c.l.b16 %v591
        %v902 = vunpack.c.l.b16 %v592
        %v903 = vunpack.c.h.b16 %v592
        %v904 = vunpack.c.l.b16 %v593
        %v905 = vunpack.c.l.b16 %v594
        %v906 = vunpack.c.h.b16 %v594
        %v907 = vunpack.c.l.b16 %v595
        %v908 = vunpack.c.l.b16 %v596
        %v909 = vunpack.c.h.b16 %v596
        %v910 = vunpack.c.l.b16 %v597
        %v911 = vunpack.c.l.b16 %v598
        %v912 = vunpack.c.h.b16 %v598
        %v913 = vunpack.c.l.b16 %v599
        %v914 = vunpack.c.l.b16 %v600
        %v915 = vunpack.c.h.b16 %v600
        %v916 = vunpack.c.l.b16 %v601
        %v917 = vunpack.c.l.b16 %v602
        %v918 = vunpack.c.h.b16 %v602
        %v919 = vunpack.c.l.b16 %v603
        %v920 = vunpack.c.l.b16 %v604
        %v921 = vunpack.c.h.b16 %v604
        %v922 = vunpack.c.l.b16 %v605
        %v923 = vpack.c.b16 %v878, %v875
        %v924 = vpack.c.b16 %v879, %v876
        %v925 = vpack.c.b16 %v880, %v877
        %v926 = vpack.c.b16 %v884, %v881
        %v927 = vpack.c.b16 %v885, %v882
        %v928 = vpack.c.b16 %v886, %v883
        %v929 = vpack.c.b16 %v890, %v887
        %v930 = vpack.c.b16 %v891, %v888
        %v931 = vpack.c.b16 %v892, %v889
        %v932 = vpack.c.b16 %v896, %v893
        %v933 = vpack.c.b16 %v897, %v894
        %v934 = vpack.c.b16 %v898, %v895
        %v935 = vpack.c.b16 %v902, %v899
        %v936 = vpack.c.b16 %v903, %v900
        %v937 = vpack.c.b16 %v904, %v901
        %v938 = vpack.c.b16 %v908, %v905
        %v939 = vpack.c.b16 %v909, %v906
        %v940 = vpack.c.b16 %v910, %v907
        %v941 = vpack.c.b16 %v914, %v911
        %v942 = vpack.c.b16 %v915, %v912
        %v943 = vpack.c.b16 %v916, %v913
        %v944 = vpack.c.b16 %v920, %v917
        %v945 = vpack.c.b16 %v921, %v918
        %v946 = vpack.c.b16 %v922, %v919
        %971 = vmatprep.subr.bf16.mxu0 %v924
        %972 = vmatpush1.bf16.msra.mxu0 %v923
        %973 = vmatprep.subr.bf16.mxu0 %v927
        %974 = vmatpush1.bf16.msra.mxu0 %v926
        %975 = vmatprep.subr.bf16.mxu0 %v930
        %976 = vmatpush1.bf16.msra.mxu0 %v929
        %977 = vmatprep.subr.bf16.mxu0 %v933
        %978 = vmatpush1.bf16.msra.mxu0 %v932
        %979 = vmatprep.subr.bf16.mxu0 %v936
        %980 = vmatpush1.bf16.msra.mxu0 %v935
        %981 = vmatprep.subr.bf16.mxu0 %v939
        %982 = vmatpush1.bf16.msra.mxu0 %v938
        %983 = vmatprep.subr.bf16.mxu0 %v942
        %984 = vmatpush1.bf16.msra.mxu0 %v941
        %985 = vmatprep.subr.bf16.mxu0 %v945
        %986 = vmatpush1.bf16.msra.mxu0 %v944
        %987 = vmatprep.subr.bf16.mxu0 0
        %988 = vmatpush1.bf16.msra.mxu0 0
        %989 = vmatprep.subr.bf16.mxu0 0
        %990 = vmatpush1.bf16.msra.mxu0 0
        %991 = vmatprep.subr.bf16.mxu0 0
        %992 = vmatpush1.bf16.msra.mxu0 0
        %993 = vmatprep.subr.bf16.mxu0 0
        %994 = vmatpush1.bf16.msra.mxu0 0
        %995 = vmatprep.subr.bf16.mxu0 0
        %996 = vmatpush1.bf16.msra.mxu0 0
        %997 = vmatprep.subr.bf16.mxu0 0
        %998 = vmatpush1.bf16.msra.mxu0 0
        %999 = vmatprep.subr.bf16.mxu0 0
        %1000 = vmatpush1.bf16.msra.mxu0 0
        %1001 = vmatprep.subr.bf16.mxu0 0
        %1002 = vmatpush1.bf16.msra.mxu0 0
        %1003 = vmatprep.mubr.bf16.mxu0 0
        %1004 = vmatmul.mubr.bf16.gmra.mrb[0].mxu0 %v573
        %v1005 = vpop.f32.mrb[0].mxu0
        %v1006 = vadd.f32 %v840, %v1005
        %v1007 = vpop.f32.mrb[0].mxu0
        %v1008 = vadd.f32 %v841, %v1007
        %v1009 = vpop.f32.mrb[0].mxu0
        %v1010 = vpop.f32.mrb[0].mxu0
        %1011 = vdwg.mxu0
        %1012 = vmatprep.subr.bf16.mxu0 0
        %1013 = vmatpush1.bf16.msra.mxu0 %v925
        %1014 = vmatprep.subr.bf16.mxu0 0
        %1015 = vmatpush1.bf16.msra.mxu0 %v928
        %1016 = vmatprep.subr.bf16.mxu0 0
        %1017 = vmatpush1.bf16.msra.mxu0 %v931
        %1018 = vmatprep.subr.bf16.mxu0 0
        %1019 = vmatpush1.bf16.msra.mxu0 %v934
        %1020 = vmatprep.subr.bf16.mxu0 0
        %1021 = vmatpush1.bf16.msra.mxu0 %v937
        %1022 = vmatprep.subr.bf16.mxu0 0
        %1023 = vmatpush1.bf16.msra.mxu0 %v940
        %1024 = vmatprep.subr.bf16.mxu0 0
        %1025 = vmatpush1.bf16.msra.mxu0 %v943
        %1026 = vmatprep.subr.bf16.mxu0 0
        %1027 = vmatpush1.bf16.msra.mxu0 %v946
        %1028 = vmatprep.subr.bf16.mxu0 0
        %1029 = vmatpush1.bf16.msra.mxu0 0
        %1030 = vmatprep.subr.bf16.mxu0 0
        %1031 = vmatpush1.bf16.msra.mxu0 0
        %1032 = vmatprep.subr.bf16.mxu0 0
        %1033 = vmatpush1.bf16.msra.mxu0 0
        %1034 = vmatprep.subr.bf16.mxu0 0
        %1035 = vmatpush1.bf16.msra.mxu0 0
        %1036 = vmatprep.subr.bf16.mxu0 0
        %1037 = vmatpush1.bf16.msra.mxu0 0
        %1038 = vmatprep.subr.bf16.mxu0 0
        %1039 = vmatpush1.bf16.msra.mxu0 0
        %1040 = vmatprep.subr.bf16.mxu0 0
        %1041 = vmatpush1.bf16.msra.mxu0 0
        %1042 = vmatprep.subr.bf16.mxu0 0
        %1043 = vmatpush1.bf16.msra.mxu0 0
        %1044 = vmatprep.mubr.bf16.mxu0 0
        %1045 = vmatmul.mubr.bf16.gmra.mrb[0].mxu0 %v573
        %v1046 = vpop.f32.mrb[0].mxu0
        %v1047 = vadd.f32 %v842, %v1046
        %v1048 = vpop.f32.mrb[0].mxu0
        %v1049 = vpop.f32.mrb[0].mxu0
        %v1050 = vpop.f32.mrb[0].mxu0
        %1051 = vdwg.mxu0
        %v1052 = vld [vmem:[%s4] sm:$0x7]
        %v1054 = vlaneseq
        %v1055 = vshrl.u32 %v1054, 7
        %v1056 = vsub.s32 0, %v1055
        %v1057 = vrot.slane %v1052, %v1056
        %v1058 = vlaneseq
        %v1059 = vshrl.u32 %v1058, 7
        %v1060 = vsub.s32 1, %v1059
        %v1061 = vrot.slane %v1052, %v1060
        %v1062 = vlaneseq
        %v1063 = vshrl.u32 %v1062, 7
        %v1064 = vsub.s32 2, %v1063
        %v1065 = vrot.slane %v1052, %v1064
        %v1069 = vadd.f32 %v1006, %v1057
        %v1070 = vadd.f32 %v1008, %v1061
        %v1071 = vadd.f32 %v1047, %v1065
        %v1072 = vlaneseq
        %v1073 = vshrl.u32 %v1072, 7
        %v1074 = vlaneseq
        %v1075 = vand.u32 %v1074, 127
        %vm1076 = vcmp.le.s32.totalorder %v1075, %v1073
        %vm1077 = vcmp.ge.s32.totalorder %v1075, 0
        %vm1078 = vcmp.lt.s32.totalorder %v1075, 32
        %vm1079 = vmand %vm1077, %vm1078
        %v1080 = vsel %vm1079, 1, 0
        %v1081 = vcvt.s32.f32 %v1080
        %vm1082 = vcmp.ge.s32.totalorder %v1075, 32
        %vm1083 = vcmp.lt.s32.totalorder %v1075, 64
        %vm1084 = vmand %vm1082, %vm1083
        %v1085 = vsel %vm1084, 1, 0
        %v1086 = vcvt.s32.f32 %v1085
        %vm1087 = vcmp.ge.s32.totalorder %v1075, 64
        %vm1088 = vcmp.lt.s32.totalorder %v1075, 96
        %vm1089 = vmand %vm1087, %vm1088
        %v1090 = vsel %vm1089, 1, 0
        %v1091 = vcvt.s32.f32 %v1090
        %vm1092 = vcmp.ge.s32.totalorder %v1075, 96
        %vm1093 = vcmp.lt.s32.totalorder %v1075, 128
        %vm1094 = vmand %vm1092, %vm1093
        %v1095 = vsel %vm1094, 1, 0
        %v1096 = vcvt.s32.f32 %v1095
        %v1097 = vmul.f32 %v1070, %v1081
        %1098 = vmatprep.subr.mxu0 0.0
        %1099 = vmatpush1.xpose.msra.mxu0 %v1097
        %1100 = vmatprep.subr.mxu0 0.0
        %1101 = vmatpush1.xpose.msra.mxu0 0.0
        %1102 = vmatprep.subr.mxu0 0.0
        %1103 = vmatpush1.xpose.msra.mxu0 0.0
        %1104 = vmatprep.subr.mxu0 0.0
        %1105 = vmatpush1.xpose.msra.mxu0 0.0
        %1106 = vmatprep.subr.mxu0 0.0
        %1107 = vmatpush1.xpose.msra.mxu0 0.0
        %1108 = vmatprep.subr.mxu0 0.0
        %1109 = vmatpush1.xpose.msra.mxu0 0.0
        %1110 = vmatprep.subr.mxu0 0.0
        %1111 = vmatpush1.xpose.msra.mxu0 0.0
        %1112 = vmatprep.subr.mxu0 0.0
        %1113 = vmatpush1.xpose.msra.mxu0 0.0
        %1114 = vmatprep.subr.mxu0 0.0
        %1115 = vmatpush1.xpose.msra.mxu0 0.0
        %1116 = vmatprep.subr.mxu0 0.0
        %1117 = vmatpush1.xpose.msra.mxu0 0.0
        %1118 = vmatprep.subr.mxu0 0.0
        %1119 = vmatpush1.xpose.msra.mxu0 0.0
        %1120 = vmatprep.subr.mxu0 0.0
        %1121 = vmatpush1.xpose.msra.mxu0 0.0
        %1122 = vmatprep.subr.mxu0 0.0
        %1123 = vmatpush1.xpose.msra.mxu0 0.0
        %1124 = vmatprep.subr.mxu0 0.0
        %1125 = vmatpush1.xpose.msra.mxu0 0.0
        %1126 = vmatprep.subr.mxu0 0.0
        %1127 = vmatpush1.xpose.msra.mxu0 0.0
        %1128 = vmatprep.subr.mxu0 0.0
        %1129 = vmatpush1.xpose.msra.mxu0 0.0
        %1130 = vmatprep.subr.mxu0 0.0
        %1131 = vmatpush1.xpose.msra.mxu0 0.0
        %1132 = vmatprep.subr.mxu0 0.0
        %1133 = vmatpush1.xpose.msra.mxu0 0.0
        %1134 = vmatprep.subr.mxu0 0.0
        %1135 = vmatpush1.xpose.msra.mxu0 0.0
        %1136 = vmatprep.subr.mxu0 0.0
        %1137 = vmatpush1.xpose.msra.mxu0 0.0
        %1138 = vmatprep.subr.mxu0 0.0
        %1139 = vmatpush1.xpose.msra.mxu0 0.0
        %1140 = vmatprep.subr.mxu0 0.0
        %1141 = vmatpush1.xpose.msra.mxu0 0.0
        %1142 = vmatprep.subr.mxu0 0.0
        %1143 = vmatpush1.xpose.msra.mxu0 0.0
        %1144 = vmatprep.subr.mxu0 0.0
        %1145 = vmatpush1.xpose.msra.mxu0 0.0
        %1146 = vmatprep.subr.mxu0 0.0
        %1147 = vmatpush1.xpose.msra.mxu0 0.0
        %1148 = vmatprep.subr.mxu0 0.0
        %1149 = vmatpush1.xpose.msra.mxu0 0.0
        %1150 = vmatprep.subr.mxu0 0.0
        %1151 = vmatpush1.xpose.msra.mxu0 0.0
        %1152 = vmatprep.subr.mxu0 0.0
        %1153 = vmatpush1.xpose.msra.mxu0 0.0
        %1154 = vmatprep.subr.mxu0 0.0
        %1155 = vmatpush1.xpose.msra.mxu0 0.0
        %1156 = vmatprep.subr.mxu0 0.0
        %1157 = vmatpush1.xpose.msra.mxu0 0.0
        %1158 = vmatprep.subr.mxu0 0.0
        %1159 = vmatpush1.xpose.msra.mxu0 0.0
        %1160 = vmatprep.subr.mxu0 0.0
        %1161 = vmatpush1.xpose.msra.mxu0 0.0
        %1162 = vmatprep.mubr.f32.mxu0 0.0
        %1163 = vmatmul.mubr.f32.gmra.mrb[0].mxu0 %v1069
        %v1164 = vpop.f32.mrb[0].mxu0
        %v1165 = vadd.f32 0.0, %v1164
        %v1166 = vpop.f32.mrb[0].mxu0
        %1167 = vdwg.mxu0
        %v1168 = vmul.f32 %v1165, 0.17677669
        %v1169 = vsel %vm1076, %v1168, -1e+30
        %v1170 = vsel %vm695, %v1169, -inf
        %1171 = vmax.xlane.f32.xlu0 %v1170
        %v1172 = vpop.xlane.xlu0 %1171
        %v1173 = vsub.f32 %v1169, %v1172
        %v1174 = vmul.f32 %v1173, 1.442695
        %v1175 = vpow.pop %v1174
        %v1176 = vsel %vm695, %v1175, 0.0
        %1177 = vadd.xlane.f32.xlu0 %v1176
        %v1178 = vpop.xlane.xlu0 %1177
        %v1179 = vrcp.pop %v1178
        %v1180 = vmul.f32 %v1175, %v1179
        %v1181 = vmul.f32 %v1071, %v1081
        %v1182 = vmul.f32 %v1070, %v1086
        %1183 = vmatprep.subr.mxu0 0.0
        %1184 = vmatpush1.xpose.msra.mxu0 %v1182
        %1185 = vmatprep.subr.mxu0 0.0
        %1186 = vmatpush1.xpose.msra.mxu0 0.0
        %1187 = vmatprep.subr.mxu0 0.0
        %1188 = vmatpush1.xpose.msra.mxu0 0.0
        %1189 = vmatprep.subr.mxu0 0.0
        %1190 = vmatpush1.xpose.msra.mxu0 0.0
        %1191 = vmatprep.subr.mxu0 0.0
        %1192 = vmatpush1.xpose.msra.mxu0 0.0
        %1193 = vmatprep.subr.mxu0 0.0
        %1194 = vmatpush1.xpose.msra.mxu0 0.0
        %1195 = vmatprep.subr.mxu0 0.0
        %1196 = vmatpush1.xpose.msra.mxu0 0.0
        %1197 = vmatprep.subr.mxu0 0.0
        %1198 = vmatpush1.xpose.msra.mxu0 0.0
        %1199 = vmatprep.subr.mxu0 0.0
        %1200 = vmatpush1.xpose.msra.mxu0 0.0
        %1201 = vmatprep.subr.mxu0 0.0
        %1202 = vmatpush1.xpose.msra.mxu0 0.0
        %1203 = vmatprep.subr.mxu0 0.0
        %1204 = vmatpush1.xpose.msra.mxu0 0.0
        %1205 = vmatprep.subr.mxu0 0.0
        %1206 = vmatpush1.xpose.msra.mxu0 0.0
        %1207 = vmatprep.subr.mxu0 0.0
        %1208 = vmatpush1.xpose.msra.mxu0 0.0
        %1209 = vmatprep.subr.mxu0 0.0
        %1210 = vmatpush1.xpose.msra.mxu0 0.0
        %1211 = vmatprep.subr.mxu0 0.0
        %1212 = vmatpush1.xpose.msra.mxu0 0.0
        %1213 = vmatprep.subr.mxu0 0.0
        %1214 = vmatpush1.xpose.msra.mxu0 0.0
        %1215 = vmatprep.subr.mxu0 0.0
        %1216 = vmatpush1.xpose.msra.mxu0 0.0
        %1217 = vmatprep.subr.mxu0 0.0
        %1218 = vmatpush1.xpose.msra.mxu0 0.0
        %1219 = vmatprep.subr.mxu0 0.0
        %1220 = vmatpush1.xpose.msra.mxu0 0.0
        %1221 = vmatprep.subr.mxu0 0.0
        %1222 = vmatpush1.xpose.msra.mxu0 0.0
        %1223 = vmatprep.subr.mxu0 0.0
        %1224 = vmatpush1.xpose.msra.mxu0 0.0
        %1225 = vmatprep.subr.mxu0 0.0
        %1226 = vmatpush1.xpose.msra.mxu0 0.0
        %1227 = vmatprep.subr.mxu0 0.0
        %1228 = vmatpush1.xpose.msra.mxu0 0.0
        %1229 = vmatprep.subr.mxu0 0.0
        %1230 = vmatpush1.xpose.msra.mxu0 0.0
        %1231 = vmatprep.subr.mxu0 0.0
        %1232 = vmatpush1.xpose.msra.mxu0 0.0
        %1233 = vmatprep.subr.mxu0 0.0
        %1234 = vmatpush1.xpose.msra.mxu0 0.0
        %1235 = vmatprep.subr.mxu0 0.0
        %1236 = vmatpush1.xpose.msra.mxu0 0.0
        %1237 = vmatprep.subr.mxu0 0.0
        %1238 = vmatpush1.xpose.msra.mxu0 0.0
        %1239 = vmatprep.subr.mxu0 0.0
        %1240 = vmatpush1.xpose.msra.mxu0 0.0
        %1241 = vmatprep.subr.mxu0 0.0
        %1242 = vmatpush1.xpose.msra.mxu0 0.0
        %1243 = vmatprep.subr.mxu0 0.0
        %1244 = vmatpush1.xpose.msra.mxu0 0.0
        %1245 = vmatprep.subr.mxu0 0.0
        %1246 = vmatpush1.xpose.msra.mxu0 0.0
        %1247 = vmatprep.mubr.f32.mxu0 0.0
        %1248 = vmatmul.mubr.f32.gmra.mrb[0].mxu0 %v1069
        %v1249 = vpop.f32.mrb[0].mxu0
        %v1250 = vadd.f32 0.0, %v1249
        %v1251 = vpop.f32.mrb[0].mxu0
        %1252 = vdwg.mxu0
        %v1253 = vmul.f32 %v1250, 0.17677669
        %v1254 = vsel %vm1076, %v1253, -1e+30
        %v1255 = vsel %vm695, %v1254, -inf
        %1256 = vmax.xlane.f32.xlu0 %v1255
        %v1257 = vpop.xlane.xlu0 %1256
        %v1258 = vsub.f32 %v1254, %v1257
        %v1259 = vmul.f32 %v1258, 1.442695
        %v1260 = vpow.pop %v1259
        %v1261 = vsel %vm695, %v1260, 0.0
        %1262 = vadd.xlane.f32.xlu0 %v1261
        %v1263 = vpop.xlane.xlu0 %1262
        %v1264 = vrcp.pop %v1263
        %v1265 = vmul.f32 %v1260, %v1264
        %v1266 = vmul.f32 %v1071, %v1086
        %v1268 = vsel %vm695, %v1265, 0
        %1270 = vmatprep.subr.mxu0 0.0
        %1271 = vmatpush1.msra.mxu0 %v1266
        %1272 = vmatprep.subr.mxu0 0.0
        %1273 = vmatpush1.msra.mxu0 0.0
        %1274 = vmatprep.subr.mxu0 0.0
        %1275 = vmatpush1.msra.mxu0 0.0
        %1276 = vmatprep.subr.mxu0 0.0
        %1277 = vmatpush1.msra.mxu0 0.0
        %1278 = vmatprep.subr.mxu0 0.0
        %1279 = vmatpush1.msra.mxu0 0.0
        %1280 = vmatprep.subr.mxu0 0.0
        %1281 = vmatpush1.msra.mxu0 0.0
        %1282 = vmatprep.subr.mxu0 0.0
        %1283 = vmatpush1.msra.mxu0 0.0
        %1284 = vmatprep.subr.mxu0 0.0
        %1285 = vmatpush1.msra.mxu0 0.0
        %1286 = vmatprep.subr.mxu0 0.0
        %1287 = vmatpush1.msra.mxu0 0.0
        %1288 = vmatprep.subr.mxu0 0.0
        %1289 = vmatpush1.msra.mxu0 0.0
        %1290 = vmatprep.subr.mxu0 0.0
        %1291 = vmatpush1.msra.mxu0 0.0
        %1292 = vmatprep.subr.mxu0 0.0
        %1293 = vmatpush1.msra.mxu0 0.0
        %1294 = vmatprep.subr.mxu0 0.0
        %1295 = vmatpush1.msra.mxu0 0.0
        %1296 = vmatprep.subr.mxu0 0.0
        %1297 = vmatpush1.msra.mxu0 0.0
        %1298 = vmatprep.subr.mxu0 0.0
        %1299 = vmatpush1.msra.mxu0 0.0
        %1300 = vmatprep.subr.mxu0 0.0
        %1301 = vmatpush1.msra.mxu0 0.0
        %1302 = vmatprep.subr.mxu0 0.0
        %1303 = vmatpush1.msra.mxu0 0.0
        %1304 = vmatprep.subr.mxu0 0.0
        %1305 = vmatpush1.msra.mxu0 0.0
        %1306 = vmatprep.subr.mxu0 0.0
        %1307 = vmatpush1.msra.mxu0 0.0
        %1308 = vmatprep.subr.mxu0 0.0
        %1309 = vmatpush1.msra.mxu0 0.0
        %1310 = vmatprep.subr.mxu0 0.0
        %1311 = vmatpush1.msra.mxu0 0.0
        %1312 = vmatprep.subr.mxu0 0.0
        %1313 = vmatpush1.msra.mxu0 0.0
        %1314 = vmatprep.subr.mxu0 0.0
        %1315 = vmatpush1.msra.mxu0 0.0
        %1316 = vmatprep.subr.mxu0 0.0
        %1317 = vmatpush1.msra.mxu0 0.0
        %1318 = vmatprep.subr.mxu0 0.0
        %1319 = vmatpush1.msra.mxu0 0.0
        %1320 = vmatprep.subr.mxu0 0.0
        %1321 = vmatpush1.msra.mxu0 0.0
        %1322 = vmatprep.subr.mxu0 0.0
        %1323 = vmatpush1.msra.mxu0 0.0
        %1324 = vmatprep.subr.mxu0 0.0
        %1325 = vmatpush1.msra.mxu0 0.0
        %1326 = vmatprep.subr.mxu0 0.0
        %1327 = vmatpush1.msra.mxu0 0.0
        %1328 = vmatprep.subr.mxu0 0.0
        %1329 = vmatpush1.msra.mxu0 0.0
        %1330 = vmatprep.subr.mxu0 0.0
        %1331 = vmatpush1.msra.mxu0 0.0
        %1332 = vmatprep.subr.mxu0 0.0
        %1333 = vmatpush1.msra.mxu0 0.0
        %1334 = vmatprep.mubr.f32.mxu0 0.0
        %1335 = vmatmul.mubr.f32.gmra.mrb[0].mxu0 %v1268
        %v1336 = vpop.f32.mrb[0].mxu0
        %v1337 = vadd.f32 0.0, %v1336
        %v1338 = vpop.f32.mrb[0].mxu0
        %1339 = vdwg.mxu0
        %v1341 = vsel %vm695, %v1180, 0
        %1343 = vmatprep.subr.mxu0 0.0
        %1344 = vmatpush1.msra.mxu0 %v1181
        %1345 = vmatprep.subr.mxu0 0.0
        %1346 = vmatpush1.msra.mxu0 0.0
        %1347 = vmatprep.subr.mxu0 0.0
        %1348 = vmatpush1.msra.mxu0 0.0
        %1349 = vmatprep.subr.mxu0 0.0
        %1350 = vmatpush1.msra.mxu0 0.0
        %1351 = vmatprep.subr.mxu0 0.0
        %1352 = vmatpush1.msra.mxu0 0.0
        %1353 = vmatprep.subr.mxu0 0.0
        %1354 = vmatpush1.msra.mxu0 0.0
        %1355 = vmatprep.subr.mxu0 0.0
        %1356 = vmatpush1.msra.mxu0 0.0
        %1357 = vmatprep.subr.mxu0 0.0
        %1358 = vmatpush1.msra.mxu0 0.0
        %1359 = vmatprep.subr.mxu0 0.0
        %1360 = vmatpush1.msra.mxu0 0.0
        %1361 = vmatprep.subr.mxu0 0.0
        %1362 = vmatpush1.msra.mxu0 0.0
        %1363 = vmatprep.subr.mxu0 0.0
        %1364 = vmatpush1.msra.mxu0 0.0
        %1365 = vmatprep.subr.mxu0 0.0
        %1366 = vmatpush1.msra.mxu0 0.0
        %1367 = vmatprep.subr.mxu0 0.0
        %1368 = vmatpush1.msra.mxu0 0.0
        %1369 = vmatprep.subr.mxu0 0.0
        %1370 = vmatpush1.msra.mxu0 0.0
        %1371 = vmatprep.subr.mxu0 0.0
        %1372 = vmatpush1.msra.mxu0 0.0
        %1373 = vmatprep.subr.mxu0 0.0
        %1374 = vmatpush1.msra.mxu0 0.0
        %1375 = vmatprep.subr.mxu0 0.0
        %1376 = vmatpush1.msra.mxu0 0.0
        %1377 = vmatprep.subr.mxu0 0.0
        %1378 = vmatpush1.msra.mxu0 0.0
        %1379 = vmatprep.subr.mxu0 0.0
        %1380 = vmatpush1.msra.mxu0 0.0
        %1381 = vmatprep.subr.mxu0 0.0
        %1382 = vmatpush1.msra.mxu0 0.0
        %1383 = vmatprep.subr.mxu0 0.0
        %1384 = vmatpush1.msra.mxu0 0.0
        %1385 = vmatprep.subr.mxu0 0.0
        %1386 = vmatpush1.msra.mxu0 0.0
        %1387 = vmatprep.subr.mxu0 0.0
        %1388 = vmatpush1.msra.mxu0 0.0
        %1389 = vmatprep.subr.mxu0 0.0
        %1390 = vmatpush1.msra.mxu0 0.0
        %1391 = vmatprep.subr.mxu0 0.0
        %1392 = vmatpush1.msra.mxu0 0.0
        %1393 = vmatprep.subr.mxu0 0.0
        %1394 = vmatpush1.msra.mxu0 0.0
        %1395 = vmatprep.subr.mxu0 0.0
        %1396 = vmatpush1.msra.mxu0 0.0
        %1397 = vmatprep.subr.mxu0 0.0
        %1398 = vmatpush1.msra.mxu0 0.0
        %1399 = vmatprep.subr.mxu0 0.0
        %1400 = vmatpush1.msra.mxu0 0.0
        %1401 = vmatprep.subr.mxu0 0.0
        %1402 = vmatpush1.msra.mxu0 0.0
        %1403 = vmatprep.subr.mxu0 0.0
        %1404 = vmatpush1.msra.mxu0 0.0
        %1405 = vmatprep.subr.mxu0 0.0
        %1406 = vmatpush1.msra.mxu0 0.0
        %1407 = vmatprep.mubr.f32.mxu0 0.0
        %1408 = vmatmul.mubr.f32.gmra.mrb[0].mxu0 %v1341
        %v1409 = vpop.f32.mrb[0].mxu0
        %v1410 = vadd.f32 %v1337, %v1409
        %v1411 = vpop.f32.mrb[0].mxu0
        %1412 = vdwg.mxu0
        %v1413 = vmul.f32 %v1070, %v1091
        %1414 = vmatprep.subr.mxu0 0.0
        %1415 = vmatpush1.xpose.msra.mxu0 %v1413
        %1416 = vmatprep.subr.mxu0 0.0
        %1417 = vmatpush1.xpose.msra.mxu0 0.0
        %1418 = vmatprep.subr.mxu0 0.0
        %1419 = vmatpush1.xpose.msra.mxu0 0.0
        %1420 = vmatprep.subr.mxu0 0.0
        %1421 = vmatpush1.xpose.msra.mxu0 0.0
        %1422 = vmatprep.subr.mxu0 0.0
        %1423 = vmatpush1.xpose.msra.mxu0 0.0
        %1424 = vmatprep.subr.mxu0 0.0
        %1425 = vmatpush1.xpose.msra.mxu0 0.0
        %1426 = vmatprep.subr.mxu0 0.0
        %1427 = vmatpush1.xpose.msra.mxu0 0.0
        %1428 = vmatprep.subr.mxu0 0.0
        %1429 = vmatpush1.xpose.msra.mxu0 0.0
        %1430 = vmatprep.subr.mxu0 0.0
        %1431 = vmatpush1.xpose.msra.mxu0 0.0
        %1432 = vmatprep.subr.mxu0 0.0
        %1433 = vmatpush1.xpose.msra.mxu0 0.0
        %1434 = vmatprep.subr.mxu0 0.0
        %1435 = vmatpush1.xpose.msra.mxu0 0.0
        %1436 = vmatprep.subr.mxu0 0.0
        %1437 = vmatpush1.xpose.msra.mxu0 0.0
        %1438 = vmatprep.subr.mxu0 0.0
        %1439 = vmatpush1.xpose.msra.mxu0 0.0
        %1440 = vmatprep.subr.mxu0 0.0
        %1441 = vmatpush1.xpose.msra.mxu0 0.0
        %1442 = vmatprep.subr.mxu0 0.0
        %1443 = vmatpush1.xpose.msra.mxu0 0.0
        %1444 = vmatprep.subr.mxu0 0.0
        %1445 = vmatpush1.xpose.msra.mxu0 0.0
        %1446 = vmatprep.subr.mxu0 0.0
        %1447 = vmatpush1.xpose.msra.mxu0 0.0
        %1448 = vmatprep.subr.mxu0 0.0
        %1449 = vmatpush1.xpose.msra.mxu0 0.0
        %1450 = vmatprep.subr.mxu0 0.0
        %1451 = vmatpush1.xpose.msra.mxu0 0.0
        %1452 = vmatprep.subr.mxu0 0.0
        %1453 = vmatpush1.xpose.msra.mxu0 0.0
        %1454 = vmatprep.subr.mxu0 0.0
        %1455 = vmatpush1.xpose.msra.mxu0 0.0
        %1456 = vmatprep.subr.mxu0 0.0
        %1457 = vmatpush1.xpose.msra.mxu0 0.0
        %1458 = vmatprep.subr.mxu0 0.0
        %1459 = vmatpush1.xpose.msra.mxu0 0.0
        %1460 = vmatprep.subr.mxu0 0.0
        %1461 = vmatpush1.xpose.msra.mxu0 0.0
        %1462 = vmatprep.subr.mxu0 0.0
        %1463 = vmatpush1.xpose.msra.mxu0 0.0
        %1464 = vmatprep.subr.mxu0 0.0
        %1465 = vmatpush1.xpose.msra.mxu0 0.0
        %1466 = vmatprep.subr.mxu0 0.0
        %1467 = vmatpush1.xpose.msra.mxu0 0.0
        %1468 = vmatprep.subr.mxu0 0.0
        %1469 = vmatpush1.xpose.msra.mxu0 0.0
        %1470 = vmatprep.subr.mxu0 0.0
        %1471 = vmatpush1.xpose.msra.mxu0 0.0
        %1472 = vmatprep.subr.mxu0 0.0
        %1473 = vmatpush1.xpose.msra.mxu0 0.0
        %1474 = vmatprep.subr.mxu0 0.0
        %1475 = vmatpush1.xpose.msra.mxu0 0.0
        %1476 = vmatprep.subr.mxu0 0.0
        %1477 = vmatpush1.xpose.msra.mxu0 0.0
        %1478 = vmatprep.mubr.f32.mxu0 0.0
        %1479 = vmatmul.mubr.f32.gmra.mrb[0].mxu0 %v1069
        %v1480 = vpop.f32.mrb[0].mxu0
        %v1481 = vadd.f32 0.0, %v1480
        %v1482 = vpop.f32.mrb[0].mxu0
        %1483 = vdwg.mxu0
        %v1484 = vmul.f32 %v1481, 0.17677669
        %v1485 = vsel %vm1076, %v1484, -1e+30
        %v1486 = vsel %vm695, %v1485, -inf
        %1487 = vmax.xlane.f32.xlu0 %v1486
        %v1488 = vpop.xlane.xlu0 %1487
        %v1489 = vsub.f32 %v1485, %v1488
        %v1490 = vmul.f32 %v1489, 1.442695
        %v1491 = vpow.pop %v1490
        %v1492 = vsel %vm695, %v1491, 0.0
        %1493 = vadd.xlane.f32.xlu0 %v1492
        %v1494 = vpop.xlane.xlu0 %1493
        %v1495 = vrcp.pop %v1494
        %v1496 = vmul.f32 %v1491, %v1495
        %v1497 = vmul.f32 %v1071, %v1091
        %v1499 = vsel %vm695, %v1496, 0
        %1501 = vmatprep.subr.mxu0 0.0
        %1502 = vmatpush1.msra.mxu0 %v1497
        %1503 = vmatprep.subr.mxu0 0.0
        %1504 = vmatpush1.msra.mxu0 0.0
        %1505 = vmatprep.subr.mxu0 0.0
        %1506 = vmatpush1.msra.mxu0 0.0
        %1507 = vmatprep.subr.mxu0 0.0
        %1508 = vmatpush1.msra.mxu0 0.0
        %1509 = vmatprep.subr.mxu0 0.0
        %1510 = vmatpush1.msra.mxu0 0.0
        %1511 = vmatprep.subr.mxu0 0.0
        %1512 = vmatpush1.msra.mxu0 0.0
        %1513 = vmatprep.subr.mxu0 0.0
        %1514 = vmatpush1.msra.mxu0 0.0
        %1515 = vmatprep.subr.mxu0 0.0
        %1516 = vmatpush1.msra.mxu0 0.0
        %1517 = vmatprep.subr.mxu0 0.0
        %1518 = vmatpush1.msra.mxu0 0.0
        %1519 = vmatprep.subr.mxu0 0.0
        %1520 = vmatpush1.msra.mxu0 0.0
        %1521 = vmatprep.subr.mxu0 0.0
        %1522 = vmatpush1.msra.mxu0 0.0
        %1523 = vmatprep.subr.mxu0 0.0
        %1524 = vmatpush1.msra.mxu0 0.0
        %1525 = vmatprep.subr.mxu0 0.0
        %1526 = vmatpush1.msra.mxu0 0.0
        %1527 = vmatprep.subr.mxu0 0.0
        %1528 = vmatpush1.msra.mxu0 0.0
        %1529 = vmatprep.subr.mxu0 0.0
        %1530 = vmatpush1.msra.mxu0 0.0
        %1531 = vmatprep.subr.mxu0 0.0
        %1532 = vmatpush1.msra.mxu0 0.0
        %1533 = vmatprep.subr.mxu0 0.0
        %1534 = vmatpush1.msra.mxu0 0.0
        %1535 = vmatprep.subr.mxu0 0.0
        %1536 = vmatpush1.msra.mxu0 0.0
        %1537 = vmatprep.subr.mxu0 0.0
        %1538 = vmatpush1.msra.mxu0 0.0
        %1539 = vmatprep.subr.mxu0 0.0
        %1540 = vmatpush1.msra.mxu0 0.0
        %1541 = vmatprep.subr.mxu0 0.0
        %1542 = vmatpush1.msra.mxu0 0.0
        %1543 = vmatprep.subr.mxu0 0.0
        %1544 = vmatpush1.msra.mxu0 0.0
        %1545 = vmatprep.subr.mxu0 0.0
        %1546 = vmatpush1.msra.mxu0 0.0
        %1547 = vmatprep.subr.mxu0 0.0
        %1548 = vmatpush1.msra.mxu0 0.0
        %1549 = vmatprep.subr.mxu0 0.0
        %1550 = vmatpush1.msra.mxu0 0.0
        %1551 = vmatprep.subr.mxu0 0.0
        %1552 = vmatpush1.msra.mxu0 0.0
        %1553 = vmatprep.subr.mxu0 0.0
        %1554 = vmatpush1.msra.mxu0 0.0
        %1555 = vmatprep.subr.mxu0 0.0
        %1556 = vmatpush1.msra.mxu0 0.0
        %1557 = vmatprep.subr.mxu0 0.0
        %1558 = vmatpush1.msra.mxu0 0.0
        %1559 = vmatprep.subr.mxu0 0.0
        %1560 = vmatpush1.msra.mxu0 0.0
        %1561 = vmatprep.subr.mxu0 0.0
        %1562 = vmatpush1.msra.mxu0 0.0
        %1563 = vmatprep.subr.mxu0 0.0
        %1564 = vmatpush1.msra.mxu0 0.0
        %1565 = vmatprep.mubr.f32.mxu0 0.0
        %1566 = vmatmul.mubr.f32.gmra.mrb[0].mxu0 %v1499
        %v1567 = vpop.f32.mrb[0].mxu0
        %v1568 = vadd.f32 0.0, %v1567
        %v1569 = vpop.f32.mrb[0].mxu0
        %1570 = vdwg.mxu0
        %v1571 = vadd.f32 %v1410, %v1568
        %v1572 = vmul.f32 %v1070, %v1096
        %1573 = vmatprep.subr.mxu0 0.0
        %1574 = vmatpush1.xpose.msra.mxu0 %v1572
        %1575 = vmatprep.subr.mxu0 0.0
        %1576 = vmatpush1.xpose.msra.mxu0 0.0
        %1577 = vmatprep.subr.mxu0 0.0
        %1578 = vmatpush1.xpose.msra.mxu0 0.0
        %1579 = vmatprep.subr.mxu0 0.0
        %1580 = vmatpush1.xpose.msra.mxu0 0.0
        %1581 = vmatprep.subr.mxu0 0.0
        %1582 = vmatpush1.xpose.msra.mxu0 0.0
        %1583 = vmatprep.subr.mxu0 0.0
        %1584 = vmatpush1.xpose.msra.mxu0 0.0
        %1585 = vmatprep.subr.mxu0 0.0
        %1586 = vmatpush1.xpose.msra.mxu0 0.0
        %1587 = vmatprep.subr.mxu0 0.0
        %1588 = vmatpush1.xpose.msra.mxu0 0.0
        %1589 = vmatprep.subr.mxu0 0.0
        %1590 = vmatpush1.xpose.msra.mxu0 0.0
        %1591 = vmatprep.subr.mxu0 0.0
        %1592 = vmatpush1.xpose.msra.mxu0 0.0
        %1593 = vmatprep.subr.mxu0 0.0
        %1594 = vmatpush1.xpose.msra.mxu0 0.0
        %1595 = vmatprep.subr.mxu0 0.0
        %1596 = vmatpush1.xpose.msra.mxu0 0.0
        %1597 = vmatprep.subr.mxu0 0.0
        %1598 = vmatpush1.xpose.msra.mxu0 0.0
        %1599 = vmatprep.subr.mxu0 0.0
        %1600 = vmatpush1.xpose.msra.mxu0 0.0
        %1601 = vmatprep.subr.mxu0 0.0
        %1602 = vmatpush1.xpose.msra.mxu0 0.0
        %1603 = vmatprep.subr.mxu0 0.0
        %1604 = vmatpush1.xpose.msra.mxu0 0.0
        %1605 = vmatprep.subr.mxu0 0.0
        %1606 = vmatpush1.xpose.msra.mxu0 0.0
        %1607 = vmatprep.subr.mxu0 0.0
        %1608 = vmatpush1.xpose.msra.mxu0 0.0
        %1609 = vmatprep.subr.mxu0 0.0
        %1610 = vmatpush1.xpose.msra.mxu0 0.0
        %1611 = vmatprep.subr.mxu0 0.0
        %1612 = vmatpush1.xpose.msra.mxu0 0.0
        %1613 = vmatprep.subr.mxu0 0.0
        %1614 = vmatpush1.xpose.msra.mxu0 0.0
        %1615 = vmatprep.subr.mxu0 0.0
        %1616 = vmatpush1.xpose.msra.mxu0 0.0
        %1617 = vmatprep.subr.mxu0 0.0
        %1618 = vmatpush1.xpose.msra.mxu0 0.0
        %1619 = vmatprep.subr.mxu0 0.0
        %1620 = vmatpush1.xpose.msra.mxu0 0.0
        %1621 = vmatprep.subr.mxu0 0.0
        %1622 = vmatpush1.xpose.msra.mxu0 0.0
        %1623 = vmatprep.subr.mxu0 0.0
        %1624 = vmatpush1.xpose.msra.mxu0 0.0
        %1625 = vmatprep.subr.mxu0 0.0
        %1626 = vmatpush1.xpose.msra.mxu0 0.0
        %1627 = vmatprep.subr.mxu0 0.0
        %1628 = vmatpush1.xpose.msra.mxu0 0.0
        %1629 = vmatprep.subr.mxu0 0.0
        %1630 = vmatpush1.xpose.msra.mxu0 0.0
        %1631 = vmatprep.subr.mxu0 0.0
        %1632 = vmatpush1.xpose.msra.mxu0 0.0
        %1633 = vmatprep.subr.mxu0 0.0
        %1634 = vmatpush1.xpose.msra.mxu0 0.0
        %1635 = vmatprep.subr.mxu0 0.0
        %1636 = vmatpush1.xpose.msra.mxu0 0.0
        %1637 = vmatprep.mubr.f32.mxu0 0.0
        %1638 = vmatmul.mubr.f32.gmra.mrb[0].mxu0 %v1069
        %v1639 = vpop.f32.mrb[0].mxu0
        %v1640 = vadd.f32 0.0, %v1639
        %v1641 = vpop.f32.mrb[0].mxu0
        %1642 = vdwg.mxu0
        %v1643 = vmul.f32 %v1640, 0.17677669
        %v1644 = vsel %vm1076, %v1643, -1e+30
        %v1645 = vsel %vm695, %v1644, -inf
        %1646 = vmax.xlane.f32.xlu0 %v1645
        %v1647 = vpop.xlane.xlu0 %1646
        %v1648 = vsub.f32 %v1644, %v1647
        %v1649 = vmul.f32 %v1648, 1.442695
        %v1650 = vpow.pop %v1649
        %v1651 = vsel %vm695, %v1650, 0.0
        %1652 = vadd.xlane.f32.xlu0 %v1651
        %v1653 = vpop.xlane.xlu0 %1652
        %v1654 = vrcp.pop %v1653
        %v1655 = vmul.f32 %v1650, %v1654
        %v1656 = vmul.f32 %v1071, %v1096
        %v1658 = vsel %vm695, %v1655, 0
        %1660 = vmatprep.subr.mxu0 0.0
        %1661 = vmatpush1.msra.mxu0 %v1656
        %1662 = vmatprep.subr.mxu0 0.0
        %1663 = vmatpush1.msra.mxu0 0.0
        %1664 = vmatprep.subr.mxu0 0.0
        %1665 = vmatpush1.msra.mxu0 0.0
        %1666 = vmatprep.subr.mxu0 0.0
        %1667 = vmatpush1.msra.mxu0 0.0
        %1668 = vmatprep.subr.mxu0 0.0
        %1669 = vmatpush1.msra.mxu0 0.0
        %1670 = vmatprep.subr.mxu0 0.0
        %1671 = vmatpush1.msra.mxu0 0.0
        %1672 = vmatprep.subr.mxu0 0.0
        %1673 = vmatpush1.msra.mxu0 0.0
        %1674 = vmatprep.subr.mxu0 0.0
        %1675 = vmatpush1.msra.mxu0 0.0
        %1676 = vmatprep.subr.mxu0 0.0
        %1677 = vmatpush1.msra.mxu0 0.0
        %1678 = vmatprep.subr.mxu0 0.0
        %1679 = vmatpush1.msra.mxu0 0.0
        %1680 = vmatprep.subr.mxu0 0.0
        %1681 = vmatpush1.msra.mxu0 0.0
        %1682 = vmatprep.subr.mxu0 0.0
        %1683 = vmatpush1.msra.mxu0 0.0
        %1684 = vmatprep.subr.mxu0 0.0
        %1685 = vmatpush1.msra.mxu0 0.0
        %1686 = vmatprep.subr.mxu0 0.0
        %1687 = vmatpush1.msra.mxu0 0.0
        %1688 = vmatprep.subr.mxu0 0.0
        %1689 = vmatpush1.msra.mxu0 0.0
        %1690 = vmatprep.subr.mxu0 0.0
        %1691 = vmatpush1.msra.mxu0 0.0
        %1692 = vmatprep.subr.mxu0 0.0
        %1693 = vmatpush1.msra.mxu0 0.0
        %1694 = vmatprep.subr.mxu0 0.0
        %1695 = vmatpush1.msra.mxu0 0.0
        %1696 = vmatprep.subr.mxu0 0.0
        %1697 = vmatpush1.msra.mxu0 0.0
        %1698 = vmatprep.subr.mxu0 0.0
        %1699 = vmatpush1.msra.mxu0 0.0
        %1700 = vmatprep.subr.mxu0 0.0
        %1701 = vmatpush1.msra.mxu0 0.0
        %1702 = vmatprep.subr.mxu0 0.0
        %1703 = vmatpush1.msra.mxu0 0.0
        %1704 = vmatprep.subr.mxu0 0.0
        %1705 = vmatpush1.msra.mxu0 0.0
        %1706 = vmatprep.subr.mxu0 0.0
        %1707 = vmatpush1.msra.mxu0 0.0
        %1708 = vmatprep.subr.mxu0 0.0
        %1709 = vmatpush1.msra.mxu0 0.0
        %1710 = vmatprep.subr.mxu0 0.0
        %1711 = vmatpush1.msra.mxu0 0.0
        %1712 = vmatprep.subr.mxu0 0.0
        %1713 = vmatpush1.msra.mxu0 0.0
        %1714 = vmatprep.subr.mxu0 0.0
        %1715 = vmatpush1.msra.mxu0 0.0
        %1716 = vmatprep.subr.mxu0 0.0
        %1717 = vmatpush1.msra.mxu0 0.0
        %1718 = vmatprep.subr.mxu0 0.0
        %1719 = vmatpush1.msra.mxu0 0.0
        %1720 = vmatprep.subr.mxu0 0.0
        %1721 = vmatpush1.msra.mxu0 0.0
        %1722 = vmatprep.subr.mxu0 0.0
        %1723 = vmatpush1.msra.mxu0 0.0
        %1724 = vmatprep.mubr.f32.mxu0 0.0
        %1725 = vmatmul.mubr.f32.gmra.mrb[0].mxu0 %v1658
        %v1726 = vpop.f32.mrb[0].mxu0
        %v1727 = vadd.f32 0.0, %v1726
        %v1728 = vpop.f32.mrb[0].mxu0
        %1729 = vdwg.mxu0
        %v1730 = vadd.f32 %v1571, %v1727
        %v1731 = vpack.c.bf16 %v1730, %v1730
        %v1732 = vld [vmem:[%s7] sm:$0xf]
        %v1733 = vld [vmem:[%s7 + $0x4] sm:$0xf]
        %v1734 = vld [vmem:[%s7 + $0x8] sm:$0xf]
        %v1735 = vld [vmem:[%s7 + $0xc] sm:$0xf]
        %v1736 = vld [vmem:[%s7 + $0x10] sm:$0xf]
        %v1737 = vld [vmem:[%s7 + $0x14] sm:$0xf]
        %v1738 = vld [vmem:[%s7 + $0x18] sm:$0xf]
        %v1739 = vld [vmem:[%s7 + $0x1c] sm:$0xf]
        %v1740 = vld [vmem:[%s7 + $0x20] sm:$0xf]
        %v1741 = vld [vmem:[%s7 + $0x24] sm:$0xf]
        %v1742 = vld [vmem:[%s7 + $0x28] sm:$0xf]
        %v1743 = vld [vmem:[%s7 + $0x2c] sm:$0xf]
        %v1744 = vld [vmem:[%s7 + $0x30] sm:$0xf]
        %v1745 = vld [vmem:[%s7 + $0x34] sm:$0xf]
        %v1746 = vld [vmem:[%s7 + $0x38] sm:$0xf]
        %v1747 = vld [vmem:[%s7 + $0x3c] sm:$0xf]
        %v1748 = vld [vmem:[%s8] sm:$0x1]
        %v1750 = vlaneseq
        %v1751 = vshrl.u32 %v1750, 7
        %v1752 = vsub.s32 0, %v1751
        %v1753 = vrot.slane %v1748, %v1752
        %v1771 = vunpack.c.l.b16 %v1732
        %v1772 = vunpack.c.l.b16 %v1733
        %v1773 = vunpack.c.l.b16 %v1734
        %v1774 = vunpack.c.l.b16 %v1735
        %v1775 = vunpack.c.l.b16 %v1736
        %v1776 = vunpack.c.l.b16 %v1737
        %v1777 = vunpack.c.l.b16 %v1738
        %v1778 = vunpack.c.l.b16 %v1739
        %v1779 = vunpack.c.l.b16 %v1740
        %v1780 = vunpack.c.l.b16 %v1741
        %v1781 = vunpack.c.l.b16 %v1742
        %v1782 = vunpack.c.l.b16 %v1743
        %v1783 = vunpack.c.l.b16 %v1744
        %v1784 = vunpack.c.l.b16 %v1745
        %v1785 = vunpack.c.l.b16 %v1746
        %v1786 = vunpack.c.l.b16 %v1747
        %v1787 = vpack.c.b16 %v1772, %v1771
        %v1788 = vpack.c.b16 %v1774, %v1773
        %v1789 = vpack.c.b16 %v1776, %v1775
        %v1790 = vpack.c.b16 %v1778, %v1777
        %v1791 = vpack.c.b16 %v1780, %v1779
        %v1792 = vpack.c.b16 %v1782, %v1781
        %v1793 = vpack.c.b16 %v1784, %v1783
        %v1794 = vpack.c.b16 %v1786, %v1785
        %1803 = vmatprep.subr.bf16.mxu0 0
        %1804 = vmatpush1.bf16.msra.mxu0 %v1787
        %1805 = vmatprep.subr.bf16.mxu0 0
        %1806 = vmatpush1.bf16.msra.mxu0 %v1788
        %1807 = vmatprep.subr.bf16.mxu0 0
        %1808 = vmatpush1.bf16.msra.mxu0 %v1789
        %1809 = vmatprep.subr.bf16.mxu0 0
        %1810 = vmatpush1.bf16.msra.mxu0 %v1790
        %1811 = vmatprep.subr.bf16.mxu0 0
        %1812 = vmatpush1.bf16.msra.mxu0 %v1791
        %1813 = vmatprep.subr.bf16.mxu0 0
        %1814 = vmatpush1.bf16.msra.mxu0 %v1792
        %1815 = vmatprep.subr.bf16.mxu0 0
        %1816 = vmatpush1.bf16.msra.mxu0 %v1793
        %1817 = vmatprep.subr.bf16.mxu0 0
        %1818 = vmatpush1.bf16.msra.mxu0 %v1794
        %1819 = vmatprep.subr.bf16.mxu0 0
        %1820 = vmatpush1.bf16.msra.mxu0 0
        %1821 = vmatprep.subr.bf16.mxu0 0
        %1822 = vmatpush1.bf16.msra.mxu0 0
        %1823 = vmatprep.subr.bf16.mxu0 0
        %1824 = vmatpush1.bf16.msra.mxu0 0
        %1825 = vmatprep.subr.bf16.mxu0 0
        %1826 = vmatpush1.bf16.msra.mxu0 0
        %1827 = vmatprep.subr.bf16.mxu0 0
        %1828 = vmatpush1.bf16.msra.mxu0 0
        %1829 = vmatprep.subr.bf16.mxu0 0
        %1830 = vmatpush1.bf16.msra.mxu0 0
        %1831 = vmatprep.subr.bf16.mxu0 0
        %1832 = vmatpush1.bf16.msra.mxu0 0
        %1833 = vmatprep.subr.bf16.mxu0 0
        %1834 = vmatpush1.bf16.msra.mxu0 0
        %1835 = vmatprep.mubr.bf16.mxu0 0
        %1836 = vmatmul.mubr.bf16.gmra.mrb[0].mxu0 %v1731
        %v1837 = vpop.f32.mrb[0].mxu0
        %v1838 = vadd.f32 %v1753, %v1837
        %v1839 = vpop.f32.mrb[0].mxu0
        %v1840 = vpop.f32.mrb[0].mxu0
        %v1841 = vpop.f32.mrb[0].mxu0
        %1842 = vdwg.mxu0
        %v1843 = vadd.f32 %v544, %v1838
        %v1844 = vld [vmem:[#allocation2] sm:$0x1]
        %v1845 = vld [vmem:[#allocation4] sm:$0x1]
        %1846 = vadd.xlane.f32.xlu0 %v1843
        %v1847 = vpop.xlane.xlu0 %1846
        %v1848 = vmul.f32 %v1847, %v549
        %v1849 = vsub.f32 %v1843, %v1848
        %v1850 = vmul.f32 %v1849, %v1849
        %1851 = vadd.xlane.f32.xlu0 %v1850
        %v1852 = vpop.xlane.xlu0 %1851
        %v1853 = vmul.f32 %v1852, %v549
        %v1854 = vadd.f32 %v1853, 1e-05
        %v1855 = vrsqrt.pop %v1854
        %v1856 = vmul.f32 %v1849, %v1855
        %v1858 = vlaneseq
        %v1859 = vshrl.u32 %v1858, 7
        %v1860 = vsub.s32 0, %v1859
        %v1861 = vrot.slane %v1844, %v1860
        %v1863 = vmul.f32 %v1856, %v1861
        %v1865 = vlaneseq
        %v1866 = vshrl.u32 %v1865, 7
        %v1867 = vsub.s32 0, %v1866
        %v1868 = vrot.slane %v1845, %v1867
        %v1870 = vadd.f32 %v1863, %v1868
        %v1871 = vpack.c.bf16 %v1870, %v1870
        %v1872 = vld [vmem:[%s11] sm:$0xff]
        %v1873 = vld [vmem:[%s11 + $0x8] sm:$0xff]
        %v1874 = vld [vmem:[%s11 + $0x10] sm:$0xff]
        %v1875 = vld [vmem:[%s11 + $0x18] sm:$0xff]
        %v1876 = vld [vmem:[%s11 + $0x20] sm:$0xff]
        %v1877 = vld [vmem:[%s11 + $0x28] sm:$0xff]
        %v1878 = vld [vmem:[%s11 + $0x30] sm:$0xff]
        %v1879 = vld [vmem:[%s11 + $0x38] sm:$0xff]
        %v1880 = vld [vmem:[%s11 + $0x40] sm:$0xff]
        %v1881 = vld [vmem:[%s11 + $0x48] sm:$0xff]
        %v1882 = vld [vmem:[%s11 + $0x50] sm:$0xff]
        %v1883 = vld [vmem:[%s11 + $0x58] sm:$0xff]
        %v1884 = vld [vmem:[%s11 + $0x60] sm:$0xff]
        %v1885 = vld [vmem:[%s11 + $0x68] sm:$0xff]
        %v1886 = vld [vmem:[%s11 + $0x70] sm:$0xff]
        %v1887 = vld [vmem:[%s11 + $0x78] sm:$0xff]
        %v1888 = vld [vmem:[%s12] sm:$0x3]
        %v1890 = vlaneseq
        %v1891 = vshrl.u32 %v1890, 7
        %v1892 = vsub.s32 0, %v1891
        %v1893 = vrot.slane %v1888, %v1892
        %v1894 = vlaneseq
        %v1895 = vshrl.u32 %v1894, 7
        %v1896 = vsub.s32 1, %v1895
        %v1897 = vrot.slane %v1888, %v1896
        %v1916 = vunpack.c.l.b16 %v1872
        %v1917 = vunpack.c.h.b16 %v1872
        %v1918 = vunpack.c.l.b16 %v1873
        %v1919 = vunpack.c.h.b16 %v1873
        %v1920 = vunpack.c.l.b16 %v1874
        %v1921 = vunpack.c.h.b16 %v1874
        %v1922 = vunpack.c.l.b16 %v1875
        %v1923 = vunpack.c.h.b16 %v1875
        %v1924 = vunpack.c.l.b16 %v1876
        %v1925 = vunpack.c.h.b16 %v1876
        %v1926 = vunpack.c.l.b16 %v1877
        %v1927 = vunpack.c.h.b16 %v1877
        %v1928 = vunpack.c.l.b16 %v1878
        %v1929 = vunpack.c.h.b16 %v1878
        %v1930 = vunpack.c.l.b16 %v1879
        %v1931 = vunpack.c.h.b16 %v1879
        %v1932 = vunpack.c.l.b16 %v1880
        %v1933 = vunpack.c.h.b16 %v1880
        %v1934 = vunpack.c.l.b16 %v1881
        %v1935 = vunpack.c.h.b16 %v1881
        %v1936 = vunpack.c.l.b16 %v1882
        %v1937 = vunpack.c.h.b16 %v1882
        %v1938 = vunpack.c.l.b16 %v1883
        %v1939 = vunpack.c.h.b16 %v1883
        %v1940 = vunpack.c.l.b16 %v1884
        %v1941 = vunpack.c.h.b16 %v1884
        %v1942 = vunpack.c.l.b16 %v1885
        %v1943 = vunpack.c.h.b16 %v1885
        %v1944 = vunpack.c.l.b16 %v1886
        %v1945 = vunpack.c.h.b16 %v1886
        %v1946 = vunpack.c.l.b16 %v1887
        %v1947 = vunpack.c.h.b16 %v1887
        %v1948 = vpack.c.b16 %v1918, %v1916
        %v1949 = vpack.c.b16 %v1919, %v1917
        %v1950 = vpack.c.b16 %v1922, %v1920
        %v1951 = vpack.c.b16 %v1923, %v1921
        %v1952 = vpack.c.b16 %v1926, %v1924
        %v1953 = vpack.c.b16 %v1927, %v1925
        %v1954 = vpack.c.b16 %v1930, %v1928
        %v1955 = vpack.c.b16 %v1931, %v1929
        %v1956 = vpack.c.b16 %v1934, %v1932
        %v1957 = vpack.c.b16 %v1935, %v1933
        %v1958 = vpack.c.b16 %v1938, %v1936
        %v1959 = vpack.c.b16 %v1939, %v1937
        %v1960 = vpack.c.b16 %v1942, %v1940
        %v1961 = vpack.c.b16 %v1943, %v1941
        %v1962 = vpack.c.b16 %v1946, %v1944
        %v1963 = vpack.c.b16 %v1947, %v1945
        %1980 = vmatprep.subr.bf16.mxu0 %v1949
        %1981 = vmatpush1.bf16.msra.mxu0 %v1948
        %1982 = vmatprep.subr.bf16.mxu0 %v1951
        %1983 = vmatpush1.bf16.msra.mxu0 %v1950
        %1984 = vmatprep.subr.bf16.mxu0 %v1953
        %1985 = vmatpush1.bf16.msra.mxu0 %v1952
        %1986 = vmatprep.subr.bf16.mxu0 %v1955
        %1987 = vmatpush1.bf16.msra.mxu0 %v1954
        %1988 = vmatprep.subr.bf16.mxu0 %v1957
        %1989 = vmatpush1.bf16.msra.mxu0 %v1956
        %1990 = vmatprep.subr.bf16.mxu0 %v1959
        %1991 = vmatpush1.bf16.msra.mxu0 %v1958
        %1992 = vmatprep.subr.bf16.mxu0 %v1961
        %1993 = vmatpush1.bf16.msra.mxu0 %v1960
        %1994 = vmatprep.subr.bf16.mxu0 %v1963
        %1995 = vmatpush1.bf16.msra.mxu0 %v1962
        %1996 = vmatprep.subr.bf16.mxu0 0
        %1997 = vmatpush1.bf16.msra.mxu0 0
        %1998 = vmatprep.subr.bf16.mxu0 0
        %1999 = vmatpush1.bf16.msra.mxu0 0
        %2000 = vmatprep.subr.bf16.mxu0 0
        %2001 = vmatpush1.bf16.msra.mxu0 0
        %2002 = vmatprep.subr.bf16.mxu0 0
        %2003 = vmatpush1.bf16.msra.mxu0 0
        %2004 = vmatprep.subr.bf16.mxu0 0
        %2005 = vmatpush1.bf16.msra.mxu0 0
        %2006 = vmatprep.subr.bf16.mxu0 0
        %2007 = vmatpush1.bf16.msra.mxu0 0
        %2008 = vmatprep.subr.bf16.mxu0 0
        %2009 = vmatpush1.bf16.msra.mxu0 0
        %2010 = vmatprep.subr.bf16.mxu0 0
        %2011 = vmatpush1.bf16.msra.mxu0 0
        %2012 = vmatprep.mubr.bf16.mxu0 0
        %2013 = vmatmul.mubr.bf16.gmra.mrb[0].mxu0 %v1871
        %v2014 = vpop.f32.mrb[0].mxu0
        %v2015 = vadd.f32 %v1893, %v2014
        %v2016 = vpop.f32.mrb[0].mxu0
        %v2017 = vadd.f32 %v1897, %v2016
        %v2018 = vpop.f32.mrb[0].mxu0
        %v2019 = vpop.f32.mrb[0].mxu0
        %2020 = vdwg.mxu0
        %v2021 = vmul.f32 %v2015, %v2015
        %v2022 = vmul.f32 %v2017, %v2017
        %v2023 = vmul.f32 %v2015, %v2021
        %v2024 = vmul.f32 %v2017, %v2022
        %v2025 = vmul.f32 %v2023, 0.044715
        %v2026 = vmul.f32 %v2024, 0.044715
        %v2027 = vadd.f32 %v2015, %v2025
        %v2028 = vadd.f32 %v2017, %v2026
        %v2029 = vmul.f32 %v2027, 0.7978846
        %v2030 = vmul.f32 %v2028, 0.7978846
        %v2031 = vtanh.pop %v2029
        %v2032 = vtanh.pop %v2030
        %v2033 = vadd.f32 %v2031, 1.0
        %v2034 = vadd.f32 %v2032, 1.0
        %v2035 = vmul.f32 %v2033, 0.5
        %v2036 = vmul.f32 %v2034, 0.5
        %v2037 = vmul.f32 %v2015, %v2035
        %v2038 = vmul.f32 %v2017, %v2036
        %v2039 = vpack.c.bf16 %v2037, %v2037
        %v2040 = vpack.c.bf16 %v2038, %v2038
        %v2041 = vld [vmem:[#allocation6] sm:$0xf]
        %v2042 = vld [vmem:[#allocation6 + $0x4] sm:$0xf]
        %v2043 = vld [vmem:[#allocation6 + $0x8] sm:$0xf]
        %v2044 = vld [vmem:[#allocation6 + $0xc] sm:$0xf]
        %v2045 = vld [vmem:[#allocation6 + $0x10] sm:$0xf]
        %v2046 = vld [vmem:[#allocation6 + $0x14] sm:$0xf]
        %v2047 = vld [vmem:[#allocation6 + $0x18] sm:$0xf]
        %v2048 = vld [vmem:[#allocation6 + $0x1c] sm:$0xf]
        %v2049 = vld [vmem:[#allocation6 + $0x20] sm:$0xf]
        %v2050 = vld [vmem:[#allocation6 + $0x24] sm:$0xf]
        %v2051 = vld [vmem:[#allocation6 + $0x28] sm:$0xf]
        %v2052 = vld [vmem:[#allocation6 + $0x2c] sm:$0xf]
        %v2053 = vld [vmem:[#allocation6 + $0x30] sm:$0xf]
        %v2054 = vld [vmem:[#allocation6 + $0x34] sm:$0xf]
        %v2055 = vld [vmem:[#allocation6 + $0x38] sm:$0xf]
        %v2056 = vld [vmem:[#allocation6 + $0x3c] sm:$0xf]
        %v2057 = vld [vmem:[#allocation6 + $0x40] sm:$0xf]
        %v2058 = vld [vmem:[#allocation6 + $0x44] sm:$0xf]
        %v2059 = vld [vmem:[#allocation6 + $0x48] sm:$0xf]
        %v2060 = vld [vmem:[#allocation6 + $0x4c] sm:$0xf]
        %v2061 = vld [vmem:[#allocation6 + $0x50] sm:$0xf]
        %v2062 = vld [vmem:[#allocation6 + $0x54] sm:$0xf]
        %v2063 = vld [vmem:[#allocation6 + $0x58] sm:$0xf]
        %v2064 = vld [vmem:[#allocation6 + $0x5c] sm:$0xf]
        %v2065 = vld [vmem:[#allocation6 + $0x60] sm:$0xf]
        %v2066 = vld [vmem:[#allocation6 + $0x64] sm:$0xf]
        %v2067 = vld [vmem:[#allocation6 + $0x68] sm:$0xf]
        %v2068 = vld [vmem:[#allocation6 + $0x6c] sm:$0xf]
        %v2069 = vld [vmem:[#allocation6 + $0x70] sm:$0xf]
        %v2070 = vld [vmem:[#allocation6 + $0x74] sm:$0xf]
        %v2071 = vld [vmem:[#allocation6 + $0x78] sm:$0xf]
        %v2072 = vld [vmem:[#allocation6 + $0x7c] sm:$0xf]
        %v2073 = vld [vmem:[#allocation7] sm:$0x1]
        %v2075 = vlaneseq
        %v2076 = vshrl.u32 %v2075, 7
        %v2077 = vsub.s32 0, %v2076
        %v2078 = vrot.slane %v2073, %v2077
        %v2112 = vunpack.c.l.b16 %v2041
        %v2113 = vunpack.c.l.b16 %v2042
        %v2114 = vunpack.c.l.b16 %v2043
        %v2115 = vunpack.c.l.b16 %v2044
        %v2116 = vunpack.c.l.b16 %v2045
        %v2117 = vunpack.c.l.b16 %v2046
        %v2118 = vunpack.c.l.b16 %v2047
        %v2119 = vunpack.c.l.b16 %v2048
        %v2120 = vunpack.c.l.b16 %v2049
        %v2121 = vunpack.c.l.b16 %v2050
        %v2122 = vunpack.c.l.b16 %v2051
        %v2123 = vunpack.c.l.b16 %v2052
        %v2124 = vunpack.c.l.b16 %v2053
        %v2125 = vunpack.c.l.b16 %v2054
        %v2126 = vunpack.c.l.b16 %v2055
        %v2127 = vunpack.c.l.b16 %v2056
        %v2128 = vunpack.c.l.b16 %v2057
        %v2129 = vunpack.c.l.b16 %v2058
        %v2130 = vunpack.c.l.b16 %v2059
        %v2131 = vunpack.c.l.b16 %v2060
        %v2132 = vunpack.c.l.b16 %v2061
        %v2133 = vunpack.c.l.b16 %v2062
        %v2134 = vunpack.c.l.b16 %v2063
        %v2135 = vunpack.c.l.b16 %v2064
        %v2136 = vunpack.c.l.b16 %v2065
        %v2137 = vunpack.c.l.b16 %v2066
        %v2138 = vunpack.c.l.b16 %v2067
        %v2139 = vunpack.c.l.b16 %v2068
        %v2140 = vunpack.c.l.b16 %v2069
        %v2141 = vunpack.c.l.b16 %v2070
        %v2142 = vunpack.c.l.b16 %v2071
        %v2143 = vunpack.c.l.b16 %v2072
        %v2144 = vpack.c.b16 %v2113, %v2112
        %v2145 = vpack.c.b16 %v2115, %v2114
        %v2146 = vpack.c.b16 %v2117, %v2116
        %v2147 = vpack.c.b16 %v2119, %v2118
        %v2148 = vpack.c.b16 %v2121, %v2120
        %v2149 = vpack.c.b16 %v2123, %v2122
        %v2150 = vpack.c.b16 %v2125, %v2124
        %v2151 = vpack.c.b16 %v2127, %v2126
        %v2152 = vpack.c.b16 %v2129, %v2128
        %v2153 = vpack.c.b16 %v2131, %v2130
        %v2154 = vpack.c.b16 %v2133, %v2132
        %v2155 = vpack.c.b16 %v2135, %v2134
        %v2156 = vpack.c.b16 %v2137, %v2136
        %v2157 = vpack.c.b16 %v2139, %v2138
        %v2158 = vpack.c.b16 %v2141, %v2140
        %v2159 = vpack.c.b16 %v2143, %v2142
        %2176 = vmatprep.subr.bf16.mxu0 0
        %2177 = vmatpush1.bf16.msra.mxu0 %v2144
        %2178 = vmatprep.subr.bf16.mxu0 0
        %2179 = vmatpush1.bf16.msra.mxu0 %v2145
        %2180 = vmatprep.subr.bf16.mxu0 0
        %2181 = vmatpush1.bf16.msra.mxu0 %v2146
        %2182 = vmatprep.subr.bf16.mxu0 0
        %2183 = vmatpush1.bf16.msra.mxu0 %v2147
        %2184 = vmatprep.subr.bf16.mxu0 0
        %2185 = vmatpush1.bf16.msra.mxu0 %v2148
        %2186 = vmatprep.subr.bf16.mxu0 0
        %2187 = vmatpush1.bf16.msra.mxu0 %v2149
        %2188 = vmatprep.subr.bf16.mxu0 0
        %2189 = vmatpush1.bf16.msra.mxu0 %v2150
        %2190 = vmatprep.subr.bf16.mxu0 0
        %2191 = vmatpush1.bf16.msra.mxu0 %v2151
        %2192 = vmatprep.subr.bf16.mxu0 0
        %2193 = vmatpush1.bf16.msra.mxu0 %v2152
        %2194 = vmatprep.subr.bf16.mxu0 0
        %2195 = vmatpush1.bf16.msra.mxu0 %v2153
        %2196 = vmatprep.subr.bf16.mxu0 0
        %2197 = vmatpush1.bf16.msra.mxu0 %v2154
        %2198 = vmatprep.subr.bf16.mxu0 0
        %2199 = vmatpush1.bf16.msra.mxu0 %v2155
        %2200 = vmatprep.subr.bf16.mxu0 0
        %2201 = vmatpush1.bf16.msra.mxu0 %v2156
        %2202 = vmatprep.subr.bf16.mxu0 0
        %2203 = vmatpush1.bf16.msra.mxu0 %v2157
        %2204 = vmatprep.subr.bf16.mxu0 0
        %2205 = vmatpush1.bf16.msra.mxu0 %v2158
        %2206 = vmatprep.subr.bf16.mxu0 0
        %2207 = vmatpush1.bf16.msra.mxu0 %v2159
        %2208 = vmatprep.mubr.bf16.mxu0 %v2040
        %2209 = vmatmul.mubr.bf16.gmra.mrb[0].mxu0 %v2039
        %v2210 = vpop.f32.mrb[0].mxu0
        %v2211 = vadd.f32 %v2078, %v2210
        %v2212 = vpop.f32.mrb[0].mxu0
        %v2213 = vpop.f32.mrb[0].mxu0
        %v2214 = vpop.f32.mrb[0].mxu0
        %2215 = vdwg.mxu0
        %v2216 = vadd.f32 %v1843, %v2211
        %2217 = vst [vmem:[%s542] sm:$0xff] %v2216
        %p2218 = scmp.lt.s32.totalorder %s29, 1
        %s2219 = scalar_select %p2218, %s29, 1
        %s2220 = smul.addr %s2219, 8
        %s2221 = scalar_lea.vmem %s15, %s2220
        // Predicated region
        $region97: #{chatglm_lora_forward.3} parent=79 // pred_check
          %p2222 = pneg %p367
        $region98: #{chatglm_lora_forward.3} parent=79 // pred_check_branch
          %2224 = sbr.rel (%p2222) target = $region100
        $region99: #{chatglm_lora_forward.3} parent=79 // pred_region
          _
        $region100: #{chatglm_lora_forward.3} parent=79 // pred_fallthru
          _
      $region80: #{chatglm_lora_forward.3} parent=5 // pred_fallthru
        _
      %p2225 = scmp.le.s32.totalorder 2, %s24
      // Predicated region
      $region101: #{chatglm_lora_forward.3} parent=5 // pred_check
        %p2226 = pneg %p2225
      $region102: #{chatglm_lora_forward.3} parent=5 // pred_check_branch
        %2228 = sbr.rel (%p2226) target = $region104
      $region103: #{chatglm_lora_forward.3} parent=5 // pred_region
        %s2229 = ssub.s32 %s24, 2
        // Predicated region
        $region105: #{chatglm_lora_forward.3} parent=103 // pred_check
          %p2230 = pneg %p373
        $region106: #{chatglm_lora_forward.3} parent=103 // pred_check_branch
          %2232 = sbr.rel (%p2230) target = $region108
        $region107: #{chatglm_lora_forward.3} parent=103 // pred_region
          %p2233 = scmp.lt.s32.totalorder %s30, 1
          %s2234 = scalar_select %p2233, %s30, 1
          %s2235 = smul.addr %s2234, 8
          %s2236 = scalar_lea.vmem %s15, %s2235
        $region108: #{chatglm_lora_forward.3} parent=103 // pred_fallthru
          _
      $region104: #{chatglm_lora_forward.3} parent=5 // pred_fallthru
        _
    $region6: #{chatglm_lora_forward.3} parent=1 // loop_footer
      %s28 = sadd.s32 1, %s24
    $region7: #{chatglm_lora_forward.3} parent=1 // loop_footer_branch
      %23 = sbr.rel target = $region3
    $region8: #{chatglm_lora_forward.3} parent=1 // loop_exit
      _
    %2237 = vsyncpa [#allocation3], 1
    %s2238 = scalar_lea.sflag [#allocation3], 1
    %2239 = vsyncpa %s2238, 1
    %2240 = vsyncpa [#allocation5], 1
    %2241 = vsyncpa [#allocation8], 1

// kernel: chatglm_lora_forward.4
$region0: #{chatglm_lora_forward.4}
  #allocation0 [shape = 'u32[]', space=smem, size = 0x4, offset = 0x4, fixed_abs, tag = 'smem constant byte address 0x4 - core index']
  #allocation1 [shape = 'u32[144,128]{1,0:T(1,128)}', space=vmem, size = 0x12000, scoped, tag = 'internal scratch']
  %s0 = inlined_call_operand.vmem [shape: f32[16,128], index: 0, kind: input, shape index: {}]
  %s1 = inlined_call_operand.vmem [shape: f32[1,128], index: 1, kind: input, shape index: {}]
  %s2 = inlined_call_operand.vmem [shape: f32[1,128], index: 2, kind: input, shape index: {}]
  %s3 = inlined_call_operand.vmem [shape: bf16[128,384], index: 3, kind: input, shape index: {}]
  %s4 = inlined_call_operand.vmem [shape: f32[1,384], index: 4, kind: input, shape index: {}]
  %s5 = inlined_call_operand.vmem [shape: f32[128,8], index: 5, kind: input, shape index: {}]
  %s6 = inlined_call_operand.vmem [shape: f32[8,384], index: 6, kind: input, shape index: {}]
  %s7 = inlined_call_operand.vmem [shape: bf16[128,128], index: 7, kind: input, shape index: {}]
  %s8 = inlined_call_operand.vmem [shape: f32[1,128], index: 8, kind: input, shape index: {}]
  %s9 = inlined_call_operand.vmem [shape: f32[1,128], index: 9, kind: input, shape index: {}]
  %s10 = inlined_call_operand.vmem [shape: f32[1,128], index: 10, kind: input, shape index: {}]
  %s11 = inlined_call_operand.vmem [shape: bf16[128,256], index: 11, kind: input, shape index: {}]
  %s12 = inlined_call_operand.vmem [shape: f32[1,256], index: 12, kind: input, shape index: {}]
  %s13 = inlined_call_operand.vmem [shape: bf16[256,128], index: 13, kind: input, shape index: {}]
  %s14 = inlined_call_operand.vmem [shape: f32[1,128], index: 14, kind: input, shape index: {}]
  %s15 = inlined_call_operand.vmem [shape: f32[16,128], index: 15, kind: output, shape index: {}]
  %s16 = sld [smem:[#allocation0]]
  $region93: #{chatglm_lora_forward.4} parent=0
    _
  %s18 = ssub.s32 1, %s16
  %s19 = scalar_select 0, %s18, %s16
  loop: start=0, step=1, limit=4
  $region2: #{chatglm_lora_forward.4} parent=0 // loop_pre_header
    _
  $region3: #{chatglm_lora_forward.4} parent=0 // loop_header
    %s21 = sphi 0, %s25
    %p22 = scmp.ge.s32.totalorder %s21, 4
    %s31 = sphi 0, %s33
    %s34 = sphi 0, %s31
    %s35 = sphi 0, %s34
    %s51 = sphi 0, %s35
    %s55 = sphi 0, %s55
    %s57 = sphi 0, %s55
    %s58 = sphi 0, %s57
    %s72 = sphi 0, %s58
    %s76 = sphi 0, %s76
    %s78 = sphi 0, %s76
    %s79 = sphi 0, %s78
    %s93 = sphi 0, %s79
    %s97 = sphi 0, %s97
    %s99 = sphi 0, %s97
    %s100 = sphi 0, %s99
    %s114 = sphi 0, %s100
    %s118 = sphi 0, %s118
    %s120 = sphi 0, %s118
    %s121 = sphi 0, %s120
    %s135 = sphi 0, %s121
    %s139 = sphi 0, %s139
    %s141 = sphi 0, %s139
    %s142 = sphi 0, %s141
    %s156 = sphi 0, %s142
    %s160 = sphi 0, %s160
    %s162 = sphi 0, %s160
    %s163 = sphi 0, %s162
    %s177 = sphi 0, %s163
    %s181 = sphi 0, %s181
    %s183 = sphi 0, %s181
    %s184 = sphi 0, %s183
    %s198 = sphi 0, %s184
    %s202 = sphi 0, %s202
    %s204 = sphi 0, %s202
    %s205 = sphi 0, %s204
    %s219 = sphi 0, %s205
    %s223 = sphi 0, %s223
    %s225 = sphi 0, %s223
    %s226 = sphi 0, %s225
    %s240 = sphi 0, %s226
    %s244 = sphi 0, %s244
    %s246 = sphi 0, %s244
    %s247 = sphi 0, %s246
    %s261 = sphi 0, %s247
    %s265 = sphi 0, %s265
    %s267 = sphi 0, %s265
    %s268 = sphi 0, %s267
    %s282 = sphi 0, %s268
    %s286 = sphi 0, %s286
    %s288 = sphi 0, %s286
    %s289 = sphi 0, %s288
    %s303 = sphi 0, %s289
    %s307 = sphi 0, %s307
    %s309 = sphi 0, %s307
    %s310 = sphi 0, %s309
    %s324 = sphi 0, %s310
    %s328 = sphi 0, %s328
    %s330 = sphi 0, %s328
    %s331 = sphi 0, %s330
    %s345 = sphi 0, %s331
    %s351 = sphi 0, %s353
    %s354 = sphi 0, %s351
    %s355 = sphi 0, %s354
    %s371 = sphi 0, %s355
  $region4: #{chatglm_lora_forward.4} parent=0 // loop_header_branch
    %24 = sbr.rel (%p22) target = $region8
  $region5: #{chatglm_lora_forward.4} parent=0 // loop_body
    %s26 = ssub.s32 %s21, 1
    %s27 = ssub.s32 %s21, 2
    %s28 = sadd.s32 %s21, 1
    %s29 = ssub.s32 %s21, %s28
    %p30 = scmp.eq.s32.totalorder %s29, 0
    %s32 = sadd.s32 %s31, 1
    %s33 = scalar_select %p30, %s31, %s32
    %p36 = pneg %p30
    %p37 = scmp.eq.s32.totalorder %s21, 1
    %p38 = por %p36, %p37
    %p39 = scmp.ne.s32.totalorder %s31, %s34
    %p40 = scmp.eq.s32.totalorder %s21, 0
    %p41 = por %p39, %p40
    %p42 = scmp.ne.s32.totalorder %s31, %s34
    %p43 = scmp.eq.s32.totalorder %s26, 1
    %p44 = por %p42, %p43
    %p45 = scmp.ne.s32.totalorder %s34, %s35
    %p46 = scmp.eq.s32.totalorder %s26, 0
    %p47 = por %p45, %p46
    %p48 = scmp.ne.s32.totalorder %s34, %s35
    %p49 = scmp.eq.s32.totalorder %s27, 1
    %p50 = por %p48, %p49
    %p52 = scmp.ne.s32.totalorder %s35, %s51
    %p53 = scmp.eq.s32.totalorder %s27, 0
    %p54 = por %p52, %p53
    %s56 = sadd.s32 %s55, 1
    %p59 = scmp.eq.s32.totalorder %s21, 1
    %p60 = scmp.ne.s32.totalorder %s55, %s57
    %p61 = scmp.eq.s32.totalorder %s21, 0
    %p62 = por %p60, %p61
    %p63 = scmp.ne.s32.totalorder %s55, %s57
    %p64 = scmp.eq.s32.totalorder %s26, 1
    %p65 = por %p63, %p64
    %p66 = scmp.ne.s32.totalorder %s57, %s58
    %p67 = scmp.eq.s32.totalorder %s26, 0
    %p68 = por %p66, %p67
    %p69 = scmp.ne.s32.totalorder %s57, %s58
    %p70 = scmp.eq.s32.totalorder %s27, 1
    %p71 = por %p69, %p70
    %p73 = scmp.ne.s32.totalorder %s58, %s72
    %p74 = scmp.eq.s32.totalorder %s27, 0
    %p75 = por %p73, %p74
    %s77 = sadd.s32 %s76, 1
    %p80 = scmp.eq.s32.totalorder %s21, 1
    %p81 = scmp.ne.s32.totalorder %s76, %s78
    %p82 = scmp.eq.s32.totalorder %s21, 0
    %p83 = por %p81, %p82
    %p84 = scmp.ne.s32.totalorder %s76, %s78
    %p85 = scmp.eq.s32.totalorder %s26, 1
    %p86 = por %p84, %p85
    %p87 = scmp.ne.s32.totalorder %s78, %s79
    %p88 = scmp.eq.s32.totalorder %s26, 0
    %p89 = por %p87, %p88
    %p90 = scmp.ne.s32.totalorder %s78, %s79
    %p91 = scmp.eq.s32.totalorder %s27, 1
    %p92 = por %p90, %p91
    %p94 = scmp.ne.s32.totalorder %s79, %s93
    %p95 = scmp.eq.s32.totalorder %s27, 0
    %p96 = por %p94, %p95
    %s98 = sadd.s32 %s97, 1
    %p101 = scmp.eq.s32.totalorder %s21, 1
    %p102 = scmp.ne.s32.totalorder %s97, %s99
    %p103 = scmp.eq.s32.totalorder %s21, 0
    %p104 = por %p102, %p103
    %p105 = scmp.ne.s32.totalorder %s97, %s99
    %p106 = scmp.eq.s32.totalorder %s26, 1
    %p107 = por %p105, %p106
    %p108 = scmp.ne.s32.totalorder %s99, %s100
    %p109 = scmp.eq.s32.totalorder %s26, 0
    %p110 = por %p108, %p109
    %p111 = scmp.ne.s32.totalorder %s99, %s100
    %p112 = scmp.eq.s32.totalorder %s27, 1
    %p113 = por %p111, %p112
    %p115 = scmp.ne.s32.totalorder %s100, %s114
    %p116 = scmp.eq.s32.totalorder %s27, 0
    %p117 = por %p115, %p116
    %s119 = sadd.s32 %s118, 1
    %p122 = scmp.eq.s32.totalorder %s21, 1
    %p123 = scmp.ne.s32.totalorder %s118, %s120
    %p124 = scmp.eq.s32.totalorder %s21, 0
    %p125 = por %p123, %p124
    %p126 = scmp.ne.s32.totalorder %s118, %s120
    %p127 = scmp.eq.s32.totalorder %s26, 1
    %p128 = por %p126, %p127
    %p129 = scmp.ne.s32.totalorder %s120, %s121
    %p130 = scmp.eq.s32.totalorder %s26, 0
    %p131 = por %p129, %p130
    %p132 = scmp.ne.s32.totalorder %s120, %s121
    %p133 = scmp.eq.s32.totalorder %s27, 1
    %p134 = por %p132, %p133
    %p136 = scmp.ne.s32.totalorder %s121, %s135
    %p137 = scmp.eq.s32.totalorder %s27, 0
    %p138 = por %p136, %p137
    %s140 = sadd.s32 %s139, 1
    %p143 = scmp.eq.s32.totalorder %s21, 1
    %p144 = scmp.ne.s32.totalorder %s139, %s141
    %p145 = scmp.eq.s32.totalorder %s21, 0
    %p146 = por %p144, %p145
    %p147 = scmp.ne.s32.totalorder %s139, %s141
    %p148 = scmp.eq.s32.totalorder %s26, 1
    %p149 = por %p147, %p148
    %p150 = scmp.ne.s32.totalorder %s141, %s142
    %p151 = scmp.eq.s32.totalorder %s26, 0
    %p152 = por %p150, %p151
    %p153 = scmp.ne.s32.totalorder %s141, %s142
    %p154 = scmp.eq.s32.totalorder %s27, 1
    %p155 = por %p153, %p154
    %p157 = scmp.ne.s32.totalorder %s142, %s156
    %p158 = scmp.eq.s32.totalorder %s27, 0
    %p159 = por %p157, %p158
    %s161 = sadd.s32 %s160, 1
    %p164 = scmp.eq.s32.totalorder %s21, 1
    %p165 = scmp.ne.s32.totalorder %s160, %s162
    %p166 = scmp.eq.s32.totalorder %s21, 0
    %p167 = por %p165, %p166
    %p168 = scmp.ne.s32.totalorder %s160, %s162
    %p169 = scmp.eq.s32.totalorder %s26, 1
    %p170 = por %p168, %p169
    %p171 = scmp.ne.s32.totalorder %s162, %s163
    %p172 = scmp.eq.s32.totalorder %s26, 0
    %p173 = por %p171, %p172
    %p174 = scmp.ne.s32.totalorder %s162, %s163
    %p175 = scmp.eq.s32.totalorder %s27, 1
    %p176 = por %p174, %p175
    %p178 = scmp.ne.s32.totalorder %s163, %s177
    %p179 = scmp.eq.s32.totalorder %s27, 0
    %p180 = por %p178, %p179
    %s182 = sadd.s32 %s181, 1
    %p185 = scmp.eq.s32.totalorder %s21, 1
    %p186 = scmp.ne.s32.totalorder %s181, %s183
    %p187 = scmp.eq.s32.totalorder %s21, 0
    %p188 = por %p186, %p187
    %p189 = scmp.ne.s32.totalorder %s181, %s183
    %p190 = scmp.eq.s32.totalorder %s26, 1
    %p191 = por %p189, %p190
    %p192 = scmp.ne.s32.totalorder %s183, %s184
    %p193 = scmp.eq.s32.totalorder %s26, 0
    %p194 = por %p192, %p193
    %p195 = scmp.ne.s32.totalorder %s183, %s184
    %p196 = scmp.eq.s32.totalorder %s27, 1
    %p197 = por %p195, %p196
    %p199 = scmp.ne.s32.totalorder %s184, %s198
    %p200 = scmp.eq.s32.totalorder %s27, 0
    %p201 = por %p199, %p200
    %s203 = sadd.s32 %s202, 1
    %p206 = scmp.eq.s32.totalorder %s21, 1
    %p207 = scmp.ne.s32.totalorder %s202, %s204
    %p208 = scmp.eq.s32.totalorder %s21, 0
    %p209 = por %p207, %p208
    %p210 = scmp.ne.s32.totalorder %s202, %s204
    %p211 = scmp.eq.s32.totalorder %s26, 1
    %p212 = por %p210, %p211
    %p213 = scmp.ne.s32.totalorder %s204, %s205
    %p214 = scmp.eq.s32.totalorder %s26, 0
    %p215 = por %p213, %p214
    %p216 = scmp.ne.s32.totalorder %s204, %s205
    %p217 = scmp.eq.s32.totalorder %s27, 1
    %p218 = por %p216, %p217
    %p220 = scmp.ne.s32.totalorder %s205, %s219
    %p221 = scmp.eq.s32.totalorder %s27, 0
    %p222 = por %p220, %p221
    %s224 = sadd.s32 %s223, 1
    %p227 = scmp.eq.s32.totalorder %s21, 1
    %p228 = scmp.ne.s32.totalorder %s223, %s225
    %p229 = scmp.eq.s32.totalorder %s21, 0
    %p230 = por %p228, %p229
    %p231 = scmp.ne.s32.totalorder %s223, %s225
    %p232 = scmp.eq.s32.totalorder %s26, 1
    %p233 = por %p231, %p232
    %p234 = scmp.ne.s32.totalorder %s225, %s226
    %p235 = scmp.eq.s32.totalorder %s26, 0
    %p236 = por %p234, %p235
    %p237 = scmp.ne.s32.totalorder %s225, %s226
    %p238 = scmp.eq.s32.totalorder %s27, 1
    %p239 = por %p237, %p238
    %p241 = scmp.ne.s32.totalorder %s226, %s240
    %p242 = scmp.eq.s32.totalorder %s27, 0
    %p243 = por %p241, %p242
    %s245 = sadd.s32 %s244, 1
    %p248 = scmp.eq.s32.totalorder %s21, 1
    %p249 = scmp.ne.s32.totalorder %s244, %s246
    %p250 = scmp.eq.s32.totalorder %s21, 0
    %p251 = por %p249, %p250
    %p252 = scmp.ne.s32.totalorder %s244, %s246
    %p253 = scmp.eq.s32.totalorder %s26, 1
    %p254 = por %p252, %p253
    %p255 = scmp.ne.s32.totalorder %s246, %s247
    %p256 = scmp.eq.s32.totalorder %s26, 0
    %p257 = por %p255, %p256
    %p258 = scmp.ne.s32.totalorder %s246, %s247
    %p259 = scmp.eq.s32.totalorder %s27, 1
    %p260 = por %p258, %p259
    %p262 = scmp.ne.s32.totalorder %s247, %s261
    %p263 = scmp.eq.s32.totalorder %s27, 0
    %p264 = por %p262, %p263
    %s266 = sadd.s32 %s265, 1
    %p269 = scmp.eq.s32.totalorder %s21, 1
    %p270 = scmp.ne.s32.totalorder %s265, %s267
    %p271 = scmp.eq.s32.totalorder %s21, 0
    %p272 = por %p270, %p271
    %p273 = scmp.ne.s32.totalorder %s265, %s267
    %p274 = scmp.eq.s32.totalorder %s26, 1
    %p275 = por %p273, %p274
    %p276 = scmp.ne.s32.totalorder %s267, %s268
    %p277 = scmp.eq.s32.totalorder %s26, 0
    %p278 = por %p276, %p277
    %p279 = scmp.ne.s32.totalorder %s267, %s268
    %p280 = scmp.eq.s32.totalorder %s27, 1
    %p281 = por %p279, %p280
    %p283 = scmp.ne.s32.totalorder %s268, %s282
    %p284 = scmp.eq.s32.totalorder %s27, 0
    %p285 = por %p283, %p284
    %s287 = sadd.s32 %s286, 1
    %p290 = scmp.eq.s32.totalorder %s21, 1
    %p291 = scmp.ne.s32.totalorder %s286, %s288
    %p292 = scmp.eq.s32.totalorder %s21, 0
    %p293 = por %p291, %p292
    %p294 = scmp.ne.s32.totalorder %s286, %s288
    %p295 = scmp.eq.s32.totalorder %s26, 1
    %p296 = por %p294, %p295
    %p297 = scmp.ne.s32.totalorder %s288, %s289
    %p298 = scmp.eq.s32.totalorder %s26, 0
    %p299 = por %p297, %p298
    %p300 = scmp.ne.s32.totalorder %s288, %s289
    %p301 = scmp.eq.s32.totalorder %s27, 1
    %p302 = por %p300, %p301
    %p304 = scmp.ne.s32.totalorder %s289, %s303
    %p305 = scmp.eq.s32.totalorder %s27, 0
    %p306 = por %p304, %p305
    %s308 = sadd.s32 %s307, 1
    %p311 = scmp.eq.s32.totalorder %s21, 1
    %p312 = scmp.ne.s32.totalorder %s307, %s309
    %p313 = scmp.eq.s32.totalorder %s21, 0
    %p314 = por %p312, %p313
    %p315 = scmp.ne.s32.totalorder %s307, %s309
    %p316 = scmp.eq.s32.totalorder %s26, 1
    %p317 = por %p315, %p316
    %p318 = scmp.ne.s32.totalorder %s309, %s310
    %p319 = scmp.eq.s32.totalorder %s26, 0
    %p320 = por %p318, %p319
    %p321 = scmp.ne.s32.totalorder %s309, %s310
    %p322 = scmp.eq.s32.totalorder %s27, 1
    %p323 = por %p321, %p322
    %p325 = scmp.ne.s32.totalorder %s310, %s324
    %p326 = scmp.eq.s32.totalorder %s27, 0
    %p327 = por %p325, %p326
    %s329 = sadd.s32 %s328, 1
    %p332 = scmp.eq.s32.totalorder %s21, 1
    %p333 = scmp.ne.s32.totalorder %s328, %s330
    %p334 = scmp.eq.s32.totalorder %s21, 0
    %p335 = por %p333, %p334
    %p336 = scmp.ne.s32.totalorder %s328, %s330
    %p337 = scmp.eq.s32.totalorder %s26, 1
    %p338 = por %p336, %p337
    %p339 = scmp.ne.s32.totalorder %s330, %s331
    %p340 = scmp.eq.s32.totalorder %s26, 0
    %p341 = por %p339, %p340
    %p342 = scmp.ne.s32.totalorder %s330, %s331
    %p343 = scmp.eq.s32.totalorder %s27, 1
    %p344 = por %p342, %p343
    %p346 = scmp.ne.s32.totalorder %s331, %s345
    %p347 = scmp.eq.s32.totalorder %s27, 0
    %p348 = por %p346, %p347
    %s349 = ssub.s32 %s21, %s28
    %p350 = scmp.eq.s32.totalorder %s349, 0
    %s352 = sadd.s32 %s351, 1
    %s353 = scalar_select %p350, %s351, %s352
    %p356 = pneg %p350
    %p357 = scmp.eq.s32.totalorder %s21, 1
    %p358 = por %p356, %p357
    %p359 = scmp.ne.s32.totalorder %s351, %s354
    %p360 = scmp.eq.s32.totalorder %s21, 0
    %p361 = por %p359, %p360
    %p362 = scmp.ne.s32.totalorder %s351, %s354
    %p363 = scmp.eq.s32.totalorder %s26, 1
    %p364 = por %p362, %p363
    %p365 = scmp.ne.s32.totalorder %s354, %s355
    %p366 = scmp.eq.s32.totalorder %s26, 0
    %p367 = por %p365, %p366
    %p368 = scmp.ne.s32.totalorder %s354, %s355
    %p369 = scmp.eq.s32.totalorder %s27, 1
    %p370 = por %p368, %p369
    %p372 = scmp.ne.s32.totalorder %s355, %s371
    %p373 = scmp.eq.s32.totalorder %s27, 0
    %p374 = por %p372, %p373
    %p375 = scmp.le.s32.totalorder 1, %s21
    %p376 = scmp.lt.s32.totalorder %s21, 3
    %p377 = pnand %p375, %p376
    %p378 = pneg %p377
    // Predicated region
    $region9: #{chatglm_lora_forward.4} parent=5 // pred_check
      _
    $region10: #{chatglm_lora_forward.4} parent=5 // pred_check_branch
      %380 = sbr.rel (%p377) target = $region12
    $region11: #{chatglm_lora_forward.4} parent=5 // pred_region
      %s381 = ssub.s32 %s21, 1
      // Predicated region
      $region13: #{chatglm_lora_forward.4} parent=11 // pred_check
        %p382 = pneg %p68
      $region14: #{chatglm_lora_forward.4} parent=11 // pred_check_branch
        %384 = sbr.rel (%p382) target = $region16
      $region15: #{chatglm_lora_forward.4} parent=11 // pred_region
        _
      $region16: #{chatglm_lora_forward.4} parent=11 // pred_fallthru
        _
      // Predicated region
      $region17: #{chatglm_lora_forward.4} parent=11 // pred_check
        %p385 = pneg %p89
      $region18: #{chatglm_lora_forward.4} parent=11 // pred_check_branch
        %387 = sbr.rel (%p385) target = $region20
      $region19: #{chatglm_lora_forward.4} parent=11 // pred_region
        _
      $region20: #{chatglm_lora_forward.4} parent=11 // pred_fallthru
        _
      // Predicated region
      $region21: #{chatglm_lora_forward.4} parent=11 // pred_check
        %p388 = pneg %p110
      $region22: #{chatglm_lora_forward.4} parent=11 // pred_check_branch
        %390 = sbr.rel (%p388) target = $region24
      $region23: #{chatglm_lora_forward.4} parent=11 // pred_region
        _
      $region24: #{chatglm_lora_forward.4} parent=11 // pred_fallthru
        _
      // Predicated region
      $region25: #{chatglm_lora_forward.4} parent=11 // pred_check
        %p391 = pneg %p131
      $region26: #{chatglm_lora_forward.4} parent=11 // pred_check_branch
        %393 = sbr.rel (%p391) target = $region28
      $region27: #{chatglm_lora_forward.4} parent=11 // pred_region
        _
      $region28: #{chatglm_lora_forward.4} parent=11 // pred_fallthru
        _
      // Predicated region
      $region29: #{chatglm_lora_forward.4} parent=11 // pred_check
        %p394 = pneg %p152
      $region30: #{chatglm_lora_forward.4} parent=11 // pred_check_branch
        %396 = sbr.rel (%p394) target = $region32
      $region31: #{chatglm_lora_forward.4} parent=11 // pred_region
        _
      $region32: #{chatglm_lora_forward.4} parent=11 // pred_fallthru
        _
      // Predicated region
      $region33: #{chatglm_lora_forward.4} parent=11 // pred_check
        %p397 = pneg %p173
      $region34: #{chatglm_lora_forward.4} parent=11 // pred_check_branch
        %399 = sbr.rel (%p397) target = $region36
      $region35: #{chatglm_lora_forward.4} parent=11 // pred_region
        _
      $region36: #{chatglm_lora_forward.4} parent=11 // pred_fallthru
        _
      // Predicated region
      $region37: #{chatglm_lora_forward.4} parent=11 // pred_check
        %p400 = pneg %p194
      $region38: #{chatglm_lora_forward.4} parent=11 // pred_check_branch
        %402 = sbr.rel (%p400) target = $region40
      $region39: #{chatglm_lora_forward.4} parent=11 // pred_region
        _
      $region40: #{chatglm_lora_forward.4} parent=11 // pred_fallthru
        _
      // Predicated region
      $region41: #{chatglm_lora_forward.4} parent=11 // pred_check
        %p403 = pneg %p215
      $region42: #{chatglm_lora_forward.4} parent=11 // pred_check_branch
        %405 = sbr.rel (%p403) target = $region44
      $region43: #{chatglm_lora_forward.4} parent=11 // pred_region
        _
      $region44: #{chatglm_lora_forward.4} parent=11 // pred_fallthru
        _
      // Predicated region
      $region45: #{chatglm_lora_forward.4} parent=11 // pred_check
        %p406 = pneg %p236
      $region46: #{chatglm_lora_forward.4} parent=11 // pred_check_branch
        %408 = sbr.rel (%p406) target = $region48
      $region47: #{chatglm_lora_forward.4} parent=11 // pred_region
        _
      $region48: #{chatglm_lora_forward.4} parent=11 // pred_fallthru
        _
      // Predicated region
      $region49: #{chatglm_lora_forward.4} parent=11 // pred_check
        %p409 = pneg %p257
      $region50: #{chatglm_lora_forward.4} parent=11 // pred_check_branch
        %411 = sbr.rel (%p409) target = $region52
      $region51: #{chatglm_lora_forward.4} parent=11 // pred_region
        _
      $region52: #{chatglm_lora_forward.4} parent=11 // pred_fallthru
        _
      // Predicated region
      $region53: #{chatglm_lora_forward.4} parent=11 // pred_check
        %p412 = pneg %p278
      $region54: #{chatglm_lora_forward.4} parent=11 // pred_check_branch
        %414 = sbr.rel (%p412) target = $region56
      $region55: #{chatglm_lora_forward.4} parent=11 // pred_region
        _
      $region56: #{chatglm_lora_forward.4} parent=11 // pred_fallthru
        _
      // Predicated region
      $region57: #{chatglm_lora_forward.4} parent=11 // pred_check
        %p415 = pneg %p299
      $region58: #{chatglm_lora_forward.4} parent=11 // pred_check_branch
        %417 = sbr.rel (%p415) target = $region60
      $region59: #{chatglm_lora_forward.4} parent=11 // pred_region
        _
      $region60: #{chatglm_lora_forward.4} parent=11 // pred_fallthru
        _
      // Predicated region
      $region61: #{chatglm_lora_forward.4} parent=11 // pred_check
        %p418 = pneg %p320
      $region62: #{chatglm_lora_forward.4} parent=11 // pred_check_branch
        %420 = sbr.rel (%p418) target = $region64
      $region63: #{chatglm_lora_forward.4} parent=11 // pred_region
        _
      $region64: #{chatglm_lora_forward.4} parent=11 // pred_fallthru
        _
      // Predicated region
      $region65: #{chatglm_lora_forward.4} parent=11 // pred_check
        %p421 = pneg %p341
      $region66: #{chatglm_lora_forward.4} parent=11 // pred_check_branch
        %423 = sbr.rel (%p421) target = $region68
      $region67: #{chatglm_lora_forward.4} parent=11 // pred_region
        _
      $region68: #{chatglm_lora_forward.4} parent=11 // pred_fallthru
        _
    $region12: #{chatglm_lora_forward.4} parent=5 // pred_fallthru
      _
    %p424 = scmp.lt.s32.totalorder %s21, 2
    // Predicated region
    $region69: #{chatglm_lora_forward.4} parent=5 // pred_check
      %p425 = pneg %p424
    $region70: #{chatglm_lora_forward.4} parent=5 // pred_check_branch
      %427 = sbr.rel (%p425) target = $region72
    $region71: #{chatglm_lora_forward.4} parent=5 // pred_region
      // Predicated region
      $region73: #{chatglm_lora_forward.4} parent=71 // pred_check
        %p428 = pneg %p41
      $region74: #{chatglm_lora_forward.4} parent=71 // pred_check_branch
        %430 = sbr.rel (%p428) target = $region76
      $region75: #{chatglm_lora_forward.4} parent=71 // pred_region
        %p431 = scmp.lt.s32.totalorder %s21, 1
        %s432 = scalar_select %p431, %s21, 1
        %s433 = smul.addr %s432, 8
        %s434 = scalar_lea.vmem %s0, %s433
      $region76: #{chatglm_lora_forward.4} parent=71 // pred_fallthru
        _
    $region72: #{chatglm_lora_forward.4} parent=5 // pred_fallthru
      _
    %p435 = scmp.le.s32.totalorder 1, %s21
    %p436 = scmp.lt.s32.totalorder %s21, 3
    %p437 = pnand %p435, %p436
    %p438 = pneg %p437
    // Predicated region
    $region77: #{chatglm_lora_forward.4} parent=5 // pred_check
      _
    $region78: #{chatglm_lora_forward.4} parent=5 // pred_check_branch
      %440 = sbr.rel (%p437) target = $region80
    $region79: #{chatglm_lora_forward.4} parent=5 // pred_region
      %s441 = ssub.s32 %s21, 1
      %p442 = scmp.lt.s32.totalorder %s26, 1
      %s443 = scalar_select %p442, %s26, 1
      %s444 = smul.addr %s443, 8
      %s445 = scalar_lea.vmem %s0, %s444
      %p446 = pneg %p47
      %p447 = pneg %p44
      %p448 = pneg %p68
      %p449 = pneg %p65
      %p450 = pneg %p89
      %p451 = pneg %p86
      %p452 = pneg %p110
      %p453 = pneg %p107
      %p454 = pneg %p131
      %p455 = pneg %p128
      %p456 = pneg %p152
      %p457 = pneg %p149
      %p458 = pneg %p173
      %p459 = pneg %p170
      %p460 = pneg %p194
      %p461 = pneg %p191
      %p462 = pneg %p215
      %p463 = pneg %p212
      %p464 = pneg %p236
      %p465 = pneg %p233
      %p466 = pneg %p257
      %p467 = pneg %p254
      %p468 = pneg %p278
      %p469 = pneg %p275
      %p470 = pneg %p299
      %p471 = pneg %p296
      %p472 = pneg %p320
      %p473 = pneg %p317
      %p474 = pneg %p341
      %p475 = pneg %p338
      %p476 = pneg %p367
      %p477 = pneg %p364
      %p478 = scmp.lt.s32.totalorder %s26, 1
      %s479 = scalar_select %p478, %s26, 1
      %s480 = smul.addr %s479, 8
      %s481 = scalar_lea.vmem %s15, %s480
      %p482 = scmp.lt.s32.totalorder %s26, 1
      %s483 = scalar_select %p482, %s26, 1
      %s484 = smul.addr %s483, 8
      %s485 = scalar_lea.vmem %s0, %s484
      %p486 = scmp.lt.s32.totalorder %s26, 1
      %s487 = scalar_select %p486, %s26, 1
      %s488 = smul.addr %s487, 8
      %s489 = scalar_lea.vmem %s15, %s488
      %v491 = vld [vmem:[%s485] sm:$0xff]
      %v492 = vld [vmem:[%s1] sm:$0x1]
      %v493 = vld [vmem:[%s2] sm:$0x1]
      %494 = vadd.xlane.f32.xlu0 %v491
      %v495 = vpop.xlane.xlu0 %494
      %v496 = vrcp.pop 128.0
      %v497 = vmul.f32 %v495, %v496
      %v498 = vsub.f32 %v491, %v497
      %v499 = vmul.f32 %v498, %v498
      %500 = vadd.xlane.f32.xlu0 %v499
      %v501 = vpop.xlane.xlu0 %500
      %v502 = vmul.f32 %v501, %v496
      %v503 = vadd.f32 %v502, 1e-05
      %v504 = vrsqrt.pop %v503
      %v505 = vmul.f32 %v498, %v504
      %v507 = vlaneseq
      %v508 = vshrl.u32 %v507, 7
      %v509 = vsub.s32 0, %v508
      %v510 = vrot.slane %v492, %v509
      %v512 = vmul.f32 %v505, %v510
      %v514 = vlaneseq
      %v515 = vshrl.u32 %v514, 7
      %v516 = vsub.s32 0, %v515
      %v517 = vrot.slane %v493, %v516
      %v519 = vadd.f32 %v512, %v517
      %v520 = vpack.c.bf16 %v519, %v519
      %v521 = vld [vmem:[%s3] sm:$0xff]
      %v522 = vld [vmem:[%s3 + $0x8] sm:$0xf]
      %v523 = vld [vmem:[%s3 + $0xc] sm:$0xff]
      %v524 = vld [vmem:[%s3 + $0x14] sm:$0xf]
      %v525 = vld [vmem:[%s3 + $0x18] sm:$0xff]
      %v526 = vld [vmem:[%s3 + $0x20] sm:$0xf]
      %v527 = vld [vmem:[%s3 + $0x24] sm:$0xff]
      %v528 = vld [vmem:[%s3 + $0x2c] sm:$0xf]
      %v529 = vld [vmem:[%s3 + $0x30] sm:$0xff]
      %v530 = vld [vmem:[%s3 + $0x38] sm:$0xf]
      %v531 = vld [vmem:[%s3 + $0x3c] sm:$0xff]
      %v532 = vld [vmem:[%s3 + $0x44] sm:$0xf]
      %v533 = vld [vmem:[%s3 + $0x48] sm:$0xff]
      %v534 = vld [vmem:[%s3 + $0x50] sm:$0xf]
      %v535 = vld [vmem:[%s3 + $0x54] sm:$0xff]
      %v536 = vld [vmem:[%s3 + $0x5c] sm:$0xf]
      %v537 = vld [vmem:[%s3 + $0x60] sm:$0xff]
      %v538 = vld [vmem:[%s3 + $0x68] sm:$0xf]
      %v539 = vld [vmem:[%s3 + $0x6c] sm:$0xff]
      %v540 = vld [vmem:[%s3 + $0x74] sm:$0xf]
      %v541 = vld [vmem:[%s3 + $0x78] sm:$0xff]
      %v542 = vld [vmem:[%s3 + $0x80] sm:$0xf]
      %v543 = vld [vmem:[%s3 + $0x84] sm:$0xff]
      %v544 = vld [vmem:[%s3 + $0x8c] sm:$0xf]
      %v545 = vld [vmem:[%s3 + $0x90] sm:$0xff]
      %v546 = vld [vmem:[%s3 + $0x98] sm:$0xf]
      %v547 = vld [vmem:[%s3 + $0x9c] sm:$0xff]
      %v548 = vld [vmem:[%s3 + $0xa4] sm:$0xf]
      %v549 = vld [vmem:[%s3 + $0xa8] sm:$0xff]
      %v550 = vld [vmem:[%s3 + $0xb0] sm:$0xf]
      %v551 = vld [vmem:[%s3 + $0xb4] sm:$0xff]
      %v552 = vld [vmem:[%s3 + $0xbc] sm:$0xf]
      %v553 = vld [vmem:[%s5] sm:$0xff]
      %v554 = vld [vmem:[%s5 + $0x8] sm:$0xff]
      %v555 = vld [vmem:[%s5 + $0x10] sm:$0xff]
      %v556 = vld [vmem:[%s5 + $0x18] sm:$0xff]
      %v557 = vld [vmem:[%s5 + $0x20] sm:$0xff]
      %v558 = vld [vmem:[%s5 + $0x28] sm:$0xff]
      %v559 = vld [vmem:[%s5 + $0x30] sm:$0xff]
      %v560 = vld [vmem:[%s5 + $0x38] sm:$0xff]
      %v561 = vld [vmem:[%s5 + $0x40] sm:$0xff]
      %v562 = vld [vmem:[%s5 + $0x48] sm:$0xff]
      %v563 = vld [vmem:[%s5 + $0x50] sm:$0xff]
      %v564 = vld [vmem:[%s5 + $0x58] sm:$0xff]
      %v565 = vld [vmem:[%s5 + $0x60] sm:$0xff]
      %v566 = vld [vmem:[%s5 + $0x68] sm:$0xff]
      %v567 = vld [vmem:[%s5 + $0x70] sm:$0xff]
      %v568 = vld [vmem:[%s5 + $0x78] sm:$0xff]
      %569 = vmatprep.subr.mxu0 0.0
      %570 = vmatpush1.msra.mxu0 %v553
      %571 = vmatprep.subr.mxu0 0.0
      %572 = vmatpush1.msra.mxu0 %v554
      %573 = vmatprep.subr.mxu0 0.0
      %574 = vmatpush1.msra.mxu0 %v555
      %575 = vmatprep.subr.mxu0 0.0
      %576 = vmatpush1.msra.mxu0 %v556
      %577 = vmatprep.subr.mxu0 0.0
      %578 = vmatpush1.msra.mxu0 %v557
      %579 = vmatprep.subr.mxu0 0.0
      %580 = vmatpush1.msra.mxu0 %v558
      %581 = vmatprep.subr.mxu0 0.0
      %582 = vmatpush1.msra.mxu0 %v559
      %583 = vmatprep.subr.mxu0 0.0
      %584 = vmatpush1.msra.mxu0 %v560
      %585 = vmatprep.subr.mxu0 0.0
      %586 = vmatpush1.msra.mxu0 %v561
      %587 = vmatprep.subr.mxu0 0.0
      %588 = vmatpush1.msra.mxu0 %v562
      %589 = vmatprep.subr.mxu0 0.0
      %590 = vmatpush1.msra.mxu0 %v563
      %591 = vmatprep.subr.mxu0 0.0
      %592 = vmatpush1.msra.mxu0 %v564
      %593 = vmatprep.subr.mxu0 0.0
      %594 = vmatpush1.msra.mxu0 %v565
      %595 = vmatprep.subr.mxu0 0.0
      %596 = vmatpush1.msra.mxu0 %v566
      %597 = vmatprep.subr.mxu0 0.0
      %598 = vmatpush1.msra.mxu0 %v567
      %599 = vmatprep.subr.mxu0 0.0
      %600 = vmatpush1.msra.mxu0 %v568
      %601 = vmatprep.subr.mxu0 0.0
      %602 = vmatpush1.msra.mxu0 0.0
      %603 = vmatprep.subr.mxu0 0.0
      %604 = vmatpush1.msra.mxu0 0.0
      %605 = vmatprep.subr.mxu0 0.0
      %606 = vmatpush1.msra.mxu0 0.0
      %607 = vmatprep.subr.mxu0 0.0
      %608 = vmatpush1.msra.mxu0 0.0
      %609 = vmatprep.subr.mxu0 0.0
      %610 = vmatpush1.msra.mxu0 0.0
      %611 = vmatprep.subr.mxu0 0.0
      %612 = vmatpush1.msra.mxu0 0.0
      %613 = vmatprep.subr.mxu0 0.0
      %614 = vmatpush1.msra.mxu0 0.0
      %615 = vmatprep.subr.mxu0 0.0
      %616 = vmatpush1.msra.mxu0 0.0
      %617 = vmatprep.subr.mxu0 0.0
      %618 = vmatpush1.msra.mxu0 0.0
      %619 = vmatprep.subr.mxu0 0.0
      %620 = vmatpush1.msra.mxu0 0.0
      %621 = vmatprep.subr.mxu0 0.0
      %622 = vmatpush1.msra.mxu0 0.0
      %623 = vmatprep.subr.mxu0 0.0
      %624 = vmatpush1.msra.mxu0 0.0
      %625 = vmatprep.subr.mxu0 0.0
      %626 = vmatpush1.msra.mxu0 0.0
      %627 = vmatprep.subr.mxu0 0.0
      %628 = vmatpush1.msra.mxu0 0.0
      %629 = vmatprep.subr.mxu0 0.0
      %630 = vmatpush1.msra.mxu0 0.0
      %631 = vmatprep.subr.mxu0 0.0
      %632 = vmatpush1.msra.mxu0 0.0
      %633 = vmatprep.mubr.f32.mxu0 0.0
      %634 = vmatmul.mubr.f32.gmra.mrb[0].mxu0 %v519
      %v635 = vpop.f32.mrb[0].mxu0
      %v636 = vadd.f32 0.0, %v635
      %v637 = vpop.f32.mrb[0].mxu0
      %638 = vdwg.mxu0
      %v639 = vld [vmem:[%s6] sm:$0xff]
      %v640 = vld [vmem:[%s6 + $0x8] sm:$0xff]
      %v641 = vld [vmem:[%s6 + $0x10] sm:$0xff]
      %vm642 = vcmask 64512
      %v644 = vsel %vm642, %v636, 0
      %646 = vmatprep.subr.mxu0 %v640
      %647 = vmatpush1.msra.mxu0 %v639
      %648 = vmatprep.subr.mxu0 0.0
      %649 = vmatpush1.msra.mxu0 0.0
      %650 = vmatprep.subr.mxu0 0.0
      %651 = vmatpush1.msra.mxu0 0.0
      %652 = vmatprep.subr.mxu0 0.0
      %653 = vmatpush1.msra.mxu0 0.0
      %654 = vmatprep.subr.mxu0 0.0
      %655 = vmatpush1.msra.mxu0 0.0
      %656 = vmatprep.subr.mxu0 0.0
      %657 = vmatpush1.msra.mxu0 0.0
      %658 = vmatprep.subr.mxu0 0.0
      %659 = vmatpush1.msra.mxu0 0.0
      %660 = vmatprep.subr.mxu0 0.0
      %661 = vmatpush1.msra.mxu0 0.0
      %662 = vmatprep.subr.mxu0 0.0
      %663 = vmatpush1.msra.mxu0 0.0
      %664 = vmatprep.subr.mxu0 0.0
      %665 = vmatpush1.msra.mxu0 0.0
      %666 = vmatprep.subr.mxu0 0.0
      %667 = vmatpush1.msra.mxu0 0.0
      %668 = vmatprep.subr.mxu0 0.0
      %669 = vmatpush1.msra.mxu0 0.0
      %670 = vmatprep.subr.mxu0 0.0
      %671 = vmatpush1.msra.mxu0 0.0
      %672 = vmatprep.subr.mxu0 0.0
      %673 = vmatpush1.msra.mxu0 0.0
      %674 = vmatprep.subr.mxu0 0.0
      %675 = vmatpush1.msra.mxu0 0.0
      %676 = vmatprep.subr.mxu0 0.0
      %677 = vmatpush1.msra.mxu0 0.0
      %678 = vmatprep.subr.mxu0 0.0
      %679 = vmatpush1.msra.mxu0 0.0
      %680 = vmatprep.subr.mxu0 0.0
      %681 = vmatpush1.msra.mxu0 0.0
      %682 = vmatprep.subr.mxu0 0.0
      %683 = vmatpush1.msra.mxu0 0.0
      %684 = vmatprep.subr.mxu0 0.0
      %685 = vmatpush1.msra.mxu0 0.0
      %686 = vmatprep.subr.mxu0 0.0
      %687 = vmatpush1.msra.mxu0 0.0
      %688 = vmatprep.subr.mxu0 0.0
      %689 = vmatpush1.msra.mxu0 0.0
      %690 = vmatprep.subr.mxu0 0.0
      %691 = vmatpush1.msra.mxu0 0.0
      %692 = vmatprep.subr.mxu0 0.0
      %693 = vmatpush1.msra.mxu0 0.0
      %694 = vmatprep.subr.mxu0 0.0
      %695 = vmatpush1.msra.mxu0 0.0
      %696 = vmatprep.subr.mxu0 0.0
      %697 = vmatpush1.msra.mxu0 0.0
      %698 = vmatprep.subr.mxu0 0.0
      %699 = vmatpush1.msra.mxu0 0.0
      %700 = vmatprep.subr.mxu0 0.0
      %701 = vmatpush1.msra.mxu0 0.0
      %702 = vmatprep.subr.mxu0 0.0
      %703 = vmatpush1.msra.mxu0 0.0
      %704 = vmatprep.subr.mxu0 0.0
      %705 = vmatpush1.msra.mxu0 0.0
      %706 = vmatprep.subr.mxu0 0.0
      %707 = vmatpush1.msra.mxu0 0.0
      %708 = vmatprep.subr.mxu0 0.0
      %709 = vmatpush1.msra.mxu0 0.0
      %710 = vmatprep.mubr.f32.mxu0 0.0
      %711 = vmatmul.mubr.f32.gmra.mrb[0].mxu0 %v644
      %v712 = vpop.f32.mrb[0].mxu0
      %v713 = vadd.f32 0.0, %v712
      %v714 = vpop.f32.mrb[0].mxu0
      %v715 = vadd.f32 0.0, %v714
      %716 = vdwg.mxu0
      %717 = vmatprep.subr.mxu0 0.0
      %718 = vmatpush1.msra.mxu0 %v641
      %719 = vmatprep.subr.mxu0 0.0
      %720 = vmatpush1.msra.mxu0 0.0
      %721 = vmatprep.subr.mxu0 0.0
      %722 = vmatpush1.msra.mxu0 0.0
      %723 = vmatprep.subr.mxu0 0.0
      %724 = vmatpush1.msra.mxu0 0.0
      %725 = vmatprep.subr.mxu0 0.0
      %726 = vmatpush1.msra.mxu0 0.0
      %727 = vmatprep.subr.mxu0 0.0
      %728 = vmatpush1.msra.mxu0 0.0
      %729 = vmatprep.subr.mxu0 0.0
      %730 = vmatpush1.msra.mxu0 0.0
      %731 = vmatprep.subr.mxu0 0.0
      %732 = vmatpush1.msra.mxu0 0.0
      %733 = vmatprep.subr.mxu0 0.0
      %734 = vmatpush1.msra.mxu0 0.0
      %735 = vmatprep.subr.mxu0 0.0
      %736 = vmatpush1.msra.mxu0 0.0
      %737 = vmatprep.subr.mxu0 0.0
      %738 = vmatpush1.msra.mxu0 0.0
      %739 = vmatprep.subr.mxu0 0.0
      %740 = vmatpush1.msra.mxu0 0.0
      %741 = vmatprep.subr.mxu0 0.0
      %742 = vmatpush1.msra.mxu0 0.0
      %743 = vmatprep.subr.mxu0 0.0
      %744 = vmatpush1.msra.mxu0 0.0
      %745 = vmatprep.subr.mxu0 0.0
      %746 = vmatpush1.msra.mxu0 0.0
      %747 = vmatprep.subr.mxu0 0.0
      %748 = vmatpush1.msra.mxu0 0.0
      %749 = vmatprep.subr.mxu0 0.0
      %750 = vmatpush1.msra.mxu0 0.0
      %751 = vmatprep.subr.mxu0 0.0
      %752 = vmatpush1.msra.mxu0 0.0
      %753 = vmatprep.subr.mxu0 0.0
      %754 = vmatpush1.msra.mxu0 0.0
      %755 = vmatprep.subr.mxu0 0.0
      %756 = vmatpush1.msra.mxu0 0.0
      %757 = vmatprep.subr.mxu0 0.0
      %758 = vmatpush1.msra.mxu0 0.0
      %759 = vmatprep.subr.mxu0 0.0
      %760 = vmatpush1.msra.mxu0 0.0
      %761 = vmatprep.subr.mxu0 0.0
      %762 = vmatpush1.msra.mxu0 0.0
      %763 = vmatprep.subr.mxu0 0.0
      %764 = vmatpush1.msra.mxu0 0.0
      %765 = vmatprep.subr.mxu0 0.0
      %766 = vmatpush1.msra.mxu0 0.0
      %767 = vmatprep.subr.mxu0 0.0
      %768 = vmatpush1.msra.mxu0 0.0
      %769 = vmatprep.subr.mxu0 0.0
      %770 = vmatpush1.msra.mxu0 0.0
      %771 = vmatprep.subr.mxu0 0.0
      %772 = vmatpush1.msra.mxu0 0.0
      %773 = vmatprep.subr.mxu0 0.0
      %774 = vmatpush1.msra.mxu0 0.0
      %775 = vmatprep.subr.mxu0 0.0
      %776 = vmatpush1.msra.mxu0 0.0
      %777 = vmatprep.subr.mxu0 0.0
      %778 = vmatpush1.msra.mxu0 0.0
      %779 = vmatprep.subr.mxu0 0.0
      %780 = vmatpush1.msra.mxu0 0.0
      %781 = vmatprep.mubr.f32.mxu0 0.0
      %782 = vmatmul.mubr.f32.gmra.mrb[0].mxu0 %v644
      %v783 = vpop.f32.mrb[0].mxu0
      %v784 = vadd.f32 0.0, %v783
      %v785 = vpop.f32.mrb[0].mxu0
      %786 = vdwg.mxu0
      %v787 = vmul.f32 %v713, 2.0
      %v788 = vmul.f32 %v715, 2.0
      %v789 = vmul.f32 %v784, 2.0
      %v822 = vunpack.c.l.b16 %v521
      %v823 = vunpack.c.h.b16 %v521
      %v824 = vunpack.c.l.b16 %v522
      %v825 = vunpack.c.l.b16 %v523
      %v826 = vunpack.c.h.b16 %v523
      %v827 = vunpack.c.l.b16 %v524
      %v828 = vunpack.c.l.b16 %v525
      %v829 = vunpack.c.h.b16 %v525
      %v830 = vunpack.c.l.b16 %v526
      %v831 = vunpack.c.l.b16 %v527
      %v832 = vunpack.c.h.b16 %v527
      %v833 = vunpack.c.l.b16 %v528
      %v834 = vunpack.c.l.b16 %v529
      %v835 = vunpack.c.h.b16 %v529
      %v836 = vunpack.c.l.b16 %v530
      %v837 = vunpack.c.l.b16 %v531
      %v838 = vunpack.c.h.b16 %v531
      %v839 = vunpack.c.l.b16 %v532
      %v840 = vunpack.c.l.b16 %v533
      %v841 = vunpack.c.h.b16 %v533
      %v842 = vunpack.c.l.b16 %v534
      %v843 = vunpack.c.l.b16 %v535
      %v844 = vunpack.c.h.b16 %v535
      %v845 = vunpack.c.l.b16 %v536
      %v846 = vunpack.c.l.b16 %v537
      %v847 = vunpack.c.h.b16 %v537
      %v848 = vunpack.c.l.b16 %v538
      %v849 = vunpack.c.l.b16 %v539
      %v850 = vunpack.c.h.b16 %v539
      %v851 = vunpack.c.l.b16 %v540
      %v852 = vunpack.c.l.b16 %v541
      %v853 = vunpack.c.h.b16 %v541
      %v854 = vunpack.c.l.b16 %v542
      %v855 = vunpack.c.l.b16 %v543
      %v856 = vunpack.c.h.b16 %v543
      %v857 = vunpack.c.l.b16 %v544
      %v858 = vunpack.c.l.b16 %v545
      %v859 = vunpack.c.h.b16 %v545
      %v860 = vunpack.c.l.b16 %v546
      %v861 = vunpack.c.l.b16 %v547
      %v862 = vunpack.c.h.b16 %v547
      %v863 = vunpack.c.l.b16 %v548
      %v864 = vunpack.c.l.b16 %v549
      %v865 = vunpack.c.h.b16 %v549
      %v866 = vunpack.c.l.b16 %v550
      %v867 = vunpack.c.l.b16 %v551
      %v868 = vunpack.c.h.b16 %v551
      %v869 = vunpack.c.l.b16 %v552
      %v870 = vpack.c.b16 %v825, %v822
      %v871 = vpack.c.b16 %v826, %v823
      %v872 = vpack.c.b16 %v827, %v824
      %v873 = vpack.c.b16 %v831, %v828
      %v874 = vpack.c.b16 %v832, %v829
      %v875 = vpack.c.b16 %v833, %v830
      %v876 = vpack.c.b16 %v837, %v834
      %v877 = vpack.c.b16 %v838, %v835
      %v878 = vpack.c.b16 %v839, %v836
      %v879 = vpack.c.b16 %v843, %v840
      %v880 = vpack.c.b16 %v844, %v841
      %v881 = vpack.c.b16 %v845, %v842
      %v882 = vpack.c.b16 %v849, %v846
      %v883 = vpack.c.b16 %v850, %v847
      %v884 = vpack.c.b16 %v851, %v848
      %v885 = vpack.c.b16 %v855, %v852
      %v886 = vpack.c.b16 %v856, %v853
      %v887 = vpack.c.b16 %v857, %v854
      %v888 = vpack.c.b16 %v861, %v858
      %v889 = vpack.c.b16 %v862, %v859
      %v890 = vpack.c.b16 %v863, %v860
      %v891 = vpack.c.b16 %v867, %v864
      %v892 = vpack.c.b16 %v868, %v865
      %v893 = vpack.c.b16 %v869, %v866
      %918 = vmatprep.subr.bf16.mxu0 %v871
      %919 = vmatpush1.bf16.msra.mxu0 %v870
      %920 = vmatprep.subr.bf16.mxu0 %v874
      %921 = vmatpush1.bf16.msra.mxu0 %v873
      %922 = vmatprep.subr.bf16.mxu0 %v877
      %923 = vmatpush1.bf16.msra.mxu0 %v876
      %924 = vmatprep.subr.bf16.mxu0 %v880
      %925 = vmatpush1.bf16.msra.mxu0 %v879
      %926 = vmatprep.subr.bf16.mxu0 %v883
      %927 = vmatpush1.bf16.msra.mxu0 %v882
      %928 = vmatprep.subr.bf16.mxu0 %v886
      %929 = vmatpush1.bf16.msra.mxu0 %v885
      %930 = vmatprep.subr.bf16.mxu0 %v889
      %931 = vmatpush1.bf16.msra.mxu0 %v888
      %932 = vmatprep.subr.bf16.mxu0 %v892
      %933 = vmatpush1.bf16.msra.mxu0 %v891
      %934 = vmatprep.subr.bf16.mxu0 0
      %935 = vmatpush1.bf16.msra.mxu0 0
      %936 = vmatprep.subr.bf16.mxu0 0
      %937 = vmatpush1.bf16.msra.mxu0 0
      %938 = vmatprep.subr.bf16.mxu0 0
      %939 = vmatpush1.bf16.msra.mxu0 0
      %940 = vmatprep.subr.bf16.mxu0 0
      %941 = vmatpush1.bf16.msra.mxu0 0
      %942 = vmatprep.subr.bf16.mxu0 0
      %943 = vmatpush1.bf16.msra.mxu0 0
      %944 = vmatprep.subr.bf16.mxu0 0
      %945 = vmatpush1.bf16.msra.mxu0 0
      %946 = vmatprep.subr.bf16.mxu0 0
      %947 = vmatpush1.bf16.msra.mxu0 0
      %948 = vmatprep.subr.bf16.mxu0 0
      %949 = vmatpush1.bf16.msra.mxu0 0
      %950 = vmatprep.mubr.bf16.mxu0 0
      %951 = vmatmul.mubr.bf16.gmra.mrb[0].mxu0 %v520
      %v952 = vpop.f32.mrb[0].mxu0
      %v953 = vadd.f32 %v787, %v952
      %v954 = vpop.f32.mrb[0].mxu0
      %v955 = vadd.f32 %v788, %v954
      %v956 = vpop.f32.mrb[0].mxu0
      %v957 = vpop.f32.mrb[0].mxu0
      %958 = vdwg.mxu0
      %959 = vmatprep.subr.bf16.mxu0 0
      %960 = vmatpush1.bf16.msra.mxu0 %v872
      %961 = vmatprep.subr.bf16.mxu0 0
      %962 = vmatpush1.bf16.msra.mxu0 %v875
      %963 = vmatprep.subr.bf16.mxu0 0
      %964 = vmatpush1.bf16.msra.mxu0 %v878
      %965 = vmatprep.subr.bf16.mxu0 0
      %966 = vmatpush1.bf16.msra.mxu0 %v881
      %967 = vmatprep.subr.bf16.mxu0 0
      %968 = vmatpush1.bf16.msra.mxu0 %v884
      %969 = vmatprep.subr.bf16.mxu0 0
      %970 = vmatpush1.bf16.msra.mxu0 %v887
      %971 = vmatprep.subr.bf16.mxu0 0
      %972 = vmatpush1.bf16.msra.mxu0 %v890
      %973 = vmatprep.subr.bf16.mxu0 0
      %974 = vmatpush1.bf16.msra.mxu0 %v893
      %975 = vmatprep.subr.bf16.mxu0 0
      %976 = vmatpush1.bf16.msra.mxu0 0
      %977 = vmatprep.subr.bf16.mxu0 0
      %978 = vmatpush1.bf16.msra.mxu0 0
      %979 = vmatprep.subr.bf16.mxu0 0
      %980 = vmatpush1.bf16.msra.mxu0 0
      %981 = vmatprep.subr.bf16.mxu0 0
      %982 = vmatpush1.bf16.msra.mxu0 0
      %983 = vmatprep.subr.bf16.mxu0 0
      %984 = vmatpush1.bf16.msra.mxu0 0
      %985 = vmatprep.subr.bf16.mxu0 0
      %986 = vmatpush1.bf16.msra.mxu0 0
      %987 = vmatprep.subr.bf16.mxu0 0
      %988 = vmatpush1.bf16.msra.mxu0 0
      %989 = vmatprep.subr.bf16.mxu0 0
      %990 = vmatpush1.bf16.msra.mxu0 0
      %991 = vmatprep.mubr.bf16.mxu0 0
      %992 = vmatmul.mubr.bf16.gmra.mrb[0].mxu0 %v520
      %v993 = vpop.f32.mrb[0].mxu0
      %v994 = vadd.f32 %v789, %v993
      %v995 = vpop.f32.mrb[0].mxu0
      %v996 = vpop.f32.mrb[0].mxu0
      %v997 = vpop.f32.mrb[0].mxu0
      %998 = vdwg.mxu0
      %v999 = vld [vmem:[%s4] sm:$0x7]
      %v1001 = vlaneseq
      %v1002 = vshrl.u32 %v1001, 7
      %v1003 = vsub.s32 0, %v1002
      %v1004 = vrot.slane %v999, %v1003
      %v1005 = vlaneseq
      %v1006 = vshrl.u32 %v1005, 7
      %v1007 = vsub.s32 1, %v1006
      %v1008 = vrot.slane %v999, %v1007
      %v1009 = vlaneseq
      %v1010 = vshrl.u32 %v1009, 7
      %v1011 = vsub.s32 2, %v1010
      %v1012 = vrot.slane %v999, %v1011
      %v1016 = vadd.f32 %v953, %v1004
      %v1017 = vadd.f32 %v955, %v1008
      %v1018 = vadd.f32 %v994, %v1012
      %v1019 = vlaneseq
      %v1020 = vshrl.u32 %v1019, 7
      %v1021 = vlaneseq
      %v1022 = vand.u32 %v1021, 127
      %vm1023 = vcmp.le.s32.totalorder %v1022, %v1020
      %vm1024 = vcmp.ge.s32.totalorder %v1022, 0
      %vm1025 = vcmp.lt.s32.totalorder %v1022, 32
      %vm1026 = vmand %vm1024, %vm1025
      %v1027 = vsel %vm1026, 1, 0
      %v1028 = vcvt.s32.f32 %v1027
      %vm1029 = vcmp.ge.s32.totalorder %v1022, 32
      %vm1030 = vcmp.lt.s32.totalorder %v1022, 64
      %vm1031 = vmand %vm1029, %vm1030
      %v1032 = vsel %vm1031, 1, 0
      %v1033 = vcvt.s32.f32 %v1032
      %vm1034 = vcmp.ge.s32.totalorder %v1022, 64
      %vm1035 = vcmp.lt.s32.totalorder %v1022, 96
      %vm1036 = vmand %vm1034, %vm1035
      %v1037 = vsel %vm1036, 1, 0
      %v1038 = vcvt.s32.f32 %v1037
      %vm1039 = vcmp.ge.s32.totalorder %v1022, 96
      %vm1040 = vcmp.lt.s32.totalorder %v1022, 128
      %vm1041 = vmand %vm1039, %vm1040
      %v1042 = vsel %vm1041, 1, 0
      %v1043 = vcvt.s32.f32 %v1042
      %v1044 = vmul.f32 %v1017, %v1028
      %1045 = vmatprep.subr.mxu0 0.0
      %1046 = vmatpush1.xpose.msra.mxu0 %v1044
      %1047 = vmatprep.subr.mxu0 0.0
      %1048 = vmatpush1.xpose.msra.mxu0 0.0
      %1049 = vmatprep.subr.mxu0 0.0
      %1050 = vmatpush1.xpose.msra.mxu0 0.0
      %1051 = vmatprep.subr.mxu0 0.0
      %1052 = vmatpush1.xpose.msra.mxu0 0.0
      %1053 = vmatprep.subr.mxu0 0.0
      %1054 = vmatpush1.xpose.msra.mxu0 0.0
      %1055 = vmatprep.subr.mxu0 0.0
      %1056 = vmatpush1.xpose.msra.mxu0 0.0
      %1057 = vmatprep.subr.mxu0 0.0
      %1058 = vmatpush1.xpose.msra.mxu0 0.0
      %1059 = vmatprep.subr.mxu0 0.0
      %1060 = vmatpush1.xpose.msra.mxu0 0.0
      %1061 = vmatprep.subr.mxu0 0.0
      %1062 = vmatpush1.xpose.msra.mxu0 0.0
      %1063 = vmatprep.subr.mxu0 0.0
      %1064 = vmatpush1.xpose.msra.mxu0 0.0
      %1065 = vmatprep.subr.mxu0 0.0
      %1066 = vmatpush1.xpose.msra.mxu0 0.0
      %1067 = vmatprep.subr.mxu0 0.0
      %1068 = vmatpush1.xpose.msra.mxu0 0.0
      %1069 = vmatprep.subr.mxu0 0.0
      %1070 = vmatpush1.xpose.msra.mxu0 0.0
      %1071 = vmatprep.subr.mxu0 0.0
      %1072 = vmatpush1.xpose.msra.mxu0 0.0
      %1073 = vmatprep.subr.mxu0 0.0
      %1074 = vmatpush1.xpose.msra.mxu0 0.0
      %1075 = vmatprep.subr.mxu0 0.0
      %1076 = vmatpush1.xpose.msra.mxu0 0.0
      %1077 = vmatprep.subr.mxu0 0.0
      %1078 = vmatpush1.xpose.msra.mxu0 0.0
      %1079 = vmatprep.subr.mxu0 0.0
      %1080 = vmatpush1.xpose.msra.mxu0 0.0
      %1081 = vmatprep.subr.mxu0 0.0
      %1082 = vmatpush1.xpose.msra.mxu0 0.0
      %1083 = vmatprep.subr.mxu0 0.0
      %1084 = vmatpush1.xpose.msra.mxu0 0.0
      %1085 = vmatprep.subr.mxu0 0.0
      %1086 = vmatpush1.xpose.msra.mxu0 0.0
      %1087 = vmatprep.subr.mxu0 0.0
      %1088 = vmatpush1.xpose.msra.mxu0 0.0
      %1089 = vmatprep.subr.mxu0 0.0
      %1090 = vmatpush1.xpose.msra.mxu0 0.0
      %1091 = vmatprep.subr.mxu0 0.0
      %1092 = vmatpush1.xpose.msra.mxu0 0.0
      %1093 = vmatprep.subr.mxu0 0.0
      %1094 = vmatpush1.xpose.msra.mxu0 0.0
      %1095 = vmatprep.subr.mxu0 0.0
      %1096 = vmatpush1.xpose.msra.mxu0 0.0
      %1097 = vmatprep.subr.mxu0 0.0
      %1098 = vmatpush1.xpose.msra.mxu0 0.0
      %1099 = vmatprep.subr.mxu0 0.0
      %1100 = vmatpush1.xpose.msra.mxu0 0.0
      %1101 = vmatprep.subr.mxu0 0.0
      %1102 = vmatpush1.xpose.msra.mxu0 0.0
      %1103 = vmatprep.subr.mxu0 0.0
      %1104 = vmatpush1.xpose.msra.mxu0 0.0
      %1105 = vmatprep.subr.mxu0 0.0
      %1106 = vmatpush1.xpose.msra.mxu0 0.0
      %1107 = vmatprep.subr.mxu0 0.0
      %1108 = vmatpush1.xpose.msra.mxu0 0.0
      %1109 = vmatprep.mubr.f32.mxu0 0.0
      %1110 = vmatmul.mubr.f32.gmra.mrb[0].mxu0 %v1016
      %v1111 = vpop.f32.mrb[0].mxu0
      %v1112 = vadd.f32 0.0, %v1111
      %v1113 = vpop.f32.mrb[0].mxu0
      %1114 = vdwg.mxu0
      %v1115 = vmul.f32 %v1112, 0.17677669
      %v1116 = vsel %vm1023, %v1115, -1e+30
      %v1117 = vsel %vm642, %v1116, -inf
      %1118 = vmax.xlane.f32.xlu0 %v1117
      %v1119 = vpop.xlane.xlu0 %1118
      %v1120 = vsub.f32 %v1116, %v1119
      %v1121 = vmul.f32 %v1120, 1.442695
      %v1122 = vpow.pop %v1121
      %v1123 = vsel %vm642, %v1122, 0.0
      %1124 = vadd.xlane.f32.xlu0 %v1123
      %v1125 = vpop.xlane.xlu0 %1124
      %v1126 = vrcp.pop %v1125
      %v1127 = vmul.f32 %v1122, %v1126
      %v1128 = vmul.f32 %v1018, %v1028
      %v1129 = vmul.f32 %v1017, %v1033
      %1130 = vmatprep.subr.mxu0 0.0
      %1131 = vmatpush1.xpose.msra.mxu0 %v1129
      %1132 = vmatprep.subr.mxu0 0.0
      %1133 = vmatpush1.xpose.msra.mxu0 0.0
      %1134 = vmatprep.subr.mxu0 0.0
      %1135 = vmatpush1.xpose.msra.mxu0 0.0
      %1136 = vmatprep.subr.mxu0 0.0
      %1137 = vmatpush1.xpose.msra.mxu0 0.0
      %1138 = vmatprep.subr.mxu0 0.0
      %1139 = vmatpush1.xpose.msra.mxu0 0.0
      %1140 = vmatprep.subr.mxu0 0.0
      %1141 = vmatpush1.xpose.msra.mxu0 0.0
      %1142 = vmatprep.subr.mxu0 0.0
      %1143 = vmatpush1.xpose.msra.mxu0 0.0
      %1144 = vmatprep.subr.mxu0 0.0
      %1145 = vmatpush1.xpose.msra.mxu0 0.0
      %1146 = vmatprep.subr.mxu0 0.0
      %1147 = vmatpush1.xpose.msra.mxu0 0.0
      %1148 = vmatprep.subr.mxu0 0.0
      %1149 = vmatpush1.xpose.msra.mxu0 0.0
      %1150 = vmatprep.subr.mxu0 0.0
      %1151 = vmatpush1.xpose.msra.mxu0 0.0
      %1152 = vmatprep.subr.mxu0 0.0
      %1153 = vmatpush1.xpose.msra.mxu0 0.0
      %1154 = vmatprep.subr.mxu0 0.0
      %1155 = vmatpush1.xpose.msra.mxu0 0.0
      %1156 = vmatprep.subr.mxu0 0.0
      %1157 = vmatpush1.xpose.msra.mxu0 0.0
      %1158 = vmatprep.subr.mxu0 0.0
      %1159 = vmatpush1.xpose.msra.mxu0 0.0
      %1160 = vmatprep.subr.mxu0 0.0
      %1161 = vmatpush1.xpose.msra.mxu0 0.0
      %1162 = vmatprep.subr.mxu0 0.0
      %1163 = vmatpush1.xpose.msra.mxu0 0.0
      %1164 = vmatprep.subr.mxu0 0.0
      %1165 = vmatpush1.xpose.msra.mxu0 0.0
      %1166 = vmatprep.subr.mxu0 0.0
      %1167 = vmatpush1.xpose.msra.mxu0 0.0
      %1168 = vmatprep.subr.mxu0 0.0
      %1169 = vmatpush1.xpose.msra.mxu0 0.0
      %1170 = vmatprep.subr.mxu0 0.0
      %1171 = vmatpush1.xpose.msra.mxu0 0.0
      %1172 = vmatprep.subr.mxu0 0.0
      %1173 = vmatpush1.xpose.msra.mxu0 0.0
      %1174 = vmatprep.subr.mxu0 0.0
      %1175 = vmatpush1.xpose.msra.mxu0 0.0
      %1176 = vmatprep.subr.mxu0 0.0
      %1177 = vmatpush1.xpose.msra.mxu0 0.0
      %1178 = vmatprep.subr.mxu0 0.0
      %1179 = vmatpush1.xpose.msra.mxu0 0.0
      %1180 = vmatprep.subr.mxu0 0.0
      %1181 = vmatpush1.xpose.msra.mxu0 0.0
      %1182 = vmatprep.subr.mxu0 0.0
      %1183 = vmatpush1.xpose.msra.mxu0 0.0
      %1184 = vmatprep.subr.mxu0 0.0
      %1185 = vmatpush1.xpose.msra.mxu0 0.0
      %1186 = vmatprep.subr.mxu0 0.0
      %1187 = vmatpush1.xpose.msra.mxu0 0.0
      %1188 = vmatprep.subr.mxu0 0.0
      %1189 = vmatpush1.xpose.msra.mxu0 0.0
      %1190 = vmatprep.subr.mxu0 0.0
      %1191 = vmatpush1.xpose.msra.mxu0 0.0
      %1192 = vmatprep.subr.mxu0 0.0
      %1193 = vmatpush1.xpose.msra.mxu0 0.0
      %1194 = vmatprep.mubr.f32.mxu0 0.0
      %1195 = vmatmul.mubr.f32.gmra.mrb[0].mxu0 %v1016
      %v1196 = vpop.f32.mrb[0].mxu0
      %v1197 = vadd.f32 0.0, %v1196
      %v1198 = vpop.f32.mrb[0].mxu0
      %1199 = vdwg.mxu0
      %v1200 = vmul.f32 %v1197, 0.17677669
      %v1201 = vsel %vm1023, %v1200, -1e+30
      %v1202 = vsel %vm642, %v1201, -inf
      %1203 = vmax.xlane.f32.xlu0 %v1202
      %v1204 = vpop.xlane.xlu0 %1203
      %v1205 = vsub.f32 %v1201, %v1204
      %v1206 = vmul.f32 %v1205, 1.442695
      %v1207 = vpow.pop %v1206
      %v1208 = vsel %vm642, %v1207, 0.0
      %1209 = vadd.xlane.f32.xlu0 %v1208
      %v1210 = vpop.xlane.xlu0 %1209
      %v1211 = vrcp.pop %v1210
      %v1212 = vmul.f32 %v1207, %v1211
      %v1213 = vmul.f32 %v1018, %v1033
      %v1215 = vsel %vm642, %v1212, 0
      %1217 = vmatprep.subr.mxu0 0.0
      %1218 = vmatpush1.msra.mxu0 %v1213
      %1219 = vmatprep.subr.mxu0 0.0
      %1220 = vmatpush1.msra.mxu0 0.0
      %1221 = vmatprep.subr.mxu0 0.0
      %1222 = vmatpush1.msra.mxu0 0.0
      %1223 = vmatprep.subr.mxu0 0.0
      %1224 = vmatpush1.msra.mxu0 0.0
      %1225 = vmatprep.subr.mxu0 0.0
      %1226 = vmatpush1.msra.mxu0 0.0
      %1227 = vmatprep.subr.mxu0 0.0
      %1228 = vmatpush1.msra.mxu0 0.0
      %1229 = vmatprep.subr.mxu0 0.0
      %1230 = vmatpush1.msra.mxu0 0.0
      %1231 = vmatprep.subr.mxu0 0.0
      %1232 = vmatpush1.msra.mxu0 0.0
      %1233 = vmatprep.subr.mxu0 0.0
      %1234 = vmatpush1.msra.mxu0 0.0
      %1235 = vmatprep.subr.mxu0 0.0
      %1236 = vmatpush1.msra.mxu0 0.0
      %1237 = vmatprep.subr.mxu0 0.0
      %1238 = vmatpush1.msra.mxu0 0.0
      %1239 = vmatprep.subr.mxu0 0.0
      %1240 = vmatpush1.msra.mxu0 0.0
      %1241 = vmatprep.subr.mxu0 0.0
      %1242 = vmatpush1.msra.mxu0 0.0
      %1243 = vmatprep.subr.mxu0 0.0
      %1244 = vmatpush1.msra.mxu0 0.0
      %1245 = vmatprep.subr.mxu0 0.0
      %1246 = vmatpush1.msra.mxu0 0.0
      %1247 = vmatprep.subr.mxu0 0.0
      %1248 = vmatpush1.msra.mxu0 0.0
      %1249 = vmatprep.subr.mxu0 0.0
      %1250 = vmatpush1.msra.mxu0 0.0
      %1251 = vmatprep.subr.mxu0 0.0
      %1252 = vmatpush1.msra.mxu0 0.0
      %1253 = vmatprep.subr.mxu0 0.0
      %1254 = vmatpush1.msra.mxu0 0.0
      %1255 = vmatprep.subr.mxu0 0.0
      %1256 = vmatpush1.msra.mxu0 0.0
      %1257 = vmatprep.subr.mxu0 0.0
      %1258 = vmatpush1.msra.mxu0 0.0
      %1259 = vmatprep.subr.mxu0 0.0
      %1260 = vmatpush1.msra.mxu0 0.0
      %1261 = vmatprep.subr.mxu0 0.0
      %1262 = vmatpush1.msra.mxu0 0.0
      %1263 = vmatprep.subr.mxu0 0.0
      %1264 = vmatpush1.msra.mxu0 0.0
      %1265 = vmatprep.subr.mxu0 0.0
      %1266 = vmatpush1.msra.mxu0 0.0
      %1267 = vmatprep.subr.mxu0 0.0
      %1268 = vmatpush1.msra.mxu0 0.0
      %1269 = vmatprep.subr.mxu0 0.0
      %1270 = vmatpush1.msra.mxu0 0.0
      %1271 = vmatprep.subr.mxu0 0.0
      %1272 = vmatpush1.msra.mxu0 0.0
      %1273 = vmatprep.subr.mxu0 0.0
      %1274 = vmatpush1.msra.mxu0 0.0
      %1275 = vmatprep.subr.mxu0 0.0
      %1276 = vmatpush1.msra.mxu0 0.0
      %1277 = vmatprep.subr.mxu0 0.0
      %1278 = vmatpush1.msra.mxu0 0.0
      %1279 = vmatprep.subr.mxu0 0.0
      %1280 = vmatpush1.msra.mxu0 0.0
      %1281 = vmatprep.mubr.f32.mxu0 0.0
      %1282 = vmatmul.mubr.f32.gmra.mrb[0].mxu0 %v1215
      %v1283 = vpop.f32.mrb[0].mxu0
      %v1284 = vadd.f32 0.0, %v1283
      %v1285 = vpop.f32.mrb[0].mxu0
      %1286 = vdwg.mxu0
      %v1288 = vsel %vm642, %v1127, 0
      %1290 = vmatprep.subr.mxu0 0.0
      %1291 = vmatpush1.msra.mxu0 %v1128
      %1292 = vmatprep.subr.mxu0 0.0
      %1293 = vmatpush1.msra.mxu0 0.0
      %1294 = vmatprep.subr.mxu0 0.0
      %1295 = vmatpush1.msra.mxu0 0.0
      %1296 = vmatprep.subr.mxu0 0.0
      %1297 = vmatpush1.msra.mxu0 0.0
      %1298 = vmatprep.subr.mxu0 0.0
      %1299 = vmatpush1.msra.mxu0 0.0
      %1300 = vmatprep.subr.mxu0 0.0
      %1301 = vmatpush1.msra.mxu0 0.0
      %1302 = vmatprep.subr.mxu0 0.0
      %1303 = vmatpush1.msra.mxu0 0.0
      %1304 = vmatprep.subr.mxu0 0.0
      %1305 = vmatpush1.msra.mxu0 0.0
      %1306 = vmatprep.subr.mxu0 0.0
      %1307 = vmatpush1.msra.mxu0 0.0
      %1308 = vmatprep.subr.mxu0 0.0
      %1309 = vmatpush1.msra.mxu0 0.0
      %1310 = vmatprep.subr.mxu0 0.0
      %1311 = vmatpush1.msra.mxu0 0.0
      %1312 = vmatprep.subr.mxu0 0.0
      %1313 = vmatpush1.msra.mxu0 0.0
      %1314 = vmatprep.subr.mxu0 0.0
      %1315 = vmatpush1.msra.mxu0 0.0
      %1316 = vmatprep.subr.mxu0 0.0
      %1317 = vmatpush1.msra.mxu0 0.0
      %1318 = vmatprep.subr.mxu0 0.0
      %1319 = vmatpush1.msra.mxu0 0.0
      %1320 = vmatprep.subr.mxu0 0.0
      %1321 = vmatpush1.msra.mxu0 0.0
      %1322 = vmatprep.subr.mxu0 0.0
      %1323 = vmatpush1.msra.mxu0 0.0
      %1324 = vmatprep.subr.mxu0 0.0
      %1325 = vmatpush1.msra.mxu0 0.0
      %1326 = vmatprep.subr.mxu0 0.0
      %1327 = vmatpush1.msra.mxu0 0.0
      %1328 = vmatprep.subr.mxu0 0.0
      %1329 = vmatpush1.msra.mxu0 0.0
      %1330 = vmatprep.subr.mxu0 0.0
      %1331 = vmatpush1.msra.mxu0 0.0
      %1332 = vmatprep.subr.mxu0 0.0
      %1333 = vmatpush1.msra.mxu0 0.0
      %1334 = vmatprep.subr.mxu0 0.0
      %1335 = vmatpush1.msra.mxu0 0.0
      %1336 = vmatprep.subr.mxu0 0.0
      %1337 = vmatpush1.msra.mxu0 0.0
      %1338 = vmatprep.subr.mxu0 0.0
      %1339 = vmatpush1.msra.mxu0 0.0
      %1340 = vmatprep.subr.mxu0 0.0
      %1341 = vmatpush1.msra.mxu0 0.0
      %1342 = vmatprep.subr.mxu0 0.0
      %1343 = vmatpush1.msra.mxu0 0.0
      %1344 = vmatprep.subr.mxu0 0.0
      %1345 = vmatpush1.msra.mxu0 0.0
      %1346 = vmatprep.subr.mxu0 0.0
      %1347 = vmatpush1.msra.mxu0 0.0
      %1348 = vmatprep.subr.mxu0 0.0
      %1349 = vmatpush1.msra.mxu0 0.0
      %1350 = vmatprep.subr.mxu0 0.0
      %1351 = vmatpush1.msra.mxu0 0.0
      %1352 = vmatprep.subr.mxu0 0.0
      %1353 = vmatpush1.msra.mxu0 0.0
      %1354 = vmatprep.mubr.f32.mxu0 0.0
      %1355 = vmatmul.mubr.f32.gmra.mrb[0].mxu0 %v1288
      %v1356 = vpop.f32.mrb[0].mxu0
      %v1357 = vadd.f32 %v1284, %v1356
      %v1358 = vpop.f32.mrb[0].mxu0
      %1359 = vdwg.mxu0
      %v1360 = vmul.f32 %v1017, %v1038
      %1361 = vmatprep.subr.mxu0 0.0
      %1362 = vmatpush1.xpose.msra.mxu0 %v1360
      %1363 = vmatprep.subr.mxu0 0.0
      %1364 = vmatpush1.xpose.msra.mxu0 0.0
      %1365 = vmatprep.subr.mxu0 0.0
      %1366 = vmatpush1.xpose.msra.mxu0 0.0
      %1367 = vmatprep.subr.mxu0 0.0
      %1368 = vmatpush1.xpose.msra.mxu0 0.0
      %1369 = vmatprep.subr.mxu0 0.0
      %1370 = vmatpush1.xpose.msra.mxu0 0.0
      %1371 = vmatprep.subr.mxu0 0.0
      %1372 = vmatpush1.xpose.msra.mxu0 0.0
      %1373 = vmatprep.subr.mxu0 0.0
      %1374 = vmatpush1.xpose.msra.mxu0 0.0
      %1375 = vmatprep.subr.mxu0 0.0
      %1376 = vmatpush1.xpose.msra.mxu0 0.0
      %1377 = vmatprep.subr.mxu0 0.0
      %1378 = vmatpush1.xpose.msra.mxu0 0.0
      %1379 = vmatprep.subr.mxu0 0.0
      %1380 = vmatpush1.xpose.msra.mxu0 0.0
      %1381 = vmatprep.subr.mxu0 0.0
      %1382 = vmatpush1.xpose.msra.mxu0 0.0
      %1383 = vmatprep.subr.mxu0 0.0
      %1384 = vmatpush1.xpose.msra.mxu0 0.0
      %1385 = vmatprep.subr.mxu0 0.0
      %1386 = vmatpush1.xpose.msra.mxu0 0.0
      %1387 = vmatprep.subr.mxu0 0.0
      %1388 = vmatpush1.xpose.msra.mxu0 0.0
      %1389 = vmatprep.subr.mxu0 0.0
      %1390 = vmatpush1.xpose.msra.mxu0 0.0
      %1391 = vmatprep.subr.mxu0 0.0
      %1392 = vmatpush1.xpose.msra.mxu0 0.0
      %1393 = vmatprep.subr.mxu0 0.0
      %1394 = vmatpush1.xpose.msra.mxu0 0.0
      %1395 = vmatprep.subr.mxu0 0.0
      %1396 = vmatpush1.xpose.msra.mxu0 0.0
      %1397 = vmatprep.subr.mxu0 0.0
      %1398 = vmatpush1.xpose.msra.mxu0 0.0
      %1399 = vmatprep.subr.mxu0 0.0
      %1400 = vmatpush1.xpose.msra.mxu0 0.0
      %1401 = vmatprep.subr.mxu0 0.0
      %1402 = vmatpush1.xpose.msra.mxu0 0.0
      %1403 = vmatprep.subr.mxu0 0.0
      %1404 = vmatpush1.xpose.msra.mxu0 0.0
      %1405 = vmatprep.subr.mxu0 0.0
      %1406 = vmatpush1.xpose.msra.mxu0 0.0
      %1407 = vmatprep.subr.mxu0 0.0
      %1408 = vmatpush1.xpose.msra.mxu0 0.0
      %1409 = vmatprep.subr.mxu0 0.0
      %1410 = vmatpush1.xpose.msra.mxu0 0.0
      %1411 = vmatprep.subr.mxu0 0.0
      %1412 = vmatpush1.xpose.msra.mxu0 0.0
      %1413 = vmatprep.subr.mxu0 0.0
      %1414 = vmatpush1.xpose.msra.mxu0 0.0
      %1415 = vmatprep.subr.mxu0 0.0
      %1416 = vmatpush1.xpose.msra.mxu0 0.0
      %1417 = vmatprep.subr.mxu0 0.0
      %1418 = vmatpush1.xpose.msra.mxu0 0.0
      %1419 = vmatprep.subr.mxu0 0.0
      %1420 = vmatpush1.xpose.msra.mxu0 0.0
      %1421 = vmatprep.subr.mxu0 0.0
      %1422 = vmatpush1.xpose.msra.mxu0 0.0
      %1423 = vmatprep.subr.mxu0 0.0
      %1424 = vmatpush1.xpose.msra.mxu0 0.0
      %1425 = vmatprep.mubr.f32.mxu0 0.0
      %1426 = vmatmul.mubr.f32.gmra.mrb[0].mxu0 %v1016
      %v1427 = vpop.f32.mrb[0].mxu0
      %v1428 = vadd.f32 0.0, %v1427
      %v1429 = vpop.f32.mrb[0].mxu0
      %1430 = vdwg.mxu0
      %v1431 = vmul.f32 %v1428, 0.17677669
      %v1432 = vsel %vm1023, %v1431, -1e+30
      %v1433 = vsel %vm642, %v1432, -inf
      %1434 = vmax.xlane.f32.xlu0 %v1433
      %v1435 = vpop.xlane.xlu0 %1434
      %v1436 = vsub.f32 %v1432, %v1435
      %v1437 = vmul.f32 %v1436, 1.442695
      %v1438 = vpow.pop %v1437
      %v1439 = vsel %vm642, %v1438, 0.0
      %1440 = vadd.xlane.f32.xlu0 %v1439
      %v1441 = vpop.xlane.xlu0 %1440
      %v1442 = vrcp.pop %v1441
      %v1443 = vmul.f32 %v1438, %v1442
      %v1444 = vmul.f32 %v1018, %v1038
      %v1446 = vsel %vm642, %v1443, 0
      %1448 = vmatprep.subr.mxu0 0.0
      %1449 = vmatpush1.msra.mxu0 %v1444
      %1450 = vmatprep.subr.mxu0 0.0
      %1451 = vmatpush1.msra.mxu0 0.0
      %1452 = vmatprep.subr.mxu0 0.0
      %1453 = vmatpush1.msra.mxu0 0.0
      %1454 = vmatprep.subr.mxu0 0.0
      %1455 = vmatpush1.msra.mxu0 0.0
      %1456 = vmatprep.subr.mxu0 0.0
      %1457 = vmatpush1.msra.mxu0 0.0
      %1458 = vmatprep.subr.mxu0 0.0
      %1459 = vmatpush1.msra.mxu0 0.0
      %1460 = vmatprep.subr.mxu0 0.0
      %1461 = vmatpush1.msra.mxu0 0.0
      %1462 = vmatprep.subr.mxu0 0.0
      %1463 = vmatpush1.msra.mxu0 0.0
      %1464 = vmatprep.subr.mxu0 0.0
      %1465 = vmatpush1.msra.mxu0 0.0
      %1466 = vmatprep.subr.mxu0 0.0
      %1467 = vmatpush1.msra.mxu0 0.0
      %1468 = vmatprep.subr.mxu0 0.0
      %1469 = vmatpush1.msra.mxu0 0.0
      %1470 = vmatprep.subr.mxu0 0.0
      %1471 = vmatpush1.msra.mxu0 0.0
      %1472 = vmatprep.subr.mxu0 0.0
      %1473 = vmatpush1.msra.mxu0 0.0
      %1474 = vmatprep.subr.mxu0 0.0
      %1475 = vmatpush1.msra.mxu0 0.0
      %1476 = vmatprep.subr.mxu0 0.0
      %1477 = vmatpush1.msra.mxu0 0.0
      %1478 = vmatprep.subr.mxu0 0.0
      %1479 = vmatpush1.msra.mxu0 0.0
      %1480 = vmatprep.subr.mxu0 0.0
      %1481 = vmatpush1.msra.mxu0 0.0
      %1482 = vmatprep.subr.mxu0 0.0
      %1483 = vmatpush1.msra.mxu0 0.0
      %1484 = vmatprep.subr.mxu0 0.0
      %1485 = vmatpush1.msra.mxu0 0.0
      %1486 = vmatprep.subr.mxu0 0.0
      %1487 = vmatpush1.msra.mxu0 0.0
      %1488 = vmatprep.subr.mxu0 0.0
      %1489 = vmatpush1.msra.mxu0 0.0
      %1490 = vmatprep.subr.mxu0 0.0
      %1491 = vmatpush1.msra.mxu0 0.0
      %1492 = vmatprep.subr.mxu0 0.0
      %1493 = vmatpush1.msra.mxu0 0.0
      %1494 = vmatprep.subr.mxu0 0.0
      %1495 = vmatpush1.msra.mxu0 0.0
      %1496 = vmatprep.subr.mxu0 0.0
      %1497 = vmatpush1.msra.mxu0 0.0
      %1498 = vmatprep.subr.mxu0 0.0
      %1499 = vmatpush1.msra.mxu0 0.0
      %1500 = vmatprep.subr.mxu0 0.0
      %1501 = vmatpush1.msra.mxu0 0.0
      %1502 = vmatprep.subr.mxu0 0.0
      %1503 = vmatpush1.msra.mxu0 0.0
      %1504 = vmatprep.subr.mxu0 0.0
      %1505 = vmatpush1.msra.mxu0 0.0
      %1506 = vmatprep.subr.mxu0 0.0
      %1507 = vmatpush1.msra.mxu0 0.0
      %1508 = vmatprep.subr.mxu0 0.0
      %1509 = vmatpush1.msra.mxu0 0.0
      %1510 = vmatprep.subr.mxu0 0.0
      %1511 = vmatpush1.msra.mxu0 0.0
      %1512 = vmatprep.mubr.f32.mxu0 0.0
      %1513 = vmatmul.mubr.f32.gmra.mrb[0].mxu0 %v1446
      %v1514 = vpop.f32.mrb[0].mxu0
      %v1515 = vadd.f32 0.0, %v1514
      %v1516 = vpop.f32.mrb[0].mxu0
      %1517 = vdwg.mxu0
      %v1518 = vadd.f32 %v1357, %v1515
      %v1519 = vmul.f32 %v1017, %v1043
      %1520 = vmatprep.subr.mxu0 0.0
      %1521 = vmatpush1.xpose.msra.mxu0 %v1519
      %1522 = vmatprep.subr.mxu0 0.0
      %1523 = vmatpush1.xpose.msra.mxu0 0.0
      %1524 = vmatprep.subr.mxu0 0.0
      %1525 = vmatpush1.xpose.msra.mxu0 0.0
      %1526 = vmatprep.subr.mxu0 0.0
      %1527 = vmatpush1.xpose.msra.mxu0 0.0
      %1528 = vmatprep.subr.mxu0 0.0
      %1529 = vmatpush1.xpose.msra.mxu0 0.0
      %1530 = vmatprep.subr.mxu0 0.0
      %1531 = vmatpush1.xpose.msra.mxu0 0.0
      %1532 = vmatprep.subr.mxu0 0.0
      %1533 = vmatpush1.xpose.msra.mxu0 0.0
      %1534 = vmatprep.subr.mxu0 0.0
      %1535 = vmatpush1.xpose.msra.mxu0 0.0
      %1536 = vmatprep.subr.mxu0 0.0
      %1537 = vmatpush1.xpose.msra.mxu0 0.0
      %1538 = vmatprep.subr.mxu0 0.0
      %1539 = vmatpush1.xpose.msra.mxu0 0.0
      %1540 = vmatprep.subr.mxu0 0.0
      %1541 = vmatpush1.xpose.msra.mxu0 0.0
      %1542 = vmatprep.subr.mxu0 0.0
      %1543 = vmatpush1.xpose.msra.mxu0 0.0
      %1544 = vmatprep.subr.mxu0 0.0
      %1545 = vmatpush1.xpose.msra.mxu0 0.0
      %1546 = vmatprep.subr.mxu0 0.0
      %1547 = vmatpush1.xpose.msra.mxu0 0.0
      %1548 = vmatprep.subr.mxu0 0.0
      %1549 = vmatpush1.xpose.msra.mxu0 0.0
      %1550 = vmatprep.subr.mxu0 0.0
      %1551 = vmatpush1.xpose.msra.mxu0 0.0
      %1552 = vmatprep.subr.mxu0 0.0
      %1553 = vmatpush1.xpose.msra.mxu0 0.0
      %1554 = vmatprep.subr.mxu0 0.0
      %1555 = vmatpush1.xpose.msra.mxu0 0.0
      %1556 = vmatprep.subr.mxu0 0.0
      %1557 = vmatpush1.xpose.msra.mxu0 0.0
      %1558 = vmatprep.subr.mxu0 0.0
      %1559 = vmatpush1.xpose.msra.mxu0 0.0
      %1560 = vmatprep.subr.mxu0 0.0
      %1561 = vmatpush1.xpose.msra.mxu0 0.0
      %1562 = vmatprep.subr.mxu0 0.0
      %1563 = vmatpush1.xpose.msra.mxu0 0.0
      %1564 = vmatprep.subr.mxu0 0.0
      %1565 = vmatpush1.xpose.msra.mxu0 0.0
      %1566 = vmatprep.subr.mxu0 0.0
      %1567 = vmatpush1.xpose.msra.mxu0 0.0
      %1568 = vmatprep.subr.mxu0 0.0
      %1569 = vmatpush1.xpose.msra.mxu0 0.0
      %1570 = vmatprep.subr.mxu0 0.0
      %1571 = vmatpush1.xpose.msra.mxu0 0.0
      %1572 = vmatprep.subr.mxu0 0.0
      %1573 = vmatpush1.xpose.msra.mxu0 0.0
      %1574 = vmatprep.subr.mxu0 0.0
      %1575 = vmatpush1.xpose.msra.mxu0 0.0
      %1576 = vmatprep.subr.mxu0 0.0
      %1577 = vmatpush1.xpose.msra.mxu0 0.0
      %1578 = vmatprep.subr.mxu0 0.0
      %1579 = vmatpush1.xpose.msra.mxu0 0.0
      %1580 = vmatprep.subr.mxu0 0.0
      %1581 = vmatpush1.xpose.msra.mxu0 0.0
      %1582 = vmatprep.subr.mxu0 0.0
      %1583 = vmatpush1.xpose.msra.mxu0 0.0
      %1584 = vmatprep.mubr.f32.mxu0 0.0
      %1585 = vmatmul.mubr.f32.gmra.mrb[0].mxu0 %v1016
      %v1586 = vpop.f32.mrb[0].mxu0
      %v1587 = vadd.f32 0.0, %v1586
      %v1588 = vpop.f32.mrb[0].mxu0
      %1589 = vdwg.mxu0
      %v1590 = vmul.f32 %v1587, 0.17677669
      %v1591 = vsel %vm1023, %v1590, -1e+30
      %v1592 = vsel %vm642, %v1591, -inf
      %1593 = vmax.xlane.f32.xlu0 %v1592
      %v1594 = vpop.xlane.xlu0 %1593
      %v1595 = vsub.f32 %v1591, %v1594
      %v1596 = vmul.f32 %v1595, 1.442695
      %v1597 = vpow.pop %v1596
      %v1598 = vsel %vm642, %v1597, 0.0
      %1599 = vadd.xlane.f32.xlu0 %v1598
      %v1600 = vpop.xlane.xlu0 %1599
      %v1601 = vrcp.pop %v1600
      %v1602 = vmul.f32 %v1597, %v1601
      %v1603 = vmul.f32 %v1018, %v1043
      %v1605 = vsel %vm642, %v1602, 0
      %1607 = vmatprep.subr.mxu0 0.0
      %1608 = vmatpush1.msra.mxu0 %v1603
      %1609 = vmatprep.subr.mxu0 0.0
      %1610 = vmatpush1.msra.mxu0 0.0
      %1611 = vmatprep.subr.mxu0 0.0
      %1612 = vmatpush1.msra.mxu0 0.0
      %1613 = vmatprep.subr.mxu0 0.0
      %1614 = vmatpush1.msra.mxu0 0.0
      %1615 = vmatprep.subr.mxu0 0.0
      %1616 = vmatpush1.msra.mxu0 0.0
      %1617 = vmatprep.subr.mxu0 0.0
      %1618 = vmatpush1.msra.mxu0 0.0
      %1619 = vmatprep.subr.mxu0 0.0
      %1620 = vmatpush1.msra.mxu0 0.0
      %1621 = vmatprep.subr.mxu0 0.0
      %1622 = vmatpush1.msra.mxu0 0.0
      %1623 = vmatprep.subr.mxu0 0.0
      %1624 = vmatpush1.msra.mxu0 0.0
      %1625 = vmatprep.subr.mxu0 0.0
      %1626 = vmatpush1.msra.mxu0 0.0
      %1627 = vmatprep.subr.mxu0 0.0
      %1628 = vmatpush1.msra.mxu0 0.0
      %1629 = vmatprep.subr.mxu0 0.0
      %1630 = vmatpush1.msra.mxu0 0.0
      %1631 = vmatprep.subr.mxu0 0.0
      %1632 = vmatpush1.msra.mxu0 0.0
      %1633 = vmatprep.subr.mxu0 0.0
      %1634 = vmatpush1.msra.mxu0 0.0
      %1635 = vmatprep.subr.mxu0 0.0
      %1636 = vmatpush1.msra.mxu0 0.0
      %1637 = vmatprep.subr.mxu0 0.0
      %1638 = vmatpush1.msra.mxu0 0.0
      %1639 = vmatprep.subr.mxu0 0.0
      %1640 = vmatpush1.msra.mxu0 0.0
      %1641 = vmatprep.subr.mxu0 0.0
      %1642 = vmatpush1.msra.mxu0 0.0
      %1643 = vmatprep.subr.mxu0 0.0
      %1644 = vmatpush1.msra.mxu0 0.0
      %1645 = vmatprep.subr.mxu0 0.0
      %1646 = vmatpush1.msra.mxu0 0.0
      %1647 = vmatprep.subr.mxu0 0.0
      %1648 = vmatpush1.msra.mxu0 0.0
      %1649 = vmatprep.subr.mxu0 0.0
      %1650 = vmatpush1.msra.mxu0 0.0
      %1651 = vmatprep.subr.mxu0 0.0
      %1652 = vmatpush1.msra.mxu0 0.0
      %1653 = vmatprep.subr.mxu0 0.0
      %1654 = vmatpush1.msra.mxu0 0.0
      %1655 = vmatprep.subr.mxu0 0.0
      %1656 = vmatpush1.msra.mxu0 0.0
      %1657 = vmatprep.subr.mxu0 0.0
      %1658 = vmatpush1.msra.mxu0 0.0
      %1659 = vmatprep.subr.mxu0 0.0
      %1660 = vmatpush1.msra.mxu0 0.0
      %1661 = vmatprep.subr.mxu0 0.0
      %1662 = vmatpush1.msra.mxu0 0.0
      %1663 = vmatprep.subr.mxu0 0.0
      %1664 = vmatpush1.msra.mxu0 0.0
      %1665 = vmatprep.subr.mxu0 0.0
      %1666 = vmatpush1.msra.mxu0 0.0
      %1667 = vmatprep.subr.mxu0 0.0
      %1668 = vmatpush1.msra.mxu0 0.0
      %1669 = vmatprep.subr.mxu0 0.0
      %1670 = vmatpush1.msra.mxu0 0.0
      %1671 = vmatprep.mubr.f32.mxu0 0.0
      %1672 = vmatmul.mubr.f32.gmra.mrb[0].mxu0 %v1605
      %v1673 = vpop.f32.mrb[0].mxu0
      %v1674 = vadd.f32 0.0, %v1673
      %v1675 = vpop.f32.mrb[0].mxu0
      %1676 = vdwg.mxu0
      %v1677 = vadd.f32 %v1518, %v1674
      %v1678 = vpack.c.bf16 %v1677, %v1677
      %v1679 = vld [vmem:[%s7] sm:$0xf]
      %v1680 = vld [vmem:[%s7 + $0x4] sm:$0xf]
      %v1681 = vld [vmem:[%s7 + $0x8] sm:$0xf]
      %v1682 = vld [vmem:[%s7 + $0xc] sm:$0xf]
      %v1683 = vld [vmem:[%s7 + $0x10] sm:$0xf]
      %v1684 = vld [vmem:[%s7 + $0x14] sm:$0xf]
      %v1685 = vld [vmem:[%s7 + $0x18] sm:$0xf]
      %v1686 = vld [vmem:[%s7 + $0x1c] sm:$0xf]
      %v1687 = vld [vmem:[%s7 + $0x20] sm:$0xf]
      %v1688 = vld [vmem:[%s7 + $0x24] sm:$0xf]
      %v1689 = vld [vmem:[%s7 + $0x28] sm:$0xf]
      %v1690 = vld [vmem:[%s7 + $0x2c] sm:$0xf]
      %v1691 = vld [vmem:[%s7 + $0x30] sm:$0xf]
      %v1692 = vld [vmem:[%s7 + $0x34] sm:$0xf]
      %v1693 = vld [vmem:[%s7 + $0x38] sm:$0xf]
      %v1694 = vld [vmem:[%s7 + $0x3c] sm:$0xf]
      %v1695 = vld [vmem:[%s8] sm:$0x1]
      %v1697 = vlaneseq
      %v1698 = vshrl.u32 %v1697, 7
      %v1699 = vsub.s32 0, %v1698
      %v1700 = vrot.slane %v1695, %v1699
      %v1718 = vunpack.c.l.b16 %v1679
      %v1719 = vunpack.c.l.b16 %v1680
      %v1720 = vunpack.c.l.b16 %v1681
      %v1721 = vunpack.c.l.b16 %v1682
      %v1722 = vunpack.c.l.b16 %v1683
      %v1723 = vunpack.c.l.b16 %v1684
      %v1724 = vunpack.c.l.b16 %v1685
      %v1725 = vunpack.c.l.b16 %v1686
      %v1726 = vunpack.c.l.b16 %v1687
      %v1727 = vunpack.c.l.b16 %v1688
      %v1728 = vunpack.c.l.b16 %v1689
      %v1729 = vunpack.c.l.b16 %v1690
      %v1730 = vunpack.c.l.b16 %v1691
      %v1731 = vunpack.c.l.b16 %v1692
      %v1732 = vunpack.c.l.b16 %v1693
      %v1733 = vunpack.c.l.b16 %v1694
      %v1734 = vpack.c.b16 %v1719, %v1718
      %v1735 = vpack.c.b16 %v1721, %v1720
      %v1736 = vpack.c.b16 %v1723, %v1722
      %v1737 = vpack.c.b16 %v1725, %v1724
      %v1738 = vpack.c.b16 %v1727, %v1726
      %v1739 = vpack.c.b16 %v1729, %v1728
      %v1740 = vpack.c.b16 %v1731, %v1730
      %v1741 = vpack.c.b16 %v1733, %v1732
      %1750 = vmatprep.subr.bf16.mxu0 0
      %1751 = vmatpush1.bf16.msra.mxu0 %v1734
      %1752 = vmatprep.subr.bf16.mxu0 0
      %1753 = vmatpush1.bf16.msra.mxu0 %v1735
      %1754 = vmatprep.subr.bf16.mxu0 0
      %1755 = vmatpush1.bf16.msra.mxu0 %v1736
      %1756 = vmatprep.subr.bf16.mxu0 0
      %1757 = vmatpush1.bf16.msra.mxu0 %v1737
      %1758 = vmatprep.subr.bf16.mxu0 0
      %1759 = vmatpush1.bf16.msra.mxu0 %v1738
      %1760 = vmatprep.subr.bf16.mxu0 0
      %1761 = vmatpush1.bf16.msra.mxu0 %v1739
      %1762 = vmatprep.subr.bf16.mxu0 0
      %1763 = vmatpush1.bf16.msra.mxu0 %v1740
      %1764 = vmatprep.subr.bf16.mxu0 0
      %1765 = vmatpush1.bf16.msra.mxu0 %v1741
      %1766 = vmatprep.subr.bf16.mxu0 0
      %1767 = vmatpush1.bf16.msra.mxu0 0
      %1768 = vmatprep.subr.bf16.mxu0 0
      %1769 = vmatpush1.bf16.msra.mxu0 0
      %1770 = vmatprep.subr.bf16.mxu0 0
      %1771 = vmatpush1.bf16.msra.mxu0 0
      %1772 = vmatprep.subr.bf16.mxu0 0
      %1773 = vmatpush1.bf16.msra.mxu0 0
      %1774 = vmatprep.subr.bf16.mxu0 0
      %1775 = vmatpush1.bf16.msra.mxu0 0
      %1776 = vmatprep.subr.bf16.mxu0 0
      %1777 = vmatpush1.bf16.msra.mxu0 0
      %1778 = vmatprep.subr.bf16.mxu0 0
      %1779 = vmatpush1.bf16.msra.mxu0 0
      %1780 = vmatprep.subr.bf16.mxu0 0
      %1781 = vmatpush1.bf16.msra.mxu0 0
      %1782 = vmatprep.mubr.bf16.mxu0 0
      %1783 = vmatmul.mubr.bf16.gmra.mrb[0].mxu0 %v1678
      %v1784 = vpop.f32.mrb[0].mxu0
      %v1785 = vadd.f32 %v1700, %v1784
      %v1786 = vpop.f32.mrb[0].mxu0
      %v1787 = vpop.f32.mrb[0].mxu0
      %v1788 = vpop.f32.mrb[0].mxu0
      %1789 = vdwg.mxu0
      %v1790 = vadd.f32 %v491, %v1785
      %v1791 = vld [vmem:[%s9] sm:$0x1]
      %v1792 = vld [vmem:[%s10] sm:$0x1]
      %1793 = vadd.xlane.f32.xlu0 %v1790
      %v1794 = vpop.xlane.xlu0 %1793
      %v1795 = vmul.f32 %v1794, %v496
      %v1796 = vsub.f32 %v1790, %v1795
      %v1797 = vmul.f32 %v1796, %v1796
      %1798 = vadd.xlane.f32.xlu0 %v1797
      %v1799 = vpop.xlane.xlu0 %1798
      %v1800 = vmul.f32 %v1799, %v496
      %v1801 = vadd.f32 %v1800, 1e-05
      %v1802 = vrsqrt.pop %v1801
      %v1803 = vmul.f32 %v1796, %v1802
      %v1805 = vlaneseq
      %v1806 = vshrl.u32 %v1805, 7
      %v1807 = vsub.s32 0, %v1806
      %v1808 = vrot.slane %v1791, %v1807
      %v1810 = vmul.f32 %v1803, %v1808
      %v1812 = vlaneseq
      %v1813 = vshrl.u32 %v1812, 7
      %v1814 = vsub.s32 0, %v1813
      %v1815 = vrot.slane %v1792, %v1814
      %v1817 = vadd.f32 %v1810, %v1815
      %v1818 = vpack.c.bf16 %v1817, %v1817
      %v1819 = vld [vmem:[%s11] sm:$0xff]
      %v1820 = vld [vmem:[%s11 + $0x8] sm:$0xff]
      %v1821 = vld [vmem:[%s11 + $0x10] sm:$0xff]
      %v1822 = vld [vmem:[%s11 + $0x18] sm:$0xff]
      %v1823 = vld [vmem:[%s11 + $0x20] sm:$0xff]
      %v1824 = vld [vmem:[%s11 + $0x28] sm:$0xff]
      %v1825 = vld [vmem:[%s11 + $0x30] sm:$0xff]
      %v1826 = vld [vmem:[%s11 + $0x38] sm:$0xff]
      %v1827 = vld [vmem:[%s11 + $0x40] sm:$0xff]
      %v1828 = vld [vmem:[%s11 + $0x48] sm:$0xff]
      %v1829 = vld [vmem:[%s11 + $0x50] sm:$0xff]
      %v1830 = vld [vmem:[%s11 + $0x58] sm:$0xff]
      %v1831 = vld [vmem:[%s11 + $0x60] sm:$0xff]
      %v1832 = vld [vmem:[%s11 + $0x68] sm:$0xff]
      %v1833 = vld [vmem:[%s11 + $0x70] sm:$0xff]
      %v1834 = vld [vmem:[%s11 + $0x78] sm:$0xff]
      %v1835 = vld [vmem:[%s12] sm:$0x3]
      %v1837 = vlaneseq
      %v1838 = vshrl.u32 %v1837, 7
      %v1839 = vsub.s32 0, %v1838
      %v1840 = vrot.slane %v1835, %v1839
      %v1841 = vlaneseq
      %v1842 = vshrl.u32 %v1841, 7
      %v1843 = vsub.s32 1, %v1842
      %v1844 = vrot.slane %v1835, %v1843
      %v1863 = vunpack.c.l.b16 %v1819
      %v1864 = vunpack.c.h.b16 %v1819
      %v1865 = vunpack.c.l.b16 %v1820
      %v1866 = vunpack.c.h.b16 %v1820
      %v1867 = vunpack.c.l.b16 %v1821
      %v1868 = vunpack.c.h.b16 %v1821
      %v1869 = vunpack.c.l.b16 %v1822
      %v1870 = vunpack.c.h.b16 %v1822
      %v1871 = vunpack.c.l.b16 %v1823
      %v1872 = vunpack.c.h.b16 %v1823
      %v1873 = vunpack.c.l.b16 %v1824
      %v1874 = vunpack.c.h.b16 %v1824
      %v1875 = vunpack.c.l.b16 %v1825
      %v1876 = vunpack.c.h.b16 %v1825
      %v1877 = vunpack.c.l.b16 %v1826
      %v1878 = vunpack.c.h.b16 %v1826
      %v1879 = vunpack.c.l.b16 %v1827
      %v1880 = vunpack.c.h.b16 %v1827
      %v1881 = vunpack.c.l.b16 %v1828
      %v1882 = vunpack.c.h.b16 %v1828
      %v1883 = vunpack.c.l.b16 %v1829
      %v1884 = vunpack.c.h.b16 %v1829
      %v1885 = vunpack.c.l.b16 %v1830
      %v1886 = vunpack.c.h.b16 %v1830
      %v1887 = vunpack.c.l.b16 %v1831
      %v1888 = vunpack.c.h.b16 %v1831
      %v1889 = vunpack.c.l.b16 %v1832
      %v1890 = vunpack.c.h.b16 %v1832
      %v1891 = vunpack.c.l.b16 %v1833
      %v1892 = vunpack.c.h.b16 %v1833
      %v1893 = vunpack.c.l.b16 %v1834
      %v1894 = vunpack.c.h.b16 %v1834
      %v1895 = vpack.c.b16 %v1865, %v1863
      %v1896 = vpack.c.b16 %v1866, %v1864
      %v1897 = vpack.c.b16 %v1869, %v1867
      %v1898 = vpack.c.b16 %v1870, %v1868
      %v1899 = vpack.c.b16 %v1873, %v1871
      %v1900 = vpack.c.b16 %v1874, %v1872
      %v1901 = vpack.c.b16 %v1877, %v1875
      %v1902 = vpack.c.b16 %v1878, %v1876
      %v1903 = vpack.c.b16 %v1881, %v1879
      %v1904 = vpack.c.b16 %v1882, %v1880
      %v1905 = vpack.c.b16 %v1885, %v1883
      %v1906 = vpack.c.b16 %v1886, %v1884
      %v1907 = vpack.c.b16 %v1889, %v1887
      %v1908 = vpack.c.b16 %v1890, %v1888
      %v1909 = vpack.c.b16 %v1893, %v1891
      %v1910 = vpack.c.b16 %v1894, %v1892
      %1927 = vmatprep.subr.bf16.mxu0 %v1896
      %1928 = vmatpush1.bf16.msra.mxu0 %v1895
      %1929 = vmatprep.subr.bf16.mxu0 %v1898
      %1930 = vmatpush1.bf16.msra.mxu0 %v1897
      %1931 = vmatprep.subr.bf16.mxu0 %v1900
      %1932 = vmatpush1.bf16.msra.mxu0 %v1899
      %1933 = vmatprep.subr.bf16.mxu0 %v1902
      %1934 = vmatpush1.bf16.msra.mxu0 %v1901
      %1935 = vmatprep.subr.bf16.mxu0 %v1904
      %1936 = vmatpush1.bf16.msra.mxu0 %v1903
      %1937 = vmatprep.subr.bf16.mxu0 %v1906
      %1938 = vmatpush1.bf16.msra.mxu0 %v1905
      %1939 = vmatprep.subr.bf16.mxu0 %v1908
      %1940 = vmatpush1.bf16.msra.mxu0 %v1907
      %1941 = vmatprep.subr.bf16.mxu0 %v1910
      %1942 = vmatpush1.bf16.msra.mxu0 %v1909
      %1943 = vmatprep.subr.bf16.mxu0 0
      %1944 = vmatpush1.bf16.msra.mxu0 0
      %1945 = vmatprep.subr.bf16.mxu0 0
      %1946 = vmatpush1.bf16.msra.mxu0 0
      %1947 = vmatprep.subr.bf16.mxu0 0
      %1948 = vmatpush1.bf16.msra.mxu0 0
      %1949 = vmatprep.subr.bf16.mxu0 0
      %1950 = vmatpush1.bf16.msra.mxu0 0
      %1951 = vmatprep.subr.bf16.mxu0 0
      %1952 = vmatpush1.bf16.msra.mxu0 0
      %1953 = vmatprep.subr.bf16.mxu0 0
      %1954 = vmatpush1.bf16.msra.mxu0 0
      %1955 = vmatprep.subr.bf16.mxu0 0
      %1956 = vmatpush1.bf16.msra.mxu0 0
      %1957 = vmatprep.subr.bf16.mxu0 0
      %1958 = vmatpush1.bf16.msra.mxu0 0
      %1959 = vmatprep.mubr.bf16.mxu0 0
      %1960 = vmatmul.mubr.bf16.gmra.mrb[0].mxu0 %v1818
      %v1961 = vpop.f32.mrb[0].mxu0
      %v1962 = vadd.f32 %v1840, %v1961
      %v1963 = vpop.f32.mrb[0].mxu0
      %v1964 = vadd.f32 %v1844, %v1963
      %v1965 = vpop.f32.mrb[0].mxu0
      %v1966 = vpop.f32.mrb[0].mxu0
      %1967 = vdwg.mxu0
      %v1968 = vmul.f32 %v1962, %v1962
      %v1969 = vmul.f32 %v1964, %v1964
      %v1970 = vmul.f32 %v1962, %v1968
      %v1971 = vmul.f32 %v1964, %v1969
      %v1972 = vmul.f32 %v1970, 0.044715
      %v1973 = vmul.f32 %v1971, 0.044715
      %v1974 = vadd.f32 %v1962, %v1972
      %v1975 = vadd.f32 %v1964, %v1973
      %v1976 = vmul.f32 %v1974, 0.7978846
      %v1977 = vmul.f32 %v1975, 0.7978846
      %v1978 = vtanh.pop %v1976
      %v1979 = vtanh.pop %v1977
      %v1980 = vadd.f32 %v1978, 1.0
      %v1981 = vadd.f32 %v1979, 1.0
      %v1982 = vmul.f32 %v1980, 0.5
      %v1983 = vmul.f32 %v1981, 0.5
      %v1984 = vmul.f32 %v1962, %v1982
      %v1985 = vmul.f32 %v1964, %v1983
      %v1986 = vpack.c.bf16 %v1984, %v1984
      %v1987 = vpack.c.bf16 %v1985, %v1985
      %v1988 = vld [vmem:[%s13] sm:$0xf]
      %v1989 = vld [vmem:[%s13 + $0x4] sm:$0xf]
      %v1990 = vld [vmem:[%s13 + $0x8] sm:$0xf]
      %v1991 = vld [vmem:[%s13 + $0xc] sm:$0xf]
      %v1992 = vld [vmem:[%s13 + $0x10] sm:$0xf]
      %v1993 = vld [vmem:[%s13 + $0x14] sm:$0xf]
      %v1994 = vld [vmem:[%s13 + $0x18] sm:$0xf]
      %v1995 = vld [vmem:[%s13 + $0x1c] sm:$0xf]
      %v1996 = vld [vmem:[%s13 + $0x20] sm:$0xf]
      %v1997 = vld [vmem:[%s13 + $0x24] sm:$0xf]
      %v1998 = vld [vmem:[%s13 + $0x28] sm:$0xf]
      %v1999 = vld [vmem:[%s13 + $0x2c] sm:$0xf]
      %v2000 = vld [vmem:[%s13 + $0x30] sm:$0xf]
      %v2001 = vld [vmem:[%s13 + $0x34] sm:$0xf]
      %v2002 = vld [vmem:[%s13 + $0x38] sm:$0xf]
      %v2003 = vld [vmem:[%s13 + $0x3c] sm:$0xf]
      %v2004 = vld [vmem:[%s13 + $0x40] sm:$0xf]
      %v2005 = vld [vmem:[%s13 + $0x44] sm:$0xf]
      %v2006 = vld [vmem:[%s13 + $0x48] sm:$0xf]
      %v2007 = vld [vmem:[%s13 + $0x4c] sm:$0xf]
      %v2008 = vld [vmem:[%s13 + $0x50] sm:$0xf]
      %v2009 = vld [vmem:[%s13 + $0x54] sm:$0xf]
      %v2010 = vld [vmem:[%s13 + $0x58] sm:$0xf]
      %v2011 = vld [vmem:[%s13 + $0x5c] sm:$0xf]
      %v2012 = vld [vmem:[%s13 + $0x60] sm:$0xf]
      %v2013 = vld [vmem:[%s13 + $0x64] sm:$0xf]
      %v2014 = vld [vmem:[%s13 + $0x68] sm:$0xf]
      %v2015 = vld [vmem:[%s13 + $0x6c] sm:$0xf]
      %v2016 = vld [vmem:[%s13 + $0x70] sm:$0xf]
      %v2017 = vld [vmem:[%s13 + $0x74] sm:$0xf]
      %v2018 = vld [vmem:[%s13 + $0x78] sm:$0xf]
      %v2019 = vld [vmem:[%s13 + $0x7c] sm:$0xf]
      %v2020 = vld [vmem:[%s14] sm:$0x1]
      %v2022 = vlaneseq
      %v2023 = vshrl.u32 %v2022, 7
      %v2024 = vsub.s32 0, %v2023
      %v2025 = vrot.slane %v2020, %v2024
      %v2059 = vunpack.c.l.b16 %v1988
      %v2060 = vunpack.c.l.b16 %v1989
      %v2061 = vunpack.c.l.b16 %v1990
      %v2062 = vunpack.c.l.b16 %v1991
      %v2063 = vunpack.c.l.b16 %v1992
      %v2064 = vunpack.c.l.b16 %v1993
      %v2065 = vunpack.c.l.b16 %v1994
      %v2066 = vunpack.c.l.b16 %v1995
      %v2067 = vunpack.c.l.b16 %v1996
      %v2068 = vunpack.c.l.b16 %v1997
      %v2069 = vunpack.c.l.b16 %v1998
      %v2070 = vunpack.c.l.b16 %v1999
      %v2071 = vunpack.c.l.b16 %v2000
      %v2072 = vunpack.c.l.b16 %v2001
      %v2073 = vunpack.c.l.b16 %v2002
      %v2074 = vunpack.c.l.b16 %v2003
      %v2075 = vunpack.c.l.b16 %v2004
      %v2076 = vunpack.c.l.b16 %v2005
      %v2077 = vunpack.c.l.b16 %v2006
      %v2078 = vunpack.c.l.b16 %v2007
      %v2079 = vunpack.c.l.b16 %v2008
      %v2080 = vunpack.c.l.b16 %v2009
      %v2081 = vunpack.c.l.b16 %v2010
      %v2082 = vunpack.c.l.b16 %v2011
      %v2083 = vunpack.c.l.b16 %v2012
      %v2084 = vunpack.c.l.b16 %v2013
      %v2085 = vunpack.c.l.b16 %v2014
      %v2086 = vunpack.c.l.b16 %v2015
      %v2087 = vunpack.c.l.b16 %v2016
      %v2088 = vunpack.c.l.b16 %v2017
      %v2089 = vunpack.c.l.b16 %v2018
      %v2090 = vunpack.c.l.b16 %v2019
      %v2091 = vpack.c.b16 %v2060, %v2059
      %v2092 = vpack.c.b16 %v2062, %v2061
      %v2093 = vpack.c.b16 %v2064, %v2063
      %v2094 = vpack.c.b16 %v2066, %v2065
      %v2095 = vpack.c.b16 %v2068, %v2067
      %v2096 = vpack.c.b16 %v2070, %v2069
      %v2097 = vpack.c.b16 %v2072, %v2071
      %v2098 = vpack.c.b16 %v2074, %v2073
      %v2099 = vpack.c.b16 %v2076, %v2075
      %v2100 = vpack.c.b16 %v2078, %v2077
      %v2101 = vpack.c.b16 %v2080, %v2079
      %v2102 = vpack.c.b16 %v2082, %v2081
      %v2103 = vpack.c.b16 %v2084, %v2083
      %v2104 = vpack.c.b16 %v2086, %v2085
      %v2105 = vpack.c.b16 %v2088, %v2087
      %v2106 = vpack.c.b16 %v2090, %v2089
      %2123 = vmatprep.subr.bf16.mxu0 0
      %2124 = vmatpush1.bf16.msra.mxu0 %v2091
      %2125 = vmatprep.subr.bf16.mxu0 0
      %2126 = vmatpush1.bf16.msra.mxu0 %v2092
      %2127 = vmatprep.subr.bf16.mxu0 0
      %2128 = vmatpush1.bf16.msra.mxu0 %v2093
      %2129 = vmatprep.subr.bf16.mxu0 0
      %2130 = vmatpush1.bf16.msra.mxu0 %v2094
      %2131 = vmatprep.subr.bf16.mxu0 0
      %2132 = vmatpush1.bf16.msra.mxu0 %v2095
      %2133 = vmatprep.subr.bf16.mxu0 0
      %2134 = vmatpush1.bf16.msra.mxu0 %v2096
      %2135 = vmatprep.subr.bf16.mxu0 0
      %2136 = vmatpush1.bf16.msra.mxu0 %v2097
      %2137 = vmatprep.subr.bf16.mxu0 0
      %2138 = vmatpush1.bf16.msra.mxu0 %v2098
      %2139 = vmatprep.subr.bf16.mxu0 0
      %2140 = vmatpush1.bf16.msra.mxu0 %v2099
      %2141 = vmatprep.subr.bf16.mxu0 0
      %2142 = vmatpush1.bf16.msra.mxu0 %v2100
      %2143 = vmatprep.subr.bf16.mxu0 0
      %2144 = vmatpush1.bf16.msra.mxu0 %v2101
      %2145 = vmatprep.subr.bf16.mxu0 0
      %2146 = vmatpush1.bf16.msra.mxu0 %v2102
      %2147 = vmatprep.subr.bf16.mxu0 0
      %2148 = vmatpush1.bf16.msra.mxu0 %v2103
      %2149 = vmatprep.subr.bf16.mxu0 0
      %2150 = vmatpush1.bf16.msra.mxu0 %v2104
      %2151 = vmatprep.subr.bf16.mxu0 0
      %2152 = vmatpush1.bf16.msra.mxu0 %v2105
      %2153 = vmatprep.subr.bf16.mxu0 0
      %2154 = vmatpush1.bf16.msra.mxu0 %v2106
      %2155 = vmatprep.mubr.bf16.mxu0 %v1987
      %2156 = vmatmul.mubr.bf16.gmra.mrb[0].mxu0 %v1986
      %v2157 = vpop.f32.mrb[0].mxu0
      %v2158 = vadd.f32 %v2025, %v2157
      %v2159 = vpop.f32.mrb[0].mxu0
      %v2160 = vpop.f32.mrb[0].mxu0
      %v2161 = vpop.f32.mrb[0].mxu0
      %2162 = vdwg.mxu0
      %v2163 = vadd.f32 %v1790, %v2158
      %2164 = vst [vmem:[%s489] sm:$0xff] %v2163
      %p2165 = scmp.lt.s32.totalorder %s26, 1
      %s2166 = scalar_select %p2165, %s26, 1
      %s2167 = smul.addr %s2166, 8
      %s2168 = scalar_lea.vmem %s15, %s2167
      // Predicated region
      $region81: #{chatglm_lora_forward.4} parent=79 // pred_check
        %p2169 = pneg %p364
      $region82: #{chatglm_lora_forward.4} parent=79 // pred_check_branch
        %2171 = sbr.rel (%p2169) target = $region84
      $region83: #{chatglm_lora_forward.4} parent=79 // pred_region
        _
      $region84: #{chatglm_lora_forward.4} parent=79 // pred_fallthru
        _
    $region80: #{chatglm_lora_forward.4} parent=5 // pred_fallthru
      _
    %p2172 = scmp.le.s32.totalorder 2, %s21
    // Predicated region
    $region85: #{chatglm_lora_forward.4} parent=5 // pred_check
      %p2173 = pneg %p2172
    $region86: #{chatglm_lora_forward.4} parent=5 // pred_check_branch
      %2175 = sbr.rel (%p2173) target = $region88
    $region87: #{chatglm_lora_forward.4} parent=5 // pred_region
      %s2176 = ssub.s32 %s21, 2
      // Predicated region
      $region89: #{chatglm_lora_forward.4} parent=87 // pred_check
        %p2177 = pneg %p370
      $region90: #{chatglm_lora_forward.4} parent=87 // pred_check_branch
        %2179 = sbr.rel (%p2177) target = $region92
      $region91: #{chatglm_lora_forward.4} parent=87 // pred_region
        %p2180 = scmp.lt.s32.totalorder %s27, 1
        %s2181 = scalar_select %p2180, %s27, 1
        %s2182 = smul.addr %s2181, 8
        %s2183 = scalar_lea.vmem %s15, %s2182
      $region92: #{chatglm_lora_forward.4} parent=87 // pred_fallthru
        _
    $region88: #{chatglm_lora_forward.4} parent=5 // pred_fallthru
      _
  $region6: #{chatglm_lora_forward.4} parent=0 // loop_footer
    %s25 = sadd.s32 1, %s21
  $region7: #{chatglm_lora_forward.4} parent=0 // loop_footer_branch
    %20 = sbr.rel target = $region3
  $region8: #{chatglm_lora_forward.4} parent=0 // loop_exit
    _

</llo_original>
